<compile_context>
chip_gen: v6e
topology: v6e:2x2x1
jax: 0.10.0
libtpu: 0.0.40
codegen_flags: <defaults>
</compile_context>

<pallas_src>
import jax
import jax.numpy as jnp
from jax.experimental import pallas as pl
from jax.experimental.pallas import tpu as pltpu

NUM_CLASSES = 28
G_DIM, R_DIM, D_DIM = 1024, 2048, 1920          # googlenet / resnext / densenet feature dims
FUSED_DIM = G_DIM + R_DIM + D_DIM               # 4992 = 39 * 128
H1_DIM, H2_DIM = 512, 256
OUT_PAD = 128                                   # lane-padded logits width
SUBLANE = 8


def _fusion_mlp_kernel(comb_ref,                # [Bp, 4992] f32 (concatenated backbone features)
                       w1_ref, b1_ref,          # [4992, 512] bf16, [1, 512] f32
                       w2_ref, b2_ref,          # [512, 256]  bf16, [1, 256] f32
                       w3_ref, b3_ref,          # [256, 128]  bf16 (zero-padded 28->128), [1, 128] f32
                       out_ref):                # [Bp, 128] f32
    # Fusion MLP: Linear -> ReLU -> Linear -> ReLU -> Linear (dropout = identity).
    comb = comb_ref[...].astype(jnp.bfloat16)
    h1 = jnp.dot(comb, w1_ref[...], preferred_element_type=jnp.float32) + b1_ref[...]
    h1 = jnp.maximum(h1, 0.0)
    h2 = jnp.dot(h1.astype(jnp.bfloat16), w2_ref[...],
                 preferred_element_type=jnp.float32) + b2_ref[...]
    h2 = jnp.maximum(h2, 0.0)
    logits = jnp.dot(h2.astype(jnp.bfloat16), w3_ref[...],
                     preferred_element_type=jnp.float32) + b3_ref[...]
    out_ref[...] = logits.astype(out_ref.dtype)


def fruit_freshness_forward(x, params):
    """x: [B, C, H, W] float32 (NCHW). Returns logits [B, NUM_CLASSES]."""
    B, C, H, W = x.shape
    Bp = ((B + SUBLANE - 1) // SUBLANE) * SUBLANE

    # ---- Backbone stand-ins (plain JAX, hoisted out of the kernel) ----
    # TODO(synk): the real GoogLeNet / ResNeXt101-32x8d / DenseNet201 backbones
    # are not implemented; a GAP + fused linear projection stands in, producing
    # the concatenated 4992-d feature vector the fusion head expects.
    pooled = jnp.mean(x, axis=(2, 3))                                  # [B, C]
    combined = pooled @ params["w_grd"] + params["b_grd"]              # [B, 4992] f32
    if Bp != B:
        combined = jnp.pad(combined, ((0, Bp - B), (0, 0)))            # [Bp, 4992]

    vmem_spec = pl.BlockSpec(memory_space=pltpu.MemorySpace.VMEM)
    out_padded = pl.pallas_call(
        _fusion_mlp_kernel,
        out_shape=jax.ShapeDtypeStruct((Bp, OUT_PAD), jnp.float32),
        in_specs=[vmem_spec] * 7,
        out_specs=vmem_spec,
        compiler_params=pltpu.CompilerParams(vmem_limit_bytes=16 << 20),
    )(
        combined,
        params["w1"], params["b1"],
        params["w2"], params["b2"],
        params["w3p"], params["b3p"],
    )
    # Padded batch rows / padded lanes carry garbage; slice them off here.
    return out_padded[:B, :NUM_CLASSES]


def init_params(key, in_channels):
    """Deterministic synthetic parameters (shapes follow the module's __init__)."""
    ks = jax.random.split(key, 12)

    def lin(kw, kb, fan_in, fan_out):
        w = jax.random.normal(kw, (fan_in, fan_out), jnp.float32) * (1.0 / jnp.sqrt(fan_in))
        b = jax.random.normal(kb, (1, fan_out), jnp.float32) * 0.01
        return w, b

    wg, bg = lin(ks[0], ks[1], in_channels, G_DIM)
    wr, br = lin(ks[2], ks[3], in_channels, R_DIM)
    wd, bd = lin(ks[4], ks[5], in_channels, D_DIM)
    w1, b1 = lin(ks[6], ks[7], FUSED_DIM, H1_DIM)
    w2, b2 = lin(ks[8], ks[9], H1_DIM, H2_DIM)
    w3, b3 = lin(ks[10], ks[11], H2_DIM, NUM_CLASSES)

    # Fuse the three stand-in backbone heads into one [C, 4992] projection so
    # `combined` directly matches torch.cat((g, r, d), dim=1).
    w_grd = jnp.concatenate([wg, wr, wd], axis=1)              # [C, 4992] f32 (tiny)
    b_grd = jnp.concatenate([bg, br, bd], axis=1)              # [1, 4992] f32

    # Large MLP weights in bf16 (halves the dominant HBM->VMEM traffic,
    # supported natively on v5e/v6e/v7x); biases stay f32.
    w1_bf = w1.astype(jnp.bfloat16)
    w2_bf = w2.astype(jnp.bfloat16)

    # Lane-pad the final layer 28 -> 128 with zeros (sliced off after the kernel).
    w3p = jnp.pad(w3, ((0, 0), (0, OUT_PAD - NUM_CLASSES))).astype(jnp.bfloat16)
    b3p = jnp.pad(b3, ((0, 0), (0, OUT_PAD - NUM_CLASSES)))

    return dict(w_grd=w_grd, b_grd=b_grd,
                w1=w1_bf, b1=b1,
                w2=w2_bf, b2=b2,
                w3p=w3p, b3p=b3p)


if __name__ == "__main__":
    key = jax.random.PRNGKey(0)
    k_x, k_p = jax.random.split(key)

    B, C, H, W = 2, 3, 16, 16                   # small NCHW image batch (3-channel images)
    x = jax.random.normal(k_x, (B, C, H, W), jnp.float32)
    params = init_params(k_p, C)

    logits = jax.jit(fruit_freshness_forward)(x, params)
    logits = jax.block_until_ready(logits)

    assert logits.shape == (B, NUM_CLASSES), logits.shape
    assert bool(jnp.all(jnp.isfinite(logits)))

    # Cross-check the kernel's fusion MLP against a plain-JAX f32 reference
    # (bf16 weights => ~1e-2 relative tolerance).
    pooled = jnp.mean(x, axis=(2, 3))
    combined = pooled @ params["w_grd"] + params["b_grd"]
    h1 = jnp.maximum(combined @ params["w1"].astype(jnp.float32) + params["b1"], 0.0)
    h2 = jnp.maximum(h1 @ params["w2"].astype(jnp.float32) + params["b2"], 0.0)
    ref = (h2 @ params["w3p"].astype(jnp.float32) + params["b3p"])[:, :NUM_CLASSES]
    assert bool(jnp.allclose(logits, ref, atol=2e-2, rtol=2e-2))

    print("KERNEL_OK")
</pallas_src>

<mosaic_0001>
module attributes {stable_mosaic.version = 11 : i64} {
  func.func @_fusion_mlp_kernel(%arg0: memref<8x4992xf32, #tpu.memory_space<vmem>>, %arg1: memref<4992x512xbf16, #tpu.memory_space<vmem>>, %arg2: memref<1x512xf32, #tpu.memory_space<vmem>>, %arg3: memref<512x256xbf16, #tpu.memory_space<vmem>>, %arg4: memref<1x256xf32, #tpu.memory_space<vmem>>, %arg5: memref<256x128xbf16, #tpu.memory_space<vmem>>, %arg6: memref<1x128xf32, #tpu.memory_space<vmem>>, %arg7: memref<8x128xf32, #tpu.memory_space<vmem>>) attributes {dimension_semantics = [], scalar_prefetch = 0 : i64, scratch_operands = 0 : i64, tpu.core_type = #tpu.core_type<tc>} {
    %c0 = arith.constant 0 : index
    %c0_0 = arith.constant 0 : index
    %0 = vector.load %arg0[%c0, %c0_0] : memref<8x4992xf32, #tpu.memory_space<vmem>>, vector<8x4992xf32>
    %1 = arith.truncf %0 : vector<8x4992xf32> to vector<8x4992xbf16>
    %c0_1 = arith.constant 0 : index
    %c0_2 = arith.constant 0 : index
    %2 = vector.load %arg1[%c0_1, %c0_2] : memref<4992x512xbf16, #tpu.memory_space<vmem>>, vector<4992x512xbf16>
    %cst = arith.constant dense<0.000000e+00> : vector<8x512xf32>
    %3 = tpu.matmul %1, %2, %cst {dimension_numbers = #tpu.dot_dimension_numbers<[1], [0], [0], [1], [0, 0, 1, 1], [], []>} : vector<8x4992xbf16>, vector<4992x512xbf16>, vector<8x512xf32> -> vector<8x512xf32>
    %c0_3 = arith.constant 0 : index
    %c0_4 = arith.constant 0 : index
    %4 = vector.load %arg2[%c0_3, %c0_4] : memref<1x512xf32, #tpu.memory_space<vmem>>, vector<1x512xf32>
    %5 = vector.broadcast %4 : vector<1x512xf32> to vector<8x512xf32>
    %6 = arith.addf %3, %5 : vector<8x512xf32>
    %cst_5 = arith.constant 0.000000e+00 : f32
    %7 = vector.broadcast %cst_5 : f32 to vector<8x512xf32>
    %8 = arith.maximumf %6, %7 : vector<8x512xf32>
    %9 = arith.truncf %8 : vector<8x512xf32> to vector<8x512xbf16>
    %c0_6 = arith.constant 0 : index
    %c0_7 = arith.constant 0 : index
    %10 = vector.load %arg3[%c0_6, %c0_7] : memref<512x256xbf16, #tpu.memory_space<vmem>>, vector<512x256xbf16>
    %cst_8 = arith.constant dense<0.000000e+00> : vector<8x256xf32>
    %11 = tpu.matmul %9, %10, %cst_8 {dimension_numbers = #tpu.dot_dimension_numbers<[1], [0], [0], [1], [0, 0, 1, 1], [], []>} : vector<8x512xbf16>, vector<512x256xbf16>, vector<8x256xf32> -> vector<8x256xf32>
    %c0_9 = arith.constant 0 : index
    %c0_10 = arith.constant 0 : index
    %12 = vector.load %arg4[%c0_9, %c0_10] : memref<1x256xf32, #tpu.memory_space<vmem>>, vector<1x256xf32>
    %13 = vector.broadcast %12 : vector<1x256xf32> to vector<8x256xf32>
    %14 = arith.addf %11, %13 : vector<8x256xf32>
    %cst_11 = arith.constant 0.000000e+00 : f32
    %15 = vector.broadcast %cst_11 : f32 to vector<8x256xf32>
    %16 = arith.maximumf %14, %15 : vector<8x256xf32>
    %17 = arith.truncf %16 : vector<8x256xf32> to vector<8x256xbf16>
    %c0_12 = arith.constant 0 : index
    %c0_13 = arith.constant 0 : index
    %18 = vector.load %arg5[%c0_12, %c0_13] : memref<256x128xbf16, #tpu.memory_space<vmem>>, vector<256x128xbf16>
    %cst_14 = arith.constant dense<0.000000e+00> : vector<8x128xf32>
    %19 = tpu.matmul %17, %18, %cst_14 {dimension_numbers = #tpu.dot_dimension_numbers<[1], [0], [0], [1], [0, 0, 1, 1], [], []>} : vector<8x256xbf16>, vector<256x128xbf16>, vector<8x128xf32> -> vector<8x128xf32>
    %c0_15 = arith.constant 0 : index
    %c0_16 = arith.constant 0 : index
    %20 = vector.load %arg6[%c0_15, %c0_16] : memref<1x128xf32, #tpu.memory_space<vmem>>, vector<1x128xf32>
    %21 = vector.broadcast %20 : vector<1x128xf32> to vector<8x128xf32>
    %22 = arith.addf %19, %21 : vector<8x128xf32>
    %c0_17 = arith.constant 0 : index
    %c0_18 = arith.constant 0 : index
    %23 = vector.load %arg7[%c0_17, %c0_18] : memref<8x128xf32, #tpu.memory_space<vmem>>, vector<8x128xf32>
    tpu.vector_store %arg7[%c0_17, %c0_18], %22 {strides = array<i32>} : memref<8x128xf32, #tpu.memory_space<vmem>>, vector<8x128xf32>,
    return
  }
}

</mosaic_0001>

<llo_original>
// kernel: fruit_freshness_forward.1
$region0: #{fruit_freshness_forward.1}
  #allocation0 [shape = 'u32[]', space=smem, size = 0x4, offset = 0x4, fixed_abs, tag = 'smem constant byte address 0x4 - core index']
  #allocation1 [shape = 'u32[144,128]{1,0:T(1,128)}', space=vmem, size = 0x12000, scoped, tag = 'internal scratch']
  %s0 = inlined_call_operand.vmem [shape: f32[8,4992], index: 0, kind: input, shape index: {}]
  %s1 = inlined_call_operand.hbm [shape: bf16[4992,512], index: 1, kind: input, shape index: {}]
  %s2 = inlined_call_operand.hbm [shape: f32[1,512], index: 2, kind: input, shape index: {}]
  %s3 = inlined_call_operand.hbm [shape: bf16[512,256], index: 3, kind: input, shape index: {}]
  %s4 = inlined_call_operand.hbm [shape: f32[1,256], index: 4, kind: input, shape index: {}]
  %s5 = inlined_call_operand.hbm [shape: bf16[256,128], index: 5, kind: input, shape index: {}]
  %s6 = inlined_call_operand.hbm [shape: f32[1,128], index: 6, kind: input, shape index: {}]
  %s7 = inlined_call_operand.vmem [shape: f32[8,128], index: 7, kind: output, shape index: {}]
  %s8 = sld [smem:[#allocation0]]
  $region62: #{fruit_freshness_forward.1} parent=0
    _
  %s10 = ssub.s32 1, %s8
  %s11 = scalar_select 0, %s10, %s8
  $region1: #{fruit_freshness_forward.1} parent=0
    #allocation2 [shape = 'u8[5111808]{0}', space=vmem, size = 0x4e0000, scoped, tag = 'input window, operand 1, single buffered']
    #allocation3 [shape = 's32[1]{0}', space=sflag, size = 0x4, scoped, tag = 'scoped memory for fruit_freshness_forward.1']
    #allocation4 [shape = 'u8[2048]{0}', space=vmem, size = 0x800, scoped, tag = 'input window, operand 2, single buffered']
    #allocation5 [shape = 's32[1]{0}', space=sflag, size = 0x4, scoped, tag = 'scoped memory for fruit_freshness_forward.1']
    #allocation6 [shape = 'u8[262144]{0}', space=vmem, size = 0x40000, scoped, tag = 'input window, operand 3, single buffered']
    #allocation7 [shape = 'u8[1024]{0}', space=vmem, size = 0x400, scoped, tag = 'input window, operand 4, single buffered']
    #allocation8 [shape = 's32[1]{0}', space=sflag, size = 0x4, scoped, tag = 'scoped memory for fruit_freshness_forward.1']
    #allocation9 [shape = 'u8[65536]{0}', space=vmem, size = 0x10000, scoped, tag = 'input window, operand 5, single buffered']
    #allocation10 [shape = 'u8[512]{0}', space=vmem, size = 0x400, scoped, tag = 'input window, operand 6, single buffered']
    #allocation11 [shape = 's32[1]{0}', space=sflag, size = 0x4, scoped, tag = 'scoped memory for fruit_freshness_forward.1']
    %12 = vsyncpa [#allocation3], 0
    %13 = vsyncpa [#allocation5], 0
    %14 = vsyncpa [#allocation8], 0
    %15 = vsyncpa [#allocation11], 0
    // Predicated region
    $region2: #{fruit_freshness_forward.1} parent=1 // pred_check
      _
    $region3: #{fruit_freshness_forward.1} parent=1 // pred_check_branch
      %17 = sbr.rel (0) target = $region5
    $region4: #{fruit_freshness_forward.1} parent=1 // pred_region
      _
    $region5: #{fruit_freshness_forward.1} parent=1 // pred_fallthru
      _
    // Predicated region
    $region6: #{fruit_freshness_forward.1} parent=1 // pred_check
      _
    $region7: #{fruit_freshness_forward.1} parent=1 // pred_check_branch
      %19 = sbr.rel (0) target = $region9
    $region8: #{fruit_freshness_forward.1} parent=1 // pred_region
      %s21 = ssub.s32 159744, 159744
      %22 = vsyncadd [#allocation3], %s21
      %s23 = sshll.u32 [#allocation2], 4
      %s24 = int_to_ptr.vmem [resolvable:$true] %s23
      %29 = dma.hbm_to_vmem [thread:$0]  %s1, 159744, %s24, [#allocation3], 256, 256, 16
    $region9: #{fruit_freshness_forward.1} parent=1 // pred_fallthru
      _
    // Predicated region
    $region10: #{fruit_freshness_forward.1} parent=1 // pred_check
      _
    $region11: #{fruit_freshness_forward.1} parent=1 // pred_check_branch
      %31 = sbr.rel (0) target = $region13
    $region12: #{fruit_freshness_forward.1} parent=1 // pred_region
      %s33 = ssub.s32 64, 64
      %34 = vsyncadd [#allocation5], %s33
      %s36 = sshll.u32 [#allocation4], 4
      %s37 = int_to_ptr.vmem [resolvable:$true] %s36
      %39 = dma.hbm_to_vmem [thread:$0]  %s2, 64, %s37, [#allocation5]
    $region13: #{fruit_freshness_forward.1} parent=1 // pred_fallthru
      _
    // Predicated region
    $region14: #{fruit_freshness_forward.1} parent=1 // pred_check
      _
    $region15: #{fruit_freshness_forward.1} parent=1 // pred_check_branch
      %41 = sbr.rel (0) target = $region17
    $region16: #{fruit_freshness_forward.1} parent=1 // pred_region
      %s43 = ssub.s32 8192, 8192
      %44 = vsyncadd [#allocation5], %s43
      %s45 = sshll.u32 [#allocation6], 4
      %s46 = int_to_ptr.vmem [resolvable:$true] %s45
      %51 = dma.hbm_to_vmem [thread:$0]  %s3, 8192, %s46, [#allocation5], 128, 128, 8
    $region17: #{fruit_freshness_forward.1} parent=1 // pred_fallthru
      _
    // Predicated region
    $region18: #{fruit_freshness_forward.1} parent=1 // pred_check
      _
    $region19: #{fruit_freshness_forward.1} parent=1 // pred_check_branch
      %53 = sbr.rel (0) target = $region21
    $region20: #{fruit_freshness_forward.1} parent=1 // pred_region
      %s55 = ssub.s32 32, 32
      %56 = vsyncadd [#allocation8], %s55
      %s58 = sshll.u32 [#allocation7], 4
      %s59 = int_to_ptr.vmem [resolvable:$true] %s58
      %61 = dma.hbm_to_vmem [thread:$0]  %s4, 32, %s59, [#allocation8]
    $region21: #{fruit_freshness_forward.1} parent=1 // pred_fallthru
      _
    // Predicated region
    $region22: #{fruit_freshness_forward.1} parent=1 // pred_check
      _
    $region23: #{fruit_freshness_forward.1} parent=1 // pred_check_branch
      %63 = sbr.rel (0) target = $region25
    $region24: #{fruit_freshness_forward.1} parent=1 // pred_region
      %s65 = ssub.s32 2048, 2048
      %66 = vsyncadd [#allocation8], %s65
      %s67 = sshll.u32 [#allocation9], 4
      %s68 = int_to_ptr.vmem [resolvable:$true] %s67
      %73 = dma.hbm_to_vmem [thread:$0]  %s5, 2048, %s68, [#allocation8], 64, 64, 4
    $region25: #{fruit_freshness_forward.1} parent=1 // pred_fallthru
      _
    // Predicated region
    $region26: #{fruit_freshness_forward.1} parent=1 // pred_check
      _
    $region27: #{fruit_freshness_forward.1} parent=1 // pred_check_branch
      %75 = sbr.rel (0) target = $region29
    $region28: #{fruit_freshness_forward.1} parent=1 // pred_region
      %s77 = ssub.s32 16, 16
      %78 = vsyncadd [#allocation11], %s77
      %s80 = sshll.u32 [#allocation10], 4
      %s81 = int_to_ptr.vmem [resolvable:$true] %s80
      %83 = dma.hbm_to_vmem [thread:$0]  %s6, 16, %s81, [#allocation11]
    $region29: #{fruit_freshness_forward.1} parent=1 // pred_fallthru
      _
    // Predicated region
    $region30: #{fruit_freshness_forward.1} parent=1 // pred_check
      _
    $region31: #{fruit_freshness_forward.1} parent=1 // pred_check_branch
      %85 = sbr.rel (0) target = $region33
    $region32: #{fruit_freshness_forward.1} parent=1 // pred_region
      %86 = dma.done [#allocation3], 159744
    $region33: #{fruit_freshness_forward.1} parent=1 // pred_fallthru
      _
    // Predicated region
    $region34: #{fruit_freshness_forward.1} parent=1 // pred_check
      _
    $region35: #{fruit_freshness_forward.1} parent=1 // pred_check_branch
      %88 = sbr.rel (0) target = $region37
    $region36: #{fruit_freshness_forward.1} parent=1 // pred_region
      %89 = dma.done [#allocation5], 64
    $region37: #{fruit_freshness_forward.1} parent=1 // pred_fallthru
      _
    // Predicated region
    $region38: #{fruit_freshness_forward.1} parent=1 // pred_check
      _
    $region39: #{fruit_freshness_forward.1} parent=1 // pred_check_branch
      %91 = sbr.rel (0) target = $region41
    $region40: #{fruit_freshness_forward.1} parent=1 // pred_region
      %92 = dma.done [#allocation5], 8192
    $region41: #{fruit_freshness_forward.1} parent=1 // pred_fallthru
      _
    // Predicated region
    $region42: #{fruit_freshness_forward.1} parent=1 // pred_check
      _
    $region43: #{fruit_freshness_forward.1} parent=1 // pred_check_branch
      %94 = sbr.rel (0) target = $region45
    $region44: #{fruit_freshness_forward.1} parent=1 // pred_region
      %95 = dma.done [#allocation8], 32
    $region45: #{fruit_freshness_forward.1} parent=1 // pred_fallthru
      _
    // Predicated region
    $region46: #{fruit_freshness_forward.1} parent=1 // pred_check
      _
    $region47: #{fruit_freshness_forward.1} parent=1 // pred_check_branch
      %97 = sbr.rel (0) target = $region49
    $region48: #{fruit_freshness_forward.1} parent=1 // pred_region
      %98 = dma.done [#allocation8], 2048
    $region49: #{fruit_freshness_forward.1} parent=1 // pred_fallthru
      _
    // Predicated region
    $region50: #{fruit_freshness_forward.1} parent=1 // pred_check
      _
    $region51: #{fruit_freshness_forward.1} parent=1 // pred_check_branch
      %100 = sbr.rel (0) target = $region53
    $region52: #{fruit_freshness_forward.1} parent=1 // pred_region
      %101 = dma.done [#allocation11], 16
    $region53: #{fruit_freshness_forward.1} parent=1 // pred_fallthru
      _
    %v103 = vld [vmem:[%s0] sm:$0xff]
    %v104 = vld [vmem:[%s0 + $0x8] sm:$0xff]
    %v105 = vld [vmem:[%s0 + $0x10] sm:$0xff]
    %v106 = vld [vmem:[%s0 + $0x18] sm:$0xff]
    %v107 = vld [vmem:[%s0 + $0x20] sm:$0xff]
    %v108 = vld [vmem:[%s0 + $0x28] sm:$0xff]
    %v109 = vld [vmem:[%s0 + $0x30] sm:$0xff]
    %v110 = vld [vmem:[%s0 + $0x38] sm:$0xff]
    %v111 = vld [vmem:[%s0 + $0x40] sm:$0xff]
    %v112 = vld [vmem:[%s0 + $0x48] sm:$0xff]
    %v113 = vld [vmem:[%s0 + $0x50] sm:$0xff]
    %v114 = vld [vmem:[%s0 + $0x58] sm:$0xff]
    %v115 = vld [vmem:[%s0 + $0x60] sm:$0xff]
    %v116 = vld [vmem:[%s0 + $0x68] sm:$0xff]
    %v117 = vld [vmem:[%s0 + $0x70] sm:$0xff]
    %v118 = vld [vmem:[%s0 + $0x78] sm:$0xff]
    %v119 = vld [vmem:[%s0 + $0x80] sm:$0xff]
    %v120 = vld [vmem:[%s0 + $0x88] sm:$0xff]
    %v121 = vld [vmem:[%s0 + $0x90] sm:$0xff]
    %v122 = vld [vmem:[%s0 + $0x98] sm:$0xff]
    %v123 = vld [vmem:[%s0 + $0xa0] sm:$0xff]
    %v124 = vld [vmem:[%s0 + $0xa8] sm:$0xff]
    %v125 = vld [vmem:[%s0 + $0xb0] sm:$0xff]
    %v126 = vld [vmem:[%s0 + $0xb8] sm:$0xff]
    %v127 = vld [vmem:[%s0 + $0xc0] sm:$0xff]
    %v128 = vld [vmem:[%s0 + $0xc8] sm:$0xff]
    %v129 = vld [vmem:[%s0 + $0xd0] sm:$0xff]
    %v130 = vld [vmem:[%s0 + $0xd8] sm:$0xff]
    %v131 = vld [vmem:[%s0 + $0xe0] sm:$0xff]
    %v132 = vld [vmem:[%s0 + $0xe8] sm:$0xff]
    %v133 = vld [vmem:[%s0 + $0xf0] sm:$0xff]
    %v134 = vld [vmem:[%s0 + $0xf8] sm:$0xff]
    %v135 = vld [vmem:[%s0 + $0x100] sm:$0xff]
    %v136 = vld [vmem:[%s0 + $0x108] sm:$0xff]
    %v137 = vld [vmem:[%s0 + $0x110] sm:$0xff]
    %v138 = vld [vmem:[%s0 + $0x118] sm:$0xff]
    %v139 = vld [vmem:[%s0 + $0x120] sm:$0xff]
    %v140 = vld [vmem:[%s0 + $0x128] sm:$0xff]
    %v141 = vld [vmem:[%s0 + $0x130] sm:$0xff]
    %v142 = vpack.c.bf16 %v103, %v103
    %v143 = vpack.c.bf16 %v104, %v104
    %v144 = vpack.c.bf16 %v105, %v105
    %v145 = vpack.c.bf16 %v106, %v106
    %v146 = vpack.c.bf16 %v107, %v107
    %v147 = vpack.c.bf16 %v108, %v108
    %v148 = vpack.c.bf16 %v109, %v109
    %v149 = vpack.c.bf16 %v110, %v110
    %v150 = vpack.c.bf16 %v111, %v111
    %v151 = vpack.c.bf16 %v112, %v112
    %v152 = vpack.c.bf16 %v113, %v113
    %v153 = vpack.c.bf16 %v114, %v114
    %v154 = vpack.c.bf16 %v115, %v115
    %v155 = vpack.c.bf16 %v116, %v116
    %v156 = vpack.c.bf16 %v117, %v117
    %v157 = vpack.c.bf16 %v118, %v118
    %v158 = vpack.c.bf16 %v119, %v119
    %v159 = vpack.c.bf16 %v120, %v120
    %v160 = vpack.c.bf16 %v121, %v121
    %v161 = vpack.c.bf16 %v122, %v122
    %v162 = vpack.c.bf16 %v123, %v123
    %v163 = vpack.c.bf16 %v124, %v124
    %v164 = vpack.c.bf16 %v125, %v125
    %v165 = vpack.c.bf16 %v126, %v126
    %v166 = vpack.c.bf16 %v127, %v127
    %v167 = vpack.c.bf16 %v128, %v128
    %v168 = vpack.c.bf16 %v129, %v129
    %v169 = vpack.c.bf16 %v130, %v130
    %v170 = vpack.c.bf16 %v131, %v131
    %v171 = vpack.c.bf16 %v132, %v132
    %v172 = vpack.c.bf16 %v133, %v133
    %v173 = vpack.c.bf16 %v134, %v134
    %v174 = vpack.c.bf16 %v135, %v135
    %v175 = vpack.c.bf16 %v136, %v136
    %v176 = vpack.c.bf16 %v137, %v137
    %v177 = vpack.c.bf16 %v138, %v138
    %v178 = vpack.c.bf16 %v139, %v139
    %v179 = vpack.c.bf16 %v140, %v140
    %v180 = vpack.c.bf16 %v141, %v141
    %v181 = vld [vmem:[#allocation2] sm:$0xff]
    %v182 = vld [vmem:[#allocation2 + $0x8] sm:$0xff]
    %v183 = vld [vmem:[#allocation2 + $0x10] sm:$0xff]
    %v184 = vld [vmem:[#allocation2 + $0x18] sm:$0xff]
    %v185 = vld [vmem:[#allocation2 + $0x20] sm:$0xff]
    %v186 = vld [vmem:[#allocation2 + $0x28] sm:$0xff]
    %v187 = vld [vmem:[#allocation2 + $0x30] sm:$0xff]
    %v188 = vld [vmem:[#allocation2 + $0x38] sm:$0xff]
    %v189 = vld [vmem:[#allocation2 + $0x40] sm:$0xff]
    %v190 = vld [vmem:[#allocation2 + $0x48] sm:$0xff]
    %v191 = vld [vmem:[#allocation2 + $0x50] sm:$0xff]
    %v192 = vld [vmem:[#allocation2 + $0x58] sm:$0xff]
    %v193 = vld [vmem:[#allocation2 + $0x60] sm:$0xff]
    %v194 = vld [vmem:[#allocation2 + $0x68] sm:$0xff]
    %v195 = vld [vmem:[#allocation2 + $0x70] sm:$0xff]
    %v196 = vld [vmem:[#allocation2 + $0x78] sm:$0xff]
    %v197 = vld [vmem:[#allocation2 + $0x80] sm:$0xff]
    %v198 = vld [vmem:[#allocation2 + $0x88] sm:$0xff]
    %v199 = vld [vmem:[#allocation2 + $0x90] sm:$0xff]
    %v200 = vld [vmem:[#allocation2 + $0x98] sm:$0xff]
    %v201 = vld [vmem:[#allocation2 + $0xa0] sm:$0xff]
    %v202 = vld [vmem:[#allocation2 + $0xa8] sm:$0xff]
    %v203 = vld [vmem:[#allocation2 + $0xb0] sm:$0xff]
    %v204 = vld [vmem:[#allocation2 + $0xb8] sm:$0xff]
    %v205 = vld [vmem:[#allocation2 + $0xc0] sm:$0xff]
    %v206 = vld [vmem:[#allocation2 + $0xc8] sm:$0xff]
    %v207 = vld [vmem:[#allocation2 + $0xd0] sm:$0xff]
    %v208 = vld [vmem:[#allocation2 + $0xd8] sm:$0xff]
    %v209 = vld [vmem:[#allocation2 + $0xe0] sm:$0xff]
    %v210 = vld [vmem:[#allocation2 + $0xe8] sm:$0xff]
    %v211 = vld [vmem:[#allocation2 + $0xf0] sm:$0xff]
    %v212 = vld [vmem:[#allocation2 + $0xf8] sm:$0xff]
    %v213 = vld [vmem:[#allocation2 + $0x100] sm:$0xff]
    %v214 = vld [vmem:[#allocation2 + $0x108] sm:$0xff]
    %v215 = vld [vmem:[#allocation2 + $0x110] sm:$0xff]
    %v216 = vld [vmem:[#allocation2 + $0x118] sm:$0xff]
    %v217 = vld [vmem:[#allocation2 + $0x120] sm:$0xff]
    %v218 = vld [vmem:[#allocation2 + $0x128] sm:$0xff]
    %v219 = vld [vmem:[#allocation2 + $0x130] sm:$0xff]
    %v220 = vld [vmem:[#allocation2 + $0x138] sm:$0xff]
    %v221 = vld [vmem:[#allocation2 + $0x140] sm:$0xff]
    %v222 = vld [vmem:[#allocation2 + $0x148] sm:$0xff]
    %v223 = vld [vmem:[#allocation2 + $0x150] sm:$0xff]
    %v224 = vld [vmem:[#allocation2 + $0x158] sm:$0xff]
    %v225 = vld [vmem:[#allocation2 + $0x160] sm:$0xff]
    %v226 = vld [vmem:[#allocation2 + $0x168] sm:$0xff]
    %v227 = vld [vmem:[#allocation2 + $0x170] sm:$0xff]
    %v228 = vld [vmem:[#allocation2 + $0x178] sm:$0xff]
    %v229 = vld [vmem:[#allocation2 + $0x180] sm:$0xff]
    %v230 = vld [vmem:[#allocation2 + $0x188] sm:$0xff]
    %v231 = vld [vmem:[#allocation2 + $0x190] sm:$0xff]
    %v232 = vld [vmem:[#allocation2 + $0x198] sm:$0xff]
    %v233 = vld [vmem:[#allocation2 + $0x1a0] sm:$0xff]
    %v234 = vld [vmem:[#allocation2 + $0x1a8] sm:$0xff]
    %v235 = vld [vmem:[#allocation2 + $0x1b0] sm:$0xff]
    %v236 = vld [vmem:[#allocation2 + $0x1b8] sm:$0xff]
    %v237 = vld [vmem:[#allocation2 + $0x1c0] sm:$0xff]
    %v238 = vld [vmem:[#allocation2 + $0x1c8] sm:$0xff]
    %v239 = vld [vmem:[#allocation2 + $0x1d0] sm:$0xff]
    %v240 = vld [vmem:[#allocation2 + $0x1d8] sm:$0xff]
    %v241 = vld [vmem:[#allocation2 + $0x1e0] sm:$0xff]
    %v242 = vld [vmem:[#allocation2 + $0x1e8] sm:$0xff]
    %v243 = vld [vmem:[#allocation2 + $0x1f0] sm:$0xff]
    %v244 = vld [vmem:[#allocation2 + $0x1f8] sm:$0xff]
    %v245 = vld [vmem:[#allocation2 + $0x200] sm:$0xff]
    %v246 = vld [vmem:[#allocation2 + $0x208] sm:$0xff]
    %v247 = vld [vmem:[#allocation2 + $0x210] sm:$0xff]
    %v248 = vld [vmem:[#allocation2 + $0x218] sm:$0xff]
    %v249 = vld [vmem:[#allocation2 + $0x220] sm:$0xff]
    %v250 = vld [vmem:[#allocation2 + $0x228] sm:$0xff]
    %v251 = vld [vmem:[#allocation2 + $0x230] sm:$0xff]
    %v252 = vld [vmem:[#allocation2 + $0x238] sm:$0xff]
    %v253 = vld [vmem:[#allocation2 + $0x240] sm:$0xff]
    %v254 = vld [vmem:[#allocation2 + $0x248] sm:$0xff]
    %v255 = vld [vmem:[#allocation2 + $0x250] sm:$0xff]
    %v256 = vld [vmem:[#allocation2 + $0x258] sm:$0xff]
    %v257 = vld [vmem:[#allocation2 + $0x260] sm:$0xff]
    %v258 = vld [vmem:[#allocation2 + $0x268] sm:$0xff]
    %v259 = vld [vmem:[#allocation2 + $0x270] sm:$0xff]
    %v260 = vld [vmem:[#allocation2 + $0x278] sm:$0xff]
    %v261 = vld [vmem:[#allocation2 + $0x280] sm:$0xff]
    %v262 = vld [vmem:[#allocation2 + $0x288] sm:$0xff]
    %v263 = vld [vmem:[#allocation2 + $0x290] sm:$0xff]
    %v264 = vld [vmem:[#allocation2 + $0x298] sm:$0xff]
    %v265 = vld [vmem:[#allocation2 + $0x2a0] sm:$0xff]
    %v266 = vld [vmem:[#allocation2 + $0x2a8] sm:$0xff]
    %v267 = vld [vmem:[#allocation2 + $0x2b0] sm:$0xff]
    %v268 = vld [vmem:[#allocation2 + $0x2b8] sm:$0xff]
    %v269 = vld [vmem:[#allocation2 + $0x2c0] sm:$0xff]
    %v270 = vld [vmem:[#allocation2 + $0x2c8] sm:$0xff]
    %v271 = vld [vmem:[#allocation2 + $0x2d0] sm:$0xff]
    %v272 = vld [vmem:[#allocation2 + $0x2d8] sm:$0xff]
    %v273 = vld [vmem:[#allocation2 + $0x2e0] sm:$0xff]
    %v274 = vld [vmem:[#allocation2 + $0x2e8] sm:$0xff]
    %v275 = vld [vmem:[#allocation2 + $0x2f0] sm:$0xff]
    %v276 = vld [vmem:[#allocation2 + $0x2f8] sm:$0xff]
    %v277 = vld [vmem:[#allocation2 + $0x300] sm:$0xff]
    %v278 = vld [vmem:[#allocation2 + $0x308] sm:$0xff]
    %v279 = vld [vmem:[#allocation2 + $0x310] sm:$0xff]
    %v280 = vld [vmem:[#allocation2 + $0x318] sm:$0xff]
    %v281 = vld [vmem:[#allocation2 + $0x320] sm:$0xff]
    %v282 = vld [vmem:[#allocation2 + $0x328] sm:$0xff]
    %v283 = vld [vmem:[#allocation2 + $0x330] sm:$0xff]
    %v284 = vld [vmem:[#allocation2 + $0x338] sm:$0xff]
    %v285 = vld [vmem:[#allocation2 + $0x340] sm:$0xff]
    %v286 = vld [vmem:[#allocation2 + $0x348] sm:$0xff]
    %v287 = vld [vmem:[#allocation2 + $0x350] sm:$0xff]
    %v288 = vld [vmem:[#allocation2 + $0x358] sm:$0xff]
    %v289 = vld [vmem:[#allocation2 + $0x360] sm:$0xff]
    %v290 = vld [vmem:[#allocation2 + $0x368] sm:$0xff]
    %v291 = vld [vmem:[#allocation2 + $0x370] sm:$0xff]
    %v292 = vld [vmem:[#allocation2 + $0x378] sm:$0xff]
    %v293 = vld [vmem:[#allocation2 + $0x380] sm:$0xff]
    %v294 = vld [vmem:[#allocation2 + $0x388] sm:$0xff]
    %v295 = vld [vmem:[#allocation2 + $0x390] sm:$0xff]
    %v296 = vld [vmem:[#allocation2 + $0x398] sm:$0xff]
    %v297 = vld [vmem:[#allocation2 + $0x3a0] sm:$0xff]
    %v298 = vld [vmem:[#allocation2 + $0x3a8] sm:$0xff]
    %v299 = vld [vmem:[#allocation2 + $0x3b0] sm:$0xff]
    %v300 = vld [vmem:[#allocation2 + $0x3b8] sm:$0xff]
    %v301 = vld [vmem:[#allocation2 + $0x3c0] sm:$0xff]
    %v302 = vld [vmem:[#allocation2 + $0x3c8] sm:$0xff]
    %v303 = vld [vmem:[#allocation2 + $0x3d0] sm:$0xff]
    %v304 = vld [vmem:[#allocation2 + $0x3d8] sm:$0xff]
    %v305 = vld [vmem:[#allocation2 + $0x3e0] sm:$0xff]
    %v306 = vld [vmem:[#allocation2 + $0x3e8] sm:$0xff]
    %v307 = vld [vmem:[#allocation2 + $0x3f0] sm:$0xff]
    %v308 = vld [vmem:[#allocation2 + $0x3f8] sm:$0xff]
    %v309 = vld [vmem:[#allocation2 + $0x400] sm:$0xff]
    %v310 = vld [vmem:[#allocation2 + $0x408] sm:$0xff]
    %v311 = vld [vmem:[#allocation2 + $0x410] sm:$0xff]
    %v312 = vld [vmem:[#allocation2 + $0x418] sm:$0xff]
    %v313 = vld [vmem:[#allocation2 + $0x420] sm:$0xff]
    %v314 = vld [vmem:[#allocation2 + $0x428] sm:$0xff]
    %v315 = vld [vmem:[#allocation2 + $0x430] sm:$0xff]
    %v316 = vld [vmem:[#allocation2 + $0x438] sm:$0xff]
    %v317 = vld [vmem:[#allocation2 + $0x440] sm:$0xff]
    %v318 = vld [vmem:[#allocation2 + $0x448] sm:$0xff]
    %v319 = vld [vmem:[#allocation2 + $0x450] sm:$0xff]
    %v320 = vld [vmem:[#allocation2 + $0x458] sm:$0xff]
    %v321 = vld [vmem:[#allocation2 + $0x460] sm:$0xff]
    %v322 = vld [vmem:[#allocation2 + $0x468] sm:$0xff]
    %v323 = vld [vmem:[#allocation2 + $0x470] sm:$0xff]
    %v324 = vld [vmem:[#allocation2 + $0x478] sm:$0xff]
    %v325 = vld [vmem:[#allocation2 + $0x480] sm:$0xff]
    %v326 = vld [vmem:[#allocation2 + $0x488] sm:$0xff]
    %v327 = vld [vmem:[#allocation2 + $0x490] sm:$0xff]
    %v328 = vld [vmem:[#allocation2 + $0x498] sm:$0xff]
    %v329 = vld [vmem:[#allocation2 + $0x4a0] sm:$0xff]
    %v330 = vld [vmem:[#allocation2 + $0x4a8] sm:$0xff]
    %v331 = vld [vmem:[#allocation2 + $0x4b0] sm:$0xff]
    %v332 = vld [vmem:[#allocation2 + $0x4b8] sm:$0xff]
    %v333 = vld [vmem:[#allocation2 + $0x4c0] sm:$0xff]
    %v334 = vld [vmem:[#allocation2 + $0x4c8] sm:$0xff]
    %v335 = vld [vmem:[#allocation2 + $0x4d0] sm:$0xff]
    %v336 = vld [vmem:[#allocation2 + $0x4d8] sm:$0xff]
    %v337 = vld [vmem:[#allocation2 + $0x4e0] sm:$0xff]
    %v338 = vld [vmem:[#allocation2 + $0x4e8] sm:$0xff]
    %v339 = vld [vmem:[#allocation2 + $0x4f0] sm:$0xff]
    %v340 = vld [vmem:[#allocation2 + $0x4f8] sm:$0xff]
    %v341 = vld [vmem:[#allocation2 + $0x500] sm:$0xff]
    %v342 = vld [vmem:[#allocation2 + $0x508] sm:$0xff]
    %v343 = vld [vmem:[#allocation2 + $0x510] sm:$0xff]
    %v344 = vld [vmem:[#allocation2 + $0x518] sm:$0xff]
    %v345 = vld [vmem:[#allocation2 + $0x520] sm:$0xff]
    %v346 = vld [vmem:[#allocation2 + $0x528] sm:$0xff]
    %v347 = vld [vmem:[#allocation2 + $0x530] sm:$0xff]
    %v348 = vld [vmem:[#allocation2 + $0x538] sm:$0xff]
    %v349 = vld [vmem:[#allocation2 + $0x540] sm:$0xff]
    %v350 = vld [vmem:[#allocation2 + $0x548] sm:$0xff]
    %v351 = vld [vmem:[#allocation2 + $0x550] sm:$0xff]
    %v352 = vld [vmem:[#allocation2 + $0x558] sm:$0xff]
    %v353 = vld [vmem:[#allocation2 + $0x560] sm:$0xff]
    %v354 = vld [vmem:[#allocation2 + $0x568] sm:$0xff]
    %v355 = vld [vmem:[#allocation2 + $0x570] sm:$0xff]
    %v356 = vld [vmem:[#allocation2 + $0x578] sm:$0xff]
    %v357 = vld [vmem:[#allocation2 + $0x580] sm:$0xff]
    %v358 = vld [vmem:[#allocation2 + $0x588] sm:$0xff]
    %v359 = vld [vmem:[#allocation2 + $0x590] sm:$0xff]
    %v360 = vld [vmem:[#allocation2 + $0x598] sm:$0xff]
    %v361 = vld [vmem:[#allocation2 + $0x5a0] sm:$0xff]
    %v362 = vld [vmem:[#allocation2 + $0x5a8] sm:$0xff]
    %v363 = vld [vmem:[#allocation2 + $0x5b0] sm:$0xff]
    %v364 = vld [vmem:[#allocation2 + $0x5b8] sm:$0xff]
    %v365 = vld [vmem:[#allocation2 + $0x5c0] sm:$0xff]
    %v366 = vld [vmem:[#allocation2 + $0x5c8] sm:$0xff]
    %v367 = vld [vmem:[#allocation2 + $0x5d0] sm:$0xff]
    %v368 = vld [vmem:[#allocation2 + $0x5d8] sm:$0xff]
    %v369 = vld [vmem:[#allocation2 + $0x5e0] sm:$0xff]
    %v370 = vld [vmem:[#allocation2 + $0x5e8] sm:$0xff]
    %v371 = vld [vmem:[#allocation2 + $0x5f0] sm:$0xff]
    %v372 = vld [vmem:[#allocation2 + $0x5f8] sm:$0xff]
    %v373 = vld [vmem:[#allocation2 + $0x600] sm:$0xff]
    %v374 = vld [vmem:[#allocation2 + $0x608] sm:$0xff]
    %v375 = vld [vmem:[#allocation2 + $0x610] sm:$0xff]
    %v376 = vld [vmem:[#allocation2 + $0x618] sm:$0xff]
    %v377 = vld [vmem:[#allocation2 + $0x620] sm:$0xff]
    %v378 = vld [vmem:[#allocation2 + $0x628] sm:$0xff]
    %v379 = vld [vmem:[#allocation2 + $0x630] sm:$0xff]
    %v380 = vld [vmem:[#allocation2 + $0x638] sm:$0xff]
    %v381 = vld [vmem:[#allocation2 + $0x640] sm:$0xff]
    %v382 = vld [vmem:[#allocation2 + $0x648] sm:$0xff]
    %v383 = vld [vmem:[#allocation2 + $0x650] sm:$0xff]
    %v384 = vld [vmem:[#allocation2 + $0x658] sm:$0xff]
    %v385 = vld [vmem:[#allocation2 + $0x660] sm:$0xff]
    %v386 = vld [vmem:[#allocation2 + $0x668] sm:$0xff]
    %v387 = vld [vmem:[#allocation2 + $0x670] sm:$0xff]
    %v388 = vld [vmem:[#allocation2 + $0x678] sm:$0xff]
    %v389 = vld [vmem:[#allocation2 + $0x680] sm:$0xff]
    %v390 = vld [vmem:[#allocation2 + $0x688] sm:$0xff]
    %v391 = vld [vmem:[#allocation2 + $0x690] sm:$0xff]
    %v392 = vld [vmem:[#allocation2 + $0x698] sm:$0xff]
    %v393 = vld [vmem:[#allocation2 + $0x6a0] sm:$0xff]
    %v394 = vld [vmem:[#allocation2 + $0x6a8] sm:$0xff]
    %v395 = vld [vmem:[#allocation2 + $0x6b0] sm:$0xff]
    %v396 = vld [vmem:[#allocation2 + $0x6b8] sm:$0xff]
    %v397 = vld [vmem:[#allocation2 + $0x6c0] sm:$0xff]
    %v398 = vld [vmem:[#allocation2 + $0x6c8] sm:$0xff]
    %v399 = vld [vmem:[#allocation2 + $0x6d0] sm:$0xff]
    %v400 = vld [vmem:[#allocation2 + $0x6d8] sm:$0xff]
    %v401 = vld [vmem:[#allocation2 + $0x6e0] sm:$0xff]
    %v402 = vld [vmem:[#allocation2 + $0x6e8] sm:$0xff]
    %v403 = vld [vmem:[#allocation2 + $0x6f0] sm:$0xff]
    %v404 = vld [vmem:[#allocation2 + $0x6f8] sm:$0xff]
    %v405 = vld [vmem:[#allocation2 + $0x700] sm:$0xff]
    %v406 = vld [vmem:[#allocation2 + $0x708] sm:$0xff]
    %v407 = vld [vmem:[#allocation2 + $0x710] sm:$0xff]
    %v408 = vld [vmem:[#allocation2 + $0x718] sm:$0xff]
    %v409 = vld [vmem:[#allocation2 + $0x720] sm:$0xff]
    %v410 = vld [vmem:[#allocation2 + $0x728] sm:$0xff]
    %v411 = vld [vmem:[#allocation2 + $0x730] sm:$0xff]
    %v412 = vld [vmem:[#allocation2 + $0x738] sm:$0xff]
    %v413 = vld [vmem:[#allocation2 + $0x740] sm:$0xff]
    %v414 = vld [vmem:[#allocation2 + $0x748] sm:$0xff]
    %v415 = vld [vmem:[#allocation2 + $0x750] sm:$0xff]
    %v416 = vld [vmem:[#allocation2 + $0x758] sm:$0xff]
    %v417 = vld [vmem:[#allocation2 + $0x760] sm:$0xff]
    %v418 = vld [vmem:[#allocation2 + $0x768] sm:$0xff]
    %v419 = vld [vmem:[#allocation2 + $0x770] sm:$0xff]
    %v420 = vld [vmem:[#allocation2 + $0x778] sm:$0xff]
    %v421 = vld [vmem:[#allocation2 + $0x780] sm:$0xff]
    %v422 = vld [vmem:[#allocation2 + $0x788] sm:$0xff]
    %v423 = vld [vmem:[#allocation2 + $0x790] sm:$0xff]
    %v424 = vld [vmem:[#allocation2 + $0x798] sm:$0xff]
    %v425 = vld [vmem:[#allocation2 + $0x7a0] sm:$0xff]
    %v426 = vld [vmem:[#allocation2 + $0x7a8] sm:$0xff]
    %v427 = vld [vmem:[#allocation2 + $0x7b0] sm:$0xff]
    %v428 = vld [vmem:[#allocation2 + $0x7b8] sm:$0xff]
    %v429 = vld [vmem:[#allocation2 + $0x7c0] sm:$0xff]
    %v430 = vld [vmem:[#allocation2 + $0x7c8] sm:$0xff]
    %v431 = vld [vmem:[#allocation2 + $0x7d0] sm:$0xff]
    %v432 = vld [vmem:[#allocation2 + $0x7d8] sm:$0xff]
    %v433 = vld [vmem:[#allocation2 + $0x7e0] sm:$0xff]
    %v434 = vld [vmem:[#allocation2 + $0x7e8] sm:$0xff]
    %v435 = vld [vmem:[#allocation2 + $0x7f0] sm:$0xff]
    %v436 = vld [vmem:[#allocation2 + $0x7f8] sm:$0xff]
    %v437 = vld [vmem:[#allocation2 + $0x800] sm:$0xff]
    %v438 = vld [vmem:[#allocation2 + $0x808] sm:$0xff]
    %v439 = vld [vmem:[#allocation2 + $0x810] sm:$0xff]
    %v440 = vld [vmem:[#allocation2 + $0x818] sm:$0xff]
    %v441 = vld [vmem:[#allocation2 + $0x820] sm:$0xff]
    %v442 = vld [vmem:[#allocation2 + $0x828] sm:$0xff]
    %v443 = vld [vmem:[#allocation2 + $0x830] sm:$0xff]
    %v444 = vld [vmem:[#allocation2 + $0x838] sm:$0xff]
    %v445 = vld [vmem:[#allocation2 + $0x840] sm:$0xff]
    %v446 = vld [vmem:[#allocation2 + $0x848] sm:$0xff]
    %v447 = vld [vmem:[#allocation2 + $0x850] sm:$0xff]
    %v448 = vld [vmem:[#allocation2 + $0x858] sm:$0xff]
    %v449 = vld [vmem:[#allocation2 + $0x860] sm:$0xff]
    %v450 = vld [vmem:[#allocation2 + $0x868] sm:$0xff]
    %v451 = vld [vmem:[#allocation2 + $0x870] sm:$0xff]
    %v452 = vld [vmem:[#allocation2 + $0x878] sm:$0xff]
    %v453 = vld [vmem:[#allocation2 + $0x880] sm:$0xff]
    %v454 = vld [vmem:[#allocation2 + $0x888] sm:$0xff]
    %v455 = vld [vmem:[#allocation2 + $0x890] sm:$0xff]
    %v456 = vld [vmem:[#allocation2 + $0x898] sm:$0xff]
    %v457 = vld [vmem:[#allocation2 + $0x8a0] sm:$0xff]
    %v458 = vld [vmem:[#allocation2 + $0x8a8] sm:$0xff]
    %v459 = vld [vmem:[#allocation2 + $0x8b0] sm:$0xff]
    %v460 = vld [vmem:[#allocation2 + $0x8b8] sm:$0xff]
    %v461 = vld [vmem:[#allocation2 + $0x8c0] sm:$0xff]
    %v462 = vld [vmem:[#allocation2 + $0x8c8] sm:$0xff]
    %v463 = vld [vmem:[#allocation2 + $0x8d0] sm:$0xff]
    %v464 = vld [vmem:[#allocation2 + $0x8d8] sm:$0xff]
    %v465 = vld [vmem:[#allocation2 + $0x8e0] sm:$0xff]
    %v466 = vld [vmem:[#allocation2 + $0x8e8] sm:$0xff]
    %v467 = vld [vmem:[#allocation2 + $0x8f0] sm:$0xff]
    %v468 = vld [vmem:[#allocation2 + $0x8f8] sm:$0xff]
    %v469 = vld [vmem:[#allocation2 + $0x900] sm:$0xff]
    %v470 = vld [vmem:[#allocation2 + $0x908] sm:$0xff]
    %v471 = vld [vmem:[#allocation2 + $0x910] sm:$0xff]
    %v472 = vld [vmem:[#allocation2 + $0x918] sm:$0xff]
    %v473 = vld [vmem:[#allocation2 + $0x920] sm:$0xff]
    %v474 = vld [vmem:[#allocation2 + $0x928] sm:$0xff]
    %v475 = vld [vmem:[#allocation2 + $0x930] sm:$0xff]
    %v476 = vld [vmem:[#allocation2 + $0x938] sm:$0xff]
    %v477 = vld [vmem:[#allocation2 + $0x940] sm:$0xff]
    %v478 = vld [vmem:[#allocation2 + $0x948] sm:$0xff]
    %v479 = vld [vmem:[#allocation2 + $0x950] sm:$0xff]
    %v480 = vld [vmem:[#allocation2 + $0x958] sm:$0xff]
    %v481 = vld [vmem:[#allocation2 + $0x960] sm:$0xff]
    %v482 = vld [vmem:[#allocation2 + $0x968] sm:$0xff]
    %v483 = vld [vmem:[#allocation2 + $0x970] sm:$0xff]
    %v484 = vld [vmem:[#allocation2 + $0x978] sm:$0xff]
    %v485 = vld [vmem:[#allocation2 + $0x980] sm:$0xff]
    %v486 = vld [vmem:[#allocation2 + $0x988] sm:$0xff]
    %v487 = vld [vmem:[#allocation2 + $0x990] sm:$0xff]
    %v488 = vld [vmem:[#allocation2 + $0x998] sm:$0xff]
    %v489 = vld [vmem:[#allocation2 + $0x9a0] sm:$0xff]
    %v490 = vld [vmem:[#allocation2 + $0x9a8] sm:$0xff]
    %v491 = vld [vmem:[#allocation2 + $0x9b0] sm:$0xff]
    %v492 = vld [vmem:[#allocation2 + $0x9b8] sm:$0xff]
    %v493 = vld [vmem:[#allocation2 + $0x9c0] sm:$0xff]
    %v494 = vld [vmem:[#allocation2 + $0x9c8] sm:$0xff]
    %v495 = vld [vmem:[#allocation2 + $0x9d0] sm:$0xff]
    %v496 = vld [vmem:[#allocation2 + $0x9d8] sm:$0xff]
    %v497 = vld [vmem:[#allocation2 + $0x9e0] sm:$0xff]
    %v498 = vld [vmem:[#allocation2 + $0x9e8] sm:$0xff]
    %v499 = vld [vmem:[#allocation2 + $0x9f0] sm:$0xff]
    %v500 = vld [vmem:[#allocation2 + $0x9f8] sm:$0xff]
    %v501 = vld [vmem:[#allocation2 + $0xa00] sm:$0xff]
    %v502 = vld [vmem:[#allocation2 + $0xa08] sm:$0xff]
    %v503 = vld [vmem:[#allocation2 + $0xa10] sm:$0xff]
    %v504 = vld [vmem:[#allocation2 + $0xa18] sm:$0xff]
    %v505 = vld [vmem:[#allocation2 + $0xa20] sm:$0xff]
    %v506 = vld [vmem:[#allocation2 + $0xa28] sm:$0xff]
    %v507 = vld [vmem:[#allocation2 + $0xa30] sm:$0xff]
    %v508 = vld [vmem:[#allocation2 + $0xa38] sm:$0xff]
    %v509 = vld [vmem:[#allocation2 + $0xa40] sm:$0xff]
    %v510 = vld [vmem:[#allocation2 + $0xa48] sm:$0xff]
    %v511 = vld [vmem:[#allocation2 + $0xa50] sm:$0xff]
    %v512 = vld [vmem:[#allocation2 + $0xa58] sm:$0xff]
    %v513 = vld [vmem:[#allocation2 + $0xa60] sm:$0xff]
    %v514 = vld [vmem:[#allocation2 + $0xa68] sm:$0xff]
    %v515 = vld [vmem:[#allocation2 + $0xa70] sm:$0xff]
    %v516 = vld [vmem:[#allocation2 + $0xa78] sm:$0xff]
    %v517 = vld [vmem:[#allocation2 + $0xa80] sm:$0xff]
    %v518 = vld [vmem:[#allocation2 + $0xa88] sm:$0xff]
    %v519 = vld [vmem:[#allocation2 + $0xa90] sm:$0xff]
    %v520 = vld [vmem:[#allocation2 + $0xa98] sm:$0xff]
    %v521 = vld [vmem:[#allocation2 + $0xaa0] sm:$0xff]
    %v522 = vld [vmem:[#allocation2 + $0xaa8] sm:$0xff]
    %v523 = vld [vmem:[#allocation2 + $0xab0] sm:$0xff]
    %v524 = vld [vmem:[#allocation2 + $0xab8] sm:$0xff]
    %v525 = vld [vmem:[#allocation2 + $0xac0] sm:$0xff]
    %v526 = vld [vmem:[#allocation2 + $0xac8] sm:$0xff]
    %v527 = vld [vmem:[#allocation2 + $0xad0] sm:$0xff]
    %v528 = vld [vmem:[#allocation2 + $0xad8] sm:$0xff]
    %v529 = vld [vmem:[#allocation2 + $0xae0] sm:$0xff]
    %v530 = vld [vmem:[#allocation2 + $0xae8] sm:$0xff]
    %v531 = vld [vmem:[#allocation2 + $0xaf0] sm:$0xff]
    %v532 = vld [vmem:[#allocation2 + $0xaf8] sm:$0xff]
    %v533 = vld [vmem:[#allocation2 + $0xb00] sm:$0xff]
    %v534 = vld [vmem:[#allocation2 + $0xb08] sm:$0xff]
    %v535 = vld [vmem:[#allocation2 + $0xb10] sm:$0xff]
    %v536 = vld [vmem:[#allocation2 + $0xb18] sm:$0xff]
    %v537 = vld [vmem:[#allocation2 + $0xb20] sm:$0xff]
    %v538 = vld [vmem:[#allocation2 + $0xb28] sm:$0xff]
    %v539 = vld [vmem:[#allocation2 + $0xb30] sm:$0xff]
    %v540 = vld [vmem:[#allocation2 + $0xb38] sm:$0xff]
    %v541 = vld [vmem:[#allocation2 + $0xb40] sm:$0xff]
    %v542 = vld [vmem:[#allocation2 + $0xb48] sm:$0xff]
    %v543 = vld [vmem:[#allocation2 + $0xb50] sm:$0xff]
    %v544 = vld [vmem:[#allocation2 + $0xb58] sm:$0xff]
    %v545 = vld [vmem:[#allocation2 + $0xb60] sm:$0xff]
    %v546 = vld [vmem:[#allocation2 + $0xb68] sm:$0xff]
    %v547 = vld [vmem:[#allocation2 + $0xb70] sm:$0xff]
    %v548 = vld [vmem:[#allocation2 + $0xb78] sm:$0xff]
    %v549 = vld [vmem:[#allocation2 + $0xb80] sm:$0xff]
    %v550 = vld [vmem:[#allocation2 + $0xb88] sm:$0xff]
    %v551 = vld [vmem:[#allocation2 + $0xb90] sm:$0xff]
    %v552 = vld [vmem:[#allocation2 + $0xb98] sm:$0xff]
    %v553 = vld [vmem:[#allocation2 + $0xba0] sm:$0xff]
    %v554 = vld [vmem:[#allocation2 + $0xba8] sm:$0xff]
    %v555 = vld [vmem:[#allocation2 + $0xbb0] sm:$0xff]
    %v556 = vld [vmem:[#allocation2 + $0xbb8] sm:$0xff]
    %v557 = vld [vmem:[#allocation2 + $0xbc0] sm:$0xff]
    %v558 = vld [vmem:[#allocation2 + $0xbc8] sm:$0xff]
    %v559 = vld [vmem:[#allocation2 + $0xbd0] sm:$0xff]
    %v560 = vld [vmem:[#allocation2 + $0xbd8] sm:$0xff]
    %v561 = vld [vmem:[#allocation2 + $0xbe0] sm:$0xff]
    %v562 = vld [vmem:[#allocation2 + $0xbe8] sm:$0xff]
    %v563 = vld [vmem:[#allocation2 + $0xbf0] sm:$0xff]
    %v564 = vld [vmem:[#allocation2 + $0xbf8] sm:$0xff]
    %v565 = vld [vmem:[#allocation2 + $0xc00] sm:$0xff]
    %v566 = vld [vmem:[#allocation2 + $0xc08] sm:$0xff]
    %v567 = vld [vmem:[#allocation2 + $0xc10] sm:$0xff]
    %v568 = vld [vmem:[#allocation2 + $0xc18] sm:$0xff]
    %v569 = vld [vmem:[#allocation2 + $0xc20] sm:$0xff]
    %v570 = vld [vmem:[#allocation2 + $0xc28] sm:$0xff]
    %v571 = vld [vmem:[#allocation2 + $0xc30] sm:$0xff]
    %v572 = vld [vmem:[#allocation2 + $0xc38] sm:$0xff]
    %v573 = vld [vmem:[#allocation2 + $0xc40] sm:$0xff]
    %v574 = vld [vmem:[#allocation2 + $0xc48] sm:$0xff]
    %v575 = vld [vmem:[#allocation2 + $0xc50] sm:$0xff]
    %v576 = vld [vmem:[#allocation2 + $0xc58] sm:$0xff]
    %v577 = vld [vmem:[#allocation2 + $0xc60] sm:$0xff]
    %v578 = vld [vmem:[#allocation2 + $0xc68] sm:$0xff]
    %v579 = vld [vmem:[#allocation2 + $0xc70] sm:$0xff]
    %v580 = vld [vmem:[#allocation2 + $0xc78] sm:$0xff]
    %v581 = vld [vmem:[#allocation2 + $0xc80] sm:$0xff]
    %v582 = vld [vmem:[#allocation2 + $0xc88] sm:$0xff]
    %v583 = vld [vmem:[#allocation2 + $0xc90] sm:$0xff]
    %v584 = vld [vmem:[#allocation2 + $0xc98] sm:$0xff]
    %v585 = vld [vmem:[#allocation2 + $0xca0] sm:$0xff]
    %v586 = vld [vmem:[#allocation2 + $0xca8] sm:$0xff]
    %v587 = vld [vmem:[#allocation2 + $0xcb0] sm:$0xff]
    %v588 = vld [vmem:[#allocation2 + $0xcb8] sm:$0xff]
    %v589 = vld [vmem:[#allocation2 + $0xcc0] sm:$0xff]
    %v590 = vld [vmem:[#allocation2 + $0xcc8] sm:$0xff]
    %v591 = vld [vmem:[#allocation2 + $0xcd0] sm:$0xff]
    %v592 = vld [vmem:[#allocation2 + $0xcd8] sm:$0xff]
    %v593 = vld [vmem:[#allocation2 + $0xce0] sm:$0xff]
    %v594 = vld [vmem:[#allocation2 + $0xce8] sm:$0xff]
    %v595 = vld [vmem:[#allocation2 + $0xcf0] sm:$0xff]
    %v596 = vld [vmem:[#allocation2 + $0xcf8] sm:$0xff]
    %v597 = vld [vmem:[#allocation2 + $0xd00] sm:$0xff]
    %v598 = vld [vmem:[#allocation2 + $0xd08] sm:$0xff]
    %v599 = vld [vmem:[#allocation2 + $0xd10] sm:$0xff]
    %v600 = vld [vmem:[#allocation2 + $0xd18] sm:$0xff]
    %v601 = vld [vmem:[#allocation2 + $0xd20] sm:$0xff]
    %v602 = vld [vmem:[#allocation2 + $0xd28] sm:$0xff]
    %v603 = vld [vmem:[#allocation2 + $0xd30] sm:$0xff]
    %v604 = vld [vmem:[#allocation2 + $0xd38] sm:$0xff]
    %v605 = vld [vmem:[#allocation2 + $0xd40] sm:$0xff]
    %v606 = vld [vmem:[#allocation2 + $0xd48] sm:$0xff]
    %v607 = vld [vmem:[#allocation2 + $0xd50] sm:$0xff]
    %v608 = vld [vmem:[#allocation2 + $0xd58] sm:$0xff]
    %v609 = vld [vmem:[#allocation2 + $0xd60] sm:$0xff]
    %v610 = vld [vmem:[#allocation2 + $0xd68] sm:$0xff]
    %v611 = vld [vmem:[#allocation2 + $0xd70] sm:$0xff]
    %v612 = vld [vmem:[#allocation2 + $0xd78] sm:$0xff]
    %v613 = vld [vmem:[#allocation2 + $0xd80] sm:$0xff]
    %v614 = vld [vmem:[#allocation2 + $0xd88] sm:$0xff]
    %v615 = vld [vmem:[#allocation2 + $0xd90] sm:$0xff]
    %v616 = vld [vmem:[#allocation2 + $0xd98] sm:$0xff]
    %v617 = vld [vmem:[#allocation2 + $0xda0] sm:$0xff]
    %v618 = vld [vmem:[#allocation2 + $0xda8] sm:$0xff]
    %v619 = vld [vmem:[#allocation2 + $0xdb0] sm:$0xff]
    %v620 = vld [vmem:[#allocation2 + $0xdb8] sm:$0xff]
    %v621 = vld [vmem:[#allocation2 + $0xdc0] sm:$0xff]
    %v622 = vld [vmem:[#allocation2 + $0xdc8] sm:$0xff]
    %v623 = vld [vmem:[#allocation2 + $0xdd0] sm:$0xff]
    %v624 = vld [vmem:[#allocation2 + $0xdd8] sm:$0xff]
    %v625 = vld [vmem:[#allocation2 + $0xde0] sm:$0xff]
    %v626 = vld [vmem:[#allocation2 + $0xde8] sm:$0xff]
    %v627 = vld [vmem:[#allocation2 + $0xdf0] sm:$0xff]
    %v628 = vld [vmem:[#allocation2 + $0xdf8] sm:$0xff]
    %v629 = vld [vmem:[#allocation2 + $0xe00] sm:$0xff]
    %v630 = vld [vmem:[#allocation2 + $0xe08] sm:$0xff]
    %v631 = vld [vmem:[#allocation2 + $0xe10] sm:$0xff]
    %v632 = vld [vmem:[#allocation2 + $0xe18] sm:$0xff]
    %v633 = vld [vmem:[#allocation2 + $0xe20] sm:$0xff]
    %v634 = vld [vmem:[#allocation2 + $0xe28] sm:$0xff]
    %v635 = vld [vmem:[#allocation2 + $0xe30] sm:$0xff]
    %v636 = vld [vmem:[#allocation2 + $0xe38] sm:$0xff]
    %v637 = vld [vmem:[#allocation2 + $0xe40] sm:$0xff]
    %v638 = vld [vmem:[#allocation2 + $0xe48] sm:$0xff]
    %v639 = vld [vmem:[#allocation2 + $0xe50] sm:$0xff]
    %v640 = vld [vmem:[#allocation2 + $0xe58] sm:$0xff]
    %v641 = vld [vmem:[#allocation2 + $0xe60] sm:$0xff]
    %v642 = vld [vmem:[#allocation2 + $0xe68] sm:$0xff]
    %v643 = vld [vmem:[#allocation2 + $0xe70] sm:$0xff]
    %v644 = vld [vmem:[#allocation2 + $0xe78] sm:$0xff]
    %v645 = vld [vmem:[#allocation2 + $0xe80] sm:$0xff]
    %v646 = vld [vmem:[#allocation2 + $0xe88] sm:$0xff]
    %v647 = vld [vmem:[#allocation2 + $0xe90] sm:$0xff]
    %v648 = vld [vmem:[#allocation2 + $0xe98] sm:$0xff]
    %v649 = vld [vmem:[#allocation2 + $0xea0] sm:$0xff]
    %v650 = vld [vmem:[#allocation2 + $0xea8] sm:$0xff]
    %v651 = vld [vmem:[#allocation2 + $0xeb0] sm:$0xff]
    %v652 = vld [vmem:[#allocation2 + $0xeb8] sm:$0xff]
    %v653 = vld [vmem:[#allocation2 + $0xec0] sm:$0xff]
    %v654 = vld [vmem:[#allocation2 + $0xec8] sm:$0xff]
    %v655 = vld [vmem:[#allocation2 + $0xed0] sm:$0xff]
    %v656 = vld [vmem:[#allocation2 + $0xed8] sm:$0xff]
    %v657 = vld [vmem:[#allocation2 + $0xee0] sm:$0xff]
    %v658 = vld [vmem:[#allocation2 + $0xee8] sm:$0xff]
    %v659 = vld [vmem:[#allocation2 + $0xef0] sm:$0xff]
    %v660 = vld [vmem:[#allocation2 + $0xef8] sm:$0xff]
    %v661 = vld [vmem:[#allocation2 + $0xf00] sm:$0xff]
    %v662 = vld [vmem:[#allocation2 + $0xf08] sm:$0xff]
    %v663 = vld [vmem:[#allocation2 + $0xf10] sm:$0xff]
    %v664 = vld [vmem:[#allocation2 + $0xf18] sm:$0xff]
    %v665 = vld [vmem:[#allocation2 + $0xf20] sm:$0xff]
    %v666 = vld [vmem:[#allocation2 + $0xf28] sm:$0xff]
    %v667 = vld [vmem:[#allocation2 + $0xf30] sm:$0xff]
    %v668 = vld [vmem:[#allocation2 + $0xf38] sm:$0xff]
    %v669 = vld [vmem:[#allocation2 + $0xf40] sm:$0xff]
    %v670 = vld [vmem:[#allocation2 + $0xf48] sm:$0xff]
    %v671 = vld [vmem:[#allocation2 + $0xf50] sm:$0xff]
    %v672 = vld [vmem:[#allocation2 + $0xf58] sm:$0xff]
    %v673 = vld [vmem:[#allocation2 + $0xf60] sm:$0xff]
    %v674 = vld [vmem:[#allocation2 + $0xf68] sm:$0xff]
    %v675 = vld [vmem:[#allocation2 + $0xf70] sm:$0xff]
    %v676 = vld [vmem:[#allocation2 + $0xf78] sm:$0xff]
    %v677 = vld [vmem:[#allocation2 + $0xf80] sm:$0xff]
    %v678 = vld [vmem:[#allocation2 + $0xf88] sm:$0xff]
    %v679 = vld [vmem:[#allocation2 + $0xf90] sm:$0xff]
    %v680 = vld [vmem:[#allocation2 + $0xf98] sm:$0xff]
    %v681 = vld [vmem:[#allocation2 + $0xfa0] sm:$0xff]
    %v682 = vld [vmem:[#allocation2 + $0xfa8] sm:$0xff]
    %v683 = vld [vmem:[#allocation2 + $0xfb0] sm:$0xff]
    %v684 = vld [vmem:[#allocation2 + $0xfb8] sm:$0xff]
    %v685 = vld [vmem:[#allocation2 + $0xfc0] sm:$0xff]
    %v686 = vld [vmem:[#allocation2 + $0xfc8] sm:$0xff]
    %v687 = vld [vmem:[#allocation2 + $0xfd0] sm:$0xff]
    %v688 = vld [vmem:[#allocation2 + $0xfd8] sm:$0xff]
    %v689 = vld [vmem:[#allocation2 + $0xfe0] sm:$0xff]
    %v690 = vld [vmem:[#allocation2 + $0xfe8] sm:$0xff]
    %v691 = vld [vmem:[#allocation2 + $0xff0] sm:$0xff]
    %v692 = vld [vmem:[#allocation2 + $0xff8] sm:$0xff]
    %v693 = vld [vmem:[#allocation2 + $0x1000] sm:$0xff]
    %v694 = vld [vmem:[#allocation2 + $0x1008] sm:$0xff]
    %v695 = vld [vmem:[#allocation2 + $0x1010] sm:$0xff]
    %v696 = vld [vmem:[#allocation2 + $0x1018] sm:$0xff]
    %v697 = vld [vmem:[#allocation2 + $0x1020] sm:$0xff]
    %v698 = vld [vmem:[#allocation2 + $0x1028] sm:$0xff]
    %v699 = vld [vmem:[#allocation2 + $0x1030] sm:$0xff]
    %v700 = vld [vmem:[#allocation2 + $0x1038] sm:$0xff]
    %v701 = vld [vmem:[#allocation2 + $0x1040] sm:$0xff]
    %v702 = vld [vmem:[#allocation2 + $0x1048] sm:$0xff]
    %v703 = vld [vmem:[#allocation2 + $0x1050] sm:$0xff]
    %v704 = vld [vmem:[#allocation2 + $0x1058] sm:$0xff]
    %v705 = vld [vmem:[#allocation2 + $0x1060] sm:$0xff]
    %v706 = vld [vmem:[#allocation2 + $0x1068] sm:$0xff]
    %v707 = vld [vmem:[#allocation2 + $0x1070] sm:$0xff]
    %v708 = vld [vmem:[#allocation2 + $0x1078] sm:$0xff]
    %v709 = vld [vmem:[#allocation2 + $0x1080] sm:$0xff]
    %v710 = vld [vmem:[#allocation2 + $0x1088] sm:$0xff]
    %v711 = vld [vmem:[#allocation2 + $0x1090] sm:$0xff]
    %v712 = vld [vmem:[#allocation2 + $0x1098] sm:$0xff]
    %v713 = vld [vmem:[#allocation2 + $0x10a0] sm:$0xff]
    %v714 = vld [vmem:[#allocation2 + $0x10a8] sm:$0xff]
    %v715 = vld [vmem:[#allocation2 + $0x10b0] sm:$0xff]
    %v716 = vld [vmem:[#allocation2 + $0x10b8] sm:$0xff]
    %v717 = vld [vmem:[#allocation2 + $0x10c0] sm:$0xff]
    %v718 = vld [vmem:[#allocation2 + $0x10c8] sm:$0xff]
    %v719 = vld [vmem:[#allocation2 + $0x10d0] sm:$0xff]
    %v720 = vld [vmem:[#allocation2 + $0x10d8] sm:$0xff]
    %v721 = vld [vmem:[#allocation2 + $0x10e0] sm:$0xff]
    %v722 = vld [vmem:[#allocation2 + $0x10e8] sm:$0xff]
    %v723 = vld [vmem:[#allocation2 + $0x10f0] sm:$0xff]
    %v724 = vld [vmem:[#allocation2 + $0x10f8] sm:$0xff]
    %v725 = vld [vmem:[#allocation2 + $0x1100] sm:$0xff]
    %v726 = vld [vmem:[#allocation2 + $0x1108] sm:$0xff]
    %v727 = vld [vmem:[#allocation2 + $0x1110] sm:$0xff]
    %v728 = vld [vmem:[#allocation2 + $0x1118] sm:$0xff]
    %v729 = vld [vmem:[#allocation2 + $0x1120] sm:$0xff]
    %v730 = vld [vmem:[#allocation2 + $0x1128] sm:$0xff]
    %v731 = vld [vmem:[#allocation2 + $0x1130] sm:$0xff]
    %v732 = vld [vmem:[#allocation2 + $0x1138] sm:$0xff]
    %v733 = vld [vmem:[#allocation2 + $0x1140] sm:$0xff]
    %v734 = vld [vmem:[#allocation2 + $0x1148] sm:$0xff]
    %v735 = vld [vmem:[#allocation2 + $0x1150] sm:$0xff]
    %v736 = vld [vmem:[#allocation2 + $0x1158] sm:$0xff]
    %v737 = vld [vmem:[#allocation2 + $0x1160] sm:$0xff]
    %v738 = vld [vmem:[#allocation2 + $0x1168] sm:$0xff]
    %v739 = vld [vmem:[#allocation2 + $0x1170] sm:$0xff]
    %v740 = vld [vmem:[#allocation2 + $0x1178] sm:$0xff]
    %v741 = vld [vmem:[#allocation2 + $0x1180] sm:$0xff]
    %v742 = vld [vmem:[#allocation2 + $0x1188] sm:$0xff]
    %v743 = vld [vmem:[#allocation2 + $0x1190] sm:$0xff]
    %v744 = vld [vmem:[#allocation2 + $0x1198] sm:$0xff]
    %v745 = vld [vmem:[#allocation2 + $0x11a0] sm:$0xff]
    %v746 = vld [vmem:[#allocation2 + $0x11a8] sm:$0xff]
    %v747 = vld [vmem:[#allocation2 + $0x11b0] sm:$0xff]
    %v748 = vld [vmem:[#allocation2 + $0x11b8] sm:$0xff]
    %v749 = vld [vmem:[#allocation2 + $0x11c0] sm:$0xff]
    %v750 = vld [vmem:[#allocation2 + $0x11c8] sm:$0xff]
    %v751 = vld [vmem:[#allocation2 + $0x11d0] sm:$0xff]
    %v752 = vld [vmem:[#allocation2 + $0x11d8] sm:$0xff]
    %v753 = vld [vmem:[#allocation2 + $0x11e0] sm:$0xff]
    %v754 = vld [vmem:[#allocation2 + $0x11e8] sm:$0xff]
    %v755 = vld [vmem:[#allocation2 + $0x11f0] sm:$0xff]
    %v756 = vld [vmem:[#allocation2 + $0x11f8] sm:$0xff]
    %v757 = vld [vmem:[#allocation2 + $0x1200] sm:$0xff]
    %v758 = vld [vmem:[#allocation2 + $0x1208] sm:$0xff]
    %v759 = vld [vmem:[#allocation2 + $0x1210] sm:$0xff]
    %v760 = vld [vmem:[#allocation2 + $0x1218] sm:$0xff]
    %v761 = vld [vmem:[#allocation2 + $0x1220] sm:$0xff]
    %v762 = vld [vmem:[#allocation2 + $0x1228] sm:$0xff]
    %v763 = vld [vmem:[#allocation2 + $0x1230] sm:$0xff]
    %v764 = vld [vmem:[#allocation2 + $0x1238] sm:$0xff]
    %v765 = vld [vmem:[#allocation2 + $0x1240] sm:$0xff]
    %v766 = vld [vmem:[#allocation2 + $0x1248] sm:$0xff]
    %v767 = vld [vmem:[#allocation2 + $0x1250] sm:$0xff]
    %v768 = vld [vmem:[#allocation2 + $0x1258] sm:$0xff]
    %v769 = vld [vmem:[#allocation2 + $0x1260] sm:$0xff]
    %v770 = vld [vmem:[#allocation2 + $0x1268] sm:$0xff]
    %v771 = vld [vmem:[#allocation2 + $0x1270] sm:$0xff]
    %v772 = vld [vmem:[#allocation2 + $0x1278] sm:$0xff]
    %v773 = vld [vmem:[#allocation2 + $0x1280] sm:$0xff]
    %v774 = vld [vmem:[#allocation2 + $0x1288] sm:$0xff]
    %v775 = vld [vmem:[#allocation2 + $0x1290] sm:$0xff]
    %v776 = vld [vmem:[#allocation2 + $0x1298] sm:$0xff]
    %v777 = vld [vmem:[#allocation2 + $0x12a0] sm:$0xff]
    %v778 = vld [vmem:[#allocation2 + $0x12a8] sm:$0xff]
    %v779 = vld [vmem:[#allocation2 + $0x12b0] sm:$0xff]
    %v780 = vld [vmem:[#allocation2 + $0x12b8] sm:$0xff]
    %v781 = vld [vmem:[#allocation2 + $0x12c0] sm:$0xff]
    %v782 = vld [vmem:[#allocation2 + $0x12c8] sm:$0xff]
    %v783 = vld [vmem:[#allocation2 + $0x12d0] sm:$0xff]
    %v784 = vld [vmem:[#allocation2 + $0x12d8] sm:$0xff]
    %v785 = vld [vmem:[#allocation2 + $0x12e0] sm:$0xff]
    %v786 = vld [vmem:[#allocation2 + $0x12e8] sm:$0xff]
    %v787 = vld [vmem:[#allocation2 + $0x12f0] sm:$0xff]
    %v788 = vld [vmem:[#allocation2 + $0x12f8] sm:$0xff]
    %v789 = vld [vmem:[#allocation2 + $0x1300] sm:$0xff]
    %v790 = vld [vmem:[#allocation2 + $0x1308] sm:$0xff]
    %v791 = vld [vmem:[#allocation2 + $0x1310] sm:$0xff]
    %v792 = vld [vmem:[#allocation2 + $0x1318] sm:$0xff]
    %v793 = vld [vmem:[#allocation2 + $0x1320] sm:$0xff]
    %v794 = vld [vmem:[#allocation2 + $0x1328] sm:$0xff]
    %v795 = vld [vmem:[#allocation2 + $0x1330] sm:$0xff]
    %v796 = vld [vmem:[#allocation2 + $0x1338] sm:$0xff]
    %v797 = vld [vmem:[#allocation2 + $0x1340] sm:$0xff]
    %v798 = vld [vmem:[#allocation2 + $0x1348] sm:$0xff]
    %v799 = vld [vmem:[#allocation2 + $0x1350] sm:$0xff]
    %v800 = vld [vmem:[#allocation2 + $0x1358] sm:$0xff]
    %v801 = vld [vmem:[#allocation2 + $0x1360] sm:$0xff]
    %v802 = vld [vmem:[#allocation2 + $0x1368] sm:$0xff]
    %v803 = vld [vmem:[#allocation2 + $0x1370] sm:$0xff]
    %v804 = vld [vmem:[#allocation2 + $0x1378] sm:$0xff]
    %v805 = vld [vmem:[#allocation2 + $0x1380] sm:$0xff]
    %v806 = vld [vmem:[#allocation2 + $0x1388] sm:$0xff]
    %v807 = vld [vmem:[#allocation2 + $0x1390] sm:$0xff]
    %v808 = vld [vmem:[#allocation2 + $0x1398] sm:$0xff]
    %v809 = vld [vmem:[#allocation2 + $0x13a0] sm:$0xff]
    %v810 = vld [vmem:[#allocation2 + $0x13a8] sm:$0xff]
    %v811 = vld [vmem:[#allocation2 + $0x13b0] sm:$0xff]
    %v812 = vld [vmem:[#allocation2 + $0x13b8] sm:$0xff]
    %v813 = vld [vmem:[#allocation2 + $0x13c0] sm:$0xff]
    %v814 = vld [vmem:[#allocation2 + $0x13c8] sm:$0xff]
    %v815 = vld [vmem:[#allocation2 + $0x13d0] sm:$0xff]
    %v816 = vld [vmem:[#allocation2 + $0x13d8] sm:$0xff]
    %v817 = vld [vmem:[#allocation2 + $0x13e0] sm:$0xff]
    %v818 = vld [vmem:[#allocation2 + $0x13e8] sm:$0xff]
    %v819 = vld [vmem:[#allocation2 + $0x13f0] sm:$0xff]
    %v820 = vld [vmem:[#allocation2 + $0x13f8] sm:$0xff]
    %v821 = vld [vmem:[#allocation2 + $0x1400] sm:$0xff]
    %v822 = vld [vmem:[#allocation2 + $0x1408] sm:$0xff]
    %v823 = vld [vmem:[#allocation2 + $0x1410] sm:$0xff]
    %v824 = vld [vmem:[#allocation2 + $0x1418] sm:$0xff]
    %v825 = vld [vmem:[#allocation2 + $0x1420] sm:$0xff]
    %v826 = vld [vmem:[#allocation2 + $0x1428] sm:$0xff]
    %v827 = vld [vmem:[#allocation2 + $0x1430] sm:$0xff]
    %v828 = vld [vmem:[#allocation2 + $0x1438] sm:$0xff]
    %v829 = vld [vmem:[#allocation2 + $0x1440] sm:$0xff]
    %v830 = vld [vmem:[#allocation2 + $0x1448] sm:$0xff]
    %v831 = vld [vmem:[#allocation2 + $0x1450] sm:$0xff]
    %v832 = vld [vmem:[#allocation2 + $0x1458] sm:$0xff]
    %v833 = vld [vmem:[#allocation2 + $0x1460] sm:$0xff]
    %v834 = vld [vmem:[#allocation2 + $0x1468] sm:$0xff]
    %v835 = vld [vmem:[#allocation2 + $0x1470] sm:$0xff]
    %v836 = vld [vmem:[#allocation2 + $0x1478] sm:$0xff]
    %v837 = vld [vmem:[#allocation2 + $0x1480] sm:$0xff]
    %v838 = vld [vmem:[#allocation2 + $0x1488] sm:$0xff]
    %v839 = vld [vmem:[#allocation2 + $0x1490] sm:$0xff]
    %v840 = vld [vmem:[#allocation2 + $0x1498] sm:$0xff]
    %v841 = vld [vmem:[#allocation2 + $0x14a0] sm:$0xff]
    %v842 = vld [vmem:[#allocation2 + $0x14a8] sm:$0xff]
    %v843 = vld [vmem:[#allocation2 + $0x14b0] sm:$0xff]
    %v844 = vld [vmem:[#allocation2 + $0x14b8] sm:$0xff]
    %v845 = vld [vmem:[#allocation2 + $0x14c0] sm:$0xff]
    %v846 = vld [vmem:[#allocation2 + $0x14c8] sm:$0xff]
    %v847 = vld [vmem:[#allocation2 + $0x14d0] sm:$0xff]
    %v848 = vld [vmem:[#allocation2 + $0x14d8] sm:$0xff]
    %v849 = vld [vmem:[#allocation2 + $0x14e0] sm:$0xff]
    %v850 = vld [vmem:[#allocation2 + $0x14e8] sm:$0xff]
    %v851 = vld [vmem:[#allocation2 + $0x14f0] sm:$0xff]
    %v852 = vld [vmem:[#allocation2 + $0x14f8] sm:$0xff]
    %v853 = vld [vmem:[#allocation2 + $0x1500] sm:$0xff]
    %v854 = vld [vmem:[#allocation2 + $0x1508] sm:$0xff]
    %v855 = vld [vmem:[#allocation2 + $0x1510] sm:$0xff]
    %v856 = vld [vmem:[#allocation2 + $0x1518] sm:$0xff]
    %v857 = vld [vmem:[#allocation2 + $0x1520] sm:$0xff]
    %v858 = vld [vmem:[#allocation2 + $0x1528] sm:$0xff]
    %v859 = vld [vmem:[#allocation2 + $0x1530] sm:$0xff]
    %v860 = vld [vmem:[#allocation2 + $0x1538] sm:$0xff]
    %v861 = vld [vmem:[#allocation2 + $0x1540] sm:$0xff]
    %v862 = vld [vmem:[#allocation2 + $0x1548] sm:$0xff]
    %v863 = vld [vmem:[#allocation2 + $0x1550] sm:$0xff]
    %v864 = vld [vmem:[#allocation2 + $0x1558] sm:$0xff]
    %v865 = vld [vmem:[#allocation2 + $0x1560] sm:$0xff]
    %v866 = vld [vmem:[#allocation2 + $0x1568] sm:$0xff]
    %v867 = vld [vmem:[#allocation2 + $0x1570] sm:$0xff]
    %v868 = vld [vmem:[#allocation2 + $0x1578] sm:$0xff]
    %v869 = vld [vmem:[#allocation2 + $0x1580] sm:$0xff]
    %v870 = vld [vmem:[#allocation2 + $0x1588] sm:$0xff]
    %v871 = vld [vmem:[#allocation2 + $0x1590] sm:$0xff]
    %v872 = vld [vmem:[#allocation2 + $0x1598] sm:$0xff]
    %v873 = vld [vmem:[#allocation2 + $0x15a0] sm:$0xff]
    %v874 = vld [vmem:[#allocation2 + $0x15a8] sm:$0xff]
    %v875 = vld [vmem:[#allocation2 + $0x15b0] sm:$0xff]
    %v876 = vld [vmem:[#allocation2 + $0x15b8] sm:$0xff]
    %v877 = vld [vmem:[#allocation2 + $0x15c0] sm:$0xff]
    %v878 = vld [vmem:[#allocation2 + $0x15c8] sm:$0xff]
    %v879 = vld [vmem:[#allocation2 + $0x15d0] sm:$0xff]
    %v880 = vld [vmem:[#allocation2 + $0x15d8] sm:$0xff]
    %v881 = vld [vmem:[#allocation2 + $0x15e0] sm:$0xff]
    %v882 = vld [vmem:[#allocation2 + $0x15e8] sm:$0xff]
    %v883 = vld [vmem:[#allocation2 + $0x15f0] sm:$0xff]
    %v884 = vld [vmem:[#allocation2 + $0x15f8] sm:$0xff]
    %v885 = vld [vmem:[#allocation2 + $0x1600] sm:$0xff]
    %v886 = vld [vmem:[#allocation2 + $0x1608] sm:$0xff]
    %v887 = vld [vmem:[#allocation2 + $0x1610] sm:$0xff]
    %v888 = vld [vmem:[#allocation2 + $0x1618] sm:$0xff]
    %v889 = vld [vmem:[#allocation2 + $0x1620] sm:$0xff]
    %v890 = vld [vmem:[#allocation2 + $0x1628] sm:$0xff]
    %v891 = vld [vmem:[#allocation2 + $0x1630] sm:$0xff]
    %v892 = vld [vmem:[#allocation2 + $0x1638] sm:$0xff]
    %v893 = vld [vmem:[#allocation2 + $0x1640] sm:$0xff]
    %v894 = vld [vmem:[#allocation2 + $0x1648] sm:$0xff]
    %v895 = vld [vmem:[#allocation2 + $0x1650] sm:$0xff]
    %v896 = vld [vmem:[#allocation2 + $0x1658] sm:$0xff]
    %v897 = vld [vmem:[#allocation2 + $0x1660] sm:$0xff]
    %v898 = vld [vmem:[#allocation2 + $0x1668] sm:$0xff]
    %v899 = vld [vmem:[#allocation2 + $0x1670] sm:$0xff]
    %v900 = vld [vmem:[#allocation2 + $0x1678] sm:$0xff]
    %v901 = vld [vmem:[#allocation2 + $0x1680] sm:$0xff]
    %v902 = vld [vmem:[#allocation2 + $0x1688] sm:$0xff]
    %v903 = vld [vmem:[#allocation2 + $0x1690] sm:$0xff]
    %v904 = vld [vmem:[#allocation2 + $0x1698] sm:$0xff]
    %v905 = vld [vmem:[#allocation2 + $0x16a0] sm:$0xff]
    %v906 = vld [vmem:[#allocation2 + $0x16a8] sm:$0xff]
    %v907 = vld [vmem:[#allocation2 + $0x16b0] sm:$0xff]
    %v908 = vld [vmem:[#allocation2 + $0x16b8] sm:$0xff]
    %v909 = vld [vmem:[#allocation2 + $0x16c0] sm:$0xff]
    %v910 = vld [vmem:[#allocation2 + $0x16c8] sm:$0xff]
    %v911 = vld [vmem:[#allocation2 + $0x16d0] sm:$0xff]
    %v912 = vld [vmem:[#allocation2 + $0x16d8] sm:$0xff]
    %v913 = vld [vmem:[#allocation2 + $0x16e0] sm:$0xff]
    %v914 = vld [vmem:[#allocation2 + $0x16e8] sm:$0xff]
    %v915 = vld [vmem:[#allocation2 + $0x16f0] sm:$0xff]
    %v916 = vld [vmem:[#allocation2 + $0x16f8] sm:$0xff]
    %v917 = vld [vmem:[#allocation2 + $0x1700] sm:$0xff]
    %v918 = vld [vmem:[#allocation2 + $0x1708] sm:$0xff]
    %v919 = vld [vmem:[#allocation2 + $0x1710] sm:$0xff]
    %v920 = vld [vmem:[#allocation2 + $0x1718] sm:$0xff]
    %v921 = vld [vmem:[#allocation2 + $0x1720] sm:$0xff]
    %v922 = vld [vmem:[#allocation2 + $0x1728] sm:$0xff]
    %v923 = vld [vmem:[#allocation2 + $0x1730] sm:$0xff]
    %v924 = vld [vmem:[#allocation2 + $0x1738] sm:$0xff]
    %v925 = vld [vmem:[#allocation2 + $0x1740] sm:$0xff]
    %v926 = vld [vmem:[#allocation2 + $0x1748] sm:$0xff]
    %v927 = vld [vmem:[#allocation2 + $0x1750] sm:$0xff]
    %v928 = vld [vmem:[#allocation2 + $0x1758] sm:$0xff]
    %v929 = vld [vmem:[#allocation2 + $0x1760] sm:$0xff]
    %v930 = vld [vmem:[#allocation2 + $0x1768] sm:$0xff]
    %v931 = vld [vmem:[#allocation2 + $0x1770] sm:$0xff]
    %v932 = vld [vmem:[#allocation2 + $0x1778] sm:$0xff]
    %v933 = vld [vmem:[#allocation2 + $0x1780] sm:$0xff]
    %v934 = vld [vmem:[#allocation2 + $0x1788] sm:$0xff]
    %v935 = vld [vmem:[#allocation2 + $0x1790] sm:$0xff]
    %v936 = vld [vmem:[#allocation2 + $0x1798] sm:$0xff]
    %v937 = vld [vmem:[#allocation2 + $0x17a0] sm:$0xff]
    %v938 = vld [vmem:[#allocation2 + $0x17a8] sm:$0xff]
    %v939 = vld [vmem:[#allocation2 + $0x17b0] sm:$0xff]
    %v940 = vld [vmem:[#allocation2 + $0x17b8] sm:$0xff]
    %v941 = vld [vmem:[#allocation2 + $0x17c0] sm:$0xff]
    %v942 = vld [vmem:[#allocation2 + $0x17c8] sm:$0xff]
    %v943 = vld [vmem:[#allocation2 + $0x17d0] sm:$0xff]
    %v944 = vld [vmem:[#allocation2 + $0x17d8] sm:$0xff]
    %v945 = vld [vmem:[#allocation2 + $0x17e0] sm:$0xff]
    %v946 = vld [vmem:[#allocation2 + $0x17e8] sm:$0xff]
    %v947 = vld [vmem:[#allocation2 + $0x17f0] sm:$0xff]
    %v948 = vld [vmem:[#allocation2 + $0x17f8] sm:$0xff]
    %v949 = vld [vmem:[#allocation2 + $0x1800] sm:$0xff]
    %v950 = vld [vmem:[#allocation2 + $0x1808] sm:$0xff]
    %v951 = vld [vmem:[#allocation2 + $0x1810] sm:$0xff]
    %v952 = vld [vmem:[#allocation2 + $0x1818] sm:$0xff]
    %v953 = vld [vmem:[#allocation2 + $0x1820] sm:$0xff]
    %v954 = vld [vmem:[#allocation2 + $0x1828] sm:$0xff]
    %v955 = vld [vmem:[#allocation2 + $0x1830] sm:$0xff]
    %v956 = vld [vmem:[#allocation2 + $0x1838] sm:$0xff]
    %v957 = vld [vmem:[#allocation2 + $0x1840] sm:$0xff]
    %v958 = vld [vmem:[#allocation2 + $0x1848] sm:$0xff]
    %v959 = vld [vmem:[#allocation2 + $0x1850] sm:$0xff]
    %v960 = vld [vmem:[#allocation2 + $0x1858] sm:$0xff]
    %v961 = vld [vmem:[#allocation2 + $0x1860] sm:$0xff]
    %v962 = vld [vmem:[#allocation2 + $0x1868] sm:$0xff]
    %v963 = vld [vmem:[#allocation2 + $0x1870] sm:$0xff]
    %v964 = vld [vmem:[#allocation2 + $0x1878] sm:$0xff]
    %v965 = vld [vmem:[#allocation2 + $0x1880] sm:$0xff]
    %v966 = vld [vmem:[#allocation2 + $0x1888] sm:$0xff]
    %v967 = vld [vmem:[#allocation2 + $0x1890] sm:$0xff]
    %v968 = vld [vmem:[#allocation2 + $0x1898] sm:$0xff]
    %v969 = vld [vmem:[#allocation2 + $0x18a0] sm:$0xff]
    %v970 = vld [vmem:[#allocation2 + $0x18a8] sm:$0xff]
    %v971 = vld [vmem:[#allocation2 + $0x18b0] sm:$0xff]
    %v972 = vld [vmem:[#allocation2 + $0x18b8] sm:$0xff]
    %v973 = vld [vmem:[#allocation2 + $0x18c0] sm:$0xff]
    %v974 = vld [vmem:[#allocation2 + $0x18c8] sm:$0xff]
    %v975 = vld [vmem:[#allocation2 + $0x18d0] sm:$0xff]
    %v976 = vld [vmem:[#allocation2 + $0x18d8] sm:$0xff]
    %v977 = vld [vmem:[#allocation2 + $0x18e0] sm:$0xff]
    %v978 = vld [vmem:[#allocation2 + $0x18e8] sm:$0xff]
    %v979 = vld [vmem:[#allocation2 + $0x18f0] sm:$0xff]
    %v980 = vld [vmem:[#allocation2 + $0x18f8] sm:$0xff]
    %v981 = vld [vmem:[#allocation2 + $0x1900] sm:$0xff]
    %v982 = vld [vmem:[#allocation2 + $0x1908] sm:$0xff]
    %v983 = vld [vmem:[#allocation2 + $0x1910] sm:$0xff]
    %v984 = vld [vmem:[#allocation2 + $0x1918] sm:$0xff]
    %v985 = vld [vmem:[#allocation2 + $0x1920] sm:$0xff]
    %v986 = vld [vmem:[#allocation2 + $0x1928] sm:$0xff]
    %v987 = vld [vmem:[#allocation2 + $0x1930] sm:$0xff]
    %v988 = vld [vmem:[#allocation2 + $0x1938] sm:$0xff]
    %v989 = vld [vmem:[#allocation2 + $0x1940] sm:$0xff]
    %v990 = vld [vmem:[#allocation2 + $0x1948] sm:$0xff]
    %v991 = vld [vmem:[#allocation2 + $0x1950] sm:$0xff]
    %v992 = vld [vmem:[#allocation2 + $0x1958] sm:$0xff]
    %v993 = vld [vmem:[#allocation2 + $0x1960] sm:$0xff]
    %v994 = vld [vmem:[#allocation2 + $0x1968] sm:$0xff]
    %v995 = vld [vmem:[#allocation2 + $0x1970] sm:$0xff]
    %v996 = vld [vmem:[#allocation2 + $0x1978] sm:$0xff]
    %v997 = vld [vmem:[#allocation2 + $0x1980] sm:$0xff]
    %v998 = vld [vmem:[#allocation2 + $0x1988] sm:$0xff]
    %v999 = vld [vmem:[#allocation2 + $0x1990] sm:$0xff]
    %v1000 = vld [vmem:[#allocation2 + $0x1998] sm:$0xff]
    %v1001 = vld [vmem:[#allocation2 + $0x19a0] sm:$0xff]
    %v1002 = vld [vmem:[#allocation2 + $0x19a8] sm:$0xff]
    %v1003 = vld [vmem:[#allocation2 + $0x19b0] sm:$0xff]
    %v1004 = vld [vmem:[#allocation2 + $0x19b8] sm:$0xff]
    %v1005 = vld [vmem:[#allocation2 + $0x19c0] sm:$0xff]
    %v1006 = vld [vmem:[#allocation2 + $0x19c8] sm:$0xff]
    %v1007 = vld [vmem:[#allocation2 + $0x19d0] sm:$0xff]
    %v1008 = vld [vmem:[#allocation2 + $0x19d8] sm:$0xff]
    %v1009 = vld [vmem:[#allocation2 + $0x19e0] sm:$0xff]
    %v1010 = vld [vmem:[#allocation2 + $0x19e8] sm:$0xff]
    %v1011 = vld [vmem:[#allocation2 + $0x19f0] sm:$0xff]
    %v1012 = vld [vmem:[#allocation2 + $0x19f8] sm:$0xff]
    %v1013 = vld [vmem:[#allocation2 + $0x1a00] sm:$0xff]
    %v1014 = vld [vmem:[#allocation2 + $0x1a08] sm:$0xff]
    %v1015 = vld [vmem:[#allocation2 + $0x1a10] sm:$0xff]
    %v1016 = vld [vmem:[#allocation2 + $0x1a18] sm:$0xff]
    %v1017 = vld [vmem:[#allocation2 + $0x1a20] sm:$0xff]
    %v1018 = vld [vmem:[#allocation2 + $0x1a28] sm:$0xff]
    %v1019 = vld [vmem:[#allocation2 + $0x1a30] sm:$0xff]
    %v1020 = vld [vmem:[#allocation2 + $0x1a38] sm:$0xff]
    %v1021 = vld [vmem:[#allocation2 + $0x1a40] sm:$0xff]
    %v1022 = vld [vmem:[#allocation2 + $0x1a48] sm:$0xff]
    %v1023 = vld [vmem:[#allocation2 + $0x1a50] sm:$0xff]
    %v1024 = vld [vmem:[#allocation2 + $0x1a58] sm:$0xff]
    %v1025 = vld [vmem:[#allocation2 + $0x1a60] sm:$0xff]
    %v1026 = vld [vmem:[#allocation2 + $0x1a68] sm:$0xff]
    %v1027 = vld [vmem:[#allocation2 + $0x1a70] sm:$0xff]
    %v1028 = vld [vmem:[#allocation2 + $0x1a78] sm:$0xff]
    %v1029 = vld [vmem:[#allocation2 + $0x1a80] sm:$0xff]
    %v1030 = vld [vmem:[#allocation2 + $0x1a88] sm:$0xff]
    %v1031 = vld [vmem:[#allocation2 + $0x1a90] sm:$0xff]
    %v1032 = vld [vmem:[#allocation2 + $0x1a98] sm:$0xff]
    %v1033 = vld [vmem:[#allocation2 + $0x1aa0] sm:$0xff]
    %v1034 = vld [vmem:[#allocation2 + $0x1aa8] sm:$0xff]
    %v1035 = vld [vmem:[#allocation2 + $0x1ab0] sm:$0xff]
    %v1036 = vld [vmem:[#allocation2 + $0x1ab8] sm:$0xff]
    %v1037 = vld [vmem:[#allocation2 + $0x1ac0] sm:$0xff]
    %v1038 = vld [vmem:[#allocation2 + $0x1ac8] sm:$0xff]
    %v1039 = vld [vmem:[#allocation2 + $0x1ad0] sm:$0xff]
    %v1040 = vld [vmem:[#allocation2 + $0x1ad8] sm:$0xff]
    %v1041 = vld [vmem:[#allocation2 + $0x1ae0] sm:$0xff]
    %v1042 = vld [vmem:[#allocation2 + $0x1ae8] sm:$0xff]
    %v1043 = vld [vmem:[#allocation2 + $0x1af0] sm:$0xff]
    %v1044 = vld [vmem:[#allocation2 + $0x1af8] sm:$0xff]
    %v1045 = vld [vmem:[#allocation2 + $0x1b00] sm:$0xff]
    %v1046 = vld [vmem:[#allocation2 + $0x1b08] sm:$0xff]
    %v1047 = vld [vmem:[#allocation2 + $0x1b10] sm:$0xff]
    %v1048 = vld [vmem:[#allocation2 + $0x1b18] sm:$0xff]
    %v1049 = vld [vmem:[#allocation2 + $0x1b20] sm:$0xff]
    %v1050 = vld [vmem:[#allocation2 + $0x1b28] sm:$0xff]
    %v1051 = vld [vmem:[#allocation2 + $0x1b30] sm:$0xff]
    %v1052 = vld [vmem:[#allocation2 + $0x1b38] sm:$0xff]
    %v1053 = vld [vmem:[#allocation2 + $0x1b40] sm:$0xff]
    %v1054 = vld [vmem:[#allocation2 + $0x1b48] sm:$0xff]
    %v1055 = vld [vmem:[#allocation2 + $0x1b50] sm:$0xff]
    %v1056 = vld [vmem:[#allocation2 + $0x1b58] sm:$0xff]
    %v1057 = vld [vmem:[#allocation2 + $0x1b60] sm:$0xff]
    %v1058 = vld [vmem:[#allocation2 + $0x1b68] sm:$0xff]
    %v1059 = vld [vmem:[#allocation2 + $0x1b70] sm:$0xff]
    %v1060 = vld [vmem:[#allocation2 + $0x1b78] sm:$0xff]
    %v1061 = vld [vmem:[#allocation2 + $0x1b80] sm:$0xff]
    %v1062 = vld [vmem:[#allocation2 + $0x1b88] sm:$0xff]
    %v1063 = vld [vmem:[#allocation2 + $0x1b90] sm:$0xff]
    %v1064 = vld [vmem:[#allocation2 + $0x1b98] sm:$0xff]
    %v1065 = vld [vmem:[#allocation2 + $0x1ba0] sm:$0xff]
    %v1066 = vld [vmem:[#allocation2 + $0x1ba8] sm:$0xff]
    %v1067 = vld [vmem:[#allocation2 + $0x1bb0] sm:$0xff]
    %v1068 = vld [vmem:[#allocation2 + $0x1bb8] sm:$0xff]
    %v1069 = vld [vmem:[#allocation2 + $0x1bc0] sm:$0xff]
    %v1070 = vld [vmem:[#allocation2 + $0x1bc8] sm:$0xff]
    %v1071 = vld [vmem:[#allocation2 + $0x1bd0] sm:$0xff]
    %v1072 = vld [vmem:[#allocation2 + $0x1bd8] sm:$0xff]
    %v1073 = vld [vmem:[#allocation2 + $0x1be0] sm:$0xff]
    %v1074 = vld [vmem:[#allocation2 + $0x1be8] sm:$0xff]
    %v1075 = vld [vmem:[#allocation2 + $0x1bf0] sm:$0xff]
    %v1076 = vld [vmem:[#allocation2 + $0x1bf8] sm:$0xff]
    %v1077 = vld [vmem:[#allocation2 + $0x1c00] sm:$0xff]
    %v1078 = vld [vmem:[#allocation2 + $0x1c08] sm:$0xff]
    %v1079 = vld [vmem:[#allocation2 + $0x1c10] sm:$0xff]
    %v1080 = vld [vmem:[#allocation2 + $0x1c18] sm:$0xff]
    %v1081 = vld [vmem:[#allocation2 + $0x1c20] sm:$0xff]
    %v1082 = vld [vmem:[#allocation2 + $0x1c28] sm:$0xff]
    %v1083 = vld [vmem:[#allocation2 + $0x1c30] sm:$0xff]
    %v1084 = vld [vmem:[#allocation2 + $0x1c38] sm:$0xff]
    %v1085 = vld [vmem:[#allocation2 + $0x1c40] sm:$0xff]
    %v1086 = vld [vmem:[#allocation2 + $0x1c48] sm:$0xff]
    %v1087 = vld [vmem:[#allocation2 + $0x1c50] sm:$0xff]
    %v1088 = vld [vmem:[#allocation2 + $0x1c58] sm:$0xff]
    %v1089 = vld [vmem:[#allocation2 + $0x1c60] sm:$0xff]
    %v1090 = vld [vmem:[#allocation2 + $0x1c68] sm:$0xff]
    %v1091 = vld [vmem:[#allocation2 + $0x1c70] sm:$0xff]
    %v1092 = vld [vmem:[#allocation2 + $0x1c78] sm:$0xff]
    %v1093 = vld [vmem:[#allocation2 + $0x1c80] sm:$0xff]
    %v1094 = vld [vmem:[#allocation2 + $0x1c88] sm:$0xff]
    %v1095 = vld [vmem:[#allocation2 + $0x1c90] sm:$0xff]
    %v1096 = vld [vmem:[#allocation2 + $0x1c98] sm:$0xff]
    %v1097 = vld [vmem:[#allocation2 + $0x1ca0] sm:$0xff]
    %v1098 = vld [vmem:[#allocation2 + $0x1ca8] sm:$0xff]
    %v1099 = vld [vmem:[#allocation2 + $0x1cb0] sm:$0xff]
    %v1100 = vld [vmem:[#allocation2 + $0x1cb8] sm:$0xff]
    %v1101 = vld [vmem:[#allocation2 + $0x1cc0] sm:$0xff]
    %v1102 = vld [vmem:[#allocation2 + $0x1cc8] sm:$0xff]
    %v1103 = vld [vmem:[#allocation2 + $0x1cd0] sm:$0xff]
    %v1104 = vld [vmem:[#allocation2 + $0x1cd8] sm:$0xff]
    %v1105 = vld [vmem:[#allocation2 + $0x1ce0] sm:$0xff]
    %v1106 = vld [vmem:[#allocation2 + $0x1ce8] sm:$0xff]
    %v1107 = vld [vmem:[#allocation2 + $0x1cf0] sm:$0xff]
    %v1108 = vld [vmem:[#allocation2 + $0x1cf8] sm:$0xff]
    %v1109 = vld [vmem:[#allocation2 + $0x1d00] sm:$0xff]
    %v1110 = vld [vmem:[#allocation2 + $0x1d08] sm:$0xff]
    %v1111 = vld [vmem:[#allocation2 + $0x1d10] sm:$0xff]
    %v1112 = vld [vmem:[#allocation2 + $0x1d18] sm:$0xff]
    %v1113 = vld [vmem:[#allocation2 + $0x1d20] sm:$0xff]
    %v1114 = vld [vmem:[#allocation2 + $0x1d28] sm:$0xff]
    %v1115 = vld [vmem:[#allocation2 + $0x1d30] sm:$0xff]
    %v1116 = vld [vmem:[#allocation2 + $0x1d38] sm:$0xff]
    %v1117 = vld [vmem:[#allocation2 + $0x1d40] sm:$0xff]
    %v1118 = vld [vmem:[#allocation2 + $0x1d48] sm:$0xff]
    %v1119 = vld [vmem:[#allocation2 + $0x1d50] sm:$0xff]
    %v1120 = vld [vmem:[#allocation2 + $0x1d58] sm:$0xff]
    %v1121 = vld [vmem:[#allocation2 + $0x1d60] sm:$0xff]
    %v1122 = vld [vmem:[#allocation2 + $0x1d68] sm:$0xff]
    %v1123 = vld [vmem:[#allocation2 + $0x1d70] sm:$0xff]
    %v1124 = vld [vmem:[#allocation2 + $0x1d78] sm:$0xff]
    %v1125 = vld [vmem:[#allocation2 + $0x1d80] sm:$0xff]
    %v1126 = vld [vmem:[#allocation2 + $0x1d88] sm:$0xff]
    %v1127 = vld [vmem:[#allocation2 + $0x1d90] sm:$0xff]
    %v1128 = vld [vmem:[#allocation2 + $0x1d98] sm:$0xff]
    %v1129 = vld [vmem:[#allocation2 + $0x1da0] sm:$0xff]
    %v1130 = vld [vmem:[#allocation2 + $0x1da8] sm:$0xff]
    %v1131 = vld [vmem:[#allocation2 + $0x1db0] sm:$0xff]
    %v1132 = vld [vmem:[#allocation2 + $0x1db8] sm:$0xff]
    %v1133 = vld [vmem:[#allocation2 + $0x1dc0] sm:$0xff]
    %v1134 = vld [vmem:[#allocation2 + $0x1dc8] sm:$0xff]
    %v1135 = vld [vmem:[#allocation2 + $0x1dd0] sm:$0xff]
    %v1136 = vld [vmem:[#allocation2 + $0x1dd8] sm:$0xff]
    %v1137 = vld [vmem:[#allocation2 + $0x1de0] sm:$0xff]
    %v1138 = vld [vmem:[#allocation2 + $0x1de8] sm:$0xff]
    %v1139 = vld [vmem:[#allocation2 + $0x1df0] sm:$0xff]
    %v1140 = vld [vmem:[#allocation2 + $0x1df8] sm:$0xff]
    %v1141 = vld [vmem:[#allocation2 + $0x1e00] sm:$0xff]
    %v1142 = vld [vmem:[#allocation2 + $0x1e08] sm:$0xff]
    %v1143 = vld [vmem:[#allocation2 + $0x1e10] sm:$0xff]
    %v1144 = vld [vmem:[#allocation2 + $0x1e18] sm:$0xff]
    %v1145 = vld [vmem:[#allocation2 + $0x1e20] sm:$0xff]
    %v1146 = vld [vmem:[#allocation2 + $0x1e28] sm:$0xff]
    %v1147 = vld [vmem:[#allocation2 + $0x1e30] sm:$0xff]
    %v1148 = vld [vmem:[#allocation2 + $0x1e38] sm:$0xff]
    %v1149 = vld [vmem:[#allocation2 + $0x1e40] sm:$0xff]
    %v1150 = vld [vmem:[#allocation2 + $0x1e48] sm:$0xff]
    %v1151 = vld [vmem:[#allocation2 + $0x1e50] sm:$0xff]
    %v1152 = vld [vmem:[#allocation2 + $0x1e58] sm:$0xff]
    %v1153 = vld [vmem:[#allocation2 + $0x1e60] sm:$0xff]
    %v1154 = vld [vmem:[#allocation2 + $0x1e68] sm:$0xff]
    %v1155 = vld [vmem:[#allocation2 + $0x1e70] sm:$0xff]
    %v1156 = vld [vmem:[#allocation2 + $0x1e78] sm:$0xff]
    %v1157 = vld [vmem:[#allocation2 + $0x1e80] sm:$0xff]
    %v1158 = vld [vmem:[#allocation2 + $0x1e88] sm:$0xff]
    %v1159 = vld [vmem:[#allocation2 + $0x1e90] sm:$0xff]
    %v1160 = vld [vmem:[#allocation2 + $0x1e98] sm:$0xff]
    %v1161 = vld [vmem:[#allocation2 + $0x1ea0] sm:$0xff]
    %v1162 = vld [vmem:[#allocation2 + $0x1ea8] sm:$0xff]
    %v1163 = vld [vmem:[#allocation2 + $0x1eb0] sm:$0xff]
    %v1164 = vld [vmem:[#allocation2 + $0x1eb8] sm:$0xff]
    %v1165 = vld [vmem:[#allocation2 + $0x1ec0] sm:$0xff]
    %v1166 = vld [vmem:[#allocation2 + $0x1ec8] sm:$0xff]
    %v1167 = vld [vmem:[#allocation2 + $0x1ed0] sm:$0xff]
    %v1168 = vld [vmem:[#allocation2 + $0x1ed8] sm:$0xff]
    %v1169 = vld [vmem:[#allocation2 + $0x1ee0] sm:$0xff]
    %v1170 = vld [vmem:[#allocation2 + $0x1ee8] sm:$0xff]
    %v1171 = vld [vmem:[#allocation2 + $0x1ef0] sm:$0xff]
    %v1172 = vld [vmem:[#allocation2 + $0x1ef8] sm:$0xff]
    %v1173 = vld [vmem:[#allocation2 + $0x1f00] sm:$0xff]
    %v1174 = vld [vmem:[#allocation2 + $0x1f08] sm:$0xff]
    %v1175 = vld [vmem:[#allocation2 + $0x1f10] sm:$0xff]
    %v1176 = vld [vmem:[#allocation2 + $0x1f18] sm:$0xff]
    %v1177 = vld [vmem:[#allocation2 + $0x1f20] sm:$0xff]
    %v1178 = vld [vmem:[#allocation2 + $0x1f28] sm:$0xff]
    %v1179 = vld [vmem:[#allocation2 + $0x1f30] sm:$0xff]
    %v1180 = vld [vmem:[#allocation2 + $0x1f38] sm:$0xff]
    %v1181 = vld [vmem:[#allocation2 + $0x1f40] sm:$0xff]
    %v1182 = vld [vmem:[#allocation2 + $0x1f48] sm:$0xff]
    %v1183 = vld [vmem:[#allocation2 + $0x1f50] sm:$0xff]
    %v1184 = vld [vmem:[#allocation2 + $0x1f58] sm:$0xff]
    %v1185 = vld [vmem:[#allocation2 + $0x1f60] sm:$0xff]
    %v1186 = vld [vmem:[#allocation2 + $0x1f68] sm:$0xff]
    %v1187 = vld [vmem:[#allocation2 + $0x1f70] sm:$0xff]
    %v1188 = vld [vmem:[#allocation2 + $0x1f78] sm:$0xff]
    %v1189 = vld [vmem:[#allocation2 + $0x1f80] sm:$0xff]
    %v1190 = vld [vmem:[#allocation2 + $0x1f88] sm:$0xff]
    %v1191 = vld [vmem:[#allocation2 + $0x1f90] sm:$0xff]
    %v1192 = vld [vmem:[#allocation2 + $0x1f98] sm:$0xff]
    %v1193 = vld [vmem:[#allocation2 + $0x1fa0] sm:$0xff]
    %v1194 = vld [vmem:[#allocation2 + $0x1fa8] sm:$0xff]
    %v1195 = vld [vmem:[#allocation2 + $0x1fb0] sm:$0xff]
    %v1196 = vld [vmem:[#allocation2 + $0x1fb8] sm:$0xff]
    %v1197 = vld [vmem:[#allocation2 + $0x1fc0] sm:$0xff]
    %v1198 = vld [vmem:[#allocation2 + $0x1fc8] sm:$0xff]
    %v1199 = vld [vmem:[#allocation2 + $0x1fd0] sm:$0xff]
    %v1200 = vld [vmem:[#allocation2 + $0x1fd8] sm:$0xff]
    %v1201 = vld [vmem:[#allocation2 + $0x1fe0] sm:$0xff]
    %v1202 = vld [vmem:[#allocation2 + $0x1fe8] sm:$0xff]
    %v1203 = vld [vmem:[#allocation2 + $0x1ff0] sm:$0xff]
    %v1204 = vld [vmem:[#allocation2 + $0x1ff8] sm:$0xff]
    %v1205 = vld [vmem:[#allocation2 + $0x2000] sm:$0xff]
    %v1206 = vld [vmem:[#allocation2 + $0x2008] sm:$0xff]
    %v1207 = vld [vmem:[#allocation2 + $0x2010] sm:$0xff]
    %v1208 = vld [vmem:[#allocation2 + $0x2018] sm:$0xff]
    %v1209 = vld [vmem:[#allocation2 + $0x2020] sm:$0xff]
    %v1210 = vld [vmem:[#allocation2 + $0x2028] sm:$0xff]
    %v1211 = vld [vmem:[#allocation2 + $0x2030] sm:$0xff]
    %v1212 = vld [vmem:[#allocation2 + $0x2038] sm:$0xff]
    %v1213 = vld [vmem:[#allocation2 + $0x2040] sm:$0xff]
    %v1214 = vld [vmem:[#allocation2 + $0x2048] sm:$0xff]
    %v1215 = vld [vmem:[#allocation2 + $0x2050] sm:$0xff]
    %v1216 = vld [vmem:[#allocation2 + $0x2058] sm:$0xff]
    %v1217 = vld [vmem:[#allocation2 + $0x2060] sm:$0xff]
    %v1218 = vld [vmem:[#allocation2 + $0x2068] sm:$0xff]
    %v1219 = vld [vmem:[#allocation2 + $0x2070] sm:$0xff]
    %v1220 = vld [vmem:[#allocation2 + $0x2078] sm:$0xff]
    %v1221 = vld [vmem:[#allocation2 + $0x2080] sm:$0xff]
    %v1222 = vld [vmem:[#allocation2 + $0x2088] sm:$0xff]
    %v1223 = vld [vmem:[#allocation2 + $0x2090] sm:$0xff]
    %v1224 = vld [vmem:[#allocation2 + $0x2098] sm:$0xff]
    %v1225 = vld [vmem:[#allocation2 + $0x20a0] sm:$0xff]
    %v1226 = vld [vmem:[#allocation2 + $0x20a8] sm:$0xff]
    %v1227 = vld [vmem:[#allocation2 + $0x20b0] sm:$0xff]
    %v1228 = vld [vmem:[#allocation2 + $0x20b8] sm:$0xff]
    %v1229 = vld [vmem:[#allocation2 + $0x20c0] sm:$0xff]
    %v1230 = vld [vmem:[#allocation2 + $0x20c8] sm:$0xff]
    %v1231 = vld [vmem:[#allocation2 + $0x20d0] sm:$0xff]
    %v1232 = vld [vmem:[#allocation2 + $0x20d8] sm:$0xff]
    %v1233 = vld [vmem:[#allocation2 + $0x20e0] sm:$0xff]
    %v1234 = vld [vmem:[#allocation2 + $0x20e8] sm:$0xff]
    %v1235 = vld [vmem:[#allocation2 + $0x20f0] sm:$0xff]
    %v1236 = vld [vmem:[#allocation2 + $0x20f8] sm:$0xff]
    %v1237 = vld [vmem:[#allocation2 + $0x2100] sm:$0xff]
    %v1238 = vld [vmem:[#allocation2 + $0x2108] sm:$0xff]
    %v1239 = vld [vmem:[#allocation2 + $0x2110] sm:$0xff]
    %v1240 = vld [vmem:[#allocation2 + $0x2118] sm:$0xff]
    %v1241 = vld [vmem:[#allocation2 + $0x2120] sm:$0xff]
    %v1242 = vld [vmem:[#allocation2 + $0x2128] sm:$0xff]
    %v1243 = vld [vmem:[#allocation2 + $0x2130] sm:$0xff]
    %v1244 = vld [vmem:[#allocation2 + $0x2138] sm:$0xff]
    %v1245 = vld [vmem:[#allocation2 + $0x2140] sm:$0xff]
    %v1246 = vld [vmem:[#allocation2 + $0x2148] sm:$0xff]
    %v1247 = vld [vmem:[#allocation2 + $0x2150] sm:$0xff]
    %v1248 = vld [vmem:[#allocation2 + $0x2158] sm:$0xff]
    %v1249 = vld [vmem:[#allocation2 + $0x2160] sm:$0xff]
    %v1250 = vld [vmem:[#allocation2 + $0x2168] sm:$0xff]
    %v1251 = vld [vmem:[#allocation2 + $0x2170] sm:$0xff]
    %v1252 = vld [vmem:[#allocation2 + $0x2178] sm:$0xff]
    %v1253 = vld [vmem:[#allocation2 + $0x2180] sm:$0xff]
    %v1254 = vld [vmem:[#allocation2 + $0x2188] sm:$0xff]
    %v1255 = vld [vmem:[#allocation2 + $0x2190] sm:$0xff]
    %v1256 = vld [vmem:[#allocation2 + $0x2198] sm:$0xff]
    %v1257 = vld [vmem:[#allocation2 + $0x21a0] sm:$0xff]
    %v1258 = vld [vmem:[#allocation2 + $0x21a8] sm:$0xff]
    %v1259 = vld [vmem:[#allocation2 + $0x21b0] sm:$0xff]
    %v1260 = vld [vmem:[#allocation2 + $0x21b8] sm:$0xff]
    %v1261 = vld [vmem:[#allocation2 + $0x21c0] sm:$0xff]
    %v1262 = vld [vmem:[#allocation2 + $0x21c8] sm:$0xff]
    %v1263 = vld [vmem:[#allocation2 + $0x21d0] sm:$0xff]
    %v1264 = vld [vmem:[#allocation2 + $0x21d8] sm:$0xff]
    %v1265 = vld [vmem:[#allocation2 + $0x21e0] sm:$0xff]
    %v1266 = vld [vmem:[#allocation2 + $0x21e8] sm:$0xff]
    %v1267 = vld [vmem:[#allocation2 + $0x21f0] sm:$0xff]
    %v1268 = vld [vmem:[#allocation2 + $0x21f8] sm:$0xff]
    %v1269 = vld [vmem:[#allocation2 + $0x2200] sm:$0xff]
    %v1270 = vld [vmem:[#allocation2 + $0x2208] sm:$0xff]
    %v1271 = vld [vmem:[#allocation2 + $0x2210] sm:$0xff]
    %v1272 = vld [vmem:[#allocation2 + $0x2218] sm:$0xff]
    %v1273 = vld [vmem:[#allocation2 + $0x2220] sm:$0xff]
    %v1274 = vld [vmem:[#allocation2 + $0x2228] sm:$0xff]
    %v1275 = vld [vmem:[#allocation2 + $0x2230] sm:$0xff]
    %v1276 = vld [vmem:[#allocation2 + $0x2238] sm:$0xff]
    %v1277 = vld [vmem:[#allocation2 + $0x2240] sm:$0xff]
    %v1278 = vld [vmem:[#allocation2 + $0x2248] sm:$0xff]
    %v1279 = vld [vmem:[#allocation2 + $0x2250] sm:$0xff]
    %v1280 = vld [vmem:[#allocation2 + $0x2258] sm:$0xff]
    %v1281 = vld [vmem:[#allocation2 + $0x2260] sm:$0xff]
    %v1282 = vld [vmem:[#allocation2 + $0x2268] sm:$0xff]
    %v1283 = vld [vmem:[#allocation2 + $0x2270] sm:$0xff]
    %v1284 = vld [vmem:[#allocation2 + $0x2278] sm:$0xff]
    %v1285 = vld [vmem:[#allocation2 + $0x2280] sm:$0xff]
    %v1286 = vld [vmem:[#allocation2 + $0x2288] sm:$0xff]
    %v1287 = vld [vmem:[#allocation2 + $0x2290] sm:$0xff]
    %v1288 = vld [vmem:[#allocation2 + $0x2298] sm:$0xff]
    %v1289 = vld [vmem:[#allocation2 + $0x22a0] sm:$0xff]
    %v1290 = vld [vmem:[#allocation2 + $0x22a8] sm:$0xff]
    %v1291 = vld [vmem:[#allocation2 + $0x22b0] sm:$0xff]
    %v1292 = vld [vmem:[#allocation2 + $0x22b8] sm:$0xff]
    %v1293 = vld [vmem:[#allocation2 + $0x22c0] sm:$0xff]
    %v1294 = vld [vmem:[#allocation2 + $0x22c8] sm:$0xff]
    %v1295 = vld [vmem:[#allocation2 + $0x22d0] sm:$0xff]
    %v1296 = vld [vmem:[#allocation2 + $0x22d8] sm:$0xff]
    %v1297 = vld [vmem:[#allocation2 + $0x22e0] sm:$0xff]
    %v1298 = vld [vmem:[#allocation2 + $0x22e8] sm:$0xff]
    %v1299 = vld [vmem:[#allocation2 + $0x22f0] sm:$0xff]
    %v1300 = vld [vmem:[#allocation2 + $0x22f8] sm:$0xff]
    %v1301 = vld [vmem:[#allocation2 + $0x2300] sm:$0xff]
    %v1302 = vld [vmem:[#allocation2 + $0x2308] sm:$0xff]
    %v1303 = vld [vmem:[#allocation2 + $0x2310] sm:$0xff]
    %v1304 = vld [vmem:[#allocation2 + $0x2318] sm:$0xff]
    %v1305 = vld [vmem:[#allocation2 + $0x2320] sm:$0xff]
    %v1306 = vld [vmem:[#allocation2 + $0x2328] sm:$0xff]
    %v1307 = vld [vmem:[#allocation2 + $0x2330] sm:$0xff]
    %v1308 = vld [vmem:[#allocation2 + $0x2338] sm:$0xff]
    %v1309 = vld [vmem:[#allocation2 + $0x2340] sm:$0xff]
    %v1310 = vld [vmem:[#allocation2 + $0x2348] sm:$0xff]
    %v1311 = vld [vmem:[#allocation2 + $0x2350] sm:$0xff]
    %v1312 = vld [vmem:[#allocation2 + $0x2358] sm:$0xff]
    %v1313 = vld [vmem:[#allocation2 + $0x2360] sm:$0xff]
    %v1314 = vld [vmem:[#allocation2 + $0x2368] sm:$0xff]
    %v1315 = vld [vmem:[#allocation2 + $0x2370] sm:$0xff]
    %v1316 = vld [vmem:[#allocation2 + $0x2378] sm:$0xff]
    %v1317 = vld [vmem:[#allocation2 + $0x2380] sm:$0xff]
    %v1318 = vld [vmem:[#allocation2 + $0x2388] sm:$0xff]
    %v1319 = vld [vmem:[#allocation2 + $0x2390] sm:$0xff]
    %v1320 = vld [vmem:[#allocation2 + $0x2398] sm:$0xff]
    %v1321 = vld [vmem:[#allocation2 + $0x23a0] sm:$0xff]
    %v1322 = vld [vmem:[#allocation2 + $0x23a8] sm:$0xff]
    %v1323 = vld [vmem:[#allocation2 + $0x23b0] sm:$0xff]
    %v1324 = vld [vmem:[#allocation2 + $0x23b8] sm:$0xff]
    %v1325 = vld [vmem:[#allocation2 + $0x23c0] sm:$0xff]
    %v1326 = vld [vmem:[#allocation2 + $0x23c8] sm:$0xff]
    %v1327 = vld [vmem:[#allocation2 + $0x23d0] sm:$0xff]
    %v1328 = vld [vmem:[#allocation2 + $0x23d8] sm:$0xff]
    %v1329 = vld [vmem:[#allocation2 + $0x23e0] sm:$0xff]
    %v1330 = vld [vmem:[#allocation2 + $0x23e8] sm:$0xff]
    %v1331 = vld [vmem:[#allocation2 + $0x23f0] sm:$0xff]
    %v1332 = vld [vmem:[#allocation2 + $0x23f8] sm:$0xff]
    %v1333 = vld [vmem:[#allocation2 + $0x2400] sm:$0xff]
    %v1334 = vld [vmem:[#allocation2 + $0x2408] sm:$0xff]
    %v1335 = vld [vmem:[#allocation2 + $0x2410] sm:$0xff]
    %v1336 = vld [vmem:[#allocation2 + $0x2418] sm:$0xff]
    %v1337 = vld [vmem:[#allocation2 + $0x2420] sm:$0xff]
    %v1338 = vld [vmem:[#allocation2 + $0x2428] sm:$0xff]
    %v1339 = vld [vmem:[#allocation2 + $0x2430] sm:$0xff]
    %v1340 = vld [vmem:[#allocation2 + $0x2438] sm:$0xff]
    %v1341 = vld [vmem:[#allocation2 + $0x2440] sm:$0xff]
    %v1342 = vld [vmem:[#allocation2 + $0x2448] sm:$0xff]
    %v1343 = vld [vmem:[#allocation2 + $0x2450] sm:$0xff]
    %v1344 = vld [vmem:[#allocation2 + $0x2458] sm:$0xff]
    %v1345 = vld [vmem:[#allocation2 + $0x2460] sm:$0xff]
    %v1346 = vld [vmem:[#allocation2 + $0x2468] sm:$0xff]
    %v1347 = vld [vmem:[#allocation2 + $0x2470] sm:$0xff]
    %v1348 = vld [vmem:[#allocation2 + $0x2478] sm:$0xff]
    %v1349 = vld [vmem:[#allocation2 + $0x2480] sm:$0xff]
    %v1350 = vld [vmem:[#allocation2 + $0x2488] sm:$0xff]
    %v1351 = vld [vmem:[#allocation2 + $0x2490] sm:$0xff]
    %v1352 = vld [vmem:[#allocation2 + $0x2498] sm:$0xff]
    %v1353 = vld [vmem:[#allocation2 + $0x24a0] sm:$0xff]
    %v1354 = vld [vmem:[#allocation2 + $0x24a8] sm:$0xff]
    %v1355 = vld [vmem:[#allocation2 + $0x24b0] sm:$0xff]
    %v1356 = vld [vmem:[#allocation2 + $0x24b8] sm:$0xff]
    %v1357 = vld [vmem:[#allocation2 + $0x24c0] sm:$0xff]
    %v1358 = vld [vmem:[#allocation2 + $0x24c8] sm:$0xff]
    %v1359 = vld [vmem:[#allocation2 + $0x24d0] sm:$0xff]
    %v1360 = vld [vmem:[#allocation2 + $0x24d8] sm:$0xff]
    %v1361 = vld [vmem:[#allocation2 + $0x24e0] sm:$0xff]
    %v1362 = vld [vmem:[#allocation2 + $0x24e8] sm:$0xff]
    %v1363 = vld [vmem:[#allocation2 + $0x24f0] sm:$0xff]
    %v1364 = vld [vmem:[#allocation2 + $0x24f8] sm:$0xff]
    %v1365 = vld [vmem:[#allocation2 + $0x2500] sm:$0xff]
    %v1366 = vld [vmem:[#allocation2 + $0x2508] sm:$0xff]
    %v1367 = vld [vmem:[#allocation2 + $0x2510] sm:$0xff]
    %v1368 = vld [vmem:[#allocation2 + $0x2518] sm:$0xff]
    %v1369 = vld [vmem:[#allocation2 + $0x2520] sm:$0xff]
    %v1370 = vld [vmem:[#allocation2 + $0x2528] sm:$0xff]
    %v1371 = vld [vmem:[#allocation2 + $0x2530] sm:$0xff]
    %v1372 = vld [vmem:[#allocation2 + $0x2538] sm:$0xff]
    %v1373 = vld [vmem:[#allocation2 + $0x2540] sm:$0xff]
    %v1374 = vld [vmem:[#allocation2 + $0x2548] sm:$0xff]
    %v1375 = vld [vmem:[#allocation2 + $0x2550] sm:$0xff]
    %v1376 = vld [vmem:[#allocation2 + $0x2558] sm:$0xff]
    %v1377 = vld [vmem:[#allocation2 + $0x2560] sm:$0xff]
    %v1378 = vld [vmem:[#allocation2 + $0x2568] sm:$0xff]
    %v1379 = vld [vmem:[#allocation2 + $0x2570] sm:$0xff]
    %v1380 = vld [vmem:[#allocation2 + $0x2578] sm:$0xff]
    %v1381 = vld [vmem:[#allocation2 + $0x2580] sm:$0xff]
    %v1382 = vld [vmem:[#allocation2 + $0x2588] sm:$0xff]
    %v1383 = vld [vmem:[#allocation2 + $0x2590] sm:$0xff]
    %v1384 = vld [vmem:[#allocation2 + $0x2598] sm:$0xff]
    %v1385 = vld [vmem:[#allocation2 + $0x25a0] sm:$0xff]
    %v1386 = vld [vmem:[#allocation2 + $0x25a8] sm:$0xff]
    %v1387 = vld [vmem:[#allocation2 + $0x25b0] sm:$0xff]
    %v1388 = vld [vmem:[#allocation2 + $0x25b8] sm:$0xff]
    %v1389 = vld [vmem:[#allocation2 + $0x25c0] sm:$0xff]
    %v1390 = vld [vmem:[#allocation2 + $0x25c8] sm:$0xff]
    %v1391 = vld [vmem:[#allocation2 + $0x25d0] sm:$0xff]
    %v1392 = vld [vmem:[#allocation2 + $0x25d8] sm:$0xff]
    %v1393 = vld [vmem:[#allocation2 + $0x25e0] sm:$0xff]
    %v1394 = vld [vmem:[#allocation2 + $0x25e8] sm:$0xff]
    %v1395 = vld [vmem:[#allocation2 + $0x25f0] sm:$0xff]
    %v1396 = vld [vmem:[#allocation2 + $0x25f8] sm:$0xff]
    %v1397 = vld [vmem:[#allocation2 + $0x2600] sm:$0xff]
    %v1398 = vld [vmem:[#allocation2 + $0x2608] sm:$0xff]
    %v1399 = vld [vmem:[#allocation2 + $0x2610] sm:$0xff]
    %v1400 = vld [vmem:[#allocation2 + $0x2618] sm:$0xff]
    %v1401 = vld [vmem:[#allocation2 + $0x2620] sm:$0xff]
    %v1402 = vld [vmem:[#allocation2 + $0x2628] sm:$0xff]
    %v1403 = vld [vmem:[#allocation2 + $0x2630] sm:$0xff]
    %v1404 = vld [vmem:[#allocation2 + $0x2638] sm:$0xff]
    %v1405 = vld [vmem:[#allocation2 + $0x2640] sm:$0xff]
    %v1406 = vld [vmem:[#allocation2 + $0x2648] sm:$0xff]
    %v1407 = vld [vmem:[#allocation2 + $0x2650] sm:$0xff]
    %v1408 = vld [vmem:[#allocation2 + $0x2658] sm:$0xff]
    %v1409 = vld [vmem:[#allocation2 + $0x2660] sm:$0xff]
    %v1410 = vld [vmem:[#allocation2 + $0x2668] sm:$0xff]
    %v1411 = vld [vmem:[#allocation2 + $0x2670] sm:$0xff]
    %v1412 = vld [vmem:[#allocation2 + $0x2678] sm:$0xff]
    %v1413 = vld [vmem:[#allocation2 + $0x2680] sm:$0xff]
    %v1414 = vld [vmem:[#allocation2 + $0x2688] sm:$0xff]
    %v1415 = vld [vmem:[#allocation2 + $0x2690] sm:$0xff]
    %v1416 = vld [vmem:[#allocation2 + $0x2698] sm:$0xff]
    %v1417 = vld [vmem:[#allocation2 + $0x26a0] sm:$0xff]
    %v1418 = vld [vmem:[#allocation2 + $0x26a8] sm:$0xff]
    %v1419 = vld [vmem:[#allocation2 + $0x26b0] sm:$0xff]
    %v1420 = vld [vmem:[#allocation2 + $0x26b8] sm:$0xff]
    %v1421 = vld [vmem:[#allocation2 + $0x26c0] sm:$0xff]
    %v1422 = vld [vmem:[#allocation2 + $0x26c8] sm:$0xff]
    %v1423 = vld [vmem:[#allocation2 + $0x26d0] sm:$0xff]
    %v1424 = vld [vmem:[#allocation2 + $0x26d8] sm:$0xff]
    %v1425 = vld [vmem:[#allocation2 + $0x26e0] sm:$0xff]
    %v1426 = vld [vmem:[#allocation2 + $0x26e8] sm:$0xff]
    %v1427 = vld [vmem:[#allocation2 + $0x26f0] sm:$0xff]
    %v1428 = vld [vmem:[#allocation2 + $0x26f8] sm:$0xff]
    %v1429 = vld [vmem:[#allocation4] sm:$0xf]
    %v1431 = vlaneseq
    %v1432 = vshrl.u32 %v1431, 7
    %v1433 = vsub.s32 0, %v1432
    %v1434 = vrot.slane %v1429, %v1433
    %v1435 = vlaneseq
    %v1436 = vshrl.u32 %v1435, 7
    %v1437 = vsub.s32 1, %v1436
    %v1438 = vrot.slane %v1429, %v1437
    %v1439 = vlaneseq
    %v1440 = vshrl.u32 %v1439, 7
    %v1441 = vsub.s32 2, %v1440
    %v1442 = vrot.slane %v1429, %v1441
    %v1443 = vlaneseq
    %v1444 = vshrl.u32 %v1443, 7
    %v1445 = vsub.s32 3, %v1444
    %v1446 = vrot.slane %v1429, %v1445
    %v2699 = vunpack.c.l.b16 %v181
    %v2700 = vunpack.c.h.b16 %v181
    %v2701 = vunpack.c.l.b16 %v182
    %v2702 = vunpack.c.h.b16 %v182
    %v2703 = vunpack.c.l.b16 %v183
    %v2704 = vunpack.c.h.b16 %v183
    %v2705 = vunpack.c.l.b16 %v184
    %v2706 = vunpack.c.h.b16 %v184
    %v2707 = vunpack.c.l.b16 %v185
    %v2708 = vunpack.c.h.b16 %v185
    %v2709 = vunpack.c.l.b16 %v186
    %v2710 = vunpack.c.h.b16 %v186
    %v2711 = vunpack.c.l.b16 %v187
    %v2712 = vunpack.c.h.b16 %v187
    %v2713 = vunpack.c.l.b16 %v188
    %v2714 = vunpack.c.h.b16 %v188
    %v2715 = vunpack.c.l.b16 %v189
    %v2716 = vunpack.c.h.b16 %v189
    %v2717 = vunpack.c.l.b16 %v190
    %v2718 = vunpack.c.h.b16 %v190
    %v2719 = vunpack.c.l.b16 %v191
    %v2720 = vunpack.c.h.b16 %v191
    %v2721 = vunpack.c.l.b16 %v192
    %v2722 = vunpack.c.h.b16 %v192
    %v2723 = vunpack.c.l.b16 %v193
    %v2724 = vunpack.c.h.b16 %v193
    %v2725 = vunpack.c.l.b16 %v194
    %v2726 = vunpack.c.h.b16 %v194
    %v2727 = vunpack.c.l.b16 %v195
    %v2728 = vunpack.c.h.b16 %v195
    %v2729 = vunpack.c.l.b16 %v196
    %v2730 = vunpack.c.h.b16 %v196
    %v2731 = vunpack.c.l.b16 %v197
    %v2732 = vunpack.c.h.b16 %v197
    %v2733 = vunpack.c.l.b16 %v198
    %v2734 = vunpack.c.h.b16 %v198
    %v2735 = vunpack.c.l.b16 %v199
    %v2736 = vunpack.c.h.b16 %v199
    %v2737 = vunpack.c.l.b16 %v200
    %v2738 = vunpack.c.h.b16 %v200
    %v2739 = vunpack.c.l.b16 %v201
    %v2740 = vunpack.c.h.b16 %v201
    %v2741 = vunpack.c.l.b16 %v202
    %v2742 = vunpack.c.h.b16 %v202
    %v2743 = vunpack.c.l.b16 %v203
    %v2744 = vunpack.c.h.b16 %v203
    %v2745 = vunpack.c.l.b16 %v204
    %v2746 = vunpack.c.h.b16 %v204
    %v2747 = vunpack.c.l.b16 %v205
    %v2748 = vunpack.c.h.b16 %v205
    %v2749 = vunpack.c.l.b16 %v206
    %v2750 = vunpack.c.h.b16 %v206
    %v2751 = vunpack.c.l.b16 %v207
    %v2752 = vunpack.c.h.b16 %v207
    %v2753 = vunpack.c.l.b16 %v208
    %v2754 = vunpack.c.h.b16 %v208
    %v2755 = vunpack.c.l.b16 %v209
    %v2756 = vunpack.c.h.b16 %v209
    %v2757 = vunpack.c.l.b16 %v210
    %v2758 = vunpack.c.h.b16 %v210
    %v2759 = vunpack.c.l.b16 %v211
    %v2760 = vunpack.c.h.b16 %v211
    %v2761 = vunpack.c.l.b16 %v212
    %v2762 = vunpack.c.h.b16 %v212
    %v2763 = vunpack.c.l.b16 %v213
    %v2764 = vunpack.c.h.b16 %v213
    %v2765 = vunpack.c.l.b16 %v214
    %v2766 = vunpack.c.h.b16 %v214
    %v2767 = vunpack.c.l.b16 %v215
    %v2768 = vunpack.c.h.b16 %v215
    %v2769 = vunpack.c.l.b16 %v216
    %v2770 = vunpack.c.h.b16 %v216
    %v2771 = vunpack.c.l.b16 %v217
    %v2772 = vunpack.c.h.b16 %v217
    %v2773 = vunpack.c.l.b16 %v218
    %v2774 = vunpack.c.h.b16 %v218
    %v2775 = vunpack.c.l.b16 %v219
    %v2776 = vunpack.c.h.b16 %v219
    %v2777 = vunpack.c.l.b16 %v220
    %v2778 = vunpack.c.h.b16 %v220
    %v2779 = vunpack.c.l.b16 %v221
    %v2780 = vunpack.c.h.b16 %v221
    %v2781 = vunpack.c.l.b16 %v222
    %v2782 = vunpack.c.h.b16 %v222
    %v2783 = vunpack.c.l.b16 %v223
    %v2784 = vunpack.c.h.b16 %v223
    %v2785 = vunpack.c.l.b16 %v224
    %v2786 = vunpack.c.h.b16 %v224
    %v2787 = vunpack.c.l.b16 %v225
    %v2788 = vunpack.c.h.b16 %v225
    %v2789 = vunpack.c.l.b16 %v226
    %v2790 = vunpack.c.h.b16 %v226
    %v2791 = vunpack.c.l.b16 %v227
    %v2792 = vunpack.c.h.b16 %v227
    %v2793 = vunpack.c.l.b16 %v228
    %v2794 = vunpack.c.h.b16 %v228
    %v2795 = vunpack.c.l.b16 %v229
    %v2796 = vunpack.c.h.b16 %v229
    %v2797 = vunpack.c.l.b16 %v230
    %v2798 = vunpack.c.h.b16 %v230
    %v2799 = vunpack.c.l.b16 %v231
    %v2800 = vunpack.c.h.b16 %v231
    %v2801 = vunpack.c.l.b16 %v232
    %v2802 = vunpack.c.h.b16 %v232
    %v2803 = vunpack.c.l.b16 %v233
    %v2804 = vunpack.c.h.b16 %v233
    %v2805 = vunpack.c.l.b16 %v234
    %v2806 = vunpack.c.h.b16 %v234
    %v2807 = vunpack.c.l.b16 %v235
    %v2808 = vunpack.c.h.b16 %v235
    %v2809 = vunpack.c.l.b16 %v236
    %v2810 = vunpack.c.h.b16 %v236
    %v2811 = vunpack.c.l.b16 %v237
    %v2812 = vunpack.c.h.b16 %v237
    %v2813 = vunpack.c.l.b16 %v238
    %v2814 = vunpack.c.h.b16 %v238
    %v2815 = vunpack.c.l.b16 %v239
    %v2816 = vunpack.c.h.b16 %v239
    %v2817 = vunpack.c.l.b16 %v240
    %v2818 = vunpack.c.h.b16 %v240
    %v2819 = vunpack.c.l.b16 %v241
    %v2820 = vunpack.c.h.b16 %v241
    %v2821 = vunpack.c.l.b16 %v242
    %v2822 = vunpack.c.h.b16 %v242
    %v2823 = vunpack.c.l.b16 %v243
    %v2824 = vunpack.c.h.b16 %v243
    %v2825 = vunpack.c.l.b16 %v244
    %v2826 = vunpack.c.h.b16 %v244
    %v2827 = vunpack.c.l.b16 %v245
    %v2828 = vunpack.c.h.b16 %v245
    %v2829 = vunpack.c.l.b16 %v246
    %v2830 = vunpack.c.h.b16 %v246
    %v2831 = vunpack.c.l.b16 %v247
    %v2832 = vunpack.c.h.b16 %v247
    %v2833 = vunpack.c.l.b16 %v248
    %v2834 = vunpack.c.h.b16 %v248
    %v2835 = vunpack.c.l.b16 %v249
    %v2836 = vunpack.c.h.b16 %v249
    %v2837 = vunpack.c.l.b16 %v250
    %v2838 = vunpack.c.h.b16 %v250
    %v2839 = vunpack.c.l.b16 %v251
    %v2840 = vunpack.c.h.b16 %v251
    %v2841 = vunpack.c.l.b16 %v252
    %v2842 = vunpack.c.h.b16 %v252
    %v2843 = vunpack.c.l.b16 %v253
    %v2844 = vunpack.c.h.b16 %v253
    %v2845 = vunpack.c.l.b16 %v254
    %v2846 = vunpack.c.h.b16 %v254
    %v2847 = vunpack.c.l.b16 %v255
    %v2848 = vunpack.c.h.b16 %v255
    %v2849 = vunpack.c.l.b16 %v256
    %v2850 = vunpack.c.h.b16 %v256
    %v2851 = vunpack.c.l.b16 %v257
    %v2852 = vunpack.c.h.b16 %v257
    %v2853 = vunpack.c.l.b16 %v258
    %v2854 = vunpack.c.h.b16 %v258
    %v2855 = vunpack.c.l.b16 %v259
    %v2856 = vunpack.c.h.b16 %v259
    %v2857 = vunpack.c.l.b16 %v260
    %v2858 = vunpack.c.h.b16 %v260
    %v2859 = vunpack.c.l.b16 %v261
    %v2860 = vunpack.c.h.b16 %v261
    %v2861 = vunpack.c.l.b16 %v262
    %v2862 = vunpack.c.h.b16 %v262
    %v2863 = vunpack.c.l.b16 %v263
    %v2864 = vunpack.c.h.b16 %v263
    %v2865 = vunpack.c.l.b16 %v264
    %v2866 = vunpack.c.h.b16 %v264
    %v2867 = vunpack.c.l.b16 %v265
    %v2868 = vunpack.c.h.b16 %v265
    %v2869 = vunpack.c.l.b16 %v266
    %v2870 = vunpack.c.h.b16 %v266
    %v2871 = vunpack.c.l.b16 %v267
    %v2872 = vunpack.c.h.b16 %v267
    %v2873 = vunpack.c.l.b16 %v268
    %v2874 = vunpack.c.h.b16 %v268
    %v2875 = vunpack.c.l.b16 %v269
    %v2876 = vunpack.c.h.b16 %v269
    %v2877 = vunpack.c.l.b16 %v270
    %v2878 = vunpack.c.h.b16 %v270
    %v2879 = vunpack.c.l.b16 %v271
    %v2880 = vunpack.c.h.b16 %v271
    %v2881 = vunpack.c.l.b16 %v272
    %v2882 = vunpack.c.h.b16 %v272
    %v2883 = vunpack.c.l.b16 %v273
    %v2884 = vunpack.c.h.b16 %v273
    %v2885 = vunpack.c.l.b16 %v274
    %v2886 = vunpack.c.h.b16 %v274
    %v2887 = vunpack.c.l.b16 %v275
    %v2888 = vunpack.c.h.b16 %v275
    %v2889 = vunpack.c.l.b16 %v276
    %v2890 = vunpack.c.h.b16 %v276
    %v2891 = vunpack.c.l.b16 %v277
    %v2892 = vunpack.c.h.b16 %v277
    %v2893 = vunpack.c.l.b16 %v278
    %v2894 = vunpack.c.h.b16 %v278
    %v2895 = vunpack.c.l.b16 %v279
    %v2896 = vunpack.c.h.b16 %v279
    %v2897 = vunpack.c.l.b16 %v280
    %v2898 = vunpack.c.h.b16 %v280
    %v2899 = vunpack.c.l.b16 %v281
    %v2900 = vunpack.c.h.b16 %v281
    %v2901 = vunpack.c.l.b16 %v282
    %v2902 = vunpack.c.h.b16 %v282
    %v2903 = vunpack.c.l.b16 %v283
    %v2904 = vunpack.c.h.b16 %v283
    %v2905 = vunpack.c.l.b16 %v284
    %v2906 = vunpack.c.h.b16 %v284
    %v2907 = vunpack.c.l.b16 %v285
    %v2908 = vunpack.c.h.b16 %v285
    %v2909 = vunpack.c.l.b16 %v286
    %v2910 = vunpack.c.h.b16 %v286
    %v2911 = vunpack.c.l.b16 %v287
    %v2912 = vunpack.c.h.b16 %v287
    %v2913 = vunpack.c.l.b16 %v288
    %v2914 = vunpack.c.h.b16 %v288
    %v2915 = vunpack.c.l.b16 %v289
    %v2916 = vunpack.c.h.b16 %v289
    %v2917 = vunpack.c.l.b16 %v290
    %v2918 = vunpack.c.h.b16 %v290
    %v2919 = vunpack.c.l.b16 %v291
    %v2920 = vunpack.c.h.b16 %v291
    %v2921 = vunpack.c.l.b16 %v292
    %v2922 = vunpack.c.h.b16 %v292
    %v2923 = vunpack.c.l.b16 %v293
    %v2924 = vunpack.c.h.b16 %v293
    %v2925 = vunpack.c.l.b16 %v294
    %v2926 = vunpack.c.h.b16 %v294
    %v2927 = vunpack.c.l.b16 %v295
    %v2928 = vunpack.c.h.b16 %v295
    %v2929 = vunpack.c.l.b16 %v296
    %v2930 = vunpack.c.h.b16 %v296
    %v2931 = vunpack.c.l.b16 %v297
    %v2932 = vunpack.c.h.b16 %v297
    %v2933 = vunpack.c.l.b16 %v298
    %v2934 = vunpack.c.h.b16 %v298
    %v2935 = vunpack.c.l.b16 %v299
    %v2936 = vunpack.c.h.b16 %v299
    %v2937 = vunpack.c.l.b16 %v300
    %v2938 = vunpack.c.h.b16 %v300
    %v2939 = vunpack.c.l.b16 %v301
    %v2940 = vunpack.c.h.b16 %v301
    %v2941 = vunpack.c.l.b16 %v302
    %v2942 = vunpack.c.h.b16 %v302
    %v2943 = vunpack.c.l.b16 %v303
    %v2944 = vunpack.c.h.b16 %v303
    %v2945 = vunpack.c.l.b16 %v304
    %v2946 = vunpack.c.h.b16 %v304
    %v2947 = vunpack.c.l.b16 %v305
    %v2948 = vunpack.c.h.b16 %v305
    %v2949 = vunpack.c.l.b16 %v306
    %v2950 = vunpack.c.h.b16 %v306
    %v2951 = vunpack.c.l.b16 %v307
    %v2952 = vunpack.c.h.b16 %v307
    %v2953 = vunpack.c.l.b16 %v308
    %v2954 = vunpack.c.h.b16 %v308
    %v2955 = vunpack.c.l.b16 %v309
    %v2956 = vunpack.c.h.b16 %v309
    %v2957 = vunpack.c.l.b16 %v310
    %v2958 = vunpack.c.h.b16 %v310
    %v2959 = vunpack.c.l.b16 %v311
    %v2960 = vunpack.c.h.b16 %v311
    %v2961 = vunpack.c.l.b16 %v312
    %v2962 = vunpack.c.h.b16 %v312
    %v2963 = vunpack.c.l.b16 %v313
    %v2964 = vunpack.c.h.b16 %v313
    %v2965 = vunpack.c.l.b16 %v314
    %v2966 = vunpack.c.h.b16 %v314
    %v2967 = vunpack.c.l.b16 %v315
    %v2968 = vunpack.c.h.b16 %v315
    %v2969 = vunpack.c.l.b16 %v316
    %v2970 = vunpack.c.h.b16 %v316
    %v2971 = vunpack.c.l.b16 %v317
    %v2972 = vunpack.c.h.b16 %v317
    %v2973 = vunpack.c.l.b16 %v318
    %v2974 = vunpack.c.h.b16 %v318
    %v2975 = vunpack.c.l.b16 %v319
    %v2976 = vunpack.c.h.b16 %v319
    %v2977 = vunpack.c.l.b16 %v320
    %v2978 = vunpack.c.h.b16 %v320
    %v2979 = vunpack.c.l.b16 %v321
    %v2980 = vunpack.c.h.b16 %v321
    %v2981 = vunpack.c.l.b16 %v322
    %v2982 = vunpack.c.h.b16 %v322
    %v2983 = vunpack.c.l.b16 %v323
    %v2984 = vunpack.c.h.b16 %v323
    %v2985 = vunpack.c.l.b16 %v324
    %v2986 = vunpack.c.h.b16 %v324
    %v2987 = vunpack.c.l.b16 %v325
    %v2988 = vunpack.c.h.b16 %v325
    %v2989 = vunpack.c.l.b16 %v326
    %v2990 = vunpack.c.h.b16 %v326
    %v2991 = vunpack.c.l.b16 %v327
    %v2992 = vunpack.c.h.b16 %v327
    %v2993 = vunpack.c.l.b16 %v328
    %v2994 = vunpack.c.h.b16 %v328
    %v2995 = vunpack.c.l.b16 %v329
    %v2996 = vunpack.c.h.b16 %v329
    %v2997 = vunpack.c.l.b16 %v330
    %v2998 = vunpack.c.h.b16 %v330
    %v2999 = vunpack.c.l.b16 %v331
    %v3000 = vunpack.c.h.b16 %v331
    %v3001 = vunpack.c.l.b16 %v332
    %v3002 = vunpack.c.h.b16 %v332
    %v3003 = vunpack.c.l.b16 %v333
    %v3004 = vunpack.c.h.b16 %v333
    %v3005 = vunpack.c.l.b16 %v334
    %v3006 = vunpack.c.h.b16 %v334
    %v3007 = vunpack.c.l.b16 %v335
    %v3008 = vunpack.c.h.b16 %v335
    %v3009 = vunpack.c.l.b16 %v336
    %v3010 = vunpack.c.h.b16 %v336
    %v3011 = vunpack.c.l.b16 %v337
    %v3012 = vunpack.c.h.b16 %v337
    %v3013 = vunpack.c.l.b16 %v338
    %v3014 = vunpack.c.h.b16 %v338
    %v3015 = vunpack.c.l.b16 %v339
    %v3016 = vunpack.c.h.b16 %v339
    %v3017 = vunpack.c.l.b16 %v340
    %v3018 = vunpack.c.h.b16 %v340
    %v3019 = vunpack.c.l.b16 %v341
    %v3020 = vunpack.c.h.b16 %v341
    %v3021 = vunpack.c.l.b16 %v342
    %v3022 = vunpack.c.h.b16 %v342
    %v3023 = vunpack.c.l.b16 %v343
    %v3024 = vunpack.c.h.b16 %v343
    %v3025 = vunpack.c.l.b16 %v344
    %v3026 = vunpack.c.h.b16 %v344
    %v3027 = vunpack.c.l.b16 %v345
    %v3028 = vunpack.c.h.b16 %v345
    %v3029 = vunpack.c.l.b16 %v346
    %v3030 = vunpack.c.h.b16 %v346
    %v3031 = vunpack.c.l.b16 %v347
    %v3032 = vunpack.c.h.b16 %v347
    %v3033 = vunpack.c.l.b16 %v348
    %v3034 = vunpack.c.h.b16 %v348
    %v3035 = vunpack.c.l.b16 %v349
    %v3036 = vunpack.c.h.b16 %v349
    %v3037 = vunpack.c.l.b16 %v350
    %v3038 = vunpack.c.h.b16 %v350
    %v3039 = vunpack.c.l.b16 %v351
    %v3040 = vunpack.c.h.b16 %v351
    %v3041 = vunpack.c.l.b16 %v352
    %v3042 = vunpack.c.h.b16 %v352
    %v3043 = vunpack.c.l.b16 %v353
    %v3044 = vunpack.c.h.b16 %v353
    %v3045 = vunpack.c.l.b16 %v354
    %v3046 = vunpack.c.h.b16 %v354
    %v3047 = vunpack.c.l.b16 %v355
    %v3048 = vunpack.c.h.b16 %v355
    %v3049 = vunpack.c.l.b16 %v356
    %v3050 = vunpack.c.h.b16 %v356
    %v3051 = vunpack.c.l.b16 %v357
    %v3052 = vunpack.c.h.b16 %v357
    %v3053 = vunpack.c.l.b16 %v358
    %v3054 = vunpack.c.h.b16 %v358
    %v3055 = vunpack.c.l.b16 %v359
    %v3056 = vunpack.c.h.b16 %v359
    %v3057 = vunpack.c.l.b16 %v360
    %v3058 = vunpack.c.h.b16 %v360
    %v3059 = vunpack.c.l.b16 %v361
    %v3060 = vunpack.c.h.b16 %v361
    %v3061 = vunpack.c.l.b16 %v362
    %v3062 = vunpack.c.h.b16 %v362
    %v3063 = vunpack.c.l.b16 %v363
    %v3064 = vunpack.c.h.b16 %v363
    %v3065 = vunpack.c.l.b16 %v364
    %v3066 = vunpack.c.h.b16 %v364
    %v3067 = vunpack.c.l.b16 %v365
    %v3068 = vunpack.c.h.b16 %v365
    %v3069 = vunpack.c.l.b16 %v366
    %v3070 = vunpack.c.h.b16 %v366
    %v3071 = vunpack.c.l.b16 %v367
    %v3072 = vunpack.c.h.b16 %v367
    %v3073 = vunpack.c.l.b16 %v368
    %v3074 = vunpack.c.h.b16 %v368
    %v3075 = vunpack.c.l.b16 %v369
    %v3076 = vunpack.c.h.b16 %v369
    %v3077 = vunpack.c.l.b16 %v370
    %v3078 = vunpack.c.h.b16 %v370
    %v3079 = vunpack.c.l.b16 %v371
    %v3080 = vunpack.c.h.b16 %v371
    %v3081 = vunpack.c.l.b16 %v372
    %v3082 = vunpack.c.h.b16 %v372
    %v3083 = vunpack.c.l.b16 %v373
    %v3084 = vunpack.c.h.b16 %v373
    %v3085 = vunpack.c.l.b16 %v374
    %v3086 = vunpack.c.h.b16 %v374
    %v3087 = vunpack.c.l.b16 %v375
    %v3088 = vunpack.c.h.b16 %v375
    %v3089 = vunpack.c.l.b16 %v376
    %v3090 = vunpack.c.h.b16 %v376
    %v3091 = vunpack.c.l.b16 %v377
    %v3092 = vunpack.c.h.b16 %v377
    %v3093 = vunpack.c.l.b16 %v378
    %v3094 = vunpack.c.h.b16 %v378
    %v3095 = vunpack.c.l.b16 %v379
    %v3096 = vunpack.c.h.b16 %v379
    %v3097 = vunpack.c.l.b16 %v380
    %v3098 = vunpack.c.h.b16 %v380
    %v3099 = vunpack.c.l.b16 %v381
    %v3100 = vunpack.c.h.b16 %v381
    %v3101 = vunpack.c.l.b16 %v382
    %v3102 = vunpack.c.h.b16 %v382
    %v3103 = vunpack.c.l.b16 %v383
    %v3104 = vunpack.c.h.b16 %v383
    %v3105 = vunpack.c.l.b16 %v384
    %v3106 = vunpack.c.h.b16 %v384
    %v3107 = vunpack.c.l.b16 %v385
    %v3108 = vunpack.c.h.b16 %v385
    %v3109 = vunpack.c.l.b16 %v386
    %v3110 = vunpack.c.h.b16 %v386
    %v3111 = vunpack.c.l.b16 %v387
    %v3112 = vunpack.c.h.b16 %v387
    %v3113 = vunpack.c.l.b16 %v388
    %v3114 = vunpack.c.h.b16 %v388
    %v3115 = vunpack.c.l.b16 %v389
    %v3116 = vunpack.c.h.b16 %v389
    %v3117 = vunpack.c.l.b16 %v390
    %v3118 = vunpack.c.h.b16 %v390
    %v3119 = vunpack.c.l.b16 %v391
    %v3120 = vunpack.c.h.b16 %v391
    %v3121 = vunpack.c.l.b16 %v392
    %v3122 = vunpack.c.h.b16 %v392
    %v3123 = vunpack.c.l.b16 %v393
    %v3124 = vunpack.c.h.b16 %v393
    %v3125 = vunpack.c.l.b16 %v394
    %v3126 = vunpack.c.h.b16 %v394
    %v3127 = vunpack.c.l.b16 %v395
    %v3128 = vunpack.c.h.b16 %v395
    %v3129 = vunpack.c.l.b16 %v396
    %v3130 = vunpack.c.h.b16 %v396
    %v3131 = vunpack.c.l.b16 %v397
    %v3132 = vunpack.c.h.b16 %v397
    %v3133 = vunpack.c.l.b16 %v398
    %v3134 = vunpack.c.h.b16 %v398
    %v3135 = vunpack.c.l.b16 %v399
    %v3136 = vunpack.c.h.b16 %v399
    %v3137 = vunpack.c.l.b16 %v400
    %v3138 = vunpack.c.h.b16 %v400
    %v3139 = vunpack.c.l.b16 %v401
    %v3140 = vunpack.c.h.b16 %v401
    %v3141 = vunpack.c.l.b16 %v402
    %v3142 = vunpack.c.h.b16 %v402
    %v3143 = vunpack.c.l.b16 %v403
    %v3144 = vunpack.c.h.b16 %v403
    %v3145 = vunpack.c.l.b16 %v404
    %v3146 = vunpack.c.h.b16 %v404
    %v3147 = vunpack.c.l.b16 %v405
    %v3148 = vunpack.c.h.b16 %v405
    %v3149 = vunpack.c.l.b16 %v406
    %v3150 = vunpack.c.h.b16 %v406
    %v3151 = vunpack.c.l.b16 %v407
    %v3152 = vunpack.c.h.b16 %v407
    %v3153 = vunpack.c.l.b16 %v408
    %v3154 = vunpack.c.h.b16 %v408
    %v3155 = vunpack.c.l.b16 %v409
    %v3156 = vunpack.c.h.b16 %v409
    %v3157 = vunpack.c.l.b16 %v410
    %v3158 = vunpack.c.h.b16 %v410
    %v3159 = vunpack.c.l.b16 %v411
    %v3160 = vunpack.c.h.b16 %v411
    %v3161 = vunpack.c.l.b16 %v412
    %v3162 = vunpack.c.h.b16 %v412
    %v3163 = vunpack.c.l.b16 %v413
    %v3164 = vunpack.c.h.b16 %v413
    %v3165 = vunpack.c.l.b16 %v414
    %v3166 = vunpack.c.h.b16 %v414
    %v3167 = vunpack.c.l.b16 %v415
    %v3168 = vunpack.c.h.b16 %v415
    %v3169 = vunpack.c.l.b16 %v416
    %v3170 = vunpack.c.h.b16 %v416
    %v3171 = vunpack.c.l.b16 %v417
    %v3172 = vunpack.c.h.b16 %v417
    %v3173 = vunpack.c.l.b16 %v418
    %v3174 = vunpack.c.h.b16 %v418
    %v3175 = vunpack.c.l.b16 %v419
    %v3176 = vunpack.c.h.b16 %v419
    %v3177 = vunpack.c.l.b16 %v420
    %v3178 = vunpack.c.h.b16 %v420
    %v3179 = vunpack.c.l.b16 %v421
    %v3180 = vunpack.c.h.b16 %v421
    %v3181 = vunpack.c.l.b16 %v422
    %v3182 = vunpack.c.h.b16 %v422
    %v3183 = vunpack.c.l.b16 %v423
    %v3184 = vunpack.c.h.b16 %v423
    %v3185 = vunpack.c.l.b16 %v424
    %v3186 = vunpack.c.h.b16 %v424
    %v3187 = vunpack.c.l.b16 %v425
    %v3188 = vunpack.c.h.b16 %v425
    %v3189 = vunpack.c.l.b16 %v426
    %v3190 = vunpack.c.h.b16 %v426
    %v3191 = vunpack.c.l.b16 %v427
    %v3192 = vunpack.c.h.b16 %v427
    %v3193 = vunpack.c.l.b16 %v428
    %v3194 = vunpack.c.h.b16 %v428
    %v3195 = vunpack.c.l.b16 %v429
    %v3196 = vunpack.c.h.b16 %v429
    %v3197 = vunpack.c.l.b16 %v430
    %v3198 = vunpack.c.h.b16 %v430
    %v3199 = vunpack.c.l.b16 %v431
    %v3200 = vunpack.c.h.b16 %v431
    %v3201 = vunpack.c.l.b16 %v432
    %v3202 = vunpack.c.h.b16 %v432
    %v3203 = vunpack.c.l.b16 %v433
    %v3204 = vunpack.c.h.b16 %v433
    %v3205 = vunpack.c.l.b16 %v434
    %v3206 = vunpack.c.h.b16 %v434
    %v3207 = vunpack.c.l.b16 %v435
    %v3208 = vunpack.c.h.b16 %v435
    %v3209 = vunpack.c.l.b16 %v436
    %v3210 = vunpack.c.h.b16 %v436
    %v3211 = vunpack.c.l.b16 %v437
    %v3212 = vunpack.c.h.b16 %v437
    %v3213 = vunpack.c.l.b16 %v438
    %v3214 = vunpack.c.h.b16 %v438
    %v3215 = vunpack.c.l.b16 %v439
    %v3216 = vunpack.c.h.b16 %v439
    %v3217 = vunpack.c.l.b16 %v440
    %v3218 = vunpack.c.h.b16 %v440
    %v3219 = vunpack.c.l.b16 %v441
    %v3220 = vunpack.c.h.b16 %v441
    %v3221 = vunpack.c.l.b16 %v442
    %v3222 = vunpack.c.h.b16 %v442
    %v3223 = vunpack.c.l.b16 %v443
    %v3224 = vunpack.c.h.b16 %v443
    %v3225 = vunpack.c.l.b16 %v444
    %v3226 = vunpack.c.h.b16 %v444
    %v3227 = vunpack.c.l.b16 %v445
    %v3228 = vunpack.c.h.b16 %v445
    %v3229 = vunpack.c.l.b16 %v446
    %v3230 = vunpack.c.h.b16 %v446
    %v3231 = vunpack.c.l.b16 %v447
    %v3232 = vunpack.c.h.b16 %v447
    %v3233 = vunpack.c.l.b16 %v448
    %v3234 = vunpack.c.h.b16 %v448
    %v3235 = vunpack.c.l.b16 %v449
    %v3236 = vunpack.c.h.b16 %v449
    %v3237 = vunpack.c.l.b16 %v450
    %v3238 = vunpack.c.h.b16 %v450
    %v3239 = vunpack.c.l.b16 %v451
    %v3240 = vunpack.c.h.b16 %v451
    %v3241 = vunpack.c.l.b16 %v452
    %v3242 = vunpack.c.h.b16 %v452
    %v3243 = vunpack.c.l.b16 %v453
    %v3244 = vunpack.c.h.b16 %v453
    %v3245 = vunpack.c.l.b16 %v454
    %v3246 = vunpack.c.h.b16 %v454
    %v3247 = vunpack.c.l.b16 %v455
    %v3248 = vunpack.c.h.b16 %v455
    %v3249 = vunpack.c.l.b16 %v456
    %v3250 = vunpack.c.h.b16 %v456
    %v3251 = vunpack.c.l.b16 %v457
    %v3252 = vunpack.c.h.b16 %v457
    %v3253 = vunpack.c.l.b16 %v458
    %v3254 = vunpack.c.h.b16 %v458
    %v3255 = vunpack.c.l.b16 %v459
    %v3256 = vunpack.c.h.b16 %v459
    %v3257 = vunpack.c.l.b16 %v460
    %v3258 = vunpack.c.h.b16 %v460
    %v3259 = vunpack.c.l.b16 %v461
    %v3260 = vunpack.c.h.b16 %v461
    %v3261 = vunpack.c.l.b16 %v462
    %v3262 = vunpack.c.h.b16 %v462
    %v3263 = vunpack.c.l.b16 %v463
    %v3264 = vunpack.c.h.b16 %v463
    %v3265 = vunpack.c.l.b16 %v464
    %v3266 = vunpack.c.h.b16 %v464
    %v3267 = vunpack.c.l.b16 %v465
    %v3268 = vunpack.c.h.b16 %v465
    %v3269 = vunpack.c.l.b16 %v466
    %v3270 = vunpack.c.h.b16 %v466
    %v3271 = vunpack.c.l.b16 %v467
    %v3272 = vunpack.c.h.b16 %v467
    %v3273 = vunpack.c.l.b16 %v468
    %v3274 = vunpack.c.h.b16 %v468
    %v3275 = vunpack.c.l.b16 %v469
    %v3276 = vunpack.c.h.b16 %v469
    %v3277 = vunpack.c.l.b16 %v470
    %v3278 = vunpack.c.h.b16 %v470
    %v3279 = vunpack.c.l.b16 %v471
    %v3280 = vunpack.c.h.b16 %v471
    %v3281 = vunpack.c.l.b16 %v472
    %v3282 = vunpack.c.h.b16 %v472
    %v3283 = vunpack.c.l.b16 %v473
    %v3284 = vunpack.c.h.b16 %v473
    %v3285 = vunpack.c.l.b16 %v474
    %v3286 = vunpack.c.h.b16 %v474
    %v3287 = vunpack.c.l.b16 %v475
    %v3288 = vunpack.c.h.b16 %v475
    %v3289 = vunpack.c.l.b16 %v476
    %v3290 = vunpack.c.h.b16 %v476
    %v3291 = vunpack.c.l.b16 %v477
    %v3292 = vunpack.c.h.b16 %v477
    %v3293 = vunpack.c.l.b16 %v478
    %v3294 = vunpack.c.h.b16 %v478
    %v3295 = vunpack.c.l.b16 %v479
    %v3296 = vunpack.c.h.b16 %v479
    %v3297 = vunpack.c.l.b16 %v480
    %v3298 = vunpack.c.h.b16 %v480
    %v3299 = vunpack.c.l.b16 %v481
    %v3300 = vunpack.c.h.b16 %v481
    %v3301 = vunpack.c.l.b16 %v482
    %v3302 = vunpack.c.h.b16 %v482
    %v3303 = vunpack.c.l.b16 %v483
    %v3304 = vunpack.c.h.b16 %v483
    %v3305 = vunpack.c.l.b16 %v484
    %v3306 = vunpack.c.h.b16 %v484
    %v3307 = vunpack.c.l.b16 %v485
    %v3308 = vunpack.c.h.b16 %v485
    %v3309 = vunpack.c.l.b16 %v486
    %v3310 = vunpack.c.h.b16 %v486
    %v3311 = vunpack.c.l.b16 %v487
    %v3312 = vunpack.c.h.b16 %v487
    %v3313 = vunpack.c.l.b16 %v488
    %v3314 = vunpack.c.h.b16 %v488
    %v3315 = vunpack.c.l.b16 %v489
    %v3316 = vunpack.c.h.b16 %v489
    %v3317 = vunpack.c.l.b16 %v490
    %v3318 = vunpack.c.h.b16 %v490
    %v3319 = vunpack.c.l.b16 %v491
    %v3320 = vunpack.c.h.b16 %v491
    %v3321 = vunpack.c.l.b16 %v492
    %v3322 = vunpack.c.h.b16 %v492
    %v3323 = vunpack.c.l.b16 %v493
    %v3324 = vunpack.c.h.b16 %v493
    %v3325 = vunpack.c.l.b16 %v494
    %v3326 = vunpack.c.h.b16 %v494
    %v3327 = vunpack.c.l.b16 %v495
    %v3328 = vunpack.c.h.b16 %v495
    %v3329 = vunpack.c.l.b16 %v496
    %v3330 = vunpack.c.h.b16 %v496
    %v3331 = vunpack.c.l.b16 %v497
    %v3332 = vunpack.c.h.b16 %v497
    %v3333 = vunpack.c.l.b16 %v498
    %v3334 = vunpack.c.h.b16 %v498
    %v3335 = vunpack.c.l.b16 %v499
    %v3336 = vunpack.c.h.b16 %v499
    %v3337 = vunpack.c.l.b16 %v500
    %v3338 = vunpack.c.h.b16 %v500
    %v3339 = vunpack.c.l.b16 %v501
    %v3340 = vunpack.c.h.b16 %v501
    %v3341 = vunpack.c.l.b16 %v502
    %v3342 = vunpack.c.h.b16 %v502
    %v3343 = vunpack.c.l.b16 %v503
    %v3344 = vunpack.c.h.b16 %v503
    %v3345 = vunpack.c.l.b16 %v504
    %v3346 = vunpack.c.h.b16 %v504
    %v3347 = vunpack.c.l.b16 %v505
    %v3348 = vunpack.c.h.b16 %v505
    %v3349 = vunpack.c.l.b16 %v506
    %v3350 = vunpack.c.h.b16 %v506
    %v3351 = vunpack.c.l.b16 %v507
    %v3352 = vunpack.c.h.b16 %v507
    %v3353 = vunpack.c.l.b16 %v508
    %v3354 = vunpack.c.h.b16 %v508
    %v3355 = vunpack.c.l.b16 %v509
    %v3356 = vunpack.c.h.b16 %v509
    %v3357 = vunpack.c.l.b16 %v510
    %v3358 = vunpack.c.h.b16 %v510
    %v3359 = vunpack.c.l.b16 %v511
    %v3360 = vunpack.c.h.b16 %v511
    %v3361 = vunpack.c.l.b16 %v512
    %v3362 = vunpack.c.h.b16 %v512
    %v3363 = vunpack.c.l.b16 %v513
    %v3364 = vunpack.c.h.b16 %v513
    %v3365 = vunpack.c.l.b16 %v514
    %v3366 = vunpack.c.h.b16 %v514
    %v3367 = vunpack.c.l.b16 %v515
    %v3368 = vunpack.c.h.b16 %v515
    %v3369 = vunpack.c.l.b16 %v516
    %v3370 = vunpack.c.h.b16 %v516
    %v3371 = vunpack.c.l.b16 %v517
    %v3372 = vunpack.c.h.b16 %v517
    %v3373 = vunpack.c.l.b16 %v518
    %v3374 = vunpack.c.h.b16 %v518
    %v3375 = vunpack.c.l.b16 %v519
    %v3376 = vunpack.c.h.b16 %v519
    %v3377 = vunpack.c.l.b16 %v520
    %v3378 = vunpack.c.h.b16 %v520
    %v3379 = vunpack.c.l.b16 %v521
    %v3380 = vunpack.c.h.b16 %v521
    %v3381 = vunpack.c.l.b16 %v522
    %v3382 = vunpack.c.h.b16 %v522
    %v3383 = vunpack.c.l.b16 %v523
    %v3384 = vunpack.c.h.b16 %v523
    %v3385 = vunpack.c.l.b16 %v524
    %v3386 = vunpack.c.h.b16 %v524
    %v3387 = vunpack.c.l.b16 %v525
    %v3388 = vunpack.c.h.b16 %v525
    %v3389 = vunpack.c.l.b16 %v526
    %v3390 = vunpack.c.h.b16 %v526
    %v3391 = vunpack.c.l.b16 %v527
    %v3392 = vunpack.c.h.b16 %v527
    %v3393 = vunpack.c.l.b16 %v528
    %v3394 = vunpack.c.h.b16 %v528
    %v3395 = vunpack.c.l.b16 %v529
    %v3396 = vunpack.c.h.b16 %v529
    %v3397 = vunpack.c.l.b16 %v530
    %v3398 = vunpack.c.h.b16 %v530
    %v3399 = vunpack.c.l.b16 %v531
    %v3400 = vunpack.c.h.b16 %v531
    %v3401 = vunpack.c.l.b16 %v532
    %v3402 = vunpack.c.h.b16 %v532
    %v3403 = vunpack.c.l.b16 %v533
    %v3404 = vunpack.c.h.b16 %v533
    %v3405 = vunpack.c.l.b16 %v534
    %v3406 = vunpack.c.h.b16 %v534
    %v3407 = vunpack.c.l.b16 %v535
    %v3408 = vunpack.c.h.b16 %v535
    %v3409 = vunpack.c.l.b16 %v536
    %v3410 = vunpack.c.h.b16 %v536
    %v3411 = vunpack.c.l.b16 %v537
    %v3412 = vunpack.c.h.b16 %v537
    %v3413 = vunpack.c.l.b16 %v538
    %v3414 = vunpack.c.h.b16 %v538
    %v3415 = vunpack.c.l.b16 %v539
    %v3416 = vunpack.c.h.b16 %v539
    %v3417 = vunpack.c.l.b16 %v540
    %v3418 = vunpack.c.h.b16 %v540
    %v3419 = vunpack.c.l.b16 %v541
    %v3420 = vunpack.c.h.b16 %v541
    %v3421 = vunpack.c.l.b16 %v542
    %v3422 = vunpack.c.h.b16 %v542
    %v3423 = vunpack.c.l.b16 %v543
    %v3424 = vunpack.c.h.b16 %v543
    %v3425 = vunpack.c.l.b16 %v544
    %v3426 = vunpack.c.h.b16 %v544
    %v3427 = vunpack.c.l.b16 %v545
    %v3428 = vunpack.c.h.b16 %v545
    %v3429 = vunpack.c.l.b16 %v546
    %v3430 = vunpack.c.h.b16 %v546
    %v3431 = vunpack.c.l.b16 %v547
    %v3432 = vunpack.c.h.b16 %v547
    %v3433 = vunpack.c.l.b16 %v548
    %v3434 = vunpack.c.h.b16 %v548
    %v3435 = vunpack.c.l.b16 %v549
    %v3436 = vunpack.c.h.b16 %v549
    %v3437 = vunpack.c.l.b16 %v550
    %v3438 = vunpack.c.h.b16 %v550
    %v3439 = vunpack.c.l.b16 %v551
    %v3440 = vunpack.c.h.b16 %v551
    %v3441 = vunpack.c.l.b16 %v552
    %v3442 = vunpack.c.h.b16 %v552
    %v3443 = vunpack.c.l.b16 %v553
    %v3444 = vunpack.c.h.b16 %v553
    %v3445 = vunpack.c.l.b16 %v554
    %v3446 = vunpack.c.h.b16 %v554
    %v3447 = vunpack.c.l.b16 %v555
    %v3448 = vunpack.c.h.b16 %v555
    %v3449 = vunpack.c.l.b16 %v556
    %v3450 = vunpack.c.h.b16 %v556
    %v3451 = vunpack.c.l.b16 %v557
    %v3452 = vunpack.c.h.b16 %v557
    %v3453 = vunpack.c.l.b16 %v558
    %v3454 = vunpack.c.h.b16 %v558
    %v3455 = vunpack.c.l.b16 %v559
    %v3456 = vunpack.c.h.b16 %v559
    %v3457 = vunpack.c.l.b16 %v560
    %v3458 = vunpack.c.h.b16 %v560
    %v3459 = vunpack.c.l.b16 %v561
    %v3460 = vunpack.c.h.b16 %v561
    %v3461 = vunpack.c.l.b16 %v562
    %v3462 = vunpack.c.h.b16 %v562
    %v3463 = vunpack.c.l.b16 %v563
    %v3464 = vunpack.c.h.b16 %v563
    %v3465 = vunpack.c.l.b16 %v564
    %v3466 = vunpack.c.h.b16 %v564
    %v3467 = vunpack.c.l.b16 %v565
    %v3468 = vunpack.c.h.b16 %v565
    %v3469 = vunpack.c.l.b16 %v566
    %v3470 = vunpack.c.h.b16 %v566
    %v3471 = vunpack.c.l.b16 %v567
    %v3472 = vunpack.c.h.b16 %v567
    %v3473 = vunpack.c.l.b16 %v568
    %v3474 = vunpack.c.h.b16 %v568
    %v3475 = vunpack.c.l.b16 %v569
    %v3476 = vunpack.c.h.b16 %v569
    %v3477 = vunpack.c.l.b16 %v570
    %v3478 = vunpack.c.h.b16 %v570
    %v3479 = vunpack.c.l.b16 %v571
    %v3480 = vunpack.c.h.b16 %v571
    %v3481 = vunpack.c.l.b16 %v572
    %v3482 = vunpack.c.h.b16 %v572
    %v3483 = vunpack.c.l.b16 %v573
    %v3484 = vunpack.c.h.b16 %v573
    %v3485 = vunpack.c.l.b16 %v574
    %v3486 = vunpack.c.h.b16 %v574
    %v3487 = vunpack.c.l.b16 %v575
    %v3488 = vunpack.c.h.b16 %v575
    %v3489 = vunpack.c.l.b16 %v576
    %v3490 = vunpack.c.h.b16 %v576
    %v3491 = vunpack.c.l.b16 %v577
    %v3492 = vunpack.c.h.b16 %v577
    %v3493 = vunpack.c.l.b16 %v578
    %v3494 = vunpack.c.h.b16 %v578
    %v3495 = vunpack.c.l.b16 %v579
    %v3496 = vunpack.c.h.b16 %v579
    %v3497 = vunpack.c.l.b16 %v580
    %v3498 = vunpack.c.h.b16 %v580
    %v3499 = vunpack.c.l.b16 %v581
    %v3500 = vunpack.c.h.b16 %v581
    %v3501 = vunpack.c.l.b16 %v582
    %v3502 = vunpack.c.h.b16 %v582
    %v3503 = vunpack.c.l.b16 %v583
    %v3504 = vunpack.c.h.b16 %v583
    %v3505 = vunpack.c.l.b16 %v584
    %v3506 = vunpack.c.h.b16 %v584
    %v3507 = vunpack.c.l.b16 %v585
    %v3508 = vunpack.c.h.b16 %v585
    %v3509 = vunpack.c.l.b16 %v586
    %v3510 = vunpack.c.h.b16 %v586
    %v3511 = vunpack.c.l.b16 %v587
    %v3512 = vunpack.c.h.b16 %v587
    %v3513 = vunpack.c.l.b16 %v588
    %v3514 = vunpack.c.h.b16 %v588
    %v3515 = vunpack.c.l.b16 %v589
    %v3516 = vunpack.c.h.b16 %v589
    %v3517 = vunpack.c.l.b16 %v590
    %v3518 = vunpack.c.h.b16 %v590
    %v3519 = vunpack.c.l.b16 %v591
    %v3520 = vunpack.c.h.b16 %v591
    %v3521 = vunpack.c.l.b16 %v592
    %v3522 = vunpack.c.h.b16 %v592
    %v3523 = vunpack.c.l.b16 %v593
    %v3524 = vunpack.c.h.b16 %v593
    %v3525 = vunpack.c.l.b16 %v594
    %v3526 = vunpack.c.h.b16 %v594
    %v3527 = vunpack.c.l.b16 %v595
    %v3528 = vunpack.c.h.b16 %v595
    %v3529 = vunpack.c.l.b16 %v596
    %v3530 = vunpack.c.h.b16 %v596
    %v3531 = vunpack.c.l.b16 %v597
    %v3532 = vunpack.c.h.b16 %v597
    %v3533 = vunpack.c.l.b16 %v598
    %v3534 = vunpack.c.h.b16 %v598
    %v3535 = vunpack.c.l.b16 %v599
    %v3536 = vunpack.c.h.b16 %v599
    %v3537 = vunpack.c.l.b16 %v600
    %v3538 = vunpack.c.h.b16 %v600
    %v3539 = vunpack.c.l.b16 %v601
    %v3540 = vunpack.c.h.b16 %v601
    %v3541 = vunpack.c.l.b16 %v602
    %v3542 = vunpack.c.h.b16 %v602
    %v3543 = vunpack.c.l.b16 %v603
    %v3544 = vunpack.c.h.b16 %v603
    %v3545 = vunpack.c.l.b16 %v604
    %v3546 = vunpack.c.h.b16 %v604
    %v3547 = vunpack.c.l.b16 %v605
    %v3548 = vunpack.c.h.b16 %v605
    %v3549 = vunpack.c.l.b16 %v606
    %v3550 = vunpack.c.h.b16 %v606
    %v3551 = vunpack.c.l.b16 %v607
    %v3552 = vunpack.c.h.b16 %v607
    %v3553 = vunpack.c.l.b16 %v608
    %v3554 = vunpack.c.h.b16 %v608
    %v3555 = vunpack.c.l.b16 %v609
    %v3556 = vunpack.c.h.b16 %v609
    %v3557 = vunpack.c.l.b16 %v610
    %v3558 = vunpack.c.h.b16 %v610
    %v3559 = vunpack.c.l.b16 %v611
    %v3560 = vunpack.c.h.b16 %v611
    %v3561 = vunpack.c.l.b16 %v612
    %v3562 = vunpack.c.h.b16 %v612
    %v3563 = vunpack.c.l.b16 %v613
    %v3564 = vunpack.c.h.b16 %v613
    %v3565 = vunpack.c.l.b16 %v614
    %v3566 = vunpack.c.h.b16 %v614
    %v3567 = vunpack.c.l.b16 %v615
    %v3568 = vunpack.c.h.b16 %v615
    %v3569 = vunpack.c.l.b16 %v616
    %v3570 = vunpack.c.h.b16 %v616
    %v3571 = vunpack.c.l.b16 %v617
    %v3572 = vunpack.c.h.b16 %v617
    %v3573 = vunpack.c.l.b16 %v618
    %v3574 = vunpack.c.h.b16 %v618
    %v3575 = vunpack.c.l.b16 %v619
    %v3576 = vunpack.c.h.b16 %v619
    %v3577 = vunpack.c.l.b16 %v620
    %v3578 = vunpack.c.h.b16 %v620
    %v3579 = vunpack.c.l.b16 %v621
    %v3580 = vunpack.c.h.b16 %v621
    %v3581 = vunpack.c.l.b16 %v622
    %v3582 = vunpack.c.h.b16 %v622
    %v3583 = vunpack.c.l.b16 %v623
    %v3584 = vunpack.c.h.b16 %v623
    %v3585 = vunpack.c.l.b16 %v624
    %v3586 = vunpack.c.h.b16 %v624
    %v3587 = vunpack.c.l.b16 %v625
    %v3588 = vunpack.c.h.b16 %v625
    %v3589 = vunpack.c.l.b16 %v626
    %v3590 = vunpack.c.h.b16 %v626
    %v3591 = vunpack.c.l.b16 %v627
    %v3592 = vunpack.c.h.b16 %v627
    %v3593 = vunpack.c.l.b16 %v628
    %v3594 = vunpack.c.h.b16 %v628
    %v3595 = vunpack.c.l.b16 %v629
    %v3596 = vunpack.c.h.b16 %v629
    %v3597 = vunpack.c.l.b16 %v630
    %v3598 = vunpack.c.h.b16 %v630
    %v3599 = vunpack.c.l.b16 %v631
    %v3600 = vunpack.c.h.b16 %v631
    %v3601 = vunpack.c.l.b16 %v632
    %v3602 = vunpack.c.h.b16 %v632
    %v3603 = vunpack.c.l.b16 %v633
    %v3604 = vunpack.c.h.b16 %v633
    %v3605 = vunpack.c.l.b16 %v634
    %v3606 = vunpack.c.h.b16 %v634
    %v3607 = vunpack.c.l.b16 %v635
    %v3608 = vunpack.c.h.b16 %v635
    %v3609 = vunpack.c.l.b16 %v636
    %v3610 = vunpack.c.h.b16 %v636
    %v3611 = vunpack.c.l.b16 %v637
    %v3612 = vunpack.c.h.b16 %v637
    %v3613 = vunpack.c.l.b16 %v638
    %v3614 = vunpack.c.h.b16 %v638
    %v3615 = vunpack.c.l.b16 %v639
    %v3616 = vunpack.c.h.b16 %v639
    %v3617 = vunpack.c.l.b16 %v640
    %v3618 = vunpack.c.h.b16 %v640
    %v3619 = vunpack.c.l.b16 %v641
    %v3620 = vunpack.c.h.b16 %v641
    %v3621 = vunpack.c.l.b16 %v642
    %v3622 = vunpack.c.h.b16 %v642
    %v3623 = vunpack.c.l.b16 %v643
    %v3624 = vunpack.c.h.b16 %v643
    %v3625 = vunpack.c.l.b16 %v644
    %v3626 = vunpack.c.h.b16 %v644
    %v3627 = vunpack.c.l.b16 %v645
    %v3628 = vunpack.c.h.b16 %v645
    %v3629 = vunpack.c.l.b16 %v646
    %v3630 = vunpack.c.h.b16 %v646
    %v3631 = vunpack.c.l.b16 %v647
    %v3632 = vunpack.c.h.b16 %v647
    %v3633 = vunpack.c.l.b16 %v648
    %v3634 = vunpack.c.h.b16 %v648
    %v3635 = vunpack.c.l.b16 %v649
    %v3636 = vunpack.c.h.b16 %v649
    %v3637 = vunpack.c.l.b16 %v650
    %v3638 = vunpack.c.h.b16 %v650
    %v3639 = vunpack.c.l.b16 %v651
    %v3640 = vunpack.c.h.b16 %v651
    %v3641 = vunpack.c.l.b16 %v652
    %v3642 = vunpack.c.h.b16 %v652
    %v3643 = vunpack.c.l.b16 %v653
    %v3644 = vunpack.c.h.b16 %v653
    %v3645 = vunpack.c.l.b16 %v654
    %v3646 = vunpack.c.h.b16 %v654
    %v3647 = vunpack.c.l.b16 %v655
    %v3648 = vunpack.c.h.b16 %v655
    %v3649 = vunpack.c.l.b16 %v656
    %v3650 = vunpack.c.h.b16 %v656
    %v3651 = vunpack.c.l.b16 %v657
    %v3652 = vunpack.c.h.b16 %v657
    %v3653 = vunpack.c.l.b16 %v658
    %v3654 = vunpack.c.h.b16 %v658
    %v3655 = vunpack.c.l.b16 %v659
    %v3656 = vunpack.c.h.b16 %v659
    %v3657 = vunpack.c.l.b16 %v660
    %v3658 = vunpack.c.h.b16 %v660
    %v3659 = vunpack.c.l.b16 %v661
    %v3660 = vunpack.c.h.b16 %v661
    %v3661 = vunpack.c.l.b16 %v662
    %v3662 = vunpack.c.h.b16 %v662
    %v3663 = vunpack.c.l.b16 %v663
    %v3664 = vunpack.c.h.b16 %v663
    %v3665 = vunpack.c.l.b16 %v664
    %v3666 = vunpack.c.h.b16 %v664
    %v3667 = vunpack.c.l.b16 %v665
    %v3668 = vunpack.c.h.b16 %v665
    %v3669 = vunpack.c.l.b16 %v666
    %v3670 = vunpack.c.h.b16 %v666
    %v3671 = vunpack.c.l.b16 %v667
    %v3672 = vunpack.c.h.b16 %v667
    %v3673 = vunpack.c.l.b16 %v668
    %v3674 = vunpack.c.h.b16 %v668
    %v3675 = vunpack.c.l.b16 %v669
    %v3676 = vunpack.c.h.b16 %v669
    %v3677 = vunpack.c.l.b16 %v670
    %v3678 = vunpack.c.h.b16 %v670
    %v3679 = vunpack.c.l.b16 %v671
    %v3680 = vunpack.c.h.b16 %v671
    %v3681 = vunpack.c.l.b16 %v672
    %v3682 = vunpack.c.h.b16 %v672
    %v3683 = vunpack.c.l.b16 %v673
    %v3684 = vunpack.c.h.b16 %v673
    %v3685 = vunpack.c.l.b16 %v674
    %v3686 = vunpack.c.h.b16 %v674
    %v3687 = vunpack.c.l.b16 %v675
    %v3688 = vunpack.c.h.b16 %v675
    %v3689 = vunpack.c.l.b16 %v676
    %v3690 = vunpack.c.h.b16 %v676
    %v3691 = vunpack.c.l.b16 %v677
    %v3692 = vunpack.c.h.b16 %v677
    %v3693 = vunpack.c.l.b16 %v678
    %v3694 = vunpack.c.h.b16 %v678
    %v3695 = vunpack.c.l.b16 %v679
    %v3696 = vunpack.c.h.b16 %v679
    %v3697 = vunpack.c.l.b16 %v680
    %v3698 = vunpack.c.h.b16 %v680
    %v3699 = vunpack.c.l.b16 %v681
    %v3700 = vunpack.c.h.b16 %v681
    %v3701 = vunpack.c.l.b16 %v682
    %v3702 = vunpack.c.h.b16 %v682
    %v3703 = vunpack.c.l.b16 %v683
    %v3704 = vunpack.c.h.b16 %v683
    %v3705 = vunpack.c.l.b16 %v684
    %v3706 = vunpack.c.h.b16 %v684
    %v3707 = vunpack.c.l.b16 %v685
    %v3708 = vunpack.c.h.b16 %v685
    %v3709 = vunpack.c.l.b16 %v686
    %v3710 = vunpack.c.h.b16 %v686
    %v3711 = vunpack.c.l.b16 %v687
    %v3712 = vunpack.c.h.b16 %v687
    %v3713 = vunpack.c.l.b16 %v688
    %v3714 = vunpack.c.h.b16 %v688
    %v3715 = vunpack.c.l.b16 %v689
    %v3716 = vunpack.c.h.b16 %v689
    %v3717 = vunpack.c.l.b16 %v690
    %v3718 = vunpack.c.h.b16 %v690
    %v3719 = vunpack.c.l.b16 %v691
    %v3720 = vunpack.c.h.b16 %v691
    %v3721 = vunpack.c.l.b16 %v692
    %v3722 = vunpack.c.h.b16 %v692
    %v3723 = vunpack.c.l.b16 %v693
    %v3724 = vunpack.c.h.b16 %v693
    %v3725 = vunpack.c.l.b16 %v694
    %v3726 = vunpack.c.h.b16 %v694
    %v3727 = vunpack.c.l.b16 %v695
    %v3728 = vunpack.c.h.b16 %v695
    %v3729 = vunpack.c.l.b16 %v696
    %v3730 = vunpack.c.h.b16 %v696
    %v3731 = vunpack.c.l.b16 %v697
    %v3732 = vunpack.c.h.b16 %v697
    %v3733 = vunpack.c.l.b16 %v698
    %v3734 = vunpack.c.h.b16 %v698
    %v3735 = vunpack.c.l.b16 %v699
    %v3736 = vunpack.c.h.b16 %v699
    %v3737 = vunpack.c.l.b16 %v700
    %v3738 = vunpack.c.h.b16 %v700
    %v3739 = vunpack.c.l.b16 %v701
    %v3740 = vunpack.c.h.b16 %v701
    %v3741 = vunpack.c.l.b16 %v702
    %v3742 = vunpack.c.h.b16 %v702
    %v3743 = vunpack.c.l.b16 %v703
    %v3744 = vunpack.c.h.b16 %v703
    %v3745 = vunpack.c.l.b16 %v704
    %v3746 = vunpack.c.h.b16 %v704
    %v3747 = vunpack.c.l.b16 %v705
    %v3748 = vunpack.c.h.b16 %v705
    %v3749 = vunpack.c.l.b16 %v706
    %v3750 = vunpack.c.h.b16 %v706
    %v3751 = vunpack.c.l.b16 %v707
    %v3752 = vunpack.c.h.b16 %v707
    %v3753 = vunpack.c.l.b16 %v708
    %v3754 = vunpack.c.h.b16 %v708
    %v3755 = vunpack.c.l.b16 %v709
    %v3756 = vunpack.c.h.b16 %v709
    %v3757 = vunpack.c.l.b16 %v710
    %v3758 = vunpack.c.h.b16 %v710
    %v3759 = vunpack.c.l.b16 %v711
    %v3760 = vunpack.c.h.b16 %v711
    %v3761 = vunpack.c.l.b16 %v712
    %v3762 = vunpack.c.h.b16 %v712
    %v3763 = vunpack.c.l.b16 %v713
    %v3764 = vunpack.c.h.b16 %v713
    %v3765 = vunpack.c.l.b16 %v714
    %v3766 = vunpack.c.h.b16 %v714
    %v3767 = vunpack.c.l.b16 %v715
    %v3768 = vunpack.c.h.b16 %v715
    %v3769 = vunpack.c.l.b16 %v716
    %v3770 = vunpack.c.h.b16 %v716
    %v3771 = vunpack.c.l.b16 %v717
    %v3772 = vunpack.c.h.b16 %v717
    %v3773 = vunpack.c.l.b16 %v718
    %v3774 = vunpack.c.h.b16 %v718
    %v3775 = vunpack.c.l.b16 %v719
    %v3776 = vunpack.c.h.b16 %v719
    %v3777 = vunpack.c.l.b16 %v720
    %v3778 = vunpack.c.h.b16 %v720
    %v3779 = vunpack.c.l.b16 %v721
    %v3780 = vunpack.c.h.b16 %v721
    %v3781 = vunpack.c.l.b16 %v722
    %v3782 = vunpack.c.h.b16 %v722
    %v3783 = vunpack.c.l.b16 %v723
    %v3784 = vunpack.c.h.b16 %v723
    %v3785 = vunpack.c.l.b16 %v724
    %v3786 = vunpack.c.h.b16 %v724
    %v3787 = vunpack.c.l.b16 %v725
    %v3788 = vunpack.c.h.b16 %v725
    %v3789 = vunpack.c.l.b16 %v726
    %v3790 = vunpack.c.h.b16 %v726
    %v3791 = vunpack.c.l.b16 %v727
    %v3792 = vunpack.c.h.b16 %v727
    %v3793 = vunpack.c.l.b16 %v728
    %v3794 = vunpack.c.h.b16 %v728
    %v3795 = vunpack.c.l.b16 %v729
    %v3796 = vunpack.c.h.b16 %v729
    %v3797 = vunpack.c.l.b16 %v730
    %v3798 = vunpack.c.h.b16 %v730
    %v3799 = vunpack.c.l.b16 %v731
    %v3800 = vunpack.c.h.b16 %v731
    %v3801 = vunpack.c.l.b16 %v732
    %v3802 = vunpack.c.h.b16 %v732
    %v3803 = vunpack.c.l.b16 %v733
    %v3804 = vunpack.c.h.b16 %v733
    %v3805 = vunpack.c.l.b16 %v734
    %v3806 = vunpack.c.h.b16 %v734
    %v3807 = vunpack.c.l.b16 %v735
    %v3808 = vunpack.c.h.b16 %v735
    %v3809 = vunpack.c.l.b16 %v736
    %v3810 = vunpack.c.h.b16 %v736
    %v3811 = vunpack.c.l.b16 %v737
    %v3812 = vunpack.c.h.b16 %v737
    %v3813 = vunpack.c.l.b16 %v738
    %v3814 = vunpack.c.h.b16 %v738
    %v3815 = vunpack.c.l.b16 %v739
    %v3816 = vunpack.c.h.b16 %v739
    %v3817 = vunpack.c.l.b16 %v740
    %v3818 = vunpack.c.h.b16 %v740
    %v3819 = vunpack.c.l.b16 %v741
    %v3820 = vunpack.c.h.b16 %v741
    %v3821 = vunpack.c.l.b16 %v742
    %v3822 = vunpack.c.h.b16 %v742
    %v3823 = vunpack.c.l.b16 %v743
    %v3824 = vunpack.c.h.b16 %v743
    %v3825 = vunpack.c.l.b16 %v744
    %v3826 = vunpack.c.h.b16 %v744
    %v3827 = vunpack.c.l.b16 %v745
    %v3828 = vunpack.c.h.b16 %v745
    %v3829 = vunpack.c.l.b16 %v746
    %v3830 = vunpack.c.h.b16 %v746
    %v3831 = vunpack.c.l.b16 %v747
    %v3832 = vunpack.c.h.b16 %v747
    %v3833 = vunpack.c.l.b16 %v748
    %v3834 = vunpack.c.h.b16 %v748
    %v3835 = vunpack.c.l.b16 %v749
    %v3836 = vunpack.c.h.b16 %v749
    %v3837 = vunpack.c.l.b16 %v750
    %v3838 = vunpack.c.h.b16 %v750
    %v3839 = vunpack.c.l.b16 %v751
    %v3840 = vunpack.c.h.b16 %v751
    %v3841 = vunpack.c.l.b16 %v752
    %v3842 = vunpack.c.h.b16 %v752
    %v3843 = vunpack.c.l.b16 %v753
    %v3844 = vunpack.c.h.b16 %v753
    %v3845 = vunpack.c.l.b16 %v754
    %v3846 = vunpack.c.h.b16 %v754
    %v3847 = vunpack.c.l.b16 %v755
    %v3848 = vunpack.c.h.b16 %v755
    %v3849 = vunpack.c.l.b16 %v756
    %v3850 = vunpack.c.h.b16 %v756
    %v3851 = vunpack.c.l.b16 %v757
    %v3852 = vunpack.c.h.b16 %v757
    %v3853 = vunpack.c.l.b16 %v758
    %v3854 = vunpack.c.h.b16 %v758
    %v3855 = vunpack.c.l.b16 %v759
    %v3856 = vunpack.c.h.b16 %v759
    %v3857 = vunpack.c.l.b16 %v760
    %v3858 = vunpack.c.h.b16 %v760
    %v3859 = vunpack.c.l.b16 %v761
    %v3860 = vunpack.c.h.b16 %v761
    %v3861 = vunpack.c.l.b16 %v762
    %v3862 = vunpack.c.h.b16 %v762
    %v3863 = vunpack.c.l.b16 %v763
    %v3864 = vunpack.c.h.b16 %v763
    %v3865 = vunpack.c.l.b16 %v764
    %v3866 = vunpack.c.h.b16 %v764
    %v3867 = vunpack.c.l.b16 %v765
    %v3868 = vunpack.c.h.b16 %v765
    %v3869 = vunpack.c.l.b16 %v766
    %v3870 = vunpack.c.h.b16 %v766
    %v3871 = vunpack.c.l.b16 %v767
    %v3872 = vunpack.c.h.b16 %v767
    %v3873 = vunpack.c.l.b16 %v768
    %v3874 = vunpack.c.h.b16 %v768
    %v3875 = vunpack.c.l.b16 %v769
    %v3876 = vunpack.c.h.b16 %v769
    %v3877 = vunpack.c.l.b16 %v770
    %v3878 = vunpack.c.h.b16 %v770
    %v3879 = vunpack.c.l.b16 %v771
    %v3880 = vunpack.c.h.b16 %v771
    %v3881 = vunpack.c.l.b16 %v772
    %v3882 = vunpack.c.h.b16 %v772
    %v3883 = vunpack.c.l.b16 %v773
    %v3884 = vunpack.c.h.b16 %v773
    %v3885 = vunpack.c.l.b16 %v774
    %v3886 = vunpack.c.h.b16 %v774
    %v3887 = vunpack.c.l.b16 %v775
    %v3888 = vunpack.c.h.b16 %v775
    %v3889 = vunpack.c.l.b16 %v776
    %v3890 = vunpack.c.h.b16 %v776
    %v3891 = vunpack.c.l.b16 %v777
    %v3892 = vunpack.c.h.b16 %v777
    %v3893 = vunpack.c.l.b16 %v778
    %v3894 = vunpack.c.h.b16 %v778
    %v3895 = vunpack.c.l.b16 %v779
    %v3896 = vunpack.c.h.b16 %v779
    %v3897 = vunpack.c.l.b16 %v780
    %v3898 = vunpack.c.h.b16 %v780
    %v3899 = vunpack.c.l.b16 %v781
    %v3900 = vunpack.c.h.b16 %v781
    %v3901 = vunpack.c.l.b16 %v782
    %v3902 = vunpack.c.h.b16 %v782
    %v3903 = vunpack.c.l.b16 %v783
    %v3904 = vunpack.c.h.b16 %v783
    %v3905 = vunpack.c.l.b16 %v784
    %v3906 = vunpack.c.h.b16 %v784
    %v3907 = vunpack.c.l.b16 %v785
    %v3908 = vunpack.c.h.b16 %v785
    %v3909 = vunpack.c.l.b16 %v786
    %v3910 = vunpack.c.h.b16 %v786
    %v3911 = vunpack.c.l.b16 %v787
    %v3912 = vunpack.c.h.b16 %v787
    %v3913 = vunpack.c.l.b16 %v788
    %v3914 = vunpack.c.h.b16 %v788
    %v3915 = vunpack.c.l.b16 %v789
    %v3916 = vunpack.c.h.b16 %v789
    %v3917 = vunpack.c.l.b16 %v790
    %v3918 = vunpack.c.h.b16 %v790
    %v3919 = vunpack.c.l.b16 %v791
    %v3920 = vunpack.c.h.b16 %v791
    %v3921 = vunpack.c.l.b16 %v792
    %v3922 = vunpack.c.h.b16 %v792
    %v3923 = vunpack.c.l.b16 %v793
    %v3924 = vunpack.c.h.b16 %v793
    %v3925 = vunpack.c.l.b16 %v794
    %v3926 = vunpack.c.h.b16 %v794
    %v3927 = vunpack.c.l.b16 %v795
    %v3928 = vunpack.c.h.b16 %v795
    %v3929 = vunpack.c.l.b16 %v796
    %v3930 = vunpack.c.h.b16 %v796
    %v3931 = vunpack.c.l.b16 %v797
    %v3932 = vunpack.c.h.b16 %v797
    %v3933 = vunpack.c.l.b16 %v798
    %v3934 = vunpack.c.h.b16 %v798
    %v3935 = vunpack.c.l.b16 %v799
    %v3936 = vunpack.c.h.b16 %v799
    %v3937 = vunpack.c.l.b16 %v800
    %v3938 = vunpack.c.h.b16 %v800
    %v3939 = vunpack.c.l.b16 %v801
    %v3940 = vunpack.c.h.b16 %v801
    %v3941 = vunpack.c.l.b16 %v802
    %v3942 = vunpack.c.h.b16 %v802
    %v3943 = vunpack.c.l.b16 %v803
    %v3944 = vunpack.c.h.b16 %v803
    %v3945 = vunpack.c.l.b16 %v804
    %v3946 = vunpack.c.h.b16 %v804
    %v3947 = vunpack.c.l.b16 %v805
    %v3948 = vunpack.c.h.b16 %v805
    %v3949 = vunpack.c.l.b16 %v806
    %v3950 = vunpack.c.h.b16 %v806
    %v3951 = vunpack.c.l.b16 %v807
    %v3952 = vunpack.c.h.b16 %v807
    %v3953 = vunpack.c.l.b16 %v808
    %v3954 = vunpack.c.h.b16 %v808
    %v3955 = vunpack.c.l.b16 %v809
    %v3956 = vunpack.c.h.b16 %v809
    %v3957 = vunpack.c.l.b16 %v810
    %v3958 = vunpack.c.h.b16 %v810
    %v3959 = vunpack.c.l.b16 %v811
    %v3960 = vunpack.c.h.b16 %v811
    %v3961 = vunpack.c.l.b16 %v812
    %v3962 = vunpack.c.h.b16 %v812
    %v3963 = vunpack.c.l.b16 %v813
    %v3964 = vunpack.c.h.b16 %v813
    %v3965 = vunpack.c.l.b16 %v814
    %v3966 = vunpack.c.h.b16 %v814
    %v3967 = vunpack.c.l.b16 %v815
    %v3968 = vunpack.c.h.b16 %v815
    %v3969 = vunpack.c.l.b16 %v816
    %v3970 = vunpack.c.h.b16 %v816
    %v3971 = vunpack.c.l.b16 %v817
    %v3972 = vunpack.c.h.b16 %v817
    %v3973 = vunpack.c.l.b16 %v818
    %v3974 = vunpack.c.h.b16 %v818
    %v3975 = vunpack.c.l.b16 %v819
    %v3976 = vunpack.c.h.b16 %v819
    %v3977 = vunpack.c.l.b16 %v820
    %v3978 = vunpack.c.h.b16 %v820
    %v3979 = vunpack.c.l.b16 %v821
    %v3980 = vunpack.c.h.b16 %v821
    %v3981 = vunpack.c.l.b16 %v822
    %v3982 = vunpack.c.h.b16 %v822
    %v3983 = vunpack.c.l.b16 %v823
    %v3984 = vunpack.c.h.b16 %v823
    %v3985 = vunpack.c.l.b16 %v824
    %v3986 = vunpack.c.h.b16 %v824
    %v3987 = vunpack.c.l.b16 %v825
    %v3988 = vunpack.c.h.b16 %v825
    %v3989 = vunpack.c.l.b16 %v826
    %v3990 = vunpack.c.h.b16 %v826
    %v3991 = vunpack.c.l.b16 %v827
    %v3992 = vunpack.c.h.b16 %v827
    %v3993 = vunpack.c.l.b16 %v828
    %v3994 = vunpack.c.h.b16 %v828
    %v3995 = vunpack.c.l.b16 %v829
    %v3996 = vunpack.c.h.b16 %v829
    %v3997 = vunpack.c.l.b16 %v830
    %v3998 = vunpack.c.h.b16 %v830
    %v3999 = vunpack.c.l.b16 %v831
    %v4000 = vunpack.c.h.b16 %v831
    %v4001 = vunpack.c.l.b16 %v832
    %v4002 = vunpack.c.h.b16 %v832
    %v4003 = vunpack.c.l.b16 %v833
    %v4004 = vunpack.c.h.b16 %v833
    %v4005 = vunpack.c.l.b16 %v834
    %v4006 = vunpack.c.h.b16 %v834
    %v4007 = vunpack.c.l.b16 %v835
    %v4008 = vunpack.c.h.b16 %v835
    %v4009 = vunpack.c.l.b16 %v836
    %v4010 = vunpack.c.h.b16 %v836
    %v4011 = vunpack.c.l.b16 %v837
    %v4012 = vunpack.c.h.b16 %v837
    %v4013 = vunpack.c.l.b16 %v838
    %v4014 = vunpack.c.h.b16 %v838
    %v4015 = vunpack.c.l.b16 %v839
    %v4016 = vunpack.c.h.b16 %v839
    %v4017 = vunpack.c.l.b16 %v840
    %v4018 = vunpack.c.h.b16 %v840
    %v4019 = vunpack.c.l.b16 %v841
    %v4020 = vunpack.c.h.b16 %v841
    %v4021 = vunpack.c.l.b16 %v842
    %v4022 = vunpack.c.h.b16 %v842
    %v4023 = vunpack.c.l.b16 %v843
    %v4024 = vunpack.c.h.b16 %v843
    %v4025 = vunpack.c.l.b16 %v844
    %v4026 = vunpack.c.h.b16 %v844
    %v4027 = vunpack.c.l.b16 %v845
    %v4028 = vunpack.c.h.b16 %v845
    %v4029 = vunpack.c.l.b16 %v846
    %v4030 = vunpack.c.h.b16 %v846
    %v4031 = vunpack.c.l.b16 %v847
    %v4032 = vunpack.c.h.b16 %v847
    %v4033 = vunpack.c.l.b16 %v848
    %v4034 = vunpack.c.h.b16 %v848
    %v4035 = vunpack.c.l.b16 %v849
    %v4036 = vunpack.c.h.b16 %v849
    %v4037 = vunpack.c.l.b16 %v850
    %v4038 = vunpack.c.h.b16 %v850
    %v4039 = vunpack.c.l.b16 %v851
    %v4040 = vunpack.c.h.b16 %v851
    %v4041 = vunpack.c.l.b16 %v852
    %v4042 = vunpack.c.h.b16 %v852
    %v4043 = vunpack.c.l.b16 %v853
    %v4044 = vunpack.c.h.b16 %v853
    %v4045 = vunpack.c.l.b16 %v854
    %v4046 = vunpack.c.h.b16 %v854
    %v4047 = vunpack.c.l.b16 %v855
    %v4048 = vunpack.c.h.b16 %v855
    %v4049 = vunpack.c.l.b16 %v856
    %v4050 = vunpack.c.h.b16 %v856
    %v4051 = vunpack.c.l.b16 %v857
    %v4052 = vunpack.c.h.b16 %v857
    %v4053 = vunpack.c.l.b16 %v858
    %v4054 = vunpack.c.h.b16 %v858
    %v4055 = vunpack.c.l.b16 %v859
    %v4056 = vunpack.c.h.b16 %v859
    %v4057 = vunpack.c.l.b16 %v860
    %v4058 = vunpack.c.h.b16 %v860
    %v4059 = vunpack.c.l.b16 %v861
    %v4060 = vunpack.c.h.b16 %v861
    %v4061 = vunpack.c.l.b16 %v862
    %v4062 = vunpack.c.h.b16 %v862
    %v4063 = vunpack.c.l.b16 %v863
    %v4064 = vunpack.c.h.b16 %v863
    %v4065 = vunpack.c.l.b16 %v864
    %v4066 = vunpack.c.h.b16 %v864
    %v4067 = vunpack.c.l.b16 %v865
    %v4068 = vunpack.c.h.b16 %v865
    %v4069 = vunpack.c.l.b16 %v866
    %v4070 = vunpack.c.h.b16 %v866
    %v4071 = vunpack.c.l.b16 %v867
    %v4072 = vunpack.c.h.b16 %v867
    %v4073 = vunpack.c.l.b16 %v868
    %v4074 = vunpack.c.h.b16 %v868
    %v4075 = vunpack.c.l.b16 %v869
    %v4076 = vunpack.c.h.b16 %v869
    %v4077 = vunpack.c.l.b16 %v870
    %v4078 = vunpack.c.h.b16 %v870
    %v4079 = vunpack.c.l.b16 %v871
    %v4080 = vunpack.c.h.b16 %v871
    %v4081 = vunpack.c.l.b16 %v872
    %v4082 = vunpack.c.h.b16 %v872
    %v4083 = vunpack.c.l.b16 %v873
    %v4084 = vunpack.c.h.b16 %v873
    %v4085 = vunpack.c.l.b16 %v874
    %v4086 = vunpack.c.h.b16 %v874
    %v4087 = vunpack.c.l.b16 %v875
    %v4088 = vunpack.c.h.b16 %v875
    %v4089 = vunpack.c.l.b16 %v876
    %v4090 = vunpack.c.h.b16 %v876
    %v4091 = vunpack.c.l.b16 %v877
    %v4092 = vunpack.c.h.b16 %v877
    %v4093 = vunpack.c.l.b16 %v878
    %v4094 = vunpack.c.h.b16 %v878
    %v4095 = vunpack.c.l.b16 %v879
    %v4096 = vunpack.c.h.b16 %v879
    %v4097 = vunpack.c.l.b16 %v880
    %v4098 = vunpack.c.h.b16 %v880
    %v4099 = vunpack.c.l.b16 %v881
    %v4100 = vunpack.c.h.b16 %v881
    %v4101 = vunpack.c.l.b16 %v882
    %v4102 = vunpack.c.h.b16 %v882
    %v4103 = vunpack.c.l.b16 %v883
    %v4104 = vunpack.c.h.b16 %v883
    %v4105 = vunpack.c.l.b16 %v884
    %v4106 = vunpack.c.h.b16 %v884
    %v4107 = vunpack.c.l.b16 %v885
    %v4108 = vunpack.c.h.b16 %v885
    %v4109 = vunpack.c.l.b16 %v886
    %v4110 = vunpack.c.h.b16 %v886
    %v4111 = vunpack.c.l.b16 %v887
    %v4112 = vunpack.c.h.b16 %v887
    %v4113 = vunpack.c.l.b16 %v888
    %v4114 = vunpack.c.h.b16 %v888
    %v4115 = vunpack.c.l.b16 %v889
    %v4116 = vunpack.c.h.b16 %v889
    %v4117 = vunpack.c.l.b16 %v890
    %v4118 = vunpack.c.h.b16 %v890
    %v4119 = vunpack.c.l.b16 %v891
    %v4120 = vunpack.c.h.b16 %v891
    %v4121 = vunpack.c.l.b16 %v892
    %v4122 = vunpack.c.h.b16 %v892
    %v4123 = vunpack.c.l.b16 %v893
    %v4124 = vunpack.c.h.b16 %v893
    %v4125 = vunpack.c.l.b16 %v894
    %v4126 = vunpack.c.h.b16 %v894
    %v4127 = vunpack.c.l.b16 %v895
    %v4128 = vunpack.c.h.b16 %v895
    %v4129 = vunpack.c.l.b16 %v896
    %v4130 = vunpack.c.h.b16 %v896
    %v4131 = vunpack.c.l.b16 %v897
    %v4132 = vunpack.c.h.b16 %v897
    %v4133 = vunpack.c.l.b16 %v898
    %v4134 = vunpack.c.h.b16 %v898
    %v4135 = vunpack.c.l.b16 %v899
    %v4136 = vunpack.c.h.b16 %v899
    %v4137 = vunpack.c.l.b16 %v900
    %v4138 = vunpack.c.h.b16 %v900
    %v4139 = vunpack.c.l.b16 %v901
    %v4140 = vunpack.c.h.b16 %v901
    %v4141 = vunpack.c.l.b16 %v902
    %v4142 = vunpack.c.h.b16 %v902
    %v4143 = vunpack.c.l.b16 %v903
    %v4144 = vunpack.c.h.b16 %v903
    %v4145 = vunpack.c.l.b16 %v904
    %v4146 = vunpack.c.h.b16 %v904
    %v4147 = vunpack.c.l.b16 %v905
    %v4148 = vunpack.c.h.b16 %v905
    %v4149 = vunpack.c.l.b16 %v906
    %v4150 = vunpack.c.h.b16 %v906
    %v4151 = vunpack.c.l.b16 %v907
    %v4152 = vunpack.c.h.b16 %v907
    %v4153 = vunpack.c.l.b16 %v908
    %v4154 = vunpack.c.h.b16 %v908
    %v4155 = vunpack.c.l.b16 %v909
    %v4156 = vunpack.c.h.b16 %v909
    %v4157 = vunpack.c.l.b16 %v910
    %v4158 = vunpack.c.h.b16 %v910
    %v4159 = vunpack.c.l.b16 %v911
    %v4160 = vunpack.c.h.b16 %v911
    %v4161 = vunpack.c.l.b16 %v912
    %v4162 = vunpack.c.h.b16 %v912
    %v4163 = vunpack.c.l.b16 %v913
    %v4164 = vunpack.c.h.b16 %v913
    %v4165 = vunpack.c.l.b16 %v914
    %v4166 = vunpack.c.h.b16 %v914
    %v4167 = vunpack.c.l.b16 %v915
    %v4168 = vunpack.c.h.b16 %v915
    %v4169 = vunpack.c.l.b16 %v916
    %v4170 = vunpack.c.h.b16 %v916
    %v4171 = vunpack.c.l.b16 %v917
    %v4172 = vunpack.c.h.b16 %v917
    %v4173 = vunpack.c.l.b16 %v918
    %v4174 = vunpack.c.h.b16 %v918
    %v4175 = vunpack.c.l.b16 %v919
    %v4176 = vunpack.c.h.b16 %v919
    %v4177 = vunpack.c.l.b16 %v920
    %v4178 = vunpack.c.h.b16 %v920
    %v4179 = vunpack.c.l.b16 %v921
    %v4180 = vunpack.c.h.b16 %v921
    %v4181 = vunpack.c.l.b16 %v922
    %v4182 = vunpack.c.h.b16 %v922
    %v4183 = vunpack.c.l.b16 %v923
    %v4184 = vunpack.c.h.b16 %v923
    %v4185 = vunpack.c.l.b16 %v924
    %v4186 = vunpack.c.h.b16 %v924
    %v4187 = vunpack.c.l.b16 %v925
    %v4188 = vunpack.c.h.b16 %v925
    %v4189 = vunpack.c.l.b16 %v926
    %v4190 = vunpack.c.h.b16 %v926
    %v4191 = vunpack.c.l.b16 %v927
    %v4192 = vunpack.c.h.b16 %v927
    %v4193 = vunpack.c.l.b16 %v928
    %v4194 = vunpack.c.h.b16 %v928
    %v4195 = vunpack.c.l.b16 %v929
    %v4196 = vunpack.c.h.b16 %v929
    %v4197 = vunpack.c.l.b16 %v930
    %v4198 = vunpack.c.h.b16 %v930
    %v4199 = vunpack.c.l.b16 %v931
    %v4200 = vunpack.c.h.b16 %v931
    %v4201 = vunpack.c.l.b16 %v932
    %v4202 = vunpack.c.h.b16 %v932
    %v4203 = vunpack.c.l.b16 %v933
    %v4204 = vunpack.c.h.b16 %v933
    %v4205 = vunpack.c.l.b16 %v934
    %v4206 = vunpack.c.h.b16 %v934
    %v4207 = vunpack.c.l.b16 %v935
    %v4208 = vunpack.c.h.b16 %v935
    %v4209 = vunpack.c.l.b16 %v936
    %v4210 = vunpack.c.h.b16 %v936
    %v4211 = vunpack.c.l.b16 %v937
    %v4212 = vunpack.c.h.b16 %v937
    %v4213 = vunpack.c.l.b16 %v938
    %v4214 = vunpack.c.h.b16 %v938
    %v4215 = vunpack.c.l.b16 %v939
    %v4216 = vunpack.c.h.b16 %v939
    %v4217 = vunpack.c.l.b16 %v940
    %v4218 = vunpack.c.h.b16 %v940
    %v4219 = vunpack.c.l.b16 %v941
    %v4220 = vunpack.c.h.b16 %v941
    %v4221 = vunpack.c.l.b16 %v942
    %v4222 = vunpack.c.h.b16 %v942
    %v4223 = vunpack.c.l.b16 %v943
    %v4224 = vunpack.c.h.b16 %v943
    %v4225 = vunpack.c.l.b16 %v944
    %v4226 = vunpack.c.h.b16 %v944
    %v4227 = vunpack.c.l.b16 %v945
    %v4228 = vunpack.c.h.b16 %v945
    %v4229 = vunpack.c.l.b16 %v946
    %v4230 = vunpack.c.h.b16 %v946
    %v4231 = vunpack.c.l.b16 %v947
    %v4232 = vunpack.c.h.b16 %v947
    %v4233 = vunpack.c.l.b16 %v948
    %v4234 = vunpack.c.h.b16 %v948
    %v4235 = vunpack.c.l.b16 %v949
    %v4236 = vunpack.c.h.b16 %v949
    %v4237 = vunpack.c.l.b16 %v950
    %v4238 = vunpack.c.h.b16 %v950
    %v4239 = vunpack.c.l.b16 %v951
    %v4240 = vunpack.c.h.b16 %v951
    %v4241 = vunpack.c.l.b16 %v952
    %v4242 = vunpack.c.h.b16 %v952
    %v4243 = vunpack.c.l.b16 %v953
    %v4244 = vunpack.c.h.b16 %v953
    %v4245 = vunpack.c.l.b16 %v954
    %v4246 = vunpack.c.h.b16 %v954
    %v4247 = vunpack.c.l.b16 %v955
    %v4248 = vunpack.c.h.b16 %v955
    %v4249 = vunpack.c.l.b16 %v956
    %v4250 = vunpack.c.h.b16 %v956
    %v4251 = vunpack.c.l.b16 %v957
    %v4252 = vunpack.c.h.b16 %v957
    %v4253 = vunpack.c.l.b16 %v958
    %v4254 = vunpack.c.h.b16 %v958
    %v4255 = vunpack.c.l.b16 %v959
    %v4256 = vunpack.c.h.b16 %v959
    %v4257 = vunpack.c.l.b16 %v960
    %v4258 = vunpack.c.h.b16 %v960
    %v4259 = vunpack.c.l.b16 %v961
    %v4260 = vunpack.c.h.b16 %v961
    %v4261 = vunpack.c.l.b16 %v962
    %v4262 = vunpack.c.h.b16 %v962
    %v4263 = vunpack.c.l.b16 %v963
    %v4264 = vunpack.c.h.b16 %v963
    %v4265 = vunpack.c.l.b16 %v964
    %v4266 = vunpack.c.h.b16 %v964
    %v4267 = vunpack.c.l.b16 %v965
    %v4268 = vunpack.c.h.b16 %v965
    %v4269 = vunpack.c.l.b16 %v966
    %v4270 = vunpack.c.h.b16 %v966
    %v4271 = vunpack.c.l.b16 %v967
    %v4272 = vunpack.c.h.b16 %v967
    %v4273 = vunpack.c.l.b16 %v968
    %v4274 = vunpack.c.h.b16 %v968
    %v4275 = vunpack.c.l.b16 %v969
    %v4276 = vunpack.c.h.b16 %v969
    %v4277 = vunpack.c.l.b16 %v970
    %v4278 = vunpack.c.h.b16 %v970
    %v4279 = vunpack.c.l.b16 %v971
    %v4280 = vunpack.c.h.b16 %v971
    %v4281 = vunpack.c.l.b16 %v972
    %v4282 = vunpack.c.h.b16 %v972
    %v4283 = vunpack.c.l.b16 %v973
    %v4284 = vunpack.c.h.b16 %v973
    %v4285 = vunpack.c.l.b16 %v974
    %v4286 = vunpack.c.h.b16 %v974
    %v4287 = vunpack.c.l.b16 %v975
    %v4288 = vunpack.c.h.b16 %v975
    %v4289 = vunpack.c.l.b16 %v976
    %v4290 = vunpack.c.h.b16 %v976
    %v4291 = vunpack.c.l.b16 %v977
    %v4292 = vunpack.c.h.b16 %v977
    %v4293 = vunpack.c.l.b16 %v978
    %v4294 = vunpack.c.h.b16 %v978
    %v4295 = vunpack.c.l.b16 %v979
    %v4296 = vunpack.c.h.b16 %v979
    %v4297 = vunpack.c.l.b16 %v980
    %v4298 = vunpack.c.h.b16 %v980
    %v4299 = vunpack.c.l.b16 %v981
    %v4300 = vunpack.c.h.b16 %v981
    %v4301 = vunpack.c.l.b16 %v982
    %v4302 = vunpack.c.h.b16 %v982
    %v4303 = vunpack.c.l.b16 %v983
    %v4304 = vunpack.c.h.b16 %v983
    %v4305 = vunpack.c.l.b16 %v984
    %v4306 = vunpack.c.h.b16 %v984
    %v4307 = vunpack.c.l.b16 %v985
    %v4308 = vunpack.c.h.b16 %v985
    %v4309 = vunpack.c.l.b16 %v986
    %v4310 = vunpack.c.h.b16 %v986
    %v4311 = vunpack.c.l.b16 %v987
    %v4312 = vunpack.c.h.b16 %v987
    %v4313 = vunpack.c.l.b16 %v988
    %v4314 = vunpack.c.h.b16 %v988
    %v4315 = vunpack.c.l.b16 %v989
    %v4316 = vunpack.c.h.b16 %v989
    %v4317 = vunpack.c.l.b16 %v990
    %v4318 = vunpack.c.h.b16 %v990
    %v4319 = vunpack.c.l.b16 %v991
    %v4320 = vunpack.c.h.b16 %v991
    %v4321 = vunpack.c.l.b16 %v992
    %v4322 = vunpack.c.h.b16 %v992
    %v4323 = vunpack.c.l.b16 %v993
    %v4324 = vunpack.c.h.b16 %v993
    %v4325 = vunpack.c.l.b16 %v994
    %v4326 = vunpack.c.h.b16 %v994
    %v4327 = vunpack.c.l.b16 %v995
    %v4328 = vunpack.c.h.b16 %v995
    %v4329 = vunpack.c.l.b16 %v996
    %v4330 = vunpack.c.h.b16 %v996
    %v4331 = vunpack.c.l.b16 %v997
    %v4332 = vunpack.c.h.b16 %v997
    %v4333 = vunpack.c.l.b16 %v998
    %v4334 = vunpack.c.h.b16 %v998
    %v4335 = vunpack.c.l.b16 %v999
    %v4336 = vunpack.c.h.b16 %v999
    %v4337 = vunpack.c.l.b16 %v1000
    %v4338 = vunpack.c.h.b16 %v1000
    %v4339 = vunpack.c.l.b16 %v1001
    %v4340 = vunpack.c.h.b16 %v1001
    %v4341 = vunpack.c.l.b16 %v1002
    %v4342 = vunpack.c.h.b16 %v1002
    %v4343 = vunpack.c.l.b16 %v1003
    %v4344 = vunpack.c.h.b16 %v1003
    %v4345 = vunpack.c.l.b16 %v1004
    %v4346 = vunpack.c.h.b16 %v1004
    %v4347 = vunpack.c.l.b16 %v1005
    %v4348 = vunpack.c.h.b16 %v1005
    %v4349 = vunpack.c.l.b16 %v1006
    %v4350 = vunpack.c.h.b16 %v1006
    %v4351 = vunpack.c.l.b16 %v1007
    %v4352 = vunpack.c.h.b16 %v1007
    %v4353 = vunpack.c.l.b16 %v1008
    %v4354 = vunpack.c.h.b16 %v1008
    %v4355 = vunpack.c.l.b16 %v1009
    %v4356 = vunpack.c.h.b16 %v1009
    %v4357 = vunpack.c.l.b16 %v1010
    %v4358 = vunpack.c.h.b16 %v1010
    %v4359 = vunpack.c.l.b16 %v1011
    %v4360 = vunpack.c.h.b16 %v1011
    %v4361 = vunpack.c.l.b16 %v1012
    %v4362 = vunpack.c.h.b16 %v1012
    %v4363 = vunpack.c.l.b16 %v1013
    %v4364 = vunpack.c.h.b16 %v1013
    %v4365 = vunpack.c.l.b16 %v1014
    %v4366 = vunpack.c.h.b16 %v1014
    %v4367 = vunpack.c.l.b16 %v1015
    %v4368 = vunpack.c.h.b16 %v1015
    %v4369 = vunpack.c.l.b16 %v1016
    %v4370 = vunpack.c.h.b16 %v1016
    %v4371 = vunpack.c.l.b16 %v1017
    %v4372 = vunpack.c.h.b16 %v1017
    %v4373 = vunpack.c.l.b16 %v1018
    %v4374 = vunpack.c.h.b16 %v1018
    %v4375 = vunpack.c.l.b16 %v1019
    %v4376 = vunpack.c.h.b16 %v1019
    %v4377 = vunpack.c.l.b16 %v1020
    %v4378 = vunpack.c.h.b16 %v1020
    %v4379 = vunpack.c.l.b16 %v1021
    %v4380 = vunpack.c.h.b16 %v1021
    %v4381 = vunpack.c.l.b16 %v1022
    %v4382 = vunpack.c.h.b16 %v1022
    %v4383 = vunpack.c.l.b16 %v1023
    %v4384 = vunpack.c.h.b16 %v1023
    %v4385 = vunpack.c.l.b16 %v1024
    %v4386 = vunpack.c.h.b16 %v1024
    %v4387 = vunpack.c.l.b16 %v1025
    %v4388 = vunpack.c.h.b16 %v1025
    %v4389 = vunpack.c.l.b16 %v1026
    %v4390 = vunpack.c.h.b16 %v1026
    %v4391 = vunpack.c.l.b16 %v1027
    %v4392 = vunpack.c.h.b16 %v1027
    %v4393 = vunpack.c.l.b16 %v1028
    %v4394 = vunpack.c.h.b16 %v1028
    %v4395 = vunpack.c.l.b16 %v1029
    %v4396 = vunpack.c.h.b16 %v1029
    %v4397 = vunpack.c.l.b16 %v1030
    %v4398 = vunpack.c.h.b16 %v1030
    %v4399 = vunpack.c.l.b16 %v1031
    %v4400 = vunpack.c.h.b16 %v1031
    %v4401 = vunpack.c.l.b16 %v1032
    %v4402 = vunpack.c.h.b16 %v1032
    %v4403 = vunpack.c.l.b16 %v1033
    %v4404 = vunpack.c.h.b16 %v1033
    %v4405 = vunpack.c.l.b16 %v1034
    %v4406 = vunpack.c.h.b16 %v1034
    %v4407 = vunpack.c.l.b16 %v1035
    %v4408 = vunpack.c.h.b16 %v1035
    %v4409 = vunpack.c.l.b16 %v1036
    %v4410 = vunpack.c.h.b16 %v1036
    %v4411 = vunpack.c.l.b16 %v1037
    %v4412 = vunpack.c.h.b16 %v1037
    %v4413 = vunpack.c.l.b16 %v1038
    %v4414 = vunpack.c.h.b16 %v1038
    %v4415 = vunpack.c.l.b16 %v1039
    %v4416 = vunpack.c.h.b16 %v1039
    %v4417 = vunpack.c.l.b16 %v1040
    %v4418 = vunpack.c.h.b16 %v1040
    %v4419 = vunpack.c.l.b16 %v1041
    %v4420 = vunpack.c.h.b16 %v1041
    %v4421 = vunpack.c.l.b16 %v1042
    %v4422 = vunpack.c.h.b16 %v1042
    %v4423 = vunpack.c.l.b16 %v1043
    %v4424 = vunpack.c.h.b16 %v1043
    %v4425 = vunpack.c.l.b16 %v1044
    %v4426 = vunpack.c.h.b16 %v1044
    %v4427 = vunpack.c.l.b16 %v1045
    %v4428 = vunpack.c.h.b16 %v1045
    %v4429 = vunpack.c.l.b16 %v1046
    %v4430 = vunpack.c.h.b16 %v1046
    %v4431 = vunpack.c.l.b16 %v1047
    %v4432 = vunpack.c.h.b16 %v1047
    %v4433 = vunpack.c.l.b16 %v1048
    %v4434 = vunpack.c.h.b16 %v1048
    %v4435 = vunpack.c.l.b16 %v1049
    %v4436 = vunpack.c.h.b16 %v1049
    %v4437 = vunpack.c.l.b16 %v1050
    %v4438 = vunpack.c.h.b16 %v1050
    %v4439 = vunpack.c.l.b16 %v1051
    %v4440 = vunpack.c.h.b16 %v1051
    %v4441 = vunpack.c.l.b16 %v1052
    %v4442 = vunpack.c.h.b16 %v1052
    %v4443 = vunpack.c.l.b16 %v1053
    %v4444 = vunpack.c.h.b16 %v1053
    %v4445 = vunpack.c.l.b16 %v1054
    %v4446 = vunpack.c.h.b16 %v1054
    %v4447 = vunpack.c.l.b16 %v1055
    %v4448 = vunpack.c.h.b16 %v1055
    %v4449 = vunpack.c.l.b16 %v1056
    %v4450 = vunpack.c.h.b16 %v1056
    %v4451 = vunpack.c.l.b16 %v1057
    %v4452 = vunpack.c.h.b16 %v1057
    %v4453 = vunpack.c.l.b16 %v1058
    %v4454 = vunpack.c.h.b16 %v1058
    %v4455 = vunpack.c.l.b16 %v1059
    %v4456 = vunpack.c.h.b16 %v1059
    %v4457 = vunpack.c.l.b16 %v1060
    %v4458 = vunpack.c.h.b16 %v1060
    %v4459 = vunpack.c.l.b16 %v1061
    %v4460 = vunpack.c.h.b16 %v1061
    %v4461 = vunpack.c.l.b16 %v1062
    %v4462 = vunpack.c.h.b16 %v1062
    %v4463 = vunpack.c.l.b16 %v1063
    %v4464 = vunpack.c.h.b16 %v1063
    %v4465 = vunpack.c.l.b16 %v1064
    %v4466 = vunpack.c.h.b16 %v1064
    %v4467 = vunpack.c.l.b16 %v1065
    %v4468 = vunpack.c.h.b16 %v1065
    %v4469 = vunpack.c.l.b16 %v1066
    %v4470 = vunpack.c.h.b16 %v1066
    %v4471 = vunpack.c.l.b16 %v1067
    %v4472 = vunpack.c.h.b16 %v1067
    %v4473 = vunpack.c.l.b16 %v1068
    %v4474 = vunpack.c.h.b16 %v1068
    %v4475 = vunpack.c.l.b16 %v1069
    %v4476 = vunpack.c.h.b16 %v1069
    %v4477 = vunpack.c.l.b16 %v1070
    %v4478 = vunpack.c.h.b16 %v1070
    %v4479 = vunpack.c.l.b16 %v1071
    %v4480 = vunpack.c.h.b16 %v1071
    %v4481 = vunpack.c.l.b16 %v1072
    %v4482 = vunpack.c.h.b16 %v1072
    %v4483 = vunpack.c.l.b16 %v1073
    %v4484 = vunpack.c.h.b16 %v1073
    %v4485 = vunpack.c.l.b16 %v1074
    %v4486 = vunpack.c.h.b16 %v1074
    %v4487 = vunpack.c.l.b16 %v1075
    %v4488 = vunpack.c.h.b16 %v1075
    %v4489 = vunpack.c.l.b16 %v1076
    %v4490 = vunpack.c.h.b16 %v1076
    %v4491 = vunpack.c.l.b16 %v1077
    %v4492 = vunpack.c.h.b16 %v1077
    %v4493 = vunpack.c.l.b16 %v1078
    %v4494 = vunpack.c.h.b16 %v1078
    %v4495 = vunpack.c.l.b16 %v1079
    %v4496 = vunpack.c.h.b16 %v1079
    %v4497 = vunpack.c.l.b16 %v1080
    %v4498 = vunpack.c.h.b16 %v1080
    %v4499 = vunpack.c.l.b16 %v1081
    %v4500 = vunpack.c.h.b16 %v1081
    %v4501 = vunpack.c.l.b16 %v1082
    %v4502 = vunpack.c.h.b16 %v1082
    %v4503 = vunpack.c.l.b16 %v1083
    %v4504 = vunpack.c.h.b16 %v1083
    %v4505 = vunpack.c.l.b16 %v1084
    %v4506 = vunpack.c.h.b16 %v1084
    %v4507 = vunpack.c.l.b16 %v1085
    %v4508 = vunpack.c.h.b16 %v1085
    %v4509 = vunpack.c.l.b16 %v1086
    %v4510 = vunpack.c.h.b16 %v1086
    %v4511 = vunpack.c.l.b16 %v1087
    %v4512 = vunpack.c.h.b16 %v1087
    %v4513 = vunpack.c.l.b16 %v1088
    %v4514 = vunpack.c.h.b16 %v1088
    %v4515 = vunpack.c.l.b16 %v1089
    %v4516 = vunpack.c.h.b16 %v1089
    %v4517 = vunpack.c.l.b16 %v1090
    %v4518 = vunpack.c.h.b16 %v1090
    %v4519 = vunpack.c.l.b16 %v1091
    %v4520 = vunpack.c.h.b16 %v1091
    %v4521 = vunpack.c.l.b16 %v1092
    %v4522 = vunpack.c.h.b16 %v1092
    %v4523 = vunpack.c.l.b16 %v1093
    %v4524 = vunpack.c.h.b16 %v1093
    %v4525 = vunpack.c.l.b16 %v1094
    %v4526 = vunpack.c.h.b16 %v1094
    %v4527 = vunpack.c.l.b16 %v1095
    %v4528 = vunpack.c.h.b16 %v1095
    %v4529 = vunpack.c.l.b16 %v1096
    %v4530 = vunpack.c.h.b16 %v1096
    %v4531 = vunpack.c.l.b16 %v1097
    %v4532 = vunpack.c.h.b16 %v1097
    %v4533 = vunpack.c.l.b16 %v1098
    %v4534 = vunpack.c.h.b16 %v1098
    %v4535 = vunpack.c.l.b16 %v1099
    %v4536 = vunpack.c.h.b16 %v1099
    %v4537 = vunpack.c.l.b16 %v1100
    %v4538 = vunpack.c.h.b16 %v1100
    %v4539 = vunpack.c.l.b16 %v1101
    %v4540 = vunpack.c.h.b16 %v1101
    %v4541 = vunpack.c.l.b16 %v1102
    %v4542 = vunpack.c.h.b16 %v1102
    %v4543 = vunpack.c.l.b16 %v1103
    %v4544 = vunpack.c.h.b16 %v1103
    %v4545 = vunpack.c.l.b16 %v1104
    %v4546 = vunpack.c.h.b16 %v1104
    %v4547 = vunpack.c.l.b16 %v1105
    %v4548 = vunpack.c.h.b16 %v1105
    %v4549 = vunpack.c.l.b16 %v1106
    %v4550 = vunpack.c.h.b16 %v1106
    %v4551 = vunpack.c.l.b16 %v1107
    %v4552 = vunpack.c.h.b16 %v1107
    %v4553 = vunpack.c.l.b16 %v1108
    %v4554 = vunpack.c.h.b16 %v1108
    %v4555 = vunpack.c.l.b16 %v1109
    %v4556 = vunpack.c.h.b16 %v1109
    %v4557 = vunpack.c.l.b16 %v1110
    %v4558 = vunpack.c.h.b16 %v1110
    %v4559 = vunpack.c.l.b16 %v1111
    %v4560 = vunpack.c.h.b16 %v1111
    %v4561 = vunpack.c.l.b16 %v1112
    %v4562 = vunpack.c.h.b16 %v1112
    %v4563 = vunpack.c.l.b16 %v1113
    %v4564 = vunpack.c.h.b16 %v1113
    %v4565 = vunpack.c.l.b16 %v1114
    %v4566 = vunpack.c.h.b16 %v1114
    %v4567 = vunpack.c.l.b16 %v1115
    %v4568 = vunpack.c.h.b16 %v1115
    %v4569 = vunpack.c.l.b16 %v1116
    %v4570 = vunpack.c.h.b16 %v1116
    %v4571 = vunpack.c.l.b16 %v1117
    %v4572 = vunpack.c.h.b16 %v1117
    %v4573 = vunpack.c.l.b16 %v1118
    %v4574 = vunpack.c.h.b16 %v1118
    %v4575 = vunpack.c.l.b16 %v1119
    %v4576 = vunpack.c.h.b16 %v1119
    %v4577 = vunpack.c.l.b16 %v1120
    %v4578 = vunpack.c.h.b16 %v1120
    %v4579 = vunpack.c.l.b16 %v1121
    %v4580 = vunpack.c.h.b16 %v1121
    %v4581 = vunpack.c.l.b16 %v1122
    %v4582 = vunpack.c.h.b16 %v1122
    %v4583 = vunpack.c.l.b16 %v1123
    %v4584 = vunpack.c.h.b16 %v1123
    %v4585 = vunpack.c.l.b16 %v1124
    %v4586 = vunpack.c.h.b16 %v1124
    %v4587 = vunpack.c.l.b16 %v1125
    %v4588 = vunpack.c.h.b16 %v1125
    %v4589 = vunpack.c.l.b16 %v1126
    %v4590 = vunpack.c.h.b16 %v1126
    %v4591 = vunpack.c.l.b16 %v1127
    %v4592 = vunpack.c.h.b16 %v1127
    %v4593 = vunpack.c.l.b16 %v1128
    %v4594 = vunpack.c.h.b16 %v1128
    %v4595 = vunpack.c.l.b16 %v1129
    %v4596 = vunpack.c.h.b16 %v1129
    %v4597 = vunpack.c.l.b16 %v1130
    %v4598 = vunpack.c.h.b16 %v1130
    %v4599 = vunpack.c.l.b16 %v1131
    %v4600 = vunpack.c.h.b16 %v1131
    %v4601 = vunpack.c.l.b16 %v1132
    %v4602 = vunpack.c.h.b16 %v1132
    %v4603 = vunpack.c.l.b16 %v1133
    %v4604 = vunpack.c.h.b16 %v1133
    %v4605 = vunpack.c.l.b16 %v1134
    %v4606 = vunpack.c.h.b16 %v1134
    %v4607 = vunpack.c.l.b16 %v1135
    %v4608 = vunpack.c.h.b16 %v1135
    %v4609 = vunpack.c.l.b16 %v1136
    %v4610 = vunpack.c.h.b16 %v1136
    %v4611 = vunpack.c.l.b16 %v1137
    %v4612 = vunpack.c.h.b16 %v1137
    %v4613 = vunpack.c.l.b16 %v1138
    %v4614 = vunpack.c.h.b16 %v1138
    %v4615 = vunpack.c.l.b16 %v1139
    %v4616 = vunpack.c.h.b16 %v1139
    %v4617 = vunpack.c.l.b16 %v1140
    %v4618 = vunpack.c.h.b16 %v1140
    %v4619 = vunpack.c.l.b16 %v1141
    %v4620 = vunpack.c.h.b16 %v1141
    %v4621 = vunpack.c.l.b16 %v1142
    %v4622 = vunpack.c.h.b16 %v1142
    %v4623 = vunpack.c.l.b16 %v1143
    %v4624 = vunpack.c.h.b16 %v1143
    %v4625 = vunpack.c.l.b16 %v1144
    %v4626 = vunpack.c.h.b16 %v1144
    %v4627 = vunpack.c.l.b16 %v1145
    %v4628 = vunpack.c.h.b16 %v1145
    %v4629 = vunpack.c.l.b16 %v1146
    %v4630 = vunpack.c.h.b16 %v1146
    %v4631 = vunpack.c.l.b16 %v1147
    %v4632 = vunpack.c.h.b16 %v1147
    %v4633 = vunpack.c.l.b16 %v1148
    %v4634 = vunpack.c.h.b16 %v1148
    %v4635 = vunpack.c.l.b16 %v1149
    %v4636 = vunpack.c.h.b16 %v1149
    %v4637 = vunpack.c.l.b16 %v1150
    %v4638 = vunpack.c.h.b16 %v1150
    %v4639 = vunpack.c.l.b16 %v1151
    %v4640 = vunpack.c.h.b16 %v1151
    %v4641 = vunpack.c.l.b16 %v1152
    %v4642 = vunpack.c.h.b16 %v1152
    %v4643 = vunpack.c.l.b16 %v1153
    %v4644 = vunpack.c.h.b16 %v1153
    %v4645 = vunpack.c.l.b16 %v1154
    %v4646 = vunpack.c.h.b16 %v1154
    %v4647 = vunpack.c.l.b16 %v1155
    %v4648 = vunpack.c.h.b16 %v1155
    %v4649 = vunpack.c.l.b16 %v1156
    %v4650 = vunpack.c.h.b16 %v1156
    %v4651 = vunpack.c.l.b16 %v1157
    %v4652 = vunpack.c.h.b16 %v1157
    %v4653 = vunpack.c.l.b16 %v1158
    %v4654 = vunpack.c.h.b16 %v1158
    %v4655 = vunpack.c.l.b16 %v1159
    %v4656 = vunpack.c.h.b16 %v1159
    %v4657 = vunpack.c.l.b16 %v1160
    %v4658 = vunpack.c.h.b16 %v1160
    %v4659 = vunpack.c.l.b16 %v1161
    %v4660 = vunpack.c.h.b16 %v1161
    %v4661 = vunpack.c.l.b16 %v1162
    %v4662 = vunpack.c.h.b16 %v1162
    %v4663 = vunpack.c.l.b16 %v1163
    %v4664 = vunpack.c.h.b16 %v1163
    %v4665 = vunpack.c.l.b16 %v1164
    %v4666 = vunpack.c.h.b16 %v1164
    %v4667 = vunpack.c.l.b16 %v1165
    %v4668 = vunpack.c.h.b16 %v1165
    %v4669 = vunpack.c.l.b16 %v1166
    %v4670 = vunpack.c.h.b16 %v1166
    %v4671 = vunpack.c.l.b16 %v1167
    %v4672 = vunpack.c.h.b16 %v1167
    %v4673 = vunpack.c.l.b16 %v1168
    %v4674 = vunpack.c.h.b16 %v1168
    %v4675 = vunpack.c.l.b16 %v1169
    %v4676 = vunpack.c.h.b16 %v1169
    %v4677 = vunpack.c.l.b16 %v1170
    %v4678 = vunpack.c.h.b16 %v1170
    %v4679 = vunpack.c.l.b16 %v1171
    %v4680 = vunpack.c.h.b16 %v1171
    %v4681 = vunpack.c.l.b16 %v1172
    %v4682 = vunpack.c.h.b16 %v1172
    %v4683 = vunpack.c.l.b16 %v1173
    %v4684 = vunpack.c.h.b16 %v1173
    %v4685 = vunpack.c.l.b16 %v1174
    %v4686 = vunpack.c.h.b16 %v1174
    %v4687 = vunpack.c.l.b16 %v1175
    %v4688 = vunpack.c.h.b16 %v1175
    %v4689 = vunpack.c.l.b16 %v1176
    %v4690 = vunpack.c.h.b16 %v1176
    %v4691 = vunpack.c.l.b16 %v1177
    %v4692 = vunpack.c.h.b16 %v1177
    %v4693 = vunpack.c.l.b16 %v1178
    %v4694 = vunpack.c.h.b16 %v1178
    %v4695 = vunpack.c.l.b16 %v1179
    %v4696 = vunpack.c.h.b16 %v1179
    %v4697 = vunpack.c.l.b16 %v1180
    %v4698 = vunpack.c.h.b16 %v1180
    %v4699 = vunpack.c.l.b16 %v1181
    %v4700 = vunpack.c.h.b16 %v1181
    %v4701 = vunpack.c.l.b16 %v1182
    %v4702 = vunpack.c.h.b16 %v1182
    %v4703 = vunpack.c.l.b16 %v1183
    %v4704 = vunpack.c.h.b16 %v1183
    %v4705 = vunpack.c.l.b16 %v1184
    %v4706 = vunpack.c.h.b16 %v1184
    %v4707 = vunpack.c.l.b16 %v1185
    %v4708 = vunpack.c.h.b16 %v1185
    %v4709 = vunpack.c.l.b16 %v1186
    %v4710 = vunpack.c.h.b16 %v1186
    %v4711 = vunpack.c.l.b16 %v1187
    %v4712 = vunpack.c.h.b16 %v1187
    %v4713 = vunpack.c.l.b16 %v1188
    %v4714 = vunpack.c.h.b16 %v1188
    %v4715 = vunpack.c.l.b16 %v1189
    %v4716 = vunpack.c.h.b16 %v1189
    %v4717 = vunpack.c.l.b16 %v1190
    %v4718 = vunpack.c.h.b16 %v1190
    %v4719 = vunpack.c.l.b16 %v1191
    %v4720 = vunpack.c.h.b16 %v1191
    %v4721 = vunpack.c.l.b16 %v1192
    %v4722 = vunpack.c.h.b16 %v1192
    %v4723 = vunpack.c.l.b16 %v1193
    %v4724 = vunpack.c.h.b16 %v1193
    %v4725 = vunpack.c.l.b16 %v1194
    %v4726 = vunpack.c.h.b16 %v1194
    %v4727 = vunpack.c.l.b16 %v1195
    %v4728 = vunpack.c.h.b16 %v1195
    %v4729 = vunpack.c.l.b16 %v1196
    %v4730 = vunpack.c.h.b16 %v1196
    %v4731 = vunpack.c.l.b16 %v1197
    %v4732 = vunpack.c.h.b16 %v1197
    %v4733 = vunpack.c.l.b16 %v1198
    %v4734 = vunpack.c.h.b16 %v1198
    %v4735 = vunpack.c.l.b16 %v1199
    %v4736 = vunpack.c.h.b16 %v1199
    %v4737 = vunpack.c.l.b16 %v1200
    %v4738 = vunpack.c.h.b16 %v1200
    %v4739 = vunpack.c.l.b16 %v1201
    %v4740 = vunpack.c.h.b16 %v1201
    %v4741 = vunpack.c.l.b16 %v1202
    %v4742 = vunpack.c.h.b16 %v1202
    %v4743 = vunpack.c.l.b16 %v1203
    %v4744 = vunpack.c.h.b16 %v1203
    %v4745 = vunpack.c.l.b16 %v1204
    %v4746 = vunpack.c.h.b16 %v1204
    %v4747 = vunpack.c.l.b16 %v1205
    %v4748 = vunpack.c.h.b16 %v1205
    %v4749 = vunpack.c.l.b16 %v1206
    %v4750 = vunpack.c.h.b16 %v1206
    %v4751 = vunpack.c.l.b16 %v1207
    %v4752 = vunpack.c.h.b16 %v1207
    %v4753 = vunpack.c.l.b16 %v1208
    %v4754 = vunpack.c.h.b16 %v1208
    %v4755 = vunpack.c.l.b16 %v1209
    %v4756 = vunpack.c.h.b16 %v1209
    %v4757 = vunpack.c.l.b16 %v1210
    %v4758 = vunpack.c.h.b16 %v1210
    %v4759 = vunpack.c.l.b16 %v1211
    %v4760 = vunpack.c.h.b16 %v1211
    %v4761 = vunpack.c.l.b16 %v1212
    %v4762 = vunpack.c.h.b16 %v1212
    %v4763 = vunpack.c.l.b16 %v1213
    %v4764 = vunpack.c.h.b16 %v1213
    %v4765 = vunpack.c.l.b16 %v1214
    %v4766 = vunpack.c.h.b16 %v1214
    %v4767 = vunpack.c.l.b16 %v1215
    %v4768 = vunpack.c.h.b16 %v1215
    %v4769 = vunpack.c.l.b16 %v1216
    %v4770 = vunpack.c.h.b16 %v1216
    %v4771 = vunpack.c.l.b16 %v1217
    %v4772 = vunpack.c.h.b16 %v1217
    %v4773 = vunpack.c.l.b16 %v1218
    %v4774 = vunpack.c.h.b16 %v1218
    %v4775 = vunpack.c.l.b16 %v1219
    %v4776 = vunpack.c.h.b16 %v1219
    %v4777 = vunpack.c.l.b16 %v1220
    %v4778 = vunpack.c.h.b16 %v1220
    %v4779 = vunpack.c.l.b16 %v1221
    %v4780 = vunpack.c.h.b16 %v1221
    %v4781 = vunpack.c.l.b16 %v1222
    %v4782 = vunpack.c.h.b16 %v1222
    %v4783 = vunpack.c.l.b16 %v1223
    %v4784 = vunpack.c.h.b16 %v1223
    %v4785 = vunpack.c.l.b16 %v1224
    %v4786 = vunpack.c.h.b16 %v1224
    %v4787 = vunpack.c.l.b16 %v1225
    %v4788 = vunpack.c.h.b16 %v1225
    %v4789 = vunpack.c.l.b16 %v1226
    %v4790 = vunpack.c.h.b16 %v1226
    %v4791 = vunpack.c.l.b16 %v1227
    %v4792 = vunpack.c.h.b16 %v1227
    %v4793 = vunpack.c.l.b16 %v1228
    %v4794 = vunpack.c.h.b16 %v1228
    %v4795 = vunpack.c.l.b16 %v1229
    %v4796 = vunpack.c.h.b16 %v1229
    %v4797 = vunpack.c.l.b16 %v1230
    %v4798 = vunpack.c.h.b16 %v1230
    %v4799 = vunpack.c.l.b16 %v1231
    %v4800 = vunpack.c.h.b16 %v1231
    %v4801 = vunpack.c.l.b16 %v1232
    %v4802 = vunpack.c.h.b16 %v1232
    %v4803 = vunpack.c.l.b16 %v1233
    %v4804 = vunpack.c.h.b16 %v1233
    %v4805 = vunpack.c.l.b16 %v1234
    %v4806 = vunpack.c.h.b16 %v1234
    %v4807 = vunpack.c.l.b16 %v1235
    %v4808 = vunpack.c.h.b16 %v1235
    %v4809 = vunpack.c.l.b16 %v1236
    %v4810 = vunpack.c.h.b16 %v1236
    %v4811 = vunpack.c.l.b16 %v1237
    %v4812 = vunpack.c.h.b16 %v1237
    %v4813 = vunpack.c.l.b16 %v1238
    %v4814 = vunpack.c.h.b16 %v1238
    %v4815 = vunpack.c.l.b16 %v1239
    %v4816 = vunpack.c.h.b16 %v1239
    %v4817 = vunpack.c.l.b16 %v1240
    %v4818 = vunpack.c.h.b16 %v1240
    %v4819 = vunpack.c.l.b16 %v1241
    %v4820 = vunpack.c.h.b16 %v1241
    %v4821 = vunpack.c.l.b16 %v1242
    %v4822 = vunpack.c.h.b16 %v1242
    %v4823 = vunpack.c.l.b16 %v1243
    %v4824 = vunpack.c.h.b16 %v1243
    %v4825 = vunpack.c.l.b16 %v1244
    %v4826 = vunpack.c.h.b16 %v1244
    %v4827 = vunpack.c.l.b16 %v1245
    %v4828 = vunpack.c.h.b16 %v1245
    %v4829 = vunpack.c.l.b16 %v1246
    %v4830 = vunpack.c.h.b16 %v1246
    %v4831 = vunpack.c.l.b16 %v1247
    %v4832 = vunpack.c.h.b16 %v1247
    %v4833 = vunpack.c.l.b16 %v1248
    %v4834 = vunpack.c.h.b16 %v1248
    %v4835 = vunpack.c.l.b16 %v1249
    %v4836 = vunpack.c.h.b16 %v1249
    %v4837 = vunpack.c.l.b16 %v1250
    %v4838 = vunpack.c.h.b16 %v1250
    %v4839 = vunpack.c.l.b16 %v1251
    %v4840 = vunpack.c.h.b16 %v1251
    %v4841 = vunpack.c.l.b16 %v1252
    %v4842 = vunpack.c.h.b16 %v1252
    %v4843 = vunpack.c.l.b16 %v1253
    %v4844 = vunpack.c.h.b16 %v1253
    %v4845 = vunpack.c.l.b16 %v1254
    %v4846 = vunpack.c.h.b16 %v1254
    %v4847 = vunpack.c.l.b16 %v1255
    %v4848 = vunpack.c.h.b16 %v1255
    %v4849 = vunpack.c.l.b16 %v1256
    %v4850 = vunpack.c.h.b16 %v1256
    %v4851 = vunpack.c.l.b16 %v1257
    %v4852 = vunpack.c.h.b16 %v1257
    %v4853 = vunpack.c.l.b16 %v1258
    %v4854 = vunpack.c.h.b16 %v1258
    %v4855 = vunpack.c.l.b16 %v1259
    %v4856 = vunpack.c.h.b16 %v1259
    %v4857 = vunpack.c.l.b16 %v1260
    %v4858 = vunpack.c.h.b16 %v1260
    %v4859 = vunpack.c.l.b16 %v1261
    %v4860 = vunpack.c.h.b16 %v1261
    %v4861 = vunpack.c.l.b16 %v1262
    %v4862 = vunpack.c.h.b16 %v1262
    %v4863 = vunpack.c.l.b16 %v1263
    %v4864 = vunpack.c.h.b16 %v1263
    %v4865 = vunpack.c.l.b16 %v1264
    %v4866 = vunpack.c.h.b16 %v1264
    %v4867 = vunpack.c.l.b16 %v1265
    %v4868 = vunpack.c.h.b16 %v1265
    %v4869 = vunpack.c.l.b16 %v1266
    %v4870 = vunpack.c.h.b16 %v1266
    %v4871 = vunpack.c.l.b16 %v1267
    %v4872 = vunpack.c.h.b16 %v1267
    %v4873 = vunpack.c.l.b16 %v1268
    %v4874 = vunpack.c.h.b16 %v1268
    %v4875 = vunpack.c.l.b16 %v1269
    %v4876 = vunpack.c.h.b16 %v1269
    %v4877 = vunpack.c.l.b16 %v1270
    %v4878 = vunpack.c.h.b16 %v1270
    %v4879 = vunpack.c.l.b16 %v1271
    %v4880 = vunpack.c.h.b16 %v1271
    %v4881 = vunpack.c.l.b16 %v1272
    %v4882 = vunpack.c.h.b16 %v1272
    %v4883 = vunpack.c.l.b16 %v1273
    %v4884 = vunpack.c.h.b16 %v1273
    %v4885 = vunpack.c.l.b16 %v1274
    %v4886 = vunpack.c.h.b16 %v1274
    %v4887 = vunpack.c.l.b16 %v1275
    %v4888 = vunpack.c.h.b16 %v1275
    %v4889 = vunpack.c.l.b16 %v1276
    %v4890 = vunpack.c.h.b16 %v1276
    %v4891 = vunpack.c.l.b16 %v1277
    %v4892 = vunpack.c.h.b16 %v1277
    %v4893 = vunpack.c.l.b16 %v1278
    %v4894 = vunpack.c.h.b16 %v1278
    %v4895 = vunpack.c.l.b16 %v1279
    %v4896 = vunpack.c.h.b16 %v1279
    %v4897 = vunpack.c.l.b16 %v1280
    %v4898 = vunpack.c.h.b16 %v1280
    %v4899 = vunpack.c.l.b16 %v1281
    %v4900 = vunpack.c.h.b16 %v1281
    %v4901 = vunpack.c.l.b16 %v1282
    %v4902 = vunpack.c.h.b16 %v1282
    %v4903 = vunpack.c.l.b16 %v1283
    %v4904 = vunpack.c.h.b16 %v1283
    %v4905 = vunpack.c.l.b16 %v1284
    %v4906 = vunpack.c.h.b16 %v1284
    %v4907 = vunpack.c.l.b16 %v1285
    %v4908 = vunpack.c.h.b16 %v1285
    %v4909 = vunpack.c.l.b16 %v1286
    %v4910 = vunpack.c.h.b16 %v1286
    %v4911 = vunpack.c.l.b16 %v1287
    %v4912 = vunpack.c.h.b16 %v1287
    %v4913 = vunpack.c.l.b16 %v1288
    %v4914 = vunpack.c.h.b16 %v1288
    %v4915 = vunpack.c.l.b16 %v1289
    %v4916 = vunpack.c.h.b16 %v1289
    %v4917 = vunpack.c.l.b16 %v1290
    %v4918 = vunpack.c.h.b16 %v1290
    %v4919 = vunpack.c.l.b16 %v1291
    %v4920 = vunpack.c.h.b16 %v1291
    %v4921 = vunpack.c.l.b16 %v1292
    %v4922 = vunpack.c.h.b16 %v1292
    %v4923 = vunpack.c.l.b16 %v1293
    %v4924 = vunpack.c.h.b16 %v1293
    %v4925 = vunpack.c.l.b16 %v1294
    %v4926 = vunpack.c.h.b16 %v1294
    %v4927 = vunpack.c.l.b16 %v1295
    %v4928 = vunpack.c.h.b16 %v1295
    %v4929 = vunpack.c.l.b16 %v1296
    %v4930 = vunpack.c.h.b16 %v1296
    %v4931 = vunpack.c.l.b16 %v1297
    %v4932 = vunpack.c.h.b16 %v1297
    %v4933 = vunpack.c.l.b16 %v1298
    %v4934 = vunpack.c.h.b16 %v1298
    %v4935 = vunpack.c.l.b16 %v1299
    %v4936 = vunpack.c.h.b16 %v1299
    %v4937 = vunpack.c.l.b16 %v1300
    %v4938 = vunpack.c.h.b16 %v1300
    %v4939 = vunpack.c.l.b16 %v1301
    %v4940 = vunpack.c.h.b16 %v1301
    %v4941 = vunpack.c.l.b16 %v1302
    %v4942 = vunpack.c.h.b16 %v1302
    %v4943 = vunpack.c.l.b16 %v1303
    %v4944 = vunpack.c.h.b16 %v1303
    %v4945 = vunpack.c.l.b16 %v1304
    %v4946 = vunpack.c.h.b16 %v1304
    %v4947 = vunpack.c.l.b16 %v1305
    %v4948 = vunpack.c.h.b16 %v1305
    %v4949 = vunpack.c.l.b16 %v1306
    %v4950 = vunpack.c.h.b16 %v1306
    %v4951 = vunpack.c.l.b16 %v1307
    %v4952 = vunpack.c.h.b16 %v1307
    %v4953 = vunpack.c.l.b16 %v1308
    %v4954 = vunpack.c.h.b16 %v1308
    %v4955 = vunpack.c.l.b16 %v1309
    %v4956 = vunpack.c.h.b16 %v1309
    %v4957 = vunpack.c.l.b16 %v1310
    %v4958 = vunpack.c.h.b16 %v1310
    %v4959 = vunpack.c.l.b16 %v1311
    %v4960 = vunpack.c.h.b16 %v1311
    %v4961 = vunpack.c.l.b16 %v1312
    %v4962 = vunpack.c.h.b16 %v1312
    %v4963 = vunpack.c.l.b16 %v1313
    %v4964 = vunpack.c.h.b16 %v1313
    %v4965 = vunpack.c.l.b16 %v1314
    %v4966 = vunpack.c.h.b16 %v1314
    %v4967 = vunpack.c.l.b16 %v1315
    %v4968 = vunpack.c.h.b16 %v1315
    %v4969 = vunpack.c.l.b16 %v1316
    %v4970 = vunpack.c.h.b16 %v1316
    %v4971 = vunpack.c.l.b16 %v1317
    %v4972 = vunpack.c.h.b16 %v1317
    %v4973 = vunpack.c.l.b16 %v1318
    %v4974 = vunpack.c.h.b16 %v1318
    %v4975 = vunpack.c.l.b16 %v1319
    %v4976 = vunpack.c.h.b16 %v1319
    %v4977 = vunpack.c.l.b16 %v1320
    %v4978 = vunpack.c.h.b16 %v1320
    %v4979 = vunpack.c.l.b16 %v1321
    %v4980 = vunpack.c.h.b16 %v1321
    %v4981 = vunpack.c.l.b16 %v1322
    %v4982 = vunpack.c.h.b16 %v1322
    %v4983 = vunpack.c.l.b16 %v1323
    %v4984 = vunpack.c.h.b16 %v1323
    %v4985 = vunpack.c.l.b16 %v1324
    %v4986 = vunpack.c.h.b16 %v1324
    %v4987 = vunpack.c.l.b16 %v1325
    %v4988 = vunpack.c.h.b16 %v1325
    %v4989 = vunpack.c.l.b16 %v1326
    %v4990 = vunpack.c.h.b16 %v1326
    %v4991 = vunpack.c.l.b16 %v1327
    %v4992 = vunpack.c.h.b16 %v1327
    %v4993 = vunpack.c.l.b16 %v1328
    %v4994 = vunpack.c.h.b16 %v1328
    %v4995 = vunpack.c.l.b16 %v1329
    %v4996 = vunpack.c.h.b16 %v1329
    %v4997 = vunpack.c.l.b16 %v1330
    %v4998 = vunpack.c.h.b16 %v1330
    %v4999 = vunpack.c.l.b16 %v1331
    %v5000 = vunpack.c.h.b16 %v1331
    %v5001 = vunpack.c.l.b16 %v1332
    %v5002 = vunpack.c.h.b16 %v1332
    %v5003 = vunpack.c.l.b16 %v1333
    %v5004 = vunpack.c.h.b16 %v1333
    %v5005 = vunpack.c.l.b16 %v1334
    %v5006 = vunpack.c.h.b16 %v1334
    %v5007 = vunpack.c.l.b16 %v1335
    %v5008 = vunpack.c.h.b16 %v1335
    %v5009 = vunpack.c.l.b16 %v1336
    %v5010 = vunpack.c.h.b16 %v1336
    %v5011 = vunpack.c.l.b16 %v1337
    %v5012 = vunpack.c.h.b16 %v1337
    %v5013 = vunpack.c.l.b16 %v1338
    %v5014 = vunpack.c.h.b16 %v1338
    %v5015 = vunpack.c.l.b16 %v1339
    %v5016 = vunpack.c.h.b16 %v1339
    %v5017 = vunpack.c.l.b16 %v1340
    %v5018 = vunpack.c.h.b16 %v1340
    %v5019 = vunpack.c.l.b16 %v1341
    %v5020 = vunpack.c.h.b16 %v1341
    %v5021 = vunpack.c.l.b16 %v1342
    %v5022 = vunpack.c.h.b16 %v1342
    %v5023 = vunpack.c.l.b16 %v1343
    %v5024 = vunpack.c.h.b16 %v1343
    %v5025 = vunpack.c.l.b16 %v1344
    %v5026 = vunpack.c.h.b16 %v1344
    %v5027 = vunpack.c.l.b16 %v1345
    %v5028 = vunpack.c.h.b16 %v1345
    %v5029 = vunpack.c.l.b16 %v1346
    %v5030 = vunpack.c.h.b16 %v1346
    %v5031 = vunpack.c.l.b16 %v1347
    %v5032 = vunpack.c.h.b16 %v1347
    %v5033 = vunpack.c.l.b16 %v1348
    %v5034 = vunpack.c.h.b16 %v1348
    %v5035 = vunpack.c.l.b16 %v1349
    %v5036 = vunpack.c.h.b16 %v1349
    %v5037 = vunpack.c.l.b16 %v1350
    %v5038 = vunpack.c.h.b16 %v1350
    %v5039 = vunpack.c.l.b16 %v1351
    %v5040 = vunpack.c.h.b16 %v1351
    %v5041 = vunpack.c.l.b16 %v1352
    %v5042 = vunpack.c.h.b16 %v1352
    %v5043 = vunpack.c.l.b16 %v1353
    %v5044 = vunpack.c.h.b16 %v1353
    %v5045 = vunpack.c.l.b16 %v1354
    %v5046 = vunpack.c.h.b16 %v1354
    %v5047 = vunpack.c.l.b16 %v1355
    %v5048 = vunpack.c.h.b16 %v1355
    %v5049 = vunpack.c.l.b16 %v1356
    %v5050 = vunpack.c.h.b16 %v1356
    %v5051 = vunpack.c.l.b16 %v1357
    %v5052 = vunpack.c.h.b16 %v1357
    %v5053 = vunpack.c.l.b16 %v1358
    %v5054 = vunpack.c.h.b16 %v1358
    %v5055 = vunpack.c.l.b16 %v1359
    %v5056 = vunpack.c.h.b16 %v1359
    %v5057 = vunpack.c.l.b16 %v1360
    %v5058 = vunpack.c.h.b16 %v1360
    %v5059 = vunpack.c.l.b16 %v1361
    %v5060 = vunpack.c.h.b16 %v1361
    %v5061 = vunpack.c.l.b16 %v1362
    %v5062 = vunpack.c.h.b16 %v1362
    %v5063 = vunpack.c.l.b16 %v1363
    %v5064 = vunpack.c.h.b16 %v1363
    %v5065 = vunpack.c.l.b16 %v1364
    %v5066 = vunpack.c.h.b16 %v1364
    %v5067 = vunpack.c.l.b16 %v1365
    %v5068 = vunpack.c.h.b16 %v1365
    %v5069 = vunpack.c.l.b16 %v1366
    %v5070 = vunpack.c.h.b16 %v1366
    %v5071 = vunpack.c.l.b16 %v1367
    %v5072 = vunpack.c.h.b16 %v1367
    %v5073 = vunpack.c.l.b16 %v1368
    %v5074 = vunpack.c.h.b16 %v1368
    %v5075 = vunpack.c.l.b16 %v1369
    %v5076 = vunpack.c.h.b16 %v1369
    %v5077 = vunpack.c.l.b16 %v1370
    %v5078 = vunpack.c.h.b16 %v1370
    %v5079 = vunpack.c.l.b16 %v1371
    %v5080 = vunpack.c.h.b16 %v1371
    %v5081 = vunpack.c.l.b16 %v1372
    %v5082 = vunpack.c.h.b16 %v1372
    %v5083 = vunpack.c.l.b16 %v1373
    %v5084 = vunpack.c.h.b16 %v1373
    %v5085 = vunpack.c.l.b16 %v1374
    %v5086 = vunpack.c.h.b16 %v1374
    %v5087 = vunpack.c.l.b16 %v1375
    %v5088 = vunpack.c.h.b16 %v1375
    %v5089 = vunpack.c.l.b16 %v1376
    %v5090 = vunpack.c.h.b16 %v1376
    %v5091 = vunpack.c.l.b16 %v1377
    %v5092 = vunpack.c.h.b16 %v1377
    %v5093 = vunpack.c.l.b16 %v1378
    %v5094 = vunpack.c.h.b16 %v1378
    %v5095 = vunpack.c.l.b16 %v1379
    %v5096 = vunpack.c.h.b16 %v1379
    %v5097 = vunpack.c.l.b16 %v1380
    %v5098 = vunpack.c.h.b16 %v1380
    %v5099 = vunpack.c.l.b16 %v1381
    %v5100 = vunpack.c.h.b16 %v1381
    %v5101 = vunpack.c.l.b16 %v1382
    %v5102 = vunpack.c.h.b16 %v1382
    %v5103 = vunpack.c.l.b16 %v1383
    %v5104 = vunpack.c.h.b16 %v1383
    %v5105 = vunpack.c.l.b16 %v1384
    %v5106 = vunpack.c.h.b16 %v1384
    %v5107 = vunpack.c.l.b16 %v1385
    %v5108 = vunpack.c.h.b16 %v1385
    %v5109 = vunpack.c.l.b16 %v1386
    %v5110 = vunpack.c.h.b16 %v1386
    %v5111 = vunpack.c.l.b16 %v1387
    %v5112 = vunpack.c.h.b16 %v1387
    %v5113 = vunpack.c.l.b16 %v1388
    %v5114 = vunpack.c.h.b16 %v1388
    %v5115 = vunpack.c.l.b16 %v1389
    %v5116 = vunpack.c.h.b16 %v1389
    %v5117 = vunpack.c.l.b16 %v1390
    %v5118 = vunpack.c.h.b16 %v1390
    %v5119 = vunpack.c.l.b16 %v1391
    %v5120 = vunpack.c.h.b16 %v1391
    %v5121 = vunpack.c.l.b16 %v1392
    %v5122 = vunpack.c.h.b16 %v1392
    %v5123 = vunpack.c.l.b16 %v1393
    %v5124 = vunpack.c.h.b16 %v1393
    %v5125 = vunpack.c.l.b16 %v1394
    %v5126 = vunpack.c.h.b16 %v1394
    %v5127 = vunpack.c.l.b16 %v1395
    %v5128 = vunpack.c.h.b16 %v1395
    %v5129 = vunpack.c.l.b16 %v1396
    %v5130 = vunpack.c.h.b16 %v1396
    %v5131 = vunpack.c.l.b16 %v1397
    %v5132 = vunpack.c.h.b16 %v1397
    %v5133 = vunpack.c.l.b16 %v1398
    %v5134 = vunpack.c.h.b16 %v1398
    %v5135 = vunpack.c.l.b16 %v1399
    %v5136 = vunpack.c.h.b16 %v1399
    %v5137 = vunpack.c.l.b16 %v1400
    %v5138 = vunpack.c.h.b16 %v1400
    %v5139 = vunpack.c.l.b16 %v1401
    %v5140 = vunpack.c.h.b16 %v1401
    %v5141 = vunpack.c.l.b16 %v1402
    %v5142 = vunpack.c.h.b16 %v1402
    %v5143 = vunpack.c.l.b16 %v1403
    %v5144 = vunpack.c.h.b16 %v1403
    %v5145 = vunpack.c.l.b16 %v1404
    %v5146 = vunpack.c.h.b16 %v1404
    %v5147 = vunpack.c.l.b16 %v1405
    %v5148 = vunpack.c.h.b16 %v1405
    %v5149 = vunpack.c.l.b16 %v1406
    %v5150 = vunpack.c.h.b16 %v1406
    %v5151 = vunpack.c.l.b16 %v1407
    %v5152 = vunpack.c.h.b16 %v1407
    %v5153 = vunpack.c.l.b16 %v1408
    %v5154 = vunpack.c.h.b16 %v1408
    %v5155 = vunpack.c.l.b16 %v1409
    %v5156 = vunpack.c.h.b16 %v1409
    %v5157 = vunpack.c.l.b16 %v1410
    %v5158 = vunpack.c.h.b16 %v1410
    %v5159 = vunpack.c.l.b16 %v1411
    %v5160 = vunpack.c.h.b16 %v1411
    %v5161 = vunpack.c.l.b16 %v1412
    %v5162 = vunpack.c.h.b16 %v1412
    %v5163 = vunpack.c.l.b16 %v1413
    %v5164 = vunpack.c.h.b16 %v1413
    %v5165 = vunpack.c.l.b16 %v1414
    %v5166 = vunpack.c.h.b16 %v1414
    %v5167 = vunpack.c.l.b16 %v1415
    %v5168 = vunpack.c.h.b16 %v1415
    %v5169 = vunpack.c.l.b16 %v1416
    %v5170 = vunpack.c.h.b16 %v1416
    %v5171 = vunpack.c.l.b16 %v1417
    %v5172 = vunpack.c.h.b16 %v1417
    %v5173 = vunpack.c.l.b16 %v1418
    %v5174 = vunpack.c.h.b16 %v1418
    %v5175 = vunpack.c.l.b16 %v1419
    %v5176 = vunpack.c.h.b16 %v1419
    %v5177 = vunpack.c.l.b16 %v1420
    %v5178 = vunpack.c.h.b16 %v1420
    %v5179 = vunpack.c.l.b16 %v1421
    %v5180 = vunpack.c.h.b16 %v1421
    %v5181 = vunpack.c.l.b16 %v1422
    %v5182 = vunpack.c.h.b16 %v1422
    %v5183 = vunpack.c.l.b16 %v1423
    %v5184 = vunpack.c.h.b16 %v1423
    %v5185 = vunpack.c.l.b16 %v1424
    %v5186 = vunpack.c.h.b16 %v1424
    %v5187 = vunpack.c.l.b16 %v1425
    %v5188 = vunpack.c.h.b16 %v1425
    %v5189 = vunpack.c.l.b16 %v1426
    %v5190 = vunpack.c.h.b16 %v1426
    %v5191 = vunpack.c.l.b16 %v1427
    %v5192 = vunpack.c.h.b16 %v1427
    %v5193 = vunpack.c.l.b16 %v1428
    %v5194 = vunpack.c.h.b16 %v1428
    %v5195 = vpack.c.b16 %v2703, %v2699
    %v5196 = vpack.c.b16 %v2704, %v2700
    %v5197 = vpack.c.b16 %v2705, %v2701
    %v5198 = vpack.c.b16 %v2706, %v2702
    %v5199 = vpack.c.b16 %v2711, %v2707
    %v5200 = vpack.c.b16 %v2712, %v2708
    %v5201 = vpack.c.b16 %v2713, %v2709
    %v5202 = vpack.c.b16 %v2714, %v2710
    %v5203 = vpack.c.b16 %v2719, %v2715
    %v5204 = vpack.c.b16 %v2720, %v2716
    %v5205 = vpack.c.b16 %v2721, %v2717
    %v5206 = vpack.c.b16 %v2722, %v2718
    %v5207 = vpack.c.b16 %v2727, %v2723
    %v5208 = vpack.c.b16 %v2728, %v2724
    %v5209 = vpack.c.b16 %v2729, %v2725
    %v5210 = vpack.c.b16 %v2730, %v2726
    %v5211 = vpack.c.b16 %v2735, %v2731
    %v5212 = vpack.c.b16 %v2736, %v2732
    %v5213 = vpack.c.b16 %v2737, %v2733
    %v5214 = vpack.c.b16 %v2738, %v2734
    %v5215 = vpack.c.b16 %v2743, %v2739
    %v5216 = vpack.c.b16 %v2744, %v2740
    %v5217 = vpack.c.b16 %v2745, %v2741
    %v5218 = vpack.c.b16 %v2746, %v2742
    %v5219 = vpack.c.b16 %v2751, %v2747
    %v5220 = vpack.c.b16 %v2752, %v2748
    %v5221 = vpack.c.b16 %v2753, %v2749
    %v5222 = vpack.c.b16 %v2754, %v2750
    %v5223 = vpack.c.b16 %v2759, %v2755
    %v5224 = vpack.c.b16 %v2760, %v2756
    %v5225 = vpack.c.b16 %v2761, %v2757
    %v5226 = vpack.c.b16 %v2762, %v2758
    %v5227 = vpack.c.b16 %v2767, %v2763
    %v5228 = vpack.c.b16 %v2768, %v2764
    %v5229 = vpack.c.b16 %v2769, %v2765
    %v5230 = vpack.c.b16 %v2770, %v2766
    %v5231 = vpack.c.b16 %v2775, %v2771
    %v5232 = vpack.c.b16 %v2776, %v2772
    %v5233 = vpack.c.b16 %v2777, %v2773
    %v5234 = vpack.c.b16 %v2778, %v2774
    %v5235 = vpack.c.b16 %v2783, %v2779
    %v5236 = vpack.c.b16 %v2784, %v2780
    %v5237 = vpack.c.b16 %v2785, %v2781
    %v5238 = vpack.c.b16 %v2786, %v2782
    %v5239 = vpack.c.b16 %v2791, %v2787
    %v5240 = vpack.c.b16 %v2792, %v2788
    %v5241 = vpack.c.b16 %v2793, %v2789
    %v5242 = vpack.c.b16 %v2794, %v2790
    %v5243 = vpack.c.b16 %v2799, %v2795
    %v5244 = vpack.c.b16 %v2800, %v2796
    %v5245 = vpack.c.b16 %v2801, %v2797
    %v5246 = vpack.c.b16 %v2802, %v2798
    %v5247 = vpack.c.b16 %v2807, %v2803
    %v5248 = vpack.c.b16 %v2808, %v2804
    %v5249 = vpack.c.b16 %v2809, %v2805
    %v5250 = vpack.c.b16 %v2810, %v2806
    %v5251 = vpack.c.b16 %v2815, %v2811
    %v5252 = vpack.c.b16 %v2816, %v2812
    %v5253 = vpack.c.b16 %v2817, %v2813
    %v5254 = vpack.c.b16 %v2818, %v2814
    %v5255 = vpack.c.b16 %v2823, %v2819
    %v5256 = vpack.c.b16 %v2824, %v2820
    %v5257 = vpack.c.b16 %v2825, %v2821
    %v5258 = vpack.c.b16 %v2826, %v2822
    %v5259 = vpack.c.b16 %v2831, %v2827
    %v5260 = vpack.c.b16 %v2832, %v2828
    %v5261 = vpack.c.b16 %v2833, %v2829
    %v5262 = vpack.c.b16 %v2834, %v2830
    %v5263 = vpack.c.b16 %v2839, %v2835
    %v5264 = vpack.c.b16 %v2840, %v2836
    %v5265 = vpack.c.b16 %v2841, %v2837
    %v5266 = vpack.c.b16 %v2842, %v2838
    %v5267 = vpack.c.b16 %v2847, %v2843
    %v5268 = vpack.c.b16 %v2848, %v2844
    %v5269 = vpack.c.b16 %v2849, %v2845
    %v5270 = vpack.c.b16 %v2850, %v2846
    %v5271 = vpack.c.b16 %v2855, %v2851
    %v5272 = vpack.c.b16 %v2856, %v2852
    %v5273 = vpack.c.b16 %v2857, %v2853
    %v5274 = vpack.c.b16 %v2858, %v2854
    %v5275 = vpack.c.b16 %v2863, %v2859
    %v5276 = vpack.c.b16 %v2864, %v2860
    %v5277 = vpack.c.b16 %v2865, %v2861
    %v5278 = vpack.c.b16 %v2866, %v2862
    %v5279 = vpack.c.b16 %v2871, %v2867
    %v5280 = vpack.c.b16 %v2872, %v2868
    %v5281 = vpack.c.b16 %v2873, %v2869
    %v5282 = vpack.c.b16 %v2874, %v2870
    %v5283 = vpack.c.b16 %v2879, %v2875
    %v5284 = vpack.c.b16 %v2880, %v2876
    %v5285 = vpack.c.b16 %v2881, %v2877
    %v5286 = vpack.c.b16 %v2882, %v2878
    %v5287 = vpack.c.b16 %v2887, %v2883
    %v5288 = vpack.c.b16 %v2888, %v2884
    %v5289 = vpack.c.b16 %v2889, %v2885
    %v5290 = vpack.c.b16 %v2890, %v2886
    %v5291 = vpack.c.b16 %v2895, %v2891
    %v5292 = vpack.c.b16 %v2896, %v2892
    %v5293 = vpack.c.b16 %v2897, %v2893
    %v5294 = vpack.c.b16 %v2898, %v2894
    %v5295 = vpack.c.b16 %v2903, %v2899
    %v5296 = vpack.c.b16 %v2904, %v2900
    %v5297 = vpack.c.b16 %v2905, %v2901
    %v5298 = vpack.c.b16 %v2906, %v2902
    %v5299 = vpack.c.b16 %v2911, %v2907
    %v5300 = vpack.c.b16 %v2912, %v2908
    %v5301 = vpack.c.b16 %v2913, %v2909
    %v5302 = vpack.c.b16 %v2914, %v2910
    %v5303 = vpack.c.b16 %v2919, %v2915
    %v5304 = vpack.c.b16 %v2920, %v2916
    %v5305 = vpack.c.b16 %v2921, %v2917
    %v5306 = vpack.c.b16 %v2922, %v2918
    %v5307 = vpack.c.b16 %v2927, %v2923
    %v5308 = vpack.c.b16 %v2928, %v2924
    %v5309 = vpack.c.b16 %v2929, %v2925
    %v5310 = vpack.c.b16 %v2930, %v2926
    %v5311 = vpack.c.b16 %v2935, %v2931
    %v5312 = vpack.c.b16 %v2936, %v2932
    %v5313 = vpack.c.b16 %v2937, %v2933
    %v5314 = vpack.c.b16 %v2938, %v2934
    %v5315 = vpack.c.b16 %v2943, %v2939
    %v5316 = vpack.c.b16 %v2944, %v2940
    %v5317 = vpack.c.b16 %v2945, %v2941
    %v5318 = vpack.c.b16 %v2946, %v2942
    %v5319 = vpack.c.b16 %v2951, %v2947
    %v5320 = vpack.c.b16 %v2952, %v2948
    %v5321 = vpack.c.b16 %v2953, %v2949
    %v5322 = vpack.c.b16 %v2954, %v2950
    %v5323 = vpack.c.b16 %v2959, %v2955
    %v5324 = vpack.c.b16 %v2960, %v2956
    %v5325 = vpack.c.b16 %v2961, %v2957
    %v5326 = vpack.c.b16 %v2962, %v2958
    %v5327 = vpack.c.b16 %v2967, %v2963
    %v5328 = vpack.c.b16 %v2968, %v2964
    %v5329 = vpack.c.b16 %v2969, %v2965
    %v5330 = vpack.c.b16 %v2970, %v2966
    %v5331 = vpack.c.b16 %v2975, %v2971
    %v5332 = vpack.c.b16 %v2976, %v2972
    %v5333 = vpack.c.b16 %v2977, %v2973
    %v5334 = vpack.c.b16 %v2978, %v2974
    %v5335 = vpack.c.b16 %v2983, %v2979
    %v5336 = vpack.c.b16 %v2984, %v2980
    %v5337 = vpack.c.b16 %v2985, %v2981
    %v5338 = vpack.c.b16 %v2986, %v2982
    %v5339 = vpack.c.b16 %v2991, %v2987
    %v5340 = vpack.c.b16 %v2992, %v2988
    %v5341 = vpack.c.b16 %v2993, %v2989
    %v5342 = vpack.c.b16 %v2994, %v2990
    %v5343 = vpack.c.b16 %v2999, %v2995
    %v5344 = vpack.c.b16 %v3000, %v2996
    %v5345 = vpack.c.b16 %v3001, %v2997
    %v5346 = vpack.c.b16 %v3002, %v2998
    %v5347 = vpack.c.b16 %v3007, %v3003
    %v5348 = vpack.c.b16 %v3008, %v3004
    %v5349 = vpack.c.b16 %v3009, %v3005
    %v5350 = vpack.c.b16 %v3010, %v3006
    %v5351 = vpack.c.b16 %v3015, %v3011
    %v5352 = vpack.c.b16 %v3016, %v3012
    %v5353 = vpack.c.b16 %v3017, %v3013
    %v5354 = vpack.c.b16 %v3018, %v3014
    %v5355 = vpack.c.b16 %v3023, %v3019
    %v5356 = vpack.c.b16 %v3024, %v3020
    %v5357 = vpack.c.b16 %v3025, %v3021
    %v5358 = vpack.c.b16 %v3026, %v3022
    %v5359 = vpack.c.b16 %v3031, %v3027
    %v5360 = vpack.c.b16 %v3032, %v3028
    %v5361 = vpack.c.b16 %v3033, %v3029
    %v5362 = vpack.c.b16 %v3034, %v3030
    %v5363 = vpack.c.b16 %v3039, %v3035
    %v5364 = vpack.c.b16 %v3040, %v3036
    %v5365 = vpack.c.b16 %v3041, %v3037
    %v5366 = vpack.c.b16 %v3042, %v3038
    %v5367 = vpack.c.b16 %v3047, %v3043
    %v5368 = vpack.c.b16 %v3048, %v3044
    %v5369 = vpack.c.b16 %v3049, %v3045
    %v5370 = vpack.c.b16 %v3050, %v3046
    %v5371 = vpack.c.b16 %v3055, %v3051
    %v5372 = vpack.c.b16 %v3056, %v3052
    %v5373 = vpack.c.b16 %v3057, %v3053
    %v5374 = vpack.c.b16 %v3058, %v3054
    %v5375 = vpack.c.b16 %v3063, %v3059
    %v5376 = vpack.c.b16 %v3064, %v3060
    %v5377 = vpack.c.b16 %v3065, %v3061
    %v5378 = vpack.c.b16 %v3066, %v3062
    %v5379 = vpack.c.b16 %v3071, %v3067
    %v5380 = vpack.c.b16 %v3072, %v3068
    %v5381 = vpack.c.b16 %v3073, %v3069
    %v5382 = vpack.c.b16 %v3074, %v3070
    %v5383 = vpack.c.b16 %v3079, %v3075
    %v5384 = vpack.c.b16 %v3080, %v3076
    %v5385 = vpack.c.b16 %v3081, %v3077
    %v5386 = vpack.c.b16 %v3082, %v3078
    %v5387 = vpack.c.b16 %v3087, %v3083
    %v5388 = vpack.c.b16 %v3088, %v3084
    %v5389 = vpack.c.b16 %v3089, %v3085
    %v5390 = vpack.c.b16 %v3090, %v3086
    %v5391 = vpack.c.b16 %v3095, %v3091
    %v5392 = vpack.c.b16 %v3096, %v3092
    %v5393 = vpack.c.b16 %v3097, %v3093
    %v5394 = vpack.c.b16 %v3098, %v3094
    %v5395 = vpack.c.b16 %v3103, %v3099
    %v5396 = vpack.c.b16 %v3104, %v3100
    %v5397 = vpack.c.b16 %v3105, %v3101
    %v5398 = vpack.c.b16 %v3106, %v3102
    %v5399 = vpack.c.b16 %v3111, %v3107
    %v5400 = vpack.c.b16 %v3112, %v3108
    %v5401 = vpack.c.b16 %v3113, %v3109
    %v5402 = vpack.c.b16 %v3114, %v3110
    %v5403 = vpack.c.b16 %v3119, %v3115
    %v5404 = vpack.c.b16 %v3120, %v3116
    %v5405 = vpack.c.b16 %v3121, %v3117
    %v5406 = vpack.c.b16 %v3122, %v3118
    %v5407 = vpack.c.b16 %v3127, %v3123
    %v5408 = vpack.c.b16 %v3128, %v3124
    %v5409 = vpack.c.b16 %v3129, %v3125
    %v5410 = vpack.c.b16 %v3130, %v3126
    %v5411 = vpack.c.b16 %v3135, %v3131
    %v5412 = vpack.c.b16 %v3136, %v3132
    %v5413 = vpack.c.b16 %v3137, %v3133
    %v5414 = vpack.c.b16 %v3138, %v3134
    %v5415 = vpack.c.b16 %v3143, %v3139
    %v5416 = vpack.c.b16 %v3144, %v3140
    %v5417 = vpack.c.b16 %v3145, %v3141
    %v5418 = vpack.c.b16 %v3146, %v3142
    %v5419 = vpack.c.b16 %v3151, %v3147
    %v5420 = vpack.c.b16 %v3152, %v3148
    %v5421 = vpack.c.b16 %v3153, %v3149
    %v5422 = vpack.c.b16 %v3154, %v3150
    %v5423 = vpack.c.b16 %v3159, %v3155
    %v5424 = vpack.c.b16 %v3160, %v3156
    %v5425 = vpack.c.b16 %v3161, %v3157
    %v5426 = vpack.c.b16 %v3162, %v3158
    %v5427 = vpack.c.b16 %v3167, %v3163
    %v5428 = vpack.c.b16 %v3168, %v3164
    %v5429 = vpack.c.b16 %v3169, %v3165
    %v5430 = vpack.c.b16 %v3170, %v3166
    %v5431 = vpack.c.b16 %v3175, %v3171
    %v5432 = vpack.c.b16 %v3176, %v3172
    %v5433 = vpack.c.b16 %v3177, %v3173
    %v5434 = vpack.c.b16 %v3178, %v3174
    %v5435 = vpack.c.b16 %v3183, %v3179
    %v5436 = vpack.c.b16 %v3184, %v3180
    %v5437 = vpack.c.b16 %v3185, %v3181
    %v5438 = vpack.c.b16 %v3186, %v3182
    %v5439 = vpack.c.b16 %v3191, %v3187
    %v5440 = vpack.c.b16 %v3192, %v3188
    %v5441 = vpack.c.b16 %v3193, %v3189
    %v5442 = vpack.c.b16 %v3194, %v3190
    %v5443 = vpack.c.b16 %v3199, %v3195
    %v5444 = vpack.c.b16 %v3200, %v3196
    %v5445 = vpack.c.b16 %v3201, %v3197
    %v5446 = vpack.c.b16 %v3202, %v3198
    %v5447 = vpack.c.b16 %v3207, %v3203
    %v5448 = vpack.c.b16 %v3208, %v3204
    %v5449 = vpack.c.b16 %v3209, %v3205
    %v5450 = vpack.c.b16 %v3210, %v3206
    %v5451 = vpack.c.b16 %v3215, %v3211
    %v5452 = vpack.c.b16 %v3216, %v3212
    %v5453 = vpack.c.b16 %v3217, %v3213
    %v5454 = vpack.c.b16 %v3218, %v3214
    %v5455 = vpack.c.b16 %v3223, %v3219
    %v5456 = vpack.c.b16 %v3224, %v3220
    %v5457 = vpack.c.b16 %v3225, %v3221
    %v5458 = vpack.c.b16 %v3226, %v3222
    %v5459 = vpack.c.b16 %v3231, %v3227
    %v5460 = vpack.c.b16 %v3232, %v3228
    %v5461 = vpack.c.b16 %v3233, %v3229
    %v5462 = vpack.c.b16 %v3234, %v3230
    %v5463 = vpack.c.b16 %v3239, %v3235
    %v5464 = vpack.c.b16 %v3240, %v3236
    %v5465 = vpack.c.b16 %v3241, %v3237
    %v5466 = vpack.c.b16 %v3242, %v3238
    %v5467 = vpack.c.b16 %v3247, %v3243
    %v5468 = vpack.c.b16 %v3248, %v3244
    %v5469 = vpack.c.b16 %v3249, %v3245
    %v5470 = vpack.c.b16 %v3250, %v3246
    %v5471 = vpack.c.b16 %v3255, %v3251
    %v5472 = vpack.c.b16 %v3256, %v3252
    %v5473 = vpack.c.b16 %v3257, %v3253
    %v5474 = vpack.c.b16 %v3258, %v3254
    %v5475 = vpack.c.b16 %v3263, %v3259
    %v5476 = vpack.c.b16 %v3264, %v3260
    %v5477 = vpack.c.b16 %v3265, %v3261
    %v5478 = vpack.c.b16 %v3266, %v3262
    %v5479 = vpack.c.b16 %v3271, %v3267
    %v5480 = vpack.c.b16 %v3272, %v3268
    %v5481 = vpack.c.b16 %v3273, %v3269
    %v5482 = vpack.c.b16 %v3274, %v3270
    %v5483 = vpack.c.b16 %v3279, %v3275
    %v5484 = vpack.c.b16 %v3280, %v3276
    %v5485 = vpack.c.b16 %v3281, %v3277
    %v5486 = vpack.c.b16 %v3282, %v3278
    %v5487 = vpack.c.b16 %v3287, %v3283
    %v5488 = vpack.c.b16 %v3288, %v3284
    %v5489 = vpack.c.b16 %v3289, %v3285
    %v5490 = vpack.c.b16 %v3290, %v3286
    %v5491 = vpack.c.b16 %v3295, %v3291
    %v5492 = vpack.c.b16 %v3296, %v3292
    %v5493 = vpack.c.b16 %v3297, %v3293
    %v5494 = vpack.c.b16 %v3298, %v3294
    %v5495 = vpack.c.b16 %v3303, %v3299
    %v5496 = vpack.c.b16 %v3304, %v3300
    %v5497 = vpack.c.b16 %v3305, %v3301
    %v5498 = vpack.c.b16 %v3306, %v3302
    %v5499 = vpack.c.b16 %v3311, %v3307
    %v5500 = vpack.c.b16 %v3312, %v3308
    %v5501 = vpack.c.b16 %v3313, %v3309
    %v5502 = vpack.c.b16 %v3314, %v3310
    %v5503 = vpack.c.b16 %v3319, %v3315
    %v5504 = vpack.c.b16 %v3320, %v3316
    %v5505 = vpack.c.b16 %v3321, %v3317
    %v5506 = vpack.c.b16 %v3322, %v3318
    %v5507 = vpack.c.b16 %v3327, %v3323
    %v5508 = vpack.c.b16 %v3328, %v3324
    %v5509 = vpack.c.b16 %v3329, %v3325
    %v5510 = vpack.c.b16 %v3330, %v3326
    %v5511 = vpack.c.b16 %v3335, %v3331
    %v5512 = vpack.c.b16 %v3336, %v3332
    %v5513 = vpack.c.b16 %v3337, %v3333
    %v5514 = vpack.c.b16 %v3338, %v3334
    %v5515 = vpack.c.b16 %v3343, %v3339
    %v5516 = vpack.c.b16 %v3344, %v3340
    %v5517 = vpack.c.b16 %v3345, %v3341
    %v5518 = vpack.c.b16 %v3346, %v3342
    %v5519 = vpack.c.b16 %v3351, %v3347
    %v5520 = vpack.c.b16 %v3352, %v3348
    %v5521 = vpack.c.b16 %v3353, %v3349
    %v5522 = vpack.c.b16 %v3354, %v3350
    %v5523 = vpack.c.b16 %v3359, %v3355
    %v5524 = vpack.c.b16 %v3360, %v3356
    %v5525 = vpack.c.b16 %v3361, %v3357
    %v5526 = vpack.c.b16 %v3362, %v3358
    %v5527 = vpack.c.b16 %v3367, %v3363
    %v5528 = vpack.c.b16 %v3368, %v3364
    %v5529 = vpack.c.b16 %v3369, %v3365
    %v5530 = vpack.c.b16 %v3370, %v3366
    %v5531 = vpack.c.b16 %v3375, %v3371
    %v5532 = vpack.c.b16 %v3376, %v3372
    %v5533 = vpack.c.b16 %v3377, %v3373
    %v5534 = vpack.c.b16 %v3378, %v3374
    %v5535 = vpack.c.b16 %v3383, %v3379
    %v5536 = vpack.c.b16 %v3384, %v3380
    %v5537 = vpack.c.b16 %v3385, %v3381
    %v5538 = vpack.c.b16 %v3386, %v3382
    %v5539 = vpack.c.b16 %v3391, %v3387
    %v5540 = vpack.c.b16 %v3392, %v3388
    %v5541 = vpack.c.b16 %v3393, %v3389
    %v5542 = vpack.c.b16 %v3394, %v3390
    %v5543 = vpack.c.b16 %v3399, %v3395
    %v5544 = vpack.c.b16 %v3400, %v3396
    %v5545 = vpack.c.b16 %v3401, %v3397
    %v5546 = vpack.c.b16 %v3402, %v3398
    %v5547 = vpack.c.b16 %v3407, %v3403
    %v5548 = vpack.c.b16 %v3408, %v3404
    %v5549 = vpack.c.b16 %v3409, %v3405
    %v5550 = vpack.c.b16 %v3410, %v3406
    %v5551 = vpack.c.b16 %v3415, %v3411
    %v5552 = vpack.c.b16 %v3416, %v3412
    %v5553 = vpack.c.b16 %v3417, %v3413
    %v5554 = vpack.c.b16 %v3418, %v3414
    %v5555 = vpack.c.b16 %v3423, %v3419
    %v5556 = vpack.c.b16 %v3424, %v3420
    %v5557 = vpack.c.b16 %v3425, %v3421
    %v5558 = vpack.c.b16 %v3426, %v3422
    %v5559 = vpack.c.b16 %v3431, %v3427
    %v5560 = vpack.c.b16 %v3432, %v3428
    %v5561 = vpack.c.b16 %v3433, %v3429
    %v5562 = vpack.c.b16 %v3434, %v3430
    %v5563 = vpack.c.b16 %v3439, %v3435
    %v5564 = vpack.c.b16 %v3440, %v3436
    %v5565 = vpack.c.b16 %v3441, %v3437
    %v5566 = vpack.c.b16 %v3442, %v3438
    %v5567 = vpack.c.b16 %v3447, %v3443
    %v5568 = vpack.c.b16 %v3448, %v3444
    %v5569 = vpack.c.b16 %v3449, %v3445
    %v5570 = vpack.c.b16 %v3450, %v3446
    %v5571 = vpack.c.b16 %v3455, %v3451
    %v5572 = vpack.c.b16 %v3456, %v3452
    %v5573 = vpack.c.b16 %v3457, %v3453
    %v5574 = vpack.c.b16 %v3458, %v3454
    %v5575 = vpack.c.b16 %v3463, %v3459
    %v5576 = vpack.c.b16 %v3464, %v3460
    %v5577 = vpack.c.b16 %v3465, %v3461
    %v5578 = vpack.c.b16 %v3466, %v3462
    %v5579 = vpack.c.b16 %v3471, %v3467
    %v5580 = vpack.c.b16 %v3472, %v3468
    %v5581 = vpack.c.b16 %v3473, %v3469
    %v5582 = vpack.c.b16 %v3474, %v3470
    %v5583 = vpack.c.b16 %v3479, %v3475
    %v5584 = vpack.c.b16 %v3480, %v3476
    %v5585 = vpack.c.b16 %v3481, %v3477
    %v5586 = vpack.c.b16 %v3482, %v3478
    %v5587 = vpack.c.b16 %v3487, %v3483
    %v5588 = vpack.c.b16 %v3488, %v3484
    %v5589 = vpack.c.b16 %v3489, %v3485
    %v5590 = vpack.c.b16 %v3490, %v3486
    %v5591 = vpack.c.b16 %v3495, %v3491
    %v5592 = vpack.c.b16 %v3496, %v3492
    %v5593 = vpack.c.b16 %v3497, %v3493
    %v5594 = vpack.c.b16 %v3498, %v3494
    %v5595 = vpack.c.b16 %v3503, %v3499
    %v5596 = vpack.c.b16 %v3504, %v3500
    %v5597 = vpack.c.b16 %v3505, %v3501
    %v5598 = vpack.c.b16 %v3506, %v3502
    %v5599 = vpack.c.b16 %v3511, %v3507
    %v5600 = vpack.c.b16 %v3512, %v3508
    %v5601 = vpack.c.b16 %v3513, %v3509
    %v5602 = vpack.c.b16 %v3514, %v3510
    %v5603 = vpack.c.b16 %v3519, %v3515
    %v5604 = vpack.c.b16 %v3520, %v3516
    %v5605 = vpack.c.b16 %v3521, %v3517
    %v5606 = vpack.c.b16 %v3522, %v3518
    %v5607 = vpack.c.b16 %v3527, %v3523
    %v5608 = vpack.c.b16 %v3528, %v3524
    %v5609 = vpack.c.b16 %v3529, %v3525
    %v5610 = vpack.c.b16 %v3530, %v3526
    %v5611 = vpack.c.b16 %v3535, %v3531
    %v5612 = vpack.c.b16 %v3536, %v3532
    %v5613 = vpack.c.b16 %v3537, %v3533
    %v5614 = vpack.c.b16 %v3538, %v3534
    %v5615 = vpack.c.b16 %v3543, %v3539
    %v5616 = vpack.c.b16 %v3544, %v3540
    %v5617 = vpack.c.b16 %v3545, %v3541
    %v5618 = vpack.c.b16 %v3546, %v3542
    %v5619 = vpack.c.b16 %v3551, %v3547
    %v5620 = vpack.c.b16 %v3552, %v3548
    %v5621 = vpack.c.b16 %v3553, %v3549
    %v5622 = vpack.c.b16 %v3554, %v3550
    %v5623 = vpack.c.b16 %v3559, %v3555
    %v5624 = vpack.c.b16 %v3560, %v3556
    %v5625 = vpack.c.b16 %v3561, %v3557
    %v5626 = vpack.c.b16 %v3562, %v3558
    %v5627 = vpack.c.b16 %v3567, %v3563
    %v5628 = vpack.c.b16 %v3568, %v3564
    %v5629 = vpack.c.b16 %v3569, %v3565
    %v5630 = vpack.c.b16 %v3570, %v3566
    %v5631 = vpack.c.b16 %v3575, %v3571
    %v5632 = vpack.c.b16 %v3576, %v3572
    %v5633 = vpack.c.b16 %v3577, %v3573
    %v5634 = vpack.c.b16 %v3578, %v3574
    %v5635 = vpack.c.b16 %v3583, %v3579
    %v5636 = vpack.c.b16 %v3584, %v3580
    %v5637 = vpack.c.b16 %v3585, %v3581
    %v5638 = vpack.c.b16 %v3586, %v3582
    %v5639 = vpack.c.b16 %v3591, %v3587
    %v5640 = vpack.c.b16 %v3592, %v3588
    %v5641 = vpack.c.b16 %v3593, %v3589
    %v5642 = vpack.c.b16 %v3594, %v3590
    %v5643 = vpack.c.b16 %v3599, %v3595
    %v5644 = vpack.c.b16 %v3600, %v3596
    %v5645 = vpack.c.b16 %v3601, %v3597
    %v5646 = vpack.c.b16 %v3602, %v3598
    %v5647 = vpack.c.b16 %v3607, %v3603
    %v5648 = vpack.c.b16 %v3608, %v3604
    %v5649 = vpack.c.b16 %v3609, %v3605
    %v5650 = vpack.c.b16 %v3610, %v3606
    %v5651 = vpack.c.b16 %v3615, %v3611
    %v5652 = vpack.c.b16 %v3616, %v3612
    %v5653 = vpack.c.b16 %v3617, %v3613
    %v5654 = vpack.c.b16 %v3618, %v3614
    %v5655 = vpack.c.b16 %v3623, %v3619
    %v5656 = vpack.c.b16 %v3624, %v3620
    %v5657 = vpack.c.b16 %v3625, %v3621
    %v5658 = vpack.c.b16 %v3626, %v3622
    %v5659 = vpack.c.b16 %v3631, %v3627
    %v5660 = vpack.c.b16 %v3632, %v3628
    %v5661 = vpack.c.b16 %v3633, %v3629
    %v5662 = vpack.c.b16 %v3634, %v3630
    %v5663 = vpack.c.b16 %v3639, %v3635
    %v5664 = vpack.c.b16 %v3640, %v3636
    %v5665 = vpack.c.b16 %v3641, %v3637
    %v5666 = vpack.c.b16 %v3642, %v3638
    %v5667 = vpack.c.b16 %v3647, %v3643
    %v5668 = vpack.c.b16 %v3648, %v3644
    %v5669 = vpack.c.b16 %v3649, %v3645
    %v5670 = vpack.c.b16 %v3650, %v3646
    %v5671 = vpack.c.b16 %v3655, %v3651
    %v5672 = vpack.c.b16 %v3656, %v3652
    %v5673 = vpack.c.b16 %v3657, %v3653
    %v5674 = vpack.c.b16 %v3658, %v3654
    %v5675 = vpack.c.b16 %v3663, %v3659
    %v5676 = vpack.c.b16 %v3664, %v3660
    %v5677 = vpack.c.b16 %v3665, %v3661
    %v5678 = vpack.c.b16 %v3666, %v3662
    %v5679 = vpack.c.b16 %v3671, %v3667
    %v5680 = vpack.c.b16 %v3672, %v3668
    %v5681 = vpack.c.b16 %v3673, %v3669
    %v5682 = vpack.c.b16 %v3674, %v3670
    %v5683 = vpack.c.b16 %v3679, %v3675
    %v5684 = vpack.c.b16 %v3680, %v3676
    %v5685 = vpack.c.b16 %v3681, %v3677
    %v5686 = vpack.c.b16 %v3682, %v3678
    %v5687 = vpack.c.b16 %v3687, %v3683
    %v5688 = vpack.c.b16 %v3688, %v3684
    %v5689 = vpack.c.b16 %v3689, %v3685
    %v5690 = vpack.c.b16 %v3690, %v3686
    %v5691 = vpack.c.b16 %v3695, %v3691
    %v5692 = vpack.c.b16 %v3696, %v3692
    %v5693 = vpack.c.b16 %v3697, %v3693
    %v5694 = vpack.c.b16 %v3698, %v3694
    %v5695 = vpack.c.b16 %v3703, %v3699
    %v5696 = vpack.c.b16 %v3704, %v3700
    %v5697 = vpack.c.b16 %v3705, %v3701
    %v5698 = vpack.c.b16 %v3706, %v3702
    %v5699 = vpack.c.b16 %v3711, %v3707
    %v5700 = vpack.c.b16 %v3712, %v3708
    %v5701 = vpack.c.b16 %v3713, %v3709
    %v5702 = vpack.c.b16 %v3714, %v3710
    %v5703 = vpack.c.b16 %v3719, %v3715
    %v5704 = vpack.c.b16 %v3720, %v3716
    %v5705 = vpack.c.b16 %v3721, %v3717
    %v5706 = vpack.c.b16 %v3722, %v3718
    %v5707 = vpack.c.b16 %v3727, %v3723
    %v5708 = vpack.c.b16 %v3728, %v3724
    %v5709 = vpack.c.b16 %v3729, %v3725
    %v5710 = vpack.c.b16 %v3730, %v3726
    %v5711 = vpack.c.b16 %v3735, %v3731
    %v5712 = vpack.c.b16 %v3736, %v3732
    %v5713 = vpack.c.b16 %v3737, %v3733
    %v5714 = vpack.c.b16 %v3738, %v3734
    %v5715 = vpack.c.b16 %v3743, %v3739
    %v5716 = vpack.c.b16 %v3744, %v3740
    %v5717 = vpack.c.b16 %v3745, %v3741
    %v5718 = vpack.c.b16 %v3746, %v3742
    %v5719 = vpack.c.b16 %v3751, %v3747
    %v5720 = vpack.c.b16 %v3752, %v3748
    %v5721 = vpack.c.b16 %v3753, %v3749
    %v5722 = vpack.c.b16 %v3754, %v3750
    %v5723 = vpack.c.b16 %v3759, %v3755
    %v5724 = vpack.c.b16 %v3760, %v3756
    %v5725 = vpack.c.b16 %v3761, %v3757
    %v5726 = vpack.c.b16 %v3762, %v3758
    %v5727 = vpack.c.b16 %v3767, %v3763
    %v5728 = vpack.c.b16 %v3768, %v3764
    %v5729 = vpack.c.b16 %v3769, %v3765
    %v5730 = vpack.c.b16 %v3770, %v3766
    %v5731 = vpack.c.b16 %v3775, %v3771
    %v5732 = vpack.c.b16 %v3776, %v3772
    %v5733 = vpack.c.b16 %v3777, %v3773
    %v5734 = vpack.c.b16 %v3778, %v3774
    %v5735 = vpack.c.b16 %v3783, %v3779
    %v5736 = vpack.c.b16 %v3784, %v3780
    %v5737 = vpack.c.b16 %v3785, %v3781
    %v5738 = vpack.c.b16 %v3786, %v3782
    %v5739 = vpack.c.b16 %v3791, %v3787
    %v5740 = vpack.c.b16 %v3792, %v3788
    %v5741 = vpack.c.b16 %v3793, %v3789
    %v5742 = vpack.c.b16 %v3794, %v3790
    %v5743 = vpack.c.b16 %v3799, %v3795
    %v5744 = vpack.c.b16 %v3800, %v3796
    %v5745 = vpack.c.b16 %v3801, %v3797
    %v5746 = vpack.c.b16 %v3802, %v3798
    %v5747 = vpack.c.b16 %v3807, %v3803
    %v5748 = vpack.c.b16 %v3808, %v3804
    %v5749 = vpack.c.b16 %v3809, %v3805
    %v5750 = vpack.c.b16 %v3810, %v3806
    %v5751 = vpack.c.b16 %v3815, %v3811
    %v5752 = vpack.c.b16 %v3816, %v3812
    %v5753 = vpack.c.b16 %v3817, %v3813
    %v5754 = vpack.c.b16 %v3818, %v3814
    %v5755 = vpack.c.b16 %v3823, %v3819
    %v5756 = vpack.c.b16 %v3824, %v3820
    %v5757 = vpack.c.b16 %v3825, %v3821
    %v5758 = vpack.c.b16 %v3826, %v3822
    %v5759 = vpack.c.b16 %v3831, %v3827
    %v5760 = vpack.c.b16 %v3832, %v3828
    %v5761 = vpack.c.b16 %v3833, %v3829
    %v5762 = vpack.c.b16 %v3834, %v3830
    %v5763 = vpack.c.b16 %v3839, %v3835
    %v5764 = vpack.c.b16 %v3840, %v3836
    %v5765 = vpack.c.b16 %v3841, %v3837
    %v5766 = vpack.c.b16 %v3842, %v3838
    %v5767 = vpack.c.b16 %v3847, %v3843
    %v5768 = vpack.c.b16 %v3848, %v3844
    %v5769 = vpack.c.b16 %v3849, %v3845
    %v5770 = vpack.c.b16 %v3850, %v3846
    %v5771 = vpack.c.b16 %v3855, %v3851
    %v5772 = vpack.c.b16 %v3856, %v3852
    %v5773 = vpack.c.b16 %v3857, %v3853
    %v5774 = vpack.c.b16 %v3858, %v3854
    %v5775 = vpack.c.b16 %v3863, %v3859
    %v5776 = vpack.c.b16 %v3864, %v3860
    %v5777 = vpack.c.b16 %v3865, %v3861
    %v5778 = vpack.c.b16 %v3866, %v3862
    %v5779 = vpack.c.b16 %v3871, %v3867
    %v5780 = vpack.c.b16 %v3872, %v3868
    %v5781 = vpack.c.b16 %v3873, %v3869
    %v5782 = vpack.c.b16 %v3874, %v3870
    %v5783 = vpack.c.b16 %v3879, %v3875
    %v5784 = vpack.c.b16 %v3880, %v3876
    %v5785 = vpack.c.b16 %v3881, %v3877
    %v5786 = vpack.c.b16 %v3882, %v3878
    %v5787 = vpack.c.b16 %v3887, %v3883
    %v5788 = vpack.c.b16 %v3888, %v3884
    %v5789 = vpack.c.b16 %v3889, %v3885
    %v5790 = vpack.c.b16 %v3890, %v3886
    %v5791 = vpack.c.b16 %v3895, %v3891
    %v5792 = vpack.c.b16 %v3896, %v3892
    %v5793 = vpack.c.b16 %v3897, %v3893
    %v5794 = vpack.c.b16 %v3898, %v3894
    %v5795 = vpack.c.b16 %v3903, %v3899
    %v5796 = vpack.c.b16 %v3904, %v3900
    %v5797 = vpack.c.b16 %v3905, %v3901
    %v5798 = vpack.c.b16 %v3906, %v3902
    %v5799 = vpack.c.b16 %v3911, %v3907
    %v5800 = vpack.c.b16 %v3912, %v3908
    %v5801 = vpack.c.b16 %v3913, %v3909
    %v5802 = vpack.c.b16 %v3914, %v3910
    %v5803 = vpack.c.b16 %v3919, %v3915
    %v5804 = vpack.c.b16 %v3920, %v3916
    %v5805 = vpack.c.b16 %v3921, %v3917
    %v5806 = vpack.c.b16 %v3922, %v3918
    %v5807 = vpack.c.b16 %v3927, %v3923
    %v5808 = vpack.c.b16 %v3928, %v3924
    %v5809 = vpack.c.b16 %v3929, %v3925
    %v5810 = vpack.c.b16 %v3930, %v3926
    %v5811 = vpack.c.b16 %v3935, %v3931
    %v5812 = vpack.c.b16 %v3936, %v3932
    %v5813 = vpack.c.b16 %v3937, %v3933
    %v5814 = vpack.c.b16 %v3938, %v3934
    %v5815 = vpack.c.b16 %v3943, %v3939
    %v5816 = vpack.c.b16 %v3944, %v3940
    %v5817 = vpack.c.b16 %v3945, %v3941
    %v5818 = vpack.c.b16 %v3946, %v3942
    %v5819 = vpack.c.b16 %v3951, %v3947
    %v5820 = vpack.c.b16 %v3952, %v3948
    %v5821 = vpack.c.b16 %v3953, %v3949
    %v5822 = vpack.c.b16 %v3954, %v3950
    %v5823 = vpack.c.b16 %v3959, %v3955
    %v5824 = vpack.c.b16 %v3960, %v3956
    %v5825 = vpack.c.b16 %v3961, %v3957
    %v5826 = vpack.c.b16 %v3962, %v3958
    %v5827 = vpack.c.b16 %v3967, %v3963
    %v5828 = vpack.c.b16 %v3968, %v3964
    %v5829 = vpack.c.b16 %v3969, %v3965
    %v5830 = vpack.c.b16 %v3970, %v3966
    %v5831 = vpack.c.b16 %v3975, %v3971
    %v5832 = vpack.c.b16 %v3976, %v3972
    %v5833 = vpack.c.b16 %v3977, %v3973
    %v5834 = vpack.c.b16 %v3978, %v3974
    %v5835 = vpack.c.b16 %v3983, %v3979
    %v5836 = vpack.c.b16 %v3984, %v3980
    %v5837 = vpack.c.b16 %v3985, %v3981
    %v5838 = vpack.c.b16 %v3986, %v3982
    %v5839 = vpack.c.b16 %v3991, %v3987
    %v5840 = vpack.c.b16 %v3992, %v3988
    %v5841 = vpack.c.b16 %v3993, %v3989
    %v5842 = vpack.c.b16 %v3994, %v3990
    %v5843 = vpack.c.b16 %v3999, %v3995
    %v5844 = vpack.c.b16 %v4000, %v3996
    %v5845 = vpack.c.b16 %v4001, %v3997
    %v5846 = vpack.c.b16 %v4002, %v3998
    %v5847 = vpack.c.b16 %v4007, %v4003
    %v5848 = vpack.c.b16 %v4008, %v4004
    %v5849 = vpack.c.b16 %v4009, %v4005
    %v5850 = vpack.c.b16 %v4010, %v4006
    %v5851 = vpack.c.b16 %v4015, %v4011
    %v5852 = vpack.c.b16 %v4016, %v4012
    %v5853 = vpack.c.b16 %v4017, %v4013
    %v5854 = vpack.c.b16 %v4018, %v4014
    %v5855 = vpack.c.b16 %v4023, %v4019
    %v5856 = vpack.c.b16 %v4024, %v4020
    %v5857 = vpack.c.b16 %v4025, %v4021
    %v5858 = vpack.c.b16 %v4026, %v4022
    %v5859 = vpack.c.b16 %v4031, %v4027
    %v5860 = vpack.c.b16 %v4032, %v4028
    %v5861 = vpack.c.b16 %v4033, %v4029
    %v5862 = vpack.c.b16 %v4034, %v4030
    %v5863 = vpack.c.b16 %v4039, %v4035
    %v5864 = vpack.c.b16 %v4040, %v4036
    %v5865 = vpack.c.b16 %v4041, %v4037
    %v5866 = vpack.c.b16 %v4042, %v4038
    %v5867 = vpack.c.b16 %v4047, %v4043
    %v5868 = vpack.c.b16 %v4048, %v4044
    %v5869 = vpack.c.b16 %v4049, %v4045
    %v5870 = vpack.c.b16 %v4050, %v4046
    %v5871 = vpack.c.b16 %v4055, %v4051
    %v5872 = vpack.c.b16 %v4056, %v4052
    %v5873 = vpack.c.b16 %v4057, %v4053
    %v5874 = vpack.c.b16 %v4058, %v4054
    %v5875 = vpack.c.b16 %v4063, %v4059
    %v5876 = vpack.c.b16 %v4064, %v4060
    %v5877 = vpack.c.b16 %v4065, %v4061
    %v5878 = vpack.c.b16 %v4066, %v4062
    %v5879 = vpack.c.b16 %v4071, %v4067
    %v5880 = vpack.c.b16 %v4072, %v4068
    %v5881 = vpack.c.b16 %v4073, %v4069
    %v5882 = vpack.c.b16 %v4074, %v4070
    %v5883 = vpack.c.b16 %v4079, %v4075
    %v5884 = vpack.c.b16 %v4080, %v4076
    %v5885 = vpack.c.b16 %v4081, %v4077
    %v5886 = vpack.c.b16 %v4082, %v4078
    %v5887 = vpack.c.b16 %v4087, %v4083
    %v5888 = vpack.c.b16 %v4088, %v4084
    %v5889 = vpack.c.b16 %v4089, %v4085
    %v5890 = vpack.c.b16 %v4090, %v4086
    %v5891 = vpack.c.b16 %v4095, %v4091
    %v5892 = vpack.c.b16 %v4096, %v4092
    %v5893 = vpack.c.b16 %v4097, %v4093
    %v5894 = vpack.c.b16 %v4098, %v4094
    %v5895 = vpack.c.b16 %v4103, %v4099
    %v5896 = vpack.c.b16 %v4104, %v4100
    %v5897 = vpack.c.b16 %v4105, %v4101
    %v5898 = vpack.c.b16 %v4106, %v4102
    %v5899 = vpack.c.b16 %v4111, %v4107
    %v5900 = vpack.c.b16 %v4112, %v4108
    %v5901 = vpack.c.b16 %v4113, %v4109
    %v5902 = vpack.c.b16 %v4114, %v4110
    %v5903 = vpack.c.b16 %v4119, %v4115
    %v5904 = vpack.c.b16 %v4120, %v4116
    %v5905 = vpack.c.b16 %v4121, %v4117
    %v5906 = vpack.c.b16 %v4122, %v4118
    %v5907 = vpack.c.b16 %v4127, %v4123
    %v5908 = vpack.c.b16 %v4128, %v4124
    %v5909 = vpack.c.b16 %v4129, %v4125
    %v5910 = vpack.c.b16 %v4130, %v4126
    %v5911 = vpack.c.b16 %v4135, %v4131
    %v5912 = vpack.c.b16 %v4136, %v4132
    %v5913 = vpack.c.b16 %v4137, %v4133
    %v5914 = vpack.c.b16 %v4138, %v4134
    %v5915 = vpack.c.b16 %v4143, %v4139
    %v5916 = vpack.c.b16 %v4144, %v4140
    %v5917 = vpack.c.b16 %v4145, %v4141
    %v5918 = vpack.c.b16 %v4146, %v4142
    %v5919 = vpack.c.b16 %v4151, %v4147
    %v5920 = vpack.c.b16 %v4152, %v4148
    %v5921 = vpack.c.b16 %v4153, %v4149
    %v5922 = vpack.c.b16 %v4154, %v4150
    %v5923 = vpack.c.b16 %v4159, %v4155
    %v5924 = vpack.c.b16 %v4160, %v4156
    %v5925 = vpack.c.b16 %v4161, %v4157
    %v5926 = vpack.c.b16 %v4162, %v4158
    %v5927 = vpack.c.b16 %v4167, %v4163
    %v5928 = vpack.c.b16 %v4168, %v4164
    %v5929 = vpack.c.b16 %v4169, %v4165
    %v5930 = vpack.c.b16 %v4170, %v4166
    %v5931 = vpack.c.b16 %v4175, %v4171
    %v5932 = vpack.c.b16 %v4176, %v4172
    %v5933 = vpack.c.b16 %v4177, %v4173
    %v5934 = vpack.c.b16 %v4178, %v4174
    %v5935 = vpack.c.b16 %v4183, %v4179
    %v5936 = vpack.c.b16 %v4184, %v4180
    %v5937 = vpack.c.b16 %v4185, %v4181
    %v5938 = vpack.c.b16 %v4186, %v4182
    %v5939 = vpack.c.b16 %v4191, %v4187
    %v5940 = vpack.c.b16 %v4192, %v4188
    %v5941 = vpack.c.b16 %v4193, %v4189
    %v5942 = vpack.c.b16 %v4194, %v4190
    %v5943 = vpack.c.b16 %v4199, %v4195
    %v5944 = vpack.c.b16 %v4200, %v4196
    %v5945 = vpack.c.b16 %v4201, %v4197
    %v5946 = vpack.c.b16 %v4202, %v4198
    %v5947 = vpack.c.b16 %v4207, %v4203
    %v5948 = vpack.c.b16 %v4208, %v4204
    %v5949 = vpack.c.b16 %v4209, %v4205
    %v5950 = vpack.c.b16 %v4210, %v4206
    %v5951 = vpack.c.b16 %v4215, %v4211
    %v5952 = vpack.c.b16 %v4216, %v4212
    %v5953 = vpack.c.b16 %v4217, %v4213
    %v5954 = vpack.c.b16 %v4218, %v4214
    %v5955 = vpack.c.b16 %v4223, %v4219
    %v5956 = vpack.c.b16 %v4224, %v4220
    %v5957 = vpack.c.b16 %v4225, %v4221
    %v5958 = vpack.c.b16 %v4226, %v4222
    %v5959 = vpack.c.b16 %v4231, %v4227
    %v5960 = vpack.c.b16 %v4232, %v4228
    %v5961 = vpack.c.b16 %v4233, %v4229
    %v5962 = vpack.c.b16 %v4234, %v4230
    %v5963 = vpack.c.b16 %v4239, %v4235
    %v5964 = vpack.c.b16 %v4240, %v4236
    %v5965 = vpack.c.b16 %v4241, %v4237
    %v5966 = vpack.c.b16 %v4242, %v4238
    %v5967 = vpack.c.b16 %v4247, %v4243
    %v5968 = vpack.c.b16 %v4248, %v4244
    %v5969 = vpack.c.b16 %v4249, %v4245
    %v5970 = vpack.c.b16 %v4250, %v4246
    %v5971 = vpack.c.b16 %v4255, %v4251
    %v5972 = vpack.c.b16 %v4256, %v4252
    %v5973 = vpack.c.b16 %v4257, %v4253
    %v5974 = vpack.c.b16 %v4258, %v4254
    %v5975 = vpack.c.b16 %v4263, %v4259
    %v5976 = vpack.c.b16 %v4264, %v4260
    %v5977 = vpack.c.b16 %v4265, %v4261
    %v5978 = vpack.c.b16 %v4266, %v4262
    %v5979 = vpack.c.b16 %v4271, %v4267
    %v5980 = vpack.c.b16 %v4272, %v4268
    %v5981 = vpack.c.b16 %v4273, %v4269
    %v5982 = vpack.c.b16 %v4274, %v4270
    %v5983 = vpack.c.b16 %v4279, %v4275
    %v5984 = vpack.c.b16 %v4280, %v4276
    %v5985 = vpack.c.b16 %v4281, %v4277
    %v5986 = vpack.c.b16 %v4282, %v4278
    %v5987 = vpack.c.b16 %v4287, %v4283
    %v5988 = vpack.c.b16 %v4288, %v4284
    %v5989 = vpack.c.b16 %v4289, %v4285
    %v5990 = vpack.c.b16 %v4290, %v4286
    %v5991 = vpack.c.b16 %v4295, %v4291
    %v5992 = vpack.c.b16 %v4296, %v4292
    %v5993 = vpack.c.b16 %v4297, %v4293
    %v5994 = vpack.c.b16 %v4298, %v4294
    %v5995 = vpack.c.b16 %v4303, %v4299
    %v5996 = vpack.c.b16 %v4304, %v4300
    %v5997 = vpack.c.b16 %v4305, %v4301
    %v5998 = vpack.c.b16 %v4306, %v4302
    %v5999 = vpack.c.b16 %v4311, %v4307
    %v6000 = vpack.c.b16 %v4312, %v4308
    %v6001 = vpack.c.b16 %v4313, %v4309
    %v6002 = vpack.c.b16 %v4314, %v4310
    %v6003 = vpack.c.b16 %v4319, %v4315
    %v6004 = vpack.c.b16 %v4320, %v4316
    %v6005 = vpack.c.b16 %v4321, %v4317
    %v6006 = vpack.c.b16 %v4322, %v4318
    %v6007 = vpack.c.b16 %v4327, %v4323
    %v6008 = vpack.c.b16 %v4328, %v4324
    %v6009 = vpack.c.b16 %v4329, %v4325
    %v6010 = vpack.c.b16 %v4330, %v4326
    %v6011 = vpack.c.b16 %v4335, %v4331
    %v6012 = vpack.c.b16 %v4336, %v4332
    %v6013 = vpack.c.b16 %v4337, %v4333
    %v6014 = vpack.c.b16 %v4338, %v4334
    %v6015 = vpack.c.b16 %v4343, %v4339
    %v6016 = vpack.c.b16 %v4344, %v4340
    %v6017 = vpack.c.b16 %v4345, %v4341
    %v6018 = vpack.c.b16 %v4346, %v4342
    %v6019 = vpack.c.b16 %v4351, %v4347
    %v6020 = vpack.c.b16 %v4352, %v4348
    %v6021 = vpack.c.b16 %v4353, %v4349
    %v6022 = vpack.c.b16 %v4354, %v4350
    %v6023 = vpack.c.b16 %v4359, %v4355
    %v6024 = vpack.c.b16 %v4360, %v4356
    %v6025 = vpack.c.b16 %v4361, %v4357
    %v6026 = vpack.c.b16 %v4362, %v4358
    %v6027 = vpack.c.b16 %v4367, %v4363
    %v6028 = vpack.c.b16 %v4368, %v4364
    %v6029 = vpack.c.b16 %v4369, %v4365
    %v6030 = vpack.c.b16 %v4370, %v4366
    %v6031 = vpack.c.b16 %v4375, %v4371
    %v6032 = vpack.c.b16 %v4376, %v4372
    %v6033 = vpack.c.b16 %v4377, %v4373
    %v6034 = vpack.c.b16 %v4378, %v4374
    %v6035 = vpack.c.b16 %v4383, %v4379
    %v6036 = vpack.c.b16 %v4384, %v4380
    %v6037 = vpack.c.b16 %v4385, %v4381
    %v6038 = vpack.c.b16 %v4386, %v4382
    %v6039 = vpack.c.b16 %v4391, %v4387
    %v6040 = vpack.c.b16 %v4392, %v4388
    %v6041 = vpack.c.b16 %v4393, %v4389
    %v6042 = vpack.c.b16 %v4394, %v4390
    %v6043 = vpack.c.b16 %v4399, %v4395
    %v6044 = vpack.c.b16 %v4400, %v4396
    %v6045 = vpack.c.b16 %v4401, %v4397
    %v6046 = vpack.c.b16 %v4402, %v4398
    %v6047 = vpack.c.b16 %v4407, %v4403
    %v6048 = vpack.c.b16 %v4408, %v4404
    %v6049 = vpack.c.b16 %v4409, %v4405
    %v6050 = vpack.c.b16 %v4410, %v4406
    %v6051 = vpack.c.b16 %v4415, %v4411
    %v6052 = vpack.c.b16 %v4416, %v4412
    %v6053 = vpack.c.b16 %v4417, %v4413
    %v6054 = vpack.c.b16 %v4418, %v4414
    %v6055 = vpack.c.b16 %v4423, %v4419
    %v6056 = vpack.c.b16 %v4424, %v4420
    %v6057 = vpack.c.b16 %v4425, %v4421
    %v6058 = vpack.c.b16 %v4426, %v4422
    %v6059 = vpack.c.b16 %v4431, %v4427
    %v6060 = vpack.c.b16 %v4432, %v4428
    %v6061 = vpack.c.b16 %v4433, %v4429
    %v6062 = vpack.c.b16 %v4434, %v4430
    %v6063 = vpack.c.b16 %v4439, %v4435
    %v6064 = vpack.c.b16 %v4440, %v4436
    %v6065 = vpack.c.b16 %v4441, %v4437
    %v6066 = vpack.c.b16 %v4442, %v4438
    %v6067 = vpack.c.b16 %v4447, %v4443
    %v6068 = vpack.c.b16 %v4448, %v4444
    %v6069 = vpack.c.b16 %v4449, %v4445
    %v6070 = vpack.c.b16 %v4450, %v4446
    %v6071 = vpack.c.b16 %v4455, %v4451
    %v6072 = vpack.c.b16 %v4456, %v4452
    %v6073 = vpack.c.b16 %v4457, %v4453
    %v6074 = vpack.c.b16 %v4458, %v4454
    %v6075 = vpack.c.b16 %v4463, %v4459
    %v6076 = vpack.c.b16 %v4464, %v4460
    %v6077 = vpack.c.b16 %v4465, %v4461
    %v6078 = vpack.c.b16 %v4466, %v4462
    %v6079 = vpack.c.b16 %v4471, %v4467
    %v6080 = vpack.c.b16 %v4472, %v4468
    %v6081 = vpack.c.b16 %v4473, %v4469
    %v6082 = vpack.c.b16 %v4474, %v4470
    %v6083 = vpack.c.b16 %v4479, %v4475
    %v6084 = vpack.c.b16 %v4480, %v4476
    %v6085 = vpack.c.b16 %v4481, %v4477
    %v6086 = vpack.c.b16 %v4482, %v4478
    %v6087 = vpack.c.b16 %v4487, %v4483
    %v6088 = vpack.c.b16 %v4488, %v4484
    %v6089 = vpack.c.b16 %v4489, %v4485
    %v6090 = vpack.c.b16 %v4490, %v4486
    %v6091 = vpack.c.b16 %v4495, %v4491
    %v6092 = vpack.c.b16 %v4496, %v4492
    %v6093 = vpack.c.b16 %v4497, %v4493
    %v6094 = vpack.c.b16 %v4498, %v4494
    %v6095 = vpack.c.b16 %v4503, %v4499
    %v6096 = vpack.c.b16 %v4504, %v4500
    %v6097 = vpack.c.b16 %v4505, %v4501
    %v6098 = vpack.c.b16 %v4506, %v4502
    %v6099 = vpack.c.b16 %v4511, %v4507
    %v6100 = vpack.c.b16 %v4512, %v4508
    %v6101 = vpack.c.b16 %v4513, %v4509
    %v6102 = vpack.c.b16 %v4514, %v4510
    %v6103 = vpack.c.b16 %v4519, %v4515
    %v6104 = vpack.c.b16 %v4520, %v4516
    %v6105 = vpack.c.b16 %v4521, %v4517
    %v6106 = vpack.c.b16 %v4522, %v4518
    %v6107 = vpack.c.b16 %v4527, %v4523
    %v6108 = vpack.c.b16 %v4528, %v4524
    %v6109 = vpack.c.b16 %v4529, %v4525
    %v6110 = vpack.c.b16 %v4530, %v4526
    %v6111 = vpack.c.b16 %v4535, %v4531
    %v6112 = vpack.c.b16 %v4536, %v4532
    %v6113 = vpack.c.b16 %v4537, %v4533
    %v6114 = vpack.c.b16 %v4538, %v4534
    %v6115 = vpack.c.b16 %v4543, %v4539
    %v6116 = vpack.c.b16 %v4544, %v4540
    %v6117 = vpack.c.b16 %v4545, %v4541
    %v6118 = vpack.c.b16 %v4546, %v4542
    %v6119 = vpack.c.b16 %v4551, %v4547
    %v6120 = vpack.c.b16 %v4552, %v4548
    %v6121 = vpack.c.b16 %v4553, %v4549
    %v6122 = vpack.c.b16 %v4554, %v4550
    %v6123 = vpack.c.b16 %v4559, %v4555
    %v6124 = vpack.c.b16 %v4560, %v4556
    %v6125 = vpack.c.b16 %v4561, %v4557
    %v6126 = vpack.c.b16 %v4562, %v4558
    %v6127 = vpack.c.b16 %v4567, %v4563
    %v6128 = vpack.c.b16 %v4568, %v4564
    %v6129 = vpack.c.b16 %v4569, %v4565
    %v6130 = vpack.c.b16 %v4570, %v4566
    %v6131 = vpack.c.b16 %v4575, %v4571
    %v6132 = vpack.c.b16 %v4576, %v4572
    %v6133 = vpack.c.b16 %v4577, %v4573
    %v6134 = vpack.c.b16 %v4578, %v4574
    %v6135 = vpack.c.b16 %v4583, %v4579
    %v6136 = vpack.c.b16 %v4584, %v4580
    %v6137 = vpack.c.b16 %v4585, %v4581
    %v6138 = vpack.c.b16 %v4586, %v4582
    %v6139 = vpack.c.b16 %v4591, %v4587
    %v6140 = vpack.c.b16 %v4592, %v4588
    %v6141 = vpack.c.b16 %v4593, %v4589
    %v6142 = vpack.c.b16 %v4594, %v4590
    %v6143 = vpack.c.b16 %v4599, %v4595
    %v6144 = vpack.c.b16 %v4600, %v4596
    %v6145 = vpack.c.b16 %v4601, %v4597
    %v6146 = vpack.c.b16 %v4602, %v4598
    %v6147 = vpack.c.b16 %v4607, %v4603
    %v6148 = vpack.c.b16 %v4608, %v4604
    %v6149 = vpack.c.b16 %v4609, %v4605
    %v6150 = vpack.c.b16 %v4610, %v4606
    %v6151 = vpack.c.b16 %v4615, %v4611
    %v6152 = vpack.c.b16 %v4616, %v4612
    %v6153 = vpack.c.b16 %v4617, %v4613
    %v6154 = vpack.c.b16 %v4618, %v4614
    %v6155 = vpack.c.b16 %v4623, %v4619
    %v6156 = vpack.c.b16 %v4624, %v4620
    %v6157 = vpack.c.b16 %v4625, %v4621
    %v6158 = vpack.c.b16 %v4626, %v4622
    %v6159 = vpack.c.b16 %v4631, %v4627
    %v6160 = vpack.c.b16 %v4632, %v4628
    %v6161 = vpack.c.b16 %v4633, %v4629
    %v6162 = vpack.c.b16 %v4634, %v4630
    %v6163 = vpack.c.b16 %v4639, %v4635
    %v6164 = vpack.c.b16 %v4640, %v4636
    %v6165 = vpack.c.b16 %v4641, %v4637
    %v6166 = vpack.c.b16 %v4642, %v4638
    %v6167 = vpack.c.b16 %v4647, %v4643
    %v6168 = vpack.c.b16 %v4648, %v4644
    %v6169 = vpack.c.b16 %v4649, %v4645
    %v6170 = vpack.c.b16 %v4650, %v4646
    %v6171 = vpack.c.b16 %v4655, %v4651
    %v6172 = vpack.c.b16 %v4656, %v4652
    %v6173 = vpack.c.b16 %v4657, %v4653
    %v6174 = vpack.c.b16 %v4658, %v4654
    %v6175 = vpack.c.b16 %v4663, %v4659
    %v6176 = vpack.c.b16 %v4664, %v4660
    %v6177 = vpack.c.b16 %v4665, %v4661
    %v6178 = vpack.c.b16 %v4666, %v4662
    %v6179 = vpack.c.b16 %v4671, %v4667
    %v6180 = vpack.c.b16 %v4672, %v4668
    %v6181 = vpack.c.b16 %v4673, %v4669
    %v6182 = vpack.c.b16 %v4674, %v4670
    %v6183 = vpack.c.b16 %v4679, %v4675
    %v6184 = vpack.c.b16 %v4680, %v4676
    %v6185 = vpack.c.b16 %v4681, %v4677
    %v6186 = vpack.c.b16 %v4682, %v4678
    %v6187 = vpack.c.b16 %v4687, %v4683
    %v6188 = vpack.c.b16 %v4688, %v4684
    %v6189 = vpack.c.b16 %v4689, %v4685
    %v6190 = vpack.c.b16 %v4690, %v4686
    %v6191 = vpack.c.b16 %v4695, %v4691
    %v6192 = vpack.c.b16 %v4696, %v4692
    %v6193 = vpack.c.b16 %v4697, %v4693
    %v6194 = vpack.c.b16 %v4698, %v4694
    %v6195 = vpack.c.b16 %v4703, %v4699
    %v6196 = vpack.c.b16 %v4704, %v4700
    %v6197 = vpack.c.b16 %v4705, %v4701
    %v6198 = vpack.c.b16 %v4706, %v4702
    %v6199 = vpack.c.b16 %v4711, %v4707
    %v6200 = vpack.c.b16 %v4712, %v4708
    %v6201 = vpack.c.b16 %v4713, %v4709
    %v6202 = vpack.c.b16 %v4714, %v4710
    %v6203 = vpack.c.b16 %v4719, %v4715
    %v6204 = vpack.c.b16 %v4720, %v4716
    %v6205 = vpack.c.b16 %v4721, %v4717
    %v6206 = vpack.c.b16 %v4722, %v4718
    %v6207 = vpack.c.b16 %v4727, %v4723
    %v6208 = vpack.c.b16 %v4728, %v4724
    %v6209 = vpack.c.b16 %v4729, %v4725
    %v6210 = vpack.c.b16 %v4730, %v4726
    %v6211 = vpack.c.b16 %v4735, %v4731
    %v6212 = vpack.c.b16 %v4736, %v4732
    %v6213 = vpack.c.b16 %v4737, %v4733
    %v6214 = vpack.c.b16 %v4738, %v4734
    %v6215 = vpack.c.b16 %v4743, %v4739
    %v6216 = vpack.c.b16 %v4744, %v4740
    %v6217 = vpack.c.b16 %v4745, %v4741
    %v6218 = vpack.c.b16 %v4746, %v4742
    %v6219 = vpack.c.b16 %v4751, %v4747
    %v6220 = vpack.c.b16 %v4752, %v4748
    %v6221 = vpack.c.b16 %v4753, %v4749
    %v6222 = vpack.c.b16 %v4754, %v4750
    %v6223 = vpack.c.b16 %v4759, %v4755
    %v6224 = vpack.c.b16 %v4760, %v4756
    %v6225 = vpack.c.b16 %v4761, %v4757
    %v6226 = vpack.c.b16 %v4762, %v4758
    %v6227 = vpack.c.b16 %v4767, %v4763
    %v6228 = vpack.c.b16 %v4768, %v4764
    %v6229 = vpack.c.b16 %v4769, %v4765
    %v6230 = vpack.c.b16 %v4770, %v4766
    %v6231 = vpack.c.b16 %v4775, %v4771
    %v6232 = vpack.c.b16 %v4776, %v4772
    %v6233 = vpack.c.b16 %v4777, %v4773
    %v6234 = vpack.c.b16 %v4778, %v4774
    %v6235 = vpack.c.b16 %v4783, %v4779
    %v6236 = vpack.c.b16 %v4784, %v4780
    %v6237 = vpack.c.b16 %v4785, %v4781
    %v6238 = vpack.c.b16 %v4786, %v4782
    %v6239 = vpack.c.b16 %v4791, %v4787
    %v6240 = vpack.c.b16 %v4792, %v4788
    %v6241 = vpack.c.b16 %v4793, %v4789
    %v6242 = vpack.c.b16 %v4794, %v4790
    %v6243 = vpack.c.b16 %v4799, %v4795
    %v6244 = vpack.c.b16 %v4800, %v4796
    %v6245 = vpack.c.b16 %v4801, %v4797
    %v6246 = vpack.c.b16 %v4802, %v4798
    %v6247 = vpack.c.b16 %v4807, %v4803
    %v6248 = vpack.c.b16 %v4808, %v4804
    %v6249 = vpack.c.b16 %v4809, %v4805
    %v6250 = vpack.c.b16 %v4810, %v4806
    %v6251 = vpack.c.b16 %v4815, %v4811
    %v6252 = vpack.c.b16 %v4816, %v4812
    %v6253 = vpack.c.b16 %v4817, %v4813
    %v6254 = vpack.c.b16 %v4818, %v4814
    %v6255 = vpack.c.b16 %v4823, %v4819
    %v6256 = vpack.c.b16 %v4824, %v4820
    %v6257 = vpack.c.b16 %v4825, %v4821
    %v6258 = vpack.c.b16 %v4826, %v4822
    %v6259 = vpack.c.b16 %v4831, %v4827
    %v6260 = vpack.c.b16 %v4832, %v4828
    %v6261 = vpack.c.b16 %v4833, %v4829
    %v6262 = vpack.c.b16 %v4834, %v4830
    %v6263 = vpack.c.b16 %v4839, %v4835
    %v6264 = vpack.c.b16 %v4840, %v4836
    %v6265 = vpack.c.b16 %v4841, %v4837
    %v6266 = vpack.c.b16 %v4842, %v4838
    %v6267 = vpack.c.b16 %v4847, %v4843
    %v6268 = vpack.c.b16 %v4848, %v4844
    %v6269 = vpack.c.b16 %v4849, %v4845
    %v6270 = vpack.c.b16 %v4850, %v4846
    %v6271 = vpack.c.b16 %v4855, %v4851
    %v6272 = vpack.c.b16 %v4856, %v4852
    %v6273 = vpack.c.b16 %v4857, %v4853
    %v6274 = vpack.c.b16 %v4858, %v4854
    %v6275 = vpack.c.b16 %v4863, %v4859
    %v6276 = vpack.c.b16 %v4864, %v4860
    %v6277 = vpack.c.b16 %v4865, %v4861
    %v6278 = vpack.c.b16 %v4866, %v4862
    %v6279 = vpack.c.b16 %v4871, %v4867
    %v6280 = vpack.c.b16 %v4872, %v4868
    %v6281 = vpack.c.b16 %v4873, %v4869
    %v6282 = vpack.c.b16 %v4874, %v4870
    %v6283 = vpack.c.b16 %v4879, %v4875
    %v6284 = vpack.c.b16 %v4880, %v4876
    %v6285 = vpack.c.b16 %v4881, %v4877
    %v6286 = vpack.c.b16 %v4882, %v4878
    %v6287 = vpack.c.b16 %v4887, %v4883
    %v6288 = vpack.c.b16 %v4888, %v4884
    %v6289 = vpack.c.b16 %v4889, %v4885
    %v6290 = vpack.c.b16 %v4890, %v4886
    %v6291 = vpack.c.b16 %v4895, %v4891
    %v6292 = vpack.c.b16 %v4896, %v4892
    %v6293 = vpack.c.b16 %v4897, %v4893
    %v6294 = vpack.c.b16 %v4898, %v4894
    %v6295 = vpack.c.b16 %v4903, %v4899
    %v6296 = vpack.c.b16 %v4904, %v4900
    %v6297 = vpack.c.b16 %v4905, %v4901
    %v6298 = vpack.c.b16 %v4906, %v4902
    %v6299 = vpack.c.b16 %v4911, %v4907
    %v6300 = vpack.c.b16 %v4912, %v4908
    %v6301 = vpack.c.b16 %v4913, %v4909
    %v6302 = vpack.c.b16 %v4914, %v4910
    %v6303 = vpack.c.b16 %v4919, %v4915
    %v6304 = vpack.c.b16 %v4920, %v4916
    %v6305 = vpack.c.b16 %v4921, %v4917
    %v6306 = vpack.c.b16 %v4922, %v4918
    %v6307 = vpack.c.b16 %v4927, %v4923
    %v6308 = vpack.c.b16 %v4928, %v4924
    %v6309 = vpack.c.b16 %v4929, %v4925
    %v6310 = vpack.c.b16 %v4930, %v4926
    %v6311 = vpack.c.b16 %v4935, %v4931
    %v6312 = vpack.c.b16 %v4936, %v4932
    %v6313 = vpack.c.b16 %v4937, %v4933
    %v6314 = vpack.c.b16 %v4938, %v4934
    %v6315 = vpack.c.b16 %v4943, %v4939
    %v6316 = vpack.c.b16 %v4944, %v4940
    %v6317 = vpack.c.b16 %v4945, %v4941
    %v6318 = vpack.c.b16 %v4946, %v4942
    %v6319 = vpack.c.b16 %v4951, %v4947
    %v6320 = vpack.c.b16 %v4952, %v4948
    %v6321 = vpack.c.b16 %v4953, %v4949
    %v6322 = vpack.c.b16 %v4954, %v4950
    %v6323 = vpack.c.b16 %v4959, %v4955
    %v6324 = vpack.c.b16 %v4960, %v4956
    %v6325 = vpack.c.b16 %v4961, %v4957
    %v6326 = vpack.c.b16 %v4962, %v4958
    %v6327 = vpack.c.b16 %v4967, %v4963
    %v6328 = vpack.c.b16 %v4968, %v4964
    %v6329 = vpack.c.b16 %v4969, %v4965
    %v6330 = vpack.c.b16 %v4970, %v4966
    %v6331 = vpack.c.b16 %v4975, %v4971
    %v6332 = vpack.c.b16 %v4976, %v4972
    %v6333 = vpack.c.b16 %v4977, %v4973
    %v6334 = vpack.c.b16 %v4978, %v4974
    %v6335 = vpack.c.b16 %v4983, %v4979
    %v6336 = vpack.c.b16 %v4984, %v4980
    %v6337 = vpack.c.b16 %v4985, %v4981
    %v6338 = vpack.c.b16 %v4986, %v4982
    %v6339 = vpack.c.b16 %v4991, %v4987
    %v6340 = vpack.c.b16 %v4992, %v4988
    %v6341 = vpack.c.b16 %v4993, %v4989
    %v6342 = vpack.c.b16 %v4994, %v4990
    %v6343 = vpack.c.b16 %v4999, %v4995
    %v6344 = vpack.c.b16 %v5000, %v4996
    %v6345 = vpack.c.b16 %v5001, %v4997
    %v6346 = vpack.c.b16 %v5002, %v4998
    %v6347 = vpack.c.b16 %v5007, %v5003
    %v6348 = vpack.c.b16 %v5008, %v5004
    %v6349 = vpack.c.b16 %v5009, %v5005
    %v6350 = vpack.c.b16 %v5010, %v5006
    %v6351 = vpack.c.b16 %v5015, %v5011
    %v6352 = vpack.c.b16 %v5016, %v5012
    %v6353 = vpack.c.b16 %v5017, %v5013
    %v6354 = vpack.c.b16 %v5018, %v5014
    %v6355 = vpack.c.b16 %v5023, %v5019
    %v6356 = vpack.c.b16 %v5024, %v5020
    %v6357 = vpack.c.b16 %v5025, %v5021
    %v6358 = vpack.c.b16 %v5026, %v5022
    %v6359 = vpack.c.b16 %v5031, %v5027
    %v6360 = vpack.c.b16 %v5032, %v5028
    %v6361 = vpack.c.b16 %v5033, %v5029
    %v6362 = vpack.c.b16 %v5034, %v5030
    %v6363 = vpack.c.b16 %v5039, %v5035
    %v6364 = vpack.c.b16 %v5040, %v5036
    %v6365 = vpack.c.b16 %v5041, %v5037
    %v6366 = vpack.c.b16 %v5042, %v5038
    %v6367 = vpack.c.b16 %v5047, %v5043
    %v6368 = vpack.c.b16 %v5048, %v5044
    %v6369 = vpack.c.b16 %v5049, %v5045
    %v6370 = vpack.c.b16 %v5050, %v5046
    %v6371 = vpack.c.b16 %v5055, %v5051
    %v6372 = vpack.c.b16 %v5056, %v5052
    %v6373 = vpack.c.b16 %v5057, %v5053
    %v6374 = vpack.c.b16 %v5058, %v5054
    %v6375 = vpack.c.b16 %v5063, %v5059
    %v6376 = vpack.c.b16 %v5064, %v5060
    %v6377 = vpack.c.b16 %v5065, %v5061
    %v6378 = vpack.c.b16 %v5066, %v5062
    %v6379 = vpack.c.b16 %v5071, %v5067
    %v6380 = vpack.c.b16 %v5072, %v5068
    %v6381 = vpack.c.b16 %v5073, %v5069
    %v6382 = vpack.c.b16 %v5074, %v5070
    %v6383 = vpack.c.b16 %v5079, %v5075
    %v6384 = vpack.c.b16 %v5080, %v5076
    %v6385 = vpack.c.b16 %v5081, %v5077
    %v6386 = vpack.c.b16 %v5082, %v5078
    %v6387 = vpack.c.b16 %v5087, %v5083
    %v6388 = vpack.c.b16 %v5088, %v5084
    %v6389 = vpack.c.b16 %v5089, %v5085
    %v6390 = vpack.c.b16 %v5090, %v5086
    %v6391 = vpack.c.b16 %v5095, %v5091
    %v6392 = vpack.c.b16 %v5096, %v5092
    %v6393 = vpack.c.b16 %v5097, %v5093
    %v6394 = vpack.c.b16 %v5098, %v5094
    %v6395 = vpack.c.b16 %v5103, %v5099
    %v6396 = vpack.c.b16 %v5104, %v5100
    %v6397 = vpack.c.b16 %v5105, %v5101
    %v6398 = vpack.c.b16 %v5106, %v5102
    %v6399 = vpack.c.b16 %v5111, %v5107
    %v6400 = vpack.c.b16 %v5112, %v5108
    %v6401 = vpack.c.b16 %v5113, %v5109
    %v6402 = vpack.c.b16 %v5114, %v5110
    %v6403 = vpack.c.b16 %v5119, %v5115
    %v6404 = vpack.c.b16 %v5120, %v5116
    %v6405 = vpack.c.b16 %v5121, %v5117
    %v6406 = vpack.c.b16 %v5122, %v5118
    %v6407 = vpack.c.b16 %v5127, %v5123
    %v6408 = vpack.c.b16 %v5128, %v5124
    %v6409 = vpack.c.b16 %v5129, %v5125
    %v6410 = vpack.c.b16 %v5130, %v5126
    %v6411 = vpack.c.b16 %v5135, %v5131
    %v6412 = vpack.c.b16 %v5136, %v5132
    %v6413 = vpack.c.b16 %v5137, %v5133
    %v6414 = vpack.c.b16 %v5138, %v5134
    %v6415 = vpack.c.b16 %v5143, %v5139
    %v6416 = vpack.c.b16 %v5144, %v5140
    %v6417 = vpack.c.b16 %v5145, %v5141
    %v6418 = vpack.c.b16 %v5146, %v5142
    %v6419 = vpack.c.b16 %v5151, %v5147
    %v6420 = vpack.c.b16 %v5152, %v5148
    %v6421 = vpack.c.b16 %v5153, %v5149
    %v6422 = vpack.c.b16 %v5154, %v5150
    %v6423 = vpack.c.b16 %v5159, %v5155
    %v6424 = vpack.c.b16 %v5160, %v5156
    %v6425 = vpack.c.b16 %v5161, %v5157
    %v6426 = vpack.c.b16 %v5162, %v5158
    %v6427 = vpack.c.b16 %v5167, %v5163
    %v6428 = vpack.c.b16 %v5168, %v5164
    %v6429 = vpack.c.b16 %v5169, %v5165
    %v6430 = vpack.c.b16 %v5170, %v5166
    %v6431 = vpack.c.b16 %v5175, %v5171
    %v6432 = vpack.c.b16 %v5176, %v5172
    %v6433 = vpack.c.b16 %v5177, %v5173
    %v6434 = vpack.c.b16 %v5178, %v5174
    %v6435 = vpack.c.b16 %v5183, %v5179
    %v6436 = vpack.c.b16 %v5184, %v5180
    %v6437 = vpack.c.b16 %v5185, %v5181
    %v6438 = vpack.c.b16 %v5186, %v5182
    %v6439 = vpack.c.b16 %v5191, %v5187
    %v6440 = vpack.c.b16 %v5192, %v5188
    %v6441 = vpack.c.b16 %v5193, %v5189
    %v6442 = vpack.c.b16 %v5194, %v5190
    %7691 = vmatprep.subr.bf16.mxu0 %v5224
    %7692 = vmatpush1.bf16.msra.mxu0 %v5223
    %7693 = vmatprep.subr.bf16.mxu0 %v5220
    %7694 = vmatpush1.bf16.msra.mxu0 %v5219
    %7695 = vmatprep.subr.bf16.mxu0 %v5216
    %7696 = vmatpush1.bf16.msra.mxu0 %v5215
    %7697 = vmatprep.subr.bf16.mxu0 %v5212
    %7698 = vmatpush1.bf16.msra.mxu0 %v5211
    %7699 = vmatprep.subr.bf16.mxu0 %v5208
    %7700 = vmatpush1.bf16.msra.mxu0 %v5207
    %7701 = vmatprep.subr.bf16.mxu0 %v5204
    %7702 = vmatpush1.bf16.msra.mxu0 %v5203
    %7703 = vmatprep.subr.bf16.mxu0 %v5200
    %7704 = vmatpush1.bf16.msra.mxu0 %v5199
    %7705 = vmatprep.subr.bf16.mxu0 %v5196
    %7706 = vmatpush1.bf16.msra.mxu0 %v5195
    %7707 = vmatprep.subr.bf16.mxu0 %v5256
    %7708 = vmatpush2.bf16.msra.mxu0 %v5255
    %7709 = vmatprep.subr.bf16.mxu0 %v5252
    %7710 = vmatpush2.bf16.msra.mxu0 %v5251
    %7711 = vmatprep.subr.bf16.mxu0 %v5248
    %7712 = vmatpush2.bf16.msra.mxu0 %v5247
    %7713 = vmatprep.subr.bf16.mxu0 %v5244
    %7714 = vmatpush2.bf16.msra.mxu0 %v5243
    %7715 = vmatprep.subr.bf16.mxu0 %v5240
    %7716 = vmatpush2.bf16.msra.mxu0 %v5239
    %7717 = vmatprep.subr.bf16.mxu0 %v5236
    %7718 = vmatpush2.bf16.msra.mxu0 %v5235
    %7719 = vmatprep.subr.bf16.mxu0 %v5232
    %7720 = vmatpush2.bf16.msra.mxu0 %v5231
    %7721 = vmatprep.subr.bf16.mxu0 %v5228
    %7722 = vmatpush2.bf16.msra.mxu0 %v5227
    %7723 = vmatprep.mubr.bf16.mxu0 %v143
    %7724 = vmatmul.mubr.bf16.gmra.mxu0 %v142
    %v7725 = vpop.f32.mrf.mxu0
    %v7726 = vadd.f32 %v1434, %v7725
    %v7727 = vpop.f32.mrf.mxu0
    %v7728 = vadd.f32 %v1438, %v7727
    %v7729 = vpop.f32.mrf.mxu0
    %v7730 = vpop.f32.mrf.mxu0
    %7731 = vdwg.mxu0
    %7732 = vmatprep.subr.bf16.mxu0 %v5288
    %7733 = vmatpush1.bf16.msra.mxu0 %v5287
    %7734 = vmatprep.subr.bf16.mxu0 %v5284
    %7735 = vmatpush1.bf16.msra.mxu0 %v5283
    %7736 = vmatprep.subr.bf16.mxu0 %v5280
    %7737 = vmatpush1.bf16.msra.mxu0 %v5279
    %7738 = vmatprep.subr.bf16.mxu0 %v5276
    %7739 = vmatpush1.bf16.msra.mxu0 %v5275
    %7740 = vmatprep.subr.bf16.mxu0 %v5272
    %7741 = vmatpush1.bf16.msra.mxu0 %v5271
    %7742 = vmatprep.subr.bf16.mxu0 %v5268
    %7743 = vmatpush1.bf16.msra.mxu0 %v5267
    %7744 = vmatprep.subr.bf16.mxu0 %v5264
    %7745 = vmatpush1.bf16.msra.mxu0 %v5263
    %7746 = vmatprep.subr.bf16.mxu0 %v5260
    %7747 = vmatpush1.bf16.msra.mxu0 %v5259
    %7748 = vmatprep.subr.bf16.mxu0 %v5320
    %7749 = vmatpush2.bf16.msra.mxu0 %v5319
    %7750 = vmatprep.subr.bf16.mxu0 %v5316
    %7751 = vmatpush2.bf16.msra.mxu0 %v5315
    %7752 = vmatprep.subr.bf16.mxu0 %v5312
    %7753 = vmatpush2.bf16.msra.mxu0 %v5311
    %7754 = vmatprep.subr.bf16.mxu0 %v5308
    %7755 = vmatpush2.bf16.msra.mxu0 %v5307
    %7756 = vmatprep.subr.bf16.mxu0 %v5304
    %7757 = vmatpush2.bf16.msra.mxu0 %v5303
    %7758 = vmatprep.subr.bf16.mxu0 %v5300
    %7759 = vmatpush2.bf16.msra.mxu0 %v5299
    %7760 = vmatprep.subr.bf16.mxu0 %v5296
    %7761 = vmatpush2.bf16.msra.mxu0 %v5295
    %7762 = vmatprep.subr.bf16.mxu0 %v5292
    %7763 = vmatpush2.bf16.msra.mxu0 %v5291
    %7764 = vmatprep.mubr.bf16.mxu0 %v145
    %7765 = vmatmul.mubr.bf16.gmra.mxu0 %v144
    %v7766 = vpop.f32.mrf.mxu0
    %v7767 = vadd.f32 %v7726, %v7766
    %v7768 = vpop.f32.mrf.mxu0
    %v7769 = vadd.f32 %v7728, %v7768
    %v7770 = vpop.f32.mrf.mxu0
    %v7771 = vpop.f32.mrf.mxu0
    %7772 = vdwg.mxu0
    %7773 = vmatprep.subr.bf16.mxu0 %v5352
    %7774 = vmatpush1.bf16.msra.mxu0 %v5351
    %7775 = vmatprep.subr.bf16.mxu0 %v5348
    %7776 = vmatpush1.bf16.msra.mxu0 %v5347
    %7777 = vmatprep.subr.bf16.mxu0 %v5344
    %7778 = vmatpush1.bf16.msra.mxu0 %v5343
    %7779 = vmatprep.subr.bf16.mxu0 %v5340
    %7780 = vmatpush1.bf16.msra.mxu0 %v5339
    %7781 = vmatprep.subr.bf16.mxu0 %v5336
    %7782 = vmatpush1.bf16.msra.mxu0 %v5335
    %7783 = vmatprep.subr.bf16.mxu0 %v5332
    %7784 = vmatpush1.bf16.msra.mxu0 %v5331
    %7785 = vmatprep.subr.bf16.mxu0 %v5328
    %7786 = vmatpush1.bf16.msra.mxu0 %v5327
    %7787 = vmatprep.subr.bf16.mxu0 %v5324
    %7788 = vmatpush1.bf16.msra.mxu0 %v5323
    %7789 = vmatprep.subr.bf16.mxu0 %v5384
    %7790 = vmatpush2.bf16.msra.mxu0 %v5383
    %7791 = vmatprep.subr.bf16.mxu0 %v5380
    %7792 = vmatpush2.bf16.msra.mxu0 %v5379
    %7793 = vmatprep.subr.bf16.mxu0 %v5376
    %7794 = vmatpush2.bf16.msra.mxu0 %v5375
    %7795 = vmatprep.subr.bf16.mxu0 %v5372
    %7796 = vmatpush2.bf16.msra.mxu0 %v5371
    %7797 = vmatprep.subr.bf16.mxu0 %v5368
    %7798 = vmatpush2.bf16.msra.mxu0 %v5367
    %7799 = vmatprep.subr.bf16.mxu0 %v5364
    %7800 = vmatpush2.bf16.msra.mxu0 %v5363
    %7801 = vmatprep.subr.bf16.mxu0 %v5360
    %7802 = vmatpush2.bf16.msra.mxu0 %v5359
    %7803 = vmatprep.subr.bf16.mxu0 %v5356
    %7804 = vmatpush2.bf16.msra.mxu0 %v5355
    %7805 = vmatprep.mubr.bf16.mxu0 %v147
    %7806 = vmatmul.mubr.bf16.gmra.mxu0 %v146
    %v7807 = vpop.f32.mrf.mxu0
    %v7808 = vadd.f32 %v7767, %v7807
    %v7809 = vpop.f32.mrf.mxu0
    %v7810 = vadd.f32 %v7769, %v7809
    %v7811 = vpop.f32.mrf.mxu0
    %v7812 = vpop.f32.mrf.mxu0
    %7813 = vdwg.mxu0
    %7814 = vmatprep.subr.bf16.mxu0 %v5416
    %7815 = vmatpush1.bf16.msra.mxu0 %v5415
    %7816 = vmatprep.subr.bf16.mxu0 %v5412
    %7817 = vmatpush1.bf16.msra.mxu0 %v5411
    %7818 = vmatprep.subr.bf16.mxu0 %v5408
    %7819 = vmatpush1.bf16.msra.mxu0 %v5407
    %7820 = vmatprep.subr.bf16.mxu0 %v5404
    %7821 = vmatpush1.bf16.msra.mxu0 %v5403
    %7822 = vmatprep.subr.bf16.mxu0 %v5400
    %7823 = vmatpush1.bf16.msra.mxu0 %v5399
    %7824 = vmatprep.subr.bf16.mxu0 %v5396
    %7825 = vmatpush1.bf16.msra.mxu0 %v5395
    %7826 = vmatprep.subr.bf16.mxu0 %v5392
    %7827 = vmatpush1.bf16.msra.mxu0 %v5391
    %7828 = vmatprep.subr.bf16.mxu0 %v5388
    %7829 = vmatpush1.bf16.msra.mxu0 %v5387
    %7830 = vmatprep.subr.bf16.mxu0 %v5448
    %7831 = vmatpush2.bf16.msra.mxu0 %v5447
    %7832 = vmatprep.subr.bf16.mxu0 %v5444
    %7833 = vmatpush2.bf16.msra.mxu0 %v5443
    %7834 = vmatprep.subr.bf16.mxu0 %v5440
    %7835 = vmatpush2.bf16.msra.mxu0 %v5439
    %7836 = vmatprep.subr.bf16.mxu0 %v5436
    %7837 = vmatpush2.bf16.msra.mxu0 %v5435
    %7838 = vmatprep.subr.bf16.mxu0 %v5432
    %7839 = vmatpush2.bf16.msra.mxu0 %v5431
    %7840 = vmatprep.subr.bf16.mxu0 %v5428
    %7841 = vmatpush2.bf16.msra.mxu0 %v5427
    %7842 = vmatprep.subr.bf16.mxu0 %v5424
    %7843 = vmatpush2.bf16.msra.mxu0 %v5423
    %7844 = vmatprep.subr.bf16.mxu0 %v5420
    %7845 = vmatpush2.bf16.msra.mxu0 %v5419
    %7846 = vmatprep.mubr.bf16.mxu0 %v149
    %7847 = vmatmul.mubr.bf16.gmra.mxu0 %v148
    %v7848 = vpop.f32.mrf.mxu0
    %v7849 = vadd.f32 %v7808, %v7848
    %v7850 = vpop.f32.mrf.mxu0
    %v7851 = vadd.f32 %v7810, %v7850
    %v7852 = vpop.f32.mrf.mxu0
    %v7853 = vpop.f32.mrf.mxu0
    %7854 = vdwg.mxu0
    %7855 = vmatprep.subr.bf16.mxu0 %v5480
    %7856 = vmatpush1.bf16.msra.mxu0 %v5479
    %7857 = vmatprep.subr.bf16.mxu0 %v5476
    %7858 = vmatpush1.bf16.msra.mxu0 %v5475
    %7859 = vmatprep.subr.bf16.mxu0 %v5472
    %7860 = vmatpush1.bf16.msra.mxu0 %v5471
    %7861 = vmatprep.subr.bf16.mxu0 %v5468
    %7862 = vmatpush1.bf16.msra.mxu0 %v5467
    %7863 = vmatprep.subr.bf16.mxu0 %v5464
    %7864 = vmatpush1.bf16.msra.mxu0 %v5463
    %7865 = vmatprep.subr.bf16.mxu0 %v5460
    %7866 = vmatpush1.bf16.msra.mxu0 %v5459
    %7867 = vmatprep.subr.bf16.mxu0 %v5456
    %7868 = vmatpush1.bf16.msra.mxu0 %v5455
    %7869 = vmatprep.subr.bf16.mxu0 %v5452
    %7870 = vmatpush1.bf16.msra.mxu0 %v5451
    %7871 = vmatprep.subr.bf16.mxu0 %v5512
    %7872 = vmatpush2.bf16.msra.mxu0 %v5511
    %7873 = vmatprep.subr.bf16.mxu0 %v5508
    %7874 = vmatpush2.bf16.msra.mxu0 %v5507
    %7875 = vmatprep.subr.bf16.mxu0 %v5504
    %7876 = vmatpush2.bf16.msra.mxu0 %v5503
    %7877 = vmatprep.subr.bf16.mxu0 %v5500
    %7878 = vmatpush2.bf16.msra.mxu0 %v5499
    %7879 = vmatprep.subr.bf16.mxu0 %v5496
    %7880 = vmatpush2.bf16.msra.mxu0 %v5495
    %7881 = vmatprep.subr.bf16.mxu0 %v5492
    %7882 = vmatpush2.bf16.msra.mxu0 %v5491
    %7883 = vmatprep.subr.bf16.mxu0 %v5488
    %7884 = vmatpush2.bf16.msra.mxu0 %v5487
    %7885 = vmatprep.subr.bf16.mxu0 %v5484
    %7886 = vmatpush2.bf16.msra.mxu0 %v5483
    %7887 = vmatprep.mubr.bf16.mxu0 %v151
    %7888 = vmatmul.mubr.bf16.gmra.mxu0 %v150
    %v7889 = vpop.f32.mrf.mxu0
    %v7890 = vadd.f32 %v7849, %v7889
    %v7891 = vpop.f32.mrf.mxu0
    %v7892 = vadd.f32 %v7851, %v7891
    %v7893 = vpop.f32.mrf.mxu0
    %v7894 = vpop.f32.mrf.mxu0
    %7895 = vdwg.mxu0
    %7896 = vmatprep.subr.bf16.mxu0 %v5544
    %7897 = vmatpush1.bf16.msra.mxu0 %v5543
    %7898 = vmatprep.subr.bf16.mxu0 %v5540
    %7899 = vmatpush1.bf16.msra.mxu0 %v5539
    %7900 = vmatprep.subr.bf16.mxu0 %v5536
    %7901 = vmatpush1.bf16.msra.mxu0 %v5535
    %7902 = vmatprep.subr.bf16.mxu0 %v5532
    %7903 = vmatpush1.bf16.msra.mxu0 %v5531
    %7904 = vmatprep.subr.bf16.mxu0 %v5528
    %7905 = vmatpush1.bf16.msra.mxu0 %v5527
    %7906 = vmatprep.subr.bf16.mxu0 %v5524
    %7907 = vmatpush1.bf16.msra.mxu0 %v5523
    %7908 = vmatprep.subr.bf16.mxu0 %v5520
    %7909 = vmatpush1.bf16.msra.mxu0 %v5519
    %7910 = vmatprep.subr.bf16.mxu0 %v5516
    %7911 = vmatpush1.bf16.msra.mxu0 %v5515
    %7912 = vmatprep.subr.bf16.mxu0 %v5576
    %7913 = vmatpush2.bf16.msra.mxu0 %v5575
    %7914 = vmatprep.subr.bf16.mxu0 %v5572
    %7915 = vmatpush2.bf16.msra.mxu0 %v5571
    %7916 = vmatprep.subr.bf16.mxu0 %v5568
    %7917 = vmatpush2.bf16.msra.mxu0 %v5567
    %7918 = vmatprep.subr.bf16.mxu0 %v5564
    %7919 = vmatpush2.bf16.msra.mxu0 %v5563
    %7920 = vmatprep.subr.bf16.mxu0 %v5560
    %7921 = vmatpush2.bf16.msra.mxu0 %v5559
    %7922 = vmatprep.subr.bf16.mxu0 %v5556
    %7923 = vmatpush2.bf16.msra.mxu0 %v5555
    %7924 = vmatprep.subr.bf16.mxu0 %v5552
    %7925 = vmatpush2.bf16.msra.mxu0 %v5551
    %7926 = vmatprep.subr.bf16.mxu0 %v5548
    %7927 = vmatpush2.bf16.msra.mxu0 %v5547
    %7928 = vmatprep.mubr.bf16.mxu0 %v153
    %7929 = vmatmul.mubr.bf16.gmra.mxu0 %v152
    %v7930 = vpop.f32.mrf.mxu0
    %v7931 = vadd.f32 %v7890, %v7930
    %v7932 = vpop.f32.mrf.mxu0
    %v7933 = vadd.f32 %v7892, %v7932
    %v7934 = vpop.f32.mrf.mxu0
    %v7935 = vpop.f32.mrf.mxu0
    %7936 = vdwg.mxu0
    %7937 = vmatprep.subr.bf16.mxu0 %v5608
    %7938 = vmatpush1.bf16.msra.mxu0 %v5607
    %7939 = vmatprep.subr.bf16.mxu0 %v5604
    %7940 = vmatpush1.bf16.msra.mxu0 %v5603
    %7941 = vmatprep.subr.bf16.mxu0 %v5600
    %7942 = vmatpush1.bf16.msra.mxu0 %v5599
    %7943 = vmatprep.subr.bf16.mxu0 %v5596
    %7944 = vmatpush1.bf16.msra.mxu0 %v5595
    %7945 = vmatprep.subr.bf16.mxu0 %v5592
    %7946 = vmatpush1.bf16.msra.mxu0 %v5591
    %7947 = vmatprep.subr.bf16.mxu0 %v5588
    %7948 = vmatpush1.bf16.msra.mxu0 %v5587
    %7949 = vmatprep.subr.bf16.mxu0 %v5584
    %7950 = vmatpush1.bf16.msra.mxu0 %v5583
    %7951 = vmatprep.subr.bf16.mxu0 %v5580
    %7952 = vmatpush1.bf16.msra.mxu0 %v5579
    %7953 = vmatprep.subr.bf16.mxu0 %v5640
    %7954 = vmatpush2.bf16.msra.mxu0 %v5639
    %7955 = vmatprep.subr.bf16.mxu0 %v5636
    %7956 = vmatpush2.bf16.msra.mxu0 %v5635
    %7957 = vmatprep.subr.bf16.mxu0 %v5632
    %7958 = vmatpush2.bf16.msra.mxu0 %v5631
    %7959 = vmatprep.subr.bf16.mxu0 %v5628
    %7960 = vmatpush2.bf16.msra.mxu0 %v5627
    %7961 = vmatprep.subr.bf16.mxu0 %v5624
    %7962 = vmatpush2.bf16.msra.mxu0 %v5623
    %7963 = vmatprep.subr.bf16.mxu0 %v5620
    %7964 = vmatpush2.bf16.msra.mxu0 %v5619
    %7965 = vmatprep.subr.bf16.mxu0 %v5616
    %7966 = vmatpush2.bf16.msra.mxu0 %v5615
    %7967 = vmatprep.subr.bf16.mxu0 %v5612
    %7968 = vmatpush2.bf16.msra.mxu0 %v5611
    %7969 = vmatprep.mubr.bf16.mxu0 %v155
    %7970 = vmatmul.mubr.bf16.gmra.mxu0 %v154
    %v7971 = vpop.f32.mrf.mxu0
    %v7972 = vadd.f32 %v7931, %v7971
    %v7973 = vpop.f32.mrf.mxu0
    %v7974 = vadd.f32 %v7933, %v7973
    %v7975 = vpop.f32.mrf.mxu0
    %v7976 = vpop.f32.mrf.mxu0
    %7977 = vdwg.mxu0
    %7978 = vmatprep.subr.bf16.mxu0 %v5672
    %7979 = vmatpush1.bf16.msra.mxu0 %v5671
    %7980 = vmatprep.subr.bf16.mxu0 %v5668
    %7981 = vmatpush1.bf16.msra.mxu0 %v5667
    %7982 = vmatprep.subr.bf16.mxu0 %v5664
    %7983 = vmatpush1.bf16.msra.mxu0 %v5663
    %7984 = vmatprep.subr.bf16.mxu0 %v5660
    %7985 = vmatpush1.bf16.msra.mxu0 %v5659
    %7986 = vmatprep.subr.bf16.mxu0 %v5656
    %7987 = vmatpush1.bf16.msra.mxu0 %v5655
    %7988 = vmatprep.subr.bf16.mxu0 %v5652
    %7989 = vmatpush1.bf16.msra.mxu0 %v5651
    %7990 = vmatprep.subr.bf16.mxu0 %v5648
    %7991 = vmatpush1.bf16.msra.mxu0 %v5647
    %7992 = vmatprep.subr.bf16.mxu0 %v5644
    %7993 = vmatpush1.bf16.msra.mxu0 %v5643
    %7994 = vmatprep.subr.bf16.mxu0 %v5704
    %7995 = vmatpush2.bf16.msra.mxu0 %v5703
    %7996 = vmatprep.subr.bf16.mxu0 %v5700
    %7997 = vmatpush2.bf16.msra.mxu0 %v5699
    %7998 = vmatprep.subr.bf16.mxu0 %v5696
    %7999 = vmatpush2.bf16.msra.mxu0 %v5695
    %8000 = vmatprep.subr.bf16.mxu0 %v5692
    %8001 = vmatpush2.bf16.msra.mxu0 %v5691
    %8002 = vmatprep.subr.bf16.mxu0 %v5688
    %8003 = vmatpush2.bf16.msra.mxu0 %v5687
    %8004 = vmatprep.subr.bf16.mxu0 %v5684
    %8005 = vmatpush2.bf16.msra.mxu0 %v5683
    %8006 = vmatprep.subr.bf16.mxu0 %v5680
    %8007 = vmatpush2.bf16.msra.mxu0 %v5679
    %8008 = vmatprep.subr.bf16.mxu0 %v5676
    %8009 = vmatpush2.bf16.msra.mxu0 %v5675
    %8010 = vmatprep.mubr.bf16.mxu0 %v157
    %8011 = vmatmul.mubr.bf16.gmra.mxu0 %v156
    %v8012 = vpop.f32.mrf.mxu0
    %v8013 = vadd.f32 %v7972, %v8012
    %v8014 = vpop.f32.mrf.mxu0
    %v8015 = vadd.f32 %v7974, %v8014
    %v8016 = vpop.f32.mrf.mxu0
    %v8017 = vpop.f32.mrf.mxu0
    %8018 = vdwg.mxu0
    %8019 = vmatprep.subr.bf16.mxu0 %v5736
    %8020 = vmatpush1.bf16.msra.mxu0 %v5735
    %8021 = vmatprep.subr.bf16.mxu0 %v5732
    %8022 = vmatpush1.bf16.msra.mxu0 %v5731
    %8023 = vmatprep.subr.bf16.mxu0 %v5728
    %8024 = vmatpush1.bf16.msra.mxu0 %v5727
    %8025 = vmatprep.subr.bf16.mxu0 %v5724
    %8026 = vmatpush1.bf16.msra.mxu0 %v5723
    %8027 = vmatprep.subr.bf16.mxu0 %v5720
    %8028 = vmatpush1.bf16.msra.mxu0 %v5719
    %8029 = vmatprep.subr.bf16.mxu0 %v5716
    %8030 = vmatpush1.bf16.msra.mxu0 %v5715
    %8031 = vmatprep.subr.bf16.mxu0 %v5712
    %8032 = vmatpush1.bf16.msra.mxu0 %v5711
    %8033 = vmatprep.subr.bf16.mxu0 %v5708
    %8034 = vmatpush1.bf16.msra.mxu0 %v5707
    %8035 = vmatprep.subr.bf16.mxu0 %v5768
    %8036 = vmatpush2.bf16.msra.mxu0 %v5767
    %8037 = vmatprep.subr.bf16.mxu0 %v5764
    %8038 = vmatpush2.bf16.msra.mxu0 %v5763
    %8039 = vmatprep.subr.bf16.mxu0 %v5760
    %8040 = vmatpush2.bf16.msra.mxu0 %v5759
    %8041 = vmatprep.subr.bf16.mxu0 %v5756
    %8042 = vmatpush2.bf16.msra.mxu0 %v5755
    %8043 = vmatprep.subr.bf16.mxu0 %v5752
    %8044 = vmatpush2.bf16.msra.mxu0 %v5751
    %8045 = vmatprep.subr.bf16.mxu0 %v5748
    %8046 = vmatpush2.bf16.msra.mxu0 %v5747
    %8047 = vmatprep.subr.bf16.mxu0 %v5744
    %8048 = vmatpush2.bf16.msra.mxu0 %v5743
    %8049 = vmatprep.subr.bf16.mxu0 %v5740
    %8050 = vmatpush2.bf16.msra.mxu0 %v5739
    %8051 = vmatprep.mubr.bf16.mxu0 %v159
    %8052 = vmatmul.mubr.bf16.gmra.mxu0 %v158
    %v8053 = vpop.f32.mrf.mxu0
    %v8054 = vadd.f32 %v8013, %v8053
    %v8055 = vpop.f32.mrf.mxu0
    %v8056 = vadd.f32 %v8015, %v8055
    %v8057 = vpop.f32.mrf.mxu0
    %v8058 = vpop.f32.mrf.mxu0
    %8059 = vdwg.mxu0
    %8060 = vmatprep.subr.bf16.mxu0 %v5800
    %8061 = vmatpush1.bf16.msra.mxu0 %v5799
    %8062 = vmatprep.subr.bf16.mxu0 %v5796
    %8063 = vmatpush1.bf16.msra.mxu0 %v5795
    %8064 = vmatprep.subr.bf16.mxu0 %v5792
    %8065 = vmatpush1.bf16.msra.mxu0 %v5791
    %8066 = vmatprep.subr.bf16.mxu0 %v5788
    %8067 = vmatpush1.bf16.msra.mxu0 %v5787
    %8068 = vmatprep.subr.bf16.mxu0 %v5784
    %8069 = vmatpush1.bf16.msra.mxu0 %v5783
    %8070 = vmatprep.subr.bf16.mxu0 %v5780
    %8071 = vmatpush1.bf16.msra.mxu0 %v5779
    %8072 = vmatprep.subr.bf16.mxu0 %v5776
    %8073 = vmatpush1.bf16.msra.mxu0 %v5775
    %8074 = vmatprep.subr.bf16.mxu0 %v5772
    %8075 = vmatpush1.bf16.msra.mxu0 %v5771
    %8076 = vmatprep.subr.bf16.mxu0 %v5832
    %8077 = vmatpush2.bf16.msra.mxu0 %v5831
    %8078 = vmatprep.subr.bf16.mxu0 %v5828
    %8079 = vmatpush2.bf16.msra.mxu0 %v5827
    %8080 = vmatprep.subr.bf16.mxu0 %v5824
    %8081 = vmatpush2.bf16.msra.mxu0 %v5823
    %8082 = vmatprep.subr.bf16.mxu0 %v5820
    %8083 = vmatpush2.bf16.msra.mxu0 %v5819
    %8084 = vmatprep.subr.bf16.mxu0 %v5816
    %8085 = vmatpush2.bf16.msra.mxu0 %v5815
    %8086 = vmatprep.subr.bf16.mxu0 %v5812
    %8087 = vmatpush2.bf16.msra.mxu0 %v5811
    %8088 = vmatprep.subr.bf16.mxu0 %v5808
    %8089 = vmatpush2.bf16.msra.mxu0 %v5807
    %8090 = vmatprep.subr.bf16.mxu0 %v5804
    %8091 = vmatpush2.bf16.msra.mxu0 %v5803
    %8092 = vmatprep.mubr.bf16.mxu0 %v161
    %8093 = vmatmul.mubr.bf16.gmra.mxu0 %v160
    %v8094 = vpop.f32.mrf.mxu0
    %v8095 = vadd.f32 %v8054, %v8094
    %v8096 = vpop.f32.mrf.mxu0
    %v8097 = vadd.f32 %v8056, %v8096
    %v8098 = vpop.f32.mrf.mxu0
    %v8099 = vpop.f32.mrf.mxu0
    %8100 = vdwg.mxu0
    %8101 = vmatprep.subr.bf16.mxu0 %v5864
    %8102 = vmatpush1.bf16.msra.mxu0 %v5863
    %8103 = vmatprep.subr.bf16.mxu0 %v5860
    %8104 = vmatpush1.bf16.msra.mxu0 %v5859
    %8105 = vmatprep.subr.bf16.mxu0 %v5856
    %8106 = vmatpush1.bf16.msra.mxu0 %v5855
    %8107 = vmatprep.subr.bf16.mxu0 %v5852
    %8108 = vmatpush1.bf16.msra.mxu0 %v5851
    %8109 = vmatprep.subr.bf16.mxu0 %v5848
    %8110 = vmatpush1.bf16.msra.mxu0 %v5847
    %8111 = vmatprep.subr.bf16.mxu0 %v5844
    %8112 = vmatpush1.bf16.msra.mxu0 %v5843
    %8113 = vmatprep.subr.bf16.mxu0 %v5840
    %8114 = vmatpush1.bf16.msra.mxu0 %v5839
    %8115 = vmatprep.subr.bf16.mxu0 %v5836
    %8116 = vmatpush1.bf16.msra.mxu0 %v5835
    %8117 = vmatprep.subr.bf16.mxu0 %v5896
    %8118 = vmatpush2.bf16.msra.mxu0 %v5895
    %8119 = vmatprep.subr.bf16.mxu0 %v5892
    %8120 = vmatpush2.bf16.msra.mxu0 %v5891
    %8121 = vmatprep.subr.bf16.mxu0 %v5888
    %8122 = vmatpush2.bf16.msra.mxu0 %v5887
    %8123 = vmatprep.subr.bf16.mxu0 %v5884
    %8124 = vmatpush2.bf16.msra.mxu0 %v5883
    %8125 = vmatprep.subr.bf16.mxu0 %v5880
    %8126 = vmatpush2.bf16.msra.mxu0 %v5879
    %8127 = vmatprep.subr.bf16.mxu0 %v5876
    %8128 = vmatpush2.bf16.msra.mxu0 %v5875
    %8129 = vmatprep.subr.bf16.mxu0 %v5872
    %8130 = vmatpush2.bf16.msra.mxu0 %v5871
    %8131 = vmatprep.subr.bf16.mxu0 %v5868
    %8132 = vmatpush2.bf16.msra.mxu0 %v5867
    %8133 = vmatprep.mubr.bf16.mxu0 %v163
    %8134 = vmatmul.mubr.bf16.gmra.mxu0 %v162
    %v8135 = vpop.f32.mrf.mxu0
    %v8136 = vadd.f32 %v8095, %v8135
    %v8137 = vpop.f32.mrf.mxu0
    %v8138 = vadd.f32 %v8097, %v8137
    %v8139 = vpop.f32.mrf.mxu0
    %v8140 = vpop.f32.mrf.mxu0
    %8141 = vdwg.mxu0
    %8142 = vmatprep.subr.bf16.mxu0 %v5928
    %8143 = vmatpush1.bf16.msra.mxu0 %v5927
    %8144 = vmatprep.subr.bf16.mxu0 %v5924
    %8145 = vmatpush1.bf16.msra.mxu0 %v5923
    %8146 = vmatprep.subr.bf16.mxu0 %v5920
    %8147 = vmatpush1.bf16.msra.mxu0 %v5919
    %8148 = vmatprep.subr.bf16.mxu0 %v5916
    %8149 = vmatpush1.bf16.msra.mxu0 %v5915
    %8150 = vmatprep.subr.bf16.mxu0 %v5912
    %8151 = vmatpush1.bf16.msra.mxu0 %v5911
    %8152 = vmatprep.subr.bf16.mxu0 %v5908
    %8153 = vmatpush1.bf16.msra.mxu0 %v5907
    %8154 = vmatprep.subr.bf16.mxu0 %v5904
    %8155 = vmatpush1.bf16.msra.mxu0 %v5903
    %8156 = vmatprep.subr.bf16.mxu0 %v5900
    %8157 = vmatpush1.bf16.msra.mxu0 %v5899
    %8158 = vmatprep.subr.bf16.mxu0 %v5960
    %8159 = vmatpush2.bf16.msra.mxu0 %v5959
    %8160 = vmatprep.subr.bf16.mxu0 %v5956
    %8161 = vmatpush2.bf16.msra.mxu0 %v5955
    %8162 = vmatprep.subr.bf16.mxu0 %v5952
    %8163 = vmatpush2.bf16.msra.mxu0 %v5951
    %8164 = vmatprep.subr.bf16.mxu0 %v5948
    %8165 = vmatpush2.bf16.msra.mxu0 %v5947
    %8166 = vmatprep.subr.bf16.mxu0 %v5944
    %8167 = vmatpush2.bf16.msra.mxu0 %v5943
    %8168 = vmatprep.subr.bf16.mxu0 %v5940
    %8169 = vmatpush2.bf16.msra.mxu0 %v5939
    %8170 = vmatprep.subr.bf16.mxu0 %v5936
    %8171 = vmatpush2.bf16.msra.mxu0 %v5935
    %8172 = vmatprep.subr.bf16.mxu0 %v5932
    %8173 = vmatpush2.bf16.msra.mxu0 %v5931
    %8174 = vmatprep.mubr.bf16.mxu0 %v165
    %8175 = vmatmul.mubr.bf16.gmra.mxu0 %v164
    %v8176 = vpop.f32.mrf.mxu0
    %v8177 = vadd.f32 %v8136, %v8176
    %v8178 = vpop.f32.mrf.mxu0
    %v8179 = vadd.f32 %v8138, %v8178
    %v8180 = vpop.f32.mrf.mxu0
    %v8181 = vpop.f32.mrf.mxu0
    %8182 = vdwg.mxu0
    %8183 = vmatprep.subr.bf16.mxu0 %v5992
    %8184 = vmatpush1.bf16.msra.mxu0 %v5991
    %8185 = vmatprep.subr.bf16.mxu0 %v5988
    %8186 = vmatpush1.bf16.msra.mxu0 %v5987
    %8187 = vmatprep.subr.bf16.mxu0 %v5984
    %8188 = vmatpush1.bf16.msra.mxu0 %v5983
    %8189 = vmatprep.subr.bf16.mxu0 %v5980
    %8190 = vmatpush1.bf16.msra.mxu0 %v5979
    %8191 = vmatprep.subr.bf16.mxu0 %v5976
    %8192 = vmatpush1.bf16.msra.mxu0 %v5975
    %8193 = vmatprep.subr.bf16.mxu0 %v5972
    %8194 = vmatpush1.bf16.msra.mxu0 %v5971
    %8195 = vmatprep.subr.bf16.mxu0 %v5968
    %8196 = vmatpush1.bf16.msra.mxu0 %v5967
    %8197 = vmatprep.subr.bf16.mxu0 %v5964
    %8198 = vmatpush1.bf16.msra.mxu0 %v5963
    %8199 = vmatprep.subr.bf16.mxu0 %v6024
    %8200 = vmatpush2.bf16.msra.mxu0 %v6023
    %8201 = vmatprep.subr.bf16.mxu0 %v6020
    %8202 = vmatpush2.bf16.msra.mxu0 %v6019
    %8203 = vmatprep.subr.bf16.mxu0 %v6016
    %8204 = vmatpush2.bf16.msra.mxu0 %v6015
    %8205 = vmatprep.subr.bf16.mxu0 %v6012
    %8206 = vmatpush2.bf16.msra.mxu0 %v6011
    %8207 = vmatprep.subr.bf16.mxu0 %v6008
    %8208 = vmatpush2.bf16.msra.mxu0 %v6007
    %8209 = vmatprep.subr.bf16.mxu0 %v6004
    %8210 = vmatpush2.bf16.msra.mxu0 %v6003
    %8211 = vmatprep.subr.bf16.mxu0 %v6000
    %8212 = vmatpush2.bf16.msra.mxu0 %v5999
    %8213 = vmatprep.subr.bf16.mxu0 %v5996
    %8214 = vmatpush2.bf16.msra.mxu0 %v5995
    %8215 = vmatprep.mubr.bf16.mxu0 %v167
    %8216 = vmatmul.mubr.bf16.gmra.mxu0 %v166
    %v8217 = vpop.f32.mrf.mxu0
    %v8218 = vadd.f32 %v8177, %v8217
    %v8219 = vpop.f32.mrf.mxu0
    %v8220 = vadd.f32 %v8179, %v8219
    %v8221 = vpop.f32.mrf.mxu0
    %v8222 = vpop.f32.mrf.mxu0
    %8223 = vdwg.mxu0
    %8224 = vmatprep.subr.bf16.mxu0 %v6056
    %8225 = vmatpush1.bf16.msra.mxu0 %v6055
    %8226 = vmatprep.subr.bf16.mxu0 %v6052
    %8227 = vmatpush1.bf16.msra.mxu0 %v6051
    %8228 = vmatprep.subr.bf16.mxu0 %v6048
    %8229 = vmatpush1.bf16.msra.mxu0 %v6047
    %8230 = vmatprep.subr.bf16.mxu0 %v6044
    %8231 = vmatpush1.bf16.msra.mxu0 %v6043
    %8232 = vmatprep.subr.bf16.mxu0 %v6040
    %8233 = vmatpush1.bf16.msra.mxu0 %v6039
    %8234 = vmatprep.subr.bf16.mxu0 %v6036
    %8235 = vmatpush1.bf16.msra.mxu0 %v6035
    %8236 = vmatprep.subr.bf16.mxu0 %v6032
    %8237 = vmatpush1.bf16.msra.mxu0 %v6031
    %8238 = vmatprep.subr.bf16.mxu0 %v6028
    %8239 = vmatpush1.bf16.msra.mxu0 %v6027
    %8240 = vmatprep.subr.bf16.mxu0 %v6088
    %8241 = vmatpush2.bf16.msra.mxu0 %v6087
    %8242 = vmatprep.subr.bf16.mxu0 %v6084
    %8243 = vmatpush2.bf16.msra.mxu0 %v6083
    %8244 = vmatprep.subr.bf16.mxu0 %v6080
    %8245 = vmatpush2.bf16.msra.mxu0 %v6079
    %8246 = vmatprep.subr.bf16.mxu0 %v6076
    %8247 = vmatpush2.bf16.msra.mxu0 %v6075
    %8248 = vmatprep.subr.bf16.mxu0 %v6072
    %8249 = vmatpush2.bf16.msra.mxu0 %v6071
    %8250 = vmatprep.subr.bf16.mxu0 %v6068
    %8251 = vmatpush2.bf16.msra.mxu0 %v6067
    %8252 = vmatprep.subr.bf16.mxu0 %v6064
    %8253 = vmatpush2.bf16.msra.mxu0 %v6063
    %8254 = vmatprep.subr.bf16.mxu0 %v6060
    %8255 = vmatpush2.bf16.msra.mxu0 %v6059
    %8256 = vmatprep.mubr.bf16.mxu0 %v169
    %8257 = vmatmul.mubr.bf16.gmra.mxu0 %v168
    %v8258 = vpop.f32.mrf.mxu0
    %v8259 = vadd.f32 %v8218, %v8258
    %v8260 = vpop.f32.mrf.mxu0
    %v8261 = vadd.f32 %v8220, %v8260
    %v8262 = vpop.f32.mrf.mxu0
    %v8263 = vpop.f32.mrf.mxu0
    %8264 = vdwg.mxu0
    %8265 = vmatprep.subr.bf16.mxu0 %v6120
    %8266 = vmatpush1.bf16.msra.mxu0 %v6119
    %8267 = vmatprep.subr.bf16.mxu0 %v6116
    %8268 = vmatpush1.bf16.msra.mxu0 %v6115
    %8269 = vmatprep.subr.bf16.mxu0 %v6112
    %8270 = vmatpush1.bf16.msra.mxu0 %v6111
    %8271 = vmatprep.subr.bf16.mxu0 %v6108
    %8272 = vmatpush1.bf16.msra.mxu0 %v6107
    %8273 = vmatprep.subr.bf16.mxu0 %v6104
    %8274 = vmatpush1.bf16.msra.mxu0 %v6103
    %8275 = vmatprep.subr.bf16.mxu0 %v6100
    %8276 = vmatpush1.bf16.msra.mxu0 %v6099
    %8277 = vmatprep.subr.bf16.mxu0 %v6096
    %8278 = vmatpush1.bf16.msra.mxu0 %v6095
    %8279 = vmatprep.subr.bf16.mxu0 %v6092
    %8280 = vmatpush1.bf16.msra.mxu0 %v6091
    %8281 = vmatprep.subr.bf16.mxu0 %v6152
    %8282 = vmatpush2.bf16.msra.mxu0 %v6151
    %8283 = vmatprep.subr.bf16.mxu0 %v6148
    %8284 = vmatpush2.bf16.msra.mxu0 %v6147
    %8285 = vmatprep.subr.bf16.mxu0 %v6144
    %8286 = vmatpush2.bf16.msra.mxu0 %v6143
    %8287 = vmatprep.subr.bf16.mxu0 %v6140
    %8288 = vmatpush2.bf16.msra.mxu0 %v6139
    %8289 = vmatprep.subr.bf16.mxu0 %v6136
    %8290 = vmatpush2.bf16.msra.mxu0 %v6135
    %8291 = vmatprep.subr.bf16.mxu0 %v6132
    %8292 = vmatpush2.bf16.msra.mxu0 %v6131
    %8293 = vmatprep.subr.bf16.mxu0 %v6128
    %8294 = vmatpush2.bf16.msra.mxu0 %v6127
    %8295 = vmatprep.subr.bf16.mxu0 %v6124
    %8296 = vmatpush2.bf16.msra.mxu0 %v6123
    %8297 = vmatprep.mubr.bf16.mxu0 %v171
    %8298 = vmatmul.mubr.bf16.gmra.mxu0 %v170
    %v8299 = vpop.f32.mrf.mxu0
    %v8300 = vadd.f32 %v8259, %v8299
    %v8301 = vpop.f32.mrf.mxu0
    %v8302 = vadd.f32 %v8261, %v8301
    %v8303 = vpop.f32.mrf.mxu0
    %v8304 = vpop.f32.mrf.mxu0
    %8305 = vdwg.mxu0
    %8306 = vmatprep.subr.bf16.mxu0 %v6184
    %8307 = vmatpush1.bf16.msra.mxu0 %v6183
    %8308 = vmatprep.subr.bf16.mxu0 %v6180
    %8309 = vmatpush1.bf16.msra.mxu0 %v6179
    %8310 = vmatprep.subr.bf16.mxu0 %v6176
    %8311 = vmatpush1.bf16.msra.mxu0 %v6175
    %8312 = vmatprep.subr.bf16.mxu0 %v6172
    %8313 = vmatpush1.bf16.msra.mxu0 %v6171
    %8314 = vmatprep.subr.bf16.mxu0 %v6168
    %8315 = vmatpush1.bf16.msra.mxu0 %v6167
    %8316 = vmatprep.subr.bf16.mxu0 %v6164
    %8317 = vmatpush1.bf16.msra.mxu0 %v6163
    %8318 = vmatprep.subr.bf16.mxu0 %v6160
    %8319 = vmatpush1.bf16.msra.mxu0 %v6159
    %8320 = vmatprep.subr.bf16.mxu0 %v6156
    %8321 = vmatpush1.bf16.msra.mxu0 %v6155
    %8322 = vmatprep.subr.bf16.mxu0 %v6216
    %8323 = vmatpush2.bf16.msra.mxu0 %v6215
    %8324 = vmatprep.subr.bf16.mxu0 %v6212
    %8325 = vmatpush2.bf16.msra.mxu0 %v6211
    %8326 = vmatprep.subr.bf16.mxu0 %v6208
    %8327 = vmatpush2.bf16.msra.mxu0 %v6207
    %8328 = vmatprep.subr.bf16.mxu0 %v6204
    %8329 = vmatpush2.bf16.msra.mxu0 %v6203
    %8330 = vmatprep.subr.bf16.mxu0 %v6200
    %8331 = vmatpush2.bf16.msra.mxu0 %v6199
    %8332 = vmatprep.subr.bf16.mxu0 %v6196
    %8333 = vmatpush2.bf16.msra.mxu0 %v6195
    %8334 = vmatprep.subr.bf16.mxu0 %v6192
    %8335 = vmatpush2.bf16.msra.mxu0 %v6191
    %8336 = vmatprep.subr.bf16.mxu0 %v6188
    %8337 = vmatpush2.bf16.msra.mxu0 %v6187
    %8338 = vmatprep.mubr.bf16.mxu0 %v173
    %8339 = vmatmul.mubr.bf16.gmra.mxu0 %v172
    %v8340 = vpop.f32.mrf.mxu0
    %v8341 = vadd.f32 %v8300, %v8340
    %v8342 = vpop.f32.mrf.mxu0
    %v8343 = vadd.f32 %v8302, %v8342
    %v8344 = vpop.f32.mrf.mxu0
    %v8345 = vpop.f32.mrf.mxu0
    %8346 = vdwg.mxu0
    %8347 = vmatprep.subr.bf16.mxu0 %v6248
    %8348 = vmatpush1.bf16.msra.mxu0 %v6247
    %8349 = vmatprep.subr.bf16.mxu0 %v6244
    %8350 = vmatpush1.bf16.msra.mxu0 %v6243
    %8351 = vmatprep.subr.bf16.mxu0 %v6240
    %8352 = vmatpush1.bf16.msra.mxu0 %v6239
    %8353 = vmatprep.subr.bf16.mxu0 %v6236
    %8354 = vmatpush1.bf16.msra.mxu0 %v6235
    %8355 = vmatprep.subr.bf16.mxu0 %v6232
    %8356 = vmatpush1.bf16.msra.mxu0 %v6231
    %8357 = vmatprep.subr.bf16.mxu0 %v6228
    %8358 = vmatpush1.bf16.msra.mxu0 %v6227
    %8359 = vmatprep.subr.bf16.mxu0 %v6224
    %8360 = vmatpush1.bf16.msra.mxu0 %v6223
    %8361 = vmatprep.subr.bf16.mxu0 %v6220
    %8362 = vmatpush1.bf16.msra.mxu0 %v6219
    %8363 = vmatprep.subr.bf16.mxu0 %v6280
    %8364 = vmatpush2.bf16.msra.mxu0 %v6279
    %8365 = vmatprep.subr.bf16.mxu0 %v6276
    %8366 = vmatpush2.bf16.msra.mxu0 %v6275
    %8367 = vmatprep.subr.bf16.mxu0 %v6272
    %8368 = vmatpush2.bf16.msra.mxu0 %v6271
    %8369 = vmatprep.subr.bf16.mxu0 %v6268
    %8370 = vmatpush2.bf16.msra.mxu0 %v6267
    %8371 = vmatprep.subr.bf16.mxu0 %v6264
    %8372 = vmatpush2.bf16.msra.mxu0 %v6263
    %8373 = vmatprep.subr.bf16.mxu0 %v6260
    %8374 = vmatpush2.bf16.msra.mxu0 %v6259
    %8375 = vmatprep.subr.bf16.mxu0 %v6256
    %8376 = vmatpush2.bf16.msra.mxu0 %v6255
    %8377 = vmatprep.subr.bf16.mxu0 %v6252
    %8378 = vmatpush2.bf16.msra.mxu0 %v6251
    %8379 = vmatprep.mubr.bf16.mxu0 %v175
    %8380 = vmatmul.mubr.bf16.gmra.mxu0 %v174
    %v8381 = vpop.f32.mrf.mxu0
    %v8382 = vadd.f32 %v8341, %v8381
    %v8383 = vpop.f32.mrf.mxu0
    %v8384 = vadd.f32 %v8343, %v8383
    %v8385 = vpop.f32.mrf.mxu0
    %v8386 = vpop.f32.mrf.mxu0
    %8387 = vdwg.mxu0
    %8388 = vmatprep.subr.bf16.mxu0 %v6312
    %8389 = vmatpush1.bf16.msra.mxu0 %v6311
    %8390 = vmatprep.subr.bf16.mxu0 %v6308
    %8391 = vmatpush1.bf16.msra.mxu0 %v6307
    %8392 = vmatprep.subr.bf16.mxu0 %v6304
    %8393 = vmatpush1.bf16.msra.mxu0 %v6303
    %8394 = vmatprep.subr.bf16.mxu0 %v6300
    %8395 = vmatpush1.bf16.msra.mxu0 %v6299
    %8396 = vmatprep.subr.bf16.mxu0 %v6296
    %8397 = vmatpush1.bf16.msra.mxu0 %v6295
    %8398 = vmatprep.subr.bf16.mxu0 %v6292
    %8399 = vmatpush1.bf16.msra.mxu0 %v6291
    %8400 = vmatprep.subr.bf16.mxu0 %v6288
    %8401 = vmatpush1.bf16.msra.mxu0 %v6287
    %8402 = vmatprep.subr.bf16.mxu0 %v6284
    %8403 = vmatpush1.bf16.msra.mxu0 %v6283
    %8404 = vmatprep.subr.bf16.mxu0 %v6344
    %8405 = vmatpush2.bf16.msra.mxu0 %v6343
    %8406 = vmatprep.subr.bf16.mxu0 %v6340
    %8407 = vmatpush2.bf16.msra.mxu0 %v6339
    %8408 = vmatprep.subr.bf16.mxu0 %v6336
    %8409 = vmatpush2.bf16.msra.mxu0 %v6335
    %8410 = vmatprep.subr.bf16.mxu0 %v6332
    %8411 = vmatpush2.bf16.msra.mxu0 %v6331
    %8412 = vmatprep.subr.bf16.mxu0 %v6328
    %8413 = vmatpush2.bf16.msra.mxu0 %v6327
    %8414 = vmatprep.subr.bf16.mxu0 %v6324
    %8415 = vmatpush2.bf16.msra.mxu0 %v6323
    %8416 = vmatprep.subr.bf16.mxu0 %v6320
    %8417 = vmatpush2.bf16.msra.mxu0 %v6319
    %8418 = vmatprep.subr.bf16.mxu0 %v6316
    %8419 = vmatpush2.bf16.msra.mxu0 %v6315
    %8420 = vmatprep.mubr.bf16.mxu0 %v177
    %8421 = vmatmul.mubr.bf16.gmra.mxu0 %v176
    %v8422 = vpop.f32.mrf.mxu0
    %v8423 = vadd.f32 %v8382, %v8422
    %v8424 = vpop.f32.mrf.mxu0
    %v8425 = vadd.f32 %v8384, %v8424
    %v8426 = vpop.f32.mrf.mxu0
    %v8427 = vpop.f32.mrf.mxu0
    %8428 = vdwg.mxu0
    %8429 = vmatprep.subr.bf16.mxu0 %v6376
    %8430 = vmatpush1.bf16.msra.mxu0 %v6375
    %8431 = vmatprep.subr.bf16.mxu0 %v6372
    %8432 = vmatpush1.bf16.msra.mxu0 %v6371
    %8433 = vmatprep.subr.bf16.mxu0 %v6368
    %8434 = vmatpush1.bf16.msra.mxu0 %v6367
    %8435 = vmatprep.subr.bf16.mxu0 %v6364
    %8436 = vmatpush1.bf16.msra.mxu0 %v6363
    %8437 = vmatprep.subr.bf16.mxu0 %v6360
    %8438 = vmatpush1.bf16.msra.mxu0 %v6359
    %8439 = vmatprep.subr.bf16.mxu0 %v6356
    %8440 = vmatpush1.bf16.msra.mxu0 %v6355
    %8441 = vmatprep.subr.bf16.mxu0 %v6352
    %8442 = vmatpush1.bf16.msra.mxu0 %v6351
    %8443 = vmatprep.subr.bf16.mxu0 %v6348
    %8444 = vmatpush1.bf16.msra.mxu0 %v6347
    %8445 = vmatprep.subr.bf16.mxu0 %v6408
    %8446 = vmatpush2.bf16.msra.mxu0 %v6407
    %8447 = vmatprep.subr.bf16.mxu0 %v6404
    %8448 = vmatpush2.bf16.msra.mxu0 %v6403
    %8449 = vmatprep.subr.bf16.mxu0 %v6400
    %8450 = vmatpush2.bf16.msra.mxu0 %v6399
    %8451 = vmatprep.subr.bf16.mxu0 %v6396
    %8452 = vmatpush2.bf16.msra.mxu0 %v6395
    %8453 = vmatprep.subr.bf16.mxu0 %v6392
    %8454 = vmatpush2.bf16.msra.mxu0 %v6391
    %8455 = vmatprep.subr.bf16.mxu0 %v6388
    %8456 = vmatpush2.bf16.msra.mxu0 %v6387
    %8457 = vmatprep.subr.bf16.mxu0 %v6384
    %8458 = vmatpush2.bf16.msra.mxu0 %v6383
    %8459 = vmatprep.subr.bf16.mxu0 %v6380
    %8460 = vmatpush2.bf16.msra.mxu0 %v6379
    %8461 = vmatprep.mubr.bf16.mxu0 %v179
    %8462 = vmatmul.mubr.bf16.gmra.mxu0 %v178
    %v8463 = vpop.f32.mrf.mxu0
    %v8464 = vadd.f32 %v8423, %v8463
    %v8465 = vpop.f32.mrf.mxu0
    %v8466 = vadd.f32 %v8425, %v8465
    %v8467 = vpop.f32.mrf.mxu0
    %v8468 = vpop.f32.mrf.mxu0
    %8469 = vdwg.mxu0
    %8470 = vmatprep.subr.bf16.mxu0 %v6440
    %8471 = vmatpush1.bf16.msra.mxu0 %v6439
    %8472 = vmatprep.subr.bf16.mxu0 %v6436
    %8473 = vmatpush1.bf16.msra.mxu0 %v6435
    %8474 = vmatprep.subr.bf16.mxu0 %v6432
    %8475 = vmatpush1.bf16.msra.mxu0 %v6431
    %8476 = vmatprep.subr.bf16.mxu0 %v6428
    %8477 = vmatpush1.bf16.msra.mxu0 %v6427
    %8478 = vmatprep.subr.bf16.mxu0 %v6424
    %8479 = vmatpush1.bf16.msra.mxu0 %v6423
    %8480 = vmatprep.subr.bf16.mxu0 %v6420
    %8481 = vmatpush1.bf16.msra.mxu0 %v6419
    %8482 = vmatprep.subr.bf16.mxu0 %v6416
    %8483 = vmatpush1.bf16.msra.mxu0 %v6415
    %8484 = vmatprep.subr.bf16.mxu0 %v6412
    %8485 = vmatpush1.bf16.msra.mxu0 %v6411
    %8486 = vmatprep.subr.bf16.mxu0 0
    %8487 = vmatpush2.bf16.msra.mxu0 0
    %8488 = vmatprep.subr.bf16.mxu0 0
    %8489 = vmatpush2.bf16.msra.mxu0 0
    %8490 = vmatprep.subr.bf16.mxu0 0
    %8491 = vmatpush2.bf16.msra.mxu0 0
    %8492 = vmatprep.subr.bf16.mxu0 0
    %8493 = vmatpush2.bf16.msra.mxu0 0
    %8494 = vmatprep.subr.bf16.mxu0 0
    %8495 = vmatpush2.bf16.msra.mxu0 0
    %8496 = vmatprep.subr.bf16.mxu0 0
    %8497 = vmatpush2.bf16.msra.mxu0 0
    %8498 = vmatprep.subr.bf16.mxu0 0
    %8499 = vmatpush2.bf16.msra.mxu0 0
    %8500 = vmatprep.subr.bf16.mxu0 0
    %8501 = vmatpush2.bf16.msra.mxu0 0
    %8502 = vmatprep.mubr.bf16.mxu0 0
    %8503 = vmatmul.mubr.bf16.gmra.mxu0 %v180
    %v8504 = vpop.f32.mrf.mxu0
    %v8505 = vadd.f32 %v8464, %v8504
    %v8506 = vpop.f32.mrf.mxu0
    %v8507 = vadd.f32 %v8466, %v8506
    %v8508 = vpop.f32.mrf.mxu0
    %v8509 = vpop.f32.mrf.mxu0
    %8510 = vdwg.mxu0
    %8511 = vmatprep.subr.bf16.mxu0 %v5226
    %8512 = vmatpush1.bf16.msra.mxu0 %v5225
    %8513 = vmatprep.subr.bf16.mxu0 %v5222
    %8514 = vmatpush1.bf16.msra.mxu0 %v5221
    %8515 = vmatprep.subr.bf16.mxu0 %v5218
    %8516 = vmatpush1.bf16.msra.mxu0 %v5217
    %8517 = vmatprep.subr.bf16.mxu0 %v5214
    %8518 = vmatpush1.bf16.msra.mxu0 %v5213
    %8519 = vmatprep.subr.bf16.mxu0 %v5210
    %8520 = vmatpush1.bf16.msra.mxu0 %v5209
    %8521 = vmatprep.subr.bf16.mxu0 %v5206
    %8522 = vmatpush1.bf16.msra.mxu0 %v5205
    %8523 = vmatprep.subr.bf16.mxu0 %v5202
    %8524 = vmatpush1.bf16.msra.mxu0 %v5201
    %8525 = vmatprep.subr.bf16.mxu0 %v5198
    %8526 = vmatpush1.bf16.msra.mxu0 %v5197
    %8527 = vmatprep.subr.bf16.mxu0 %v5258
    %8528 = vmatpush2.bf16.msra.mxu0 %v5257
    %8529 = vmatprep.subr.bf16.mxu0 %v5254
    %8530 = vmatpush2.bf16.msra.mxu0 %v5253
    %8531 = vmatprep.subr.bf16.mxu0 %v5250
    %8532 = vmatpush2.bf16.msra.mxu0 %v5249
    %8533 = vmatprep.subr.bf16.mxu0 %v5246
    %8534 = vmatpush2.bf16.msra.mxu0 %v5245
    %8535 = vmatprep.subr.bf16.mxu0 %v5242
    %8536 = vmatpush2.bf16.msra.mxu0 %v5241
    %8537 = vmatprep.subr.bf16.mxu0 %v5238
    %8538 = vmatpush2.bf16.msra.mxu0 %v5237
    %8539 = vmatprep.subr.bf16.mxu0 %v5234
    %8540 = vmatpush2.bf16.msra.mxu0 %v5233
    %8541 = vmatprep.subr.bf16.mxu0 %v5230
    %8542 = vmatpush2.bf16.msra.mxu0 %v5229
    %8543 = vmatprep.mubr.bf16.mxu0 %v143
    %8544 = vmatmul.mubr.bf16.gmra.mxu0 %v142
    %v8545 = vpop.f32.mrf.mxu0
    %v8546 = vadd.f32 %v1442, %v8545
    %v8547 = vpop.f32.mrf.mxu0
    %v8548 = vadd.f32 %v1446, %v8547
    %v8549 = vpop.f32.mrf.mxu0
    %v8550 = vpop.f32.mrf.mxu0
    %8551 = vdwg.mxu0
    %8552 = vmatprep.subr.bf16.mxu0 %v5290
    %8553 = vmatpush1.bf16.msra.mxu0 %v5289
    %8554 = vmatprep.subr.bf16.mxu0 %v5286
    %8555 = vmatpush1.bf16.msra.mxu0 %v5285
    %8556 = vmatprep.subr.bf16.mxu0 %v5282
    %8557 = vmatpush1.bf16.msra.mxu0 %v5281
    %8558 = vmatprep.subr.bf16.mxu0 %v5278
    %8559 = vmatpush1.bf16.msra.mxu0 %v5277
    %8560 = vmatprep.subr.bf16.mxu0 %v5274
    %8561 = vmatpush1.bf16.msra.mxu0 %v5273
    %8562 = vmatprep.subr.bf16.mxu0 %v5270
    %8563 = vmatpush1.bf16.msra.mxu0 %v5269
    %8564 = vmatprep.subr.bf16.mxu0 %v5266
    %8565 = vmatpush1.bf16.msra.mxu0 %v5265
    %8566 = vmatprep.subr.bf16.mxu0 %v5262
    %8567 = vmatpush1.bf16.msra.mxu0 %v5261
    %8568 = vmatprep.subr.bf16.mxu0 %v5322
    %8569 = vmatpush2.bf16.msra.mxu0 %v5321
    %8570 = vmatprep.subr.bf16.mxu0 %v5318
    %8571 = vmatpush2.bf16.msra.mxu0 %v5317
    %8572 = vmatprep.subr.bf16.mxu0 %v5314
    %8573 = vmatpush2.bf16.msra.mxu0 %v5313
    %8574 = vmatprep.subr.bf16.mxu0 %v5310
    %8575 = vmatpush2.bf16.msra.mxu0 %v5309
    %8576 = vmatprep.subr.bf16.mxu0 %v5306
    %8577 = vmatpush2.bf16.msra.mxu0 %v5305
    %8578 = vmatprep.subr.bf16.mxu0 %v5302
    %8579 = vmatpush2.bf16.msra.mxu0 %v5301
    %8580 = vmatprep.subr.bf16.mxu0 %v5298
    %8581 = vmatpush2.bf16.msra.mxu0 %v5297
    %8582 = vmatprep.subr.bf16.mxu0 %v5294
    %8583 = vmatpush2.bf16.msra.mxu0 %v5293
    %8584 = vmatprep.mubr.bf16.mxu0 %v145
    %8585 = vmatmul.mubr.bf16.gmra.mxu0 %v144
    %v8586 = vpop.f32.mrf.mxu0
    %v8587 = vadd.f32 %v8546, %v8586
    %v8588 = vpop.f32.mrf.mxu0
    %v8589 = vadd.f32 %v8548, %v8588
    %v8590 = vpop.f32.mrf.mxu0
    %v8591 = vpop.f32.mrf.mxu0
    %8592 = vdwg.mxu0
    %8593 = vmatprep.subr.bf16.mxu0 %v5354
    %8594 = vmatpush1.bf16.msra.mxu0 %v5353
    %8595 = vmatprep.subr.bf16.mxu0 %v5350
    %8596 = vmatpush1.bf16.msra.mxu0 %v5349
    %8597 = vmatprep.subr.bf16.mxu0 %v5346
    %8598 = vmatpush1.bf16.msra.mxu0 %v5345
    %8599 = vmatprep.subr.bf16.mxu0 %v5342
    %8600 = vmatpush1.bf16.msra.mxu0 %v5341
    %8601 = vmatprep.subr.bf16.mxu0 %v5338
    %8602 = vmatpush1.bf16.msra.mxu0 %v5337
    %8603 = vmatprep.subr.bf16.mxu0 %v5334
    %8604 = vmatpush1.bf16.msra.mxu0 %v5333
    %8605 = vmatprep.subr.bf16.mxu0 %v5330
    %8606 = vmatpush1.bf16.msra.mxu0 %v5329
    %8607 = vmatprep.subr.bf16.mxu0 %v5326
    %8608 = vmatpush1.bf16.msra.mxu0 %v5325
    %8609 = vmatprep.subr.bf16.mxu0 %v5386
    %8610 = vmatpush2.bf16.msra.mxu0 %v5385
    %8611 = vmatprep.subr.bf16.mxu0 %v5382
    %8612 = vmatpush2.bf16.msra.mxu0 %v5381
    %8613 = vmatprep.subr.bf16.mxu0 %v5378
    %8614 = vmatpush2.bf16.msra.mxu0 %v5377
    %8615 = vmatprep.subr.bf16.mxu0 %v5374
    %8616 = vmatpush2.bf16.msra.mxu0 %v5373
    %8617 = vmatprep.subr.bf16.mxu0 %v5370
    %8618 = vmatpush2.bf16.msra.mxu0 %v5369
    %8619 = vmatprep.subr.bf16.mxu0 %v5366
    %8620 = vmatpush2.bf16.msra.mxu0 %v5365
    %8621 = vmatprep.subr.bf16.mxu0 %v5362
    %8622 = vmatpush2.bf16.msra.mxu0 %v5361
    %8623 = vmatprep.subr.bf16.mxu0 %v5358
    %8624 = vmatpush2.bf16.msra.mxu0 %v5357
    %8625 = vmatprep.mubr.bf16.mxu0 %v147
    %8626 = vmatmul.mubr.bf16.gmra.mxu0 %v146
    %v8627 = vpop.f32.mrf.mxu0
    %v8628 = vadd.f32 %v8587, %v8627
    %v8629 = vpop.f32.mrf.mxu0
    %v8630 = vadd.f32 %v8589, %v8629
    %v8631 = vpop.f32.mrf.mxu0
    %v8632 = vpop.f32.mrf.mxu0
    %8633 = vdwg.mxu0
    %8634 = vmatprep.subr.bf16.mxu0 %v5418
    %8635 = vmatpush1.bf16.msra.mxu0 %v5417
    %8636 = vmatprep.subr.bf16.mxu0 %v5414
    %8637 = vmatpush1.bf16.msra.mxu0 %v5413
    %8638 = vmatprep.subr.bf16.mxu0 %v5410
    %8639 = vmatpush1.bf16.msra.mxu0 %v5409
    %8640 = vmatprep.subr.bf16.mxu0 %v5406
    %8641 = vmatpush1.bf16.msra.mxu0 %v5405
    %8642 = vmatprep.subr.bf16.mxu0 %v5402
    %8643 = vmatpush1.bf16.msra.mxu0 %v5401
    %8644 = vmatprep.subr.bf16.mxu0 %v5398
    %8645 = vmatpush1.bf16.msra.mxu0 %v5397
    %8646 = vmatprep.subr.bf16.mxu0 %v5394
    %8647 = vmatpush1.bf16.msra.mxu0 %v5393
    %8648 = vmatprep.subr.bf16.mxu0 %v5390
    %8649 = vmatpush1.bf16.msra.mxu0 %v5389
    %8650 = vmatprep.subr.bf16.mxu0 %v5450
    %8651 = vmatpush2.bf16.msra.mxu0 %v5449
    %8652 = vmatprep.subr.bf16.mxu0 %v5446
    %8653 = vmatpush2.bf16.msra.mxu0 %v5445
    %8654 = vmatprep.subr.bf16.mxu0 %v5442
    %8655 = vmatpush2.bf16.msra.mxu0 %v5441
    %8656 = vmatprep.subr.bf16.mxu0 %v5438
    %8657 = vmatpush2.bf16.msra.mxu0 %v5437
    %8658 = vmatprep.subr.bf16.mxu0 %v5434
    %8659 = vmatpush2.bf16.msra.mxu0 %v5433
    %8660 = vmatprep.subr.bf16.mxu0 %v5430
    %8661 = vmatpush2.bf16.msra.mxu0 %v5429
    %8662 = vmatprep.subr.bf16.mxu0 %v5426
    %8663 = vmatpush2.bf16.msra.mxu0 %v5425
    %8664 = vmatprep.subr.bf16.mxu0 %v5422
    %8665 = vmatpush2.bf16.msra.mxu0 %v5421
    %8666 = vmatprep.mubr.bf16.mxu0 %v149
    %8667 = vmatmul.mubr.bf16.gmra.mxu0 %v148
    %v8668 = vpop.f32.mrf.mxu0
    %v8669 = vadd.f32 %v8628, %v8668
    %v8670 = vpop.f32.mrf.mxu0
    %v8671 = vadd.f32 %v8630, %v8670
    %v8672 = vpop.f32.mrf.mxu0
    %v8673 = vpop.f32.mrf.mxu0
    %8674 = vdwg.mxu0
    %8675 = vmatprep.subr.bf16.mxu0 %v5482
    %8676 = vmatpush1.bf16.msra.mxu0 %v5481
    %8677 = vmatprep.subr.bf16.mxu0 %v5478
    %8678 = vmatpush1.bf16.msra.mxu0 %v5477
    %8679 = vmatprep.subr.bf16.mxu0 %v5474
    %8680 = vmatpush1.bf16.msra.mxu0 %v5473
    %8681 = vmatprep.subr.bf16.mxu0 %v5470
    %8682 = vmatpush1.bf16.msra.mxu0 %v5469
    %8683 = vmatprep.subr.bf16.mxu0 %v5466
    %8684 = vmatpush1.bf16.msra.mxu0 %v5465
    %8685 = vmatprep.subr.bf16.mxu0 %v5462
    %8686 = vmatpush1.bf16.msra.mxu0 %v5461
    %8687 = vmatprep.subr.bf16.mxu0 %v5458
    %8688 = vmatpush1.bf16.msra.mxu0 %v5457
    %8689 = vmatprep.subr.bf16.mxu0 %v5454
    %8690 = vmatpush1.bf16.msra.mxu0 %v5453
    %8691 = vmatprep.subr.bf16.mxu0 %v5514
    %8692 = vmatpush2.bf16.msra.mxu0 %v5513
    %8693 = vmatprep.subr.bf16.mxu0 %v5510
    %8694 = vmatpush2.bf16.msra.mxu0 %v5509
    %8695 = vmatprep.subr.bf16.mxu0 %v5506
    %8696 = vmatpush2.bf16.msra.mxu0 %v5505
    %8697 = vmatprep.subr.bf16.mxu0 %v5502
    %8698 = vmatpush2.bf16.msra.mxu0 %v5501
    %8699 = vmatprep.subr.bf16.mxu0 %v5498
    %8700 = vmatpush2.bf16.msra.mxu0 %v5497
    %8701 = vmatprep.subr.bf16.mxu0 %v5494
    %8702 = vmatpush2.bf16.msra.mxu0 %v5493
    %8703 = vmatprep.subr.bf16.mxu0 %v5490
    %8704 = vmatpush2.bf16.msra.mxu0 %v5489
    %8705 = vmatprep.subr.bf16.mxu0 %v5486
    %8706 = vmatpush2.bf16.msra.mxu0 %v5485
    %8707 = vmatprep.mubr.bf16.mxu0 %v151
    %8708 = vmatmul.mubr.bf16.gmra.mxu0 %v150
    %v8709 = vpop.f32.mrf.mxu0
    %v8710 = vadd.f32 %v8669, %v8709
    %v8711 = vpop.f32.mrf.mxu0
    %v8712 = vadd.f32 %v8671, %v8711
    %v8713 = vpop.f32.mrf.mxu0
    %v8714 = vpop.f32.mrf.mxu0
    %8715 = vdwg.mxu0
    %8716 = vmatprep.subr.bf16.mxu0 %v5546
    %8717 = vmatpush1.bf16.msra.mxu0 %v5545
    %8718 = vmatprep.subr.bf16.mxu0 %v5542
    %8719 = vmatpush1.bf16.msra.mxu0 %v5541
    %8720 = vmatprep.subr.bf16.mxu0 %v5538
    %8721 = vmatpush1.bf16.msra.mxu0 %v5537
    %8722 = vmatprep.subr.bf16.mxu0 %v5534
    %8723 = vmatpush1.bf16.msra.mxu0 %v5533
    %8724 = vmatprep.subr.bf16.mxu0 %v5530
    %8725 = vmatpush1.bf16.msra.mxu0 %v5529
    %8726 = vmatprep.subr.bf16.mxu0 %v5526
    %8727 = vmatpush1.bf16.msra.mxu0 %v5525
    %8728 = vmatprep.subr.bf16.mxu0 %v5522
    %8729 = vmatpush1.bf16.msra.mxu0 %v5521
    %8730 = vmatprep.subr.bf16.mxu0 %v5518
    %8731 = vmatpush1.bf16.msra.mxu0 %v5517
    %8732 = vmatprep.subr.bf16.mxu0 %v5578
    %8733 = vmatpush2.bf16.msra.mxu0 %v5577
    %8734 = vmatprep.subr.bf16.mxu0 %v5574
    %8735 = vmatpush2.bf16.msra.mxu0 %v5573
    %8736 = vmatprep.subr.bf16.mxu0 %v5570
    %8737 = vmatpush2.bf16.msra.mxu0 %v5569
    %8738 = vmatprep.subr.bf16.mxu0 %v5566
    %8739 = vmatpush2.bf16.msra.mxu0 %v5565
    %8740 = vmatprep.subr.bf16.mxu0 %v5562
    %8741 = vmatpush2.bf16.msra.mxu0 %v5561
    %8742 = vmatprep.subr.bf16.mxu0 %v5558
    %8743 = vmatpush2.bf16.msra.mxu0 %v5557
    %8744 = vmatprep.subr.bf16.mxu0 %v5554
    %8745 = vmatpush2.bf16.msra.mxu0 %v5553
    %8746 = vmatprep.subr.bf16.mxu0 %v5550
    %8747 = vmatpush2.bf16.msra.mxu0 %v5549
    %8748 = vmatprep.mubr.bf16.mxu0 %v153
    %8749 = vmatmul.mubr.bf16.gmra.mxu0 %v152
    %v8750 = vpop.f32.mrf.mxu0
    %v8751 = vadd.f32 %v8710, %v8750
    %v8752 = vpop.f32.mrf.mxu0
    %v8753 = vadd.f32 %v8712, %v8752
    %v8754 = vpop.f32.mrf.mxu0
    %v8755 = vpop.f32.mrf.mxu0
    %8756 = vdwg.mxu0
    %8757 = vmatprep.subr.bf16.mxu0 %v5610
    %8758 = vmatpush1.bf16.msra.mxu0 %v5609
    %8759 = vmatprep.subr.bf16.mxu0 %v5606
    %8760 = vmatpush1.bf16.msra.mxu0 %v5605
    %8761 = vmatprep.subr.bf16.mxu0 %v5602
    %8762 = vmatpush1.bf16.msra.mxu0 %v5601
    %8763 = vmatprep.subr.bf16.mxu0 %v5598
    %8764 = vmatpush1.bf16.msra.mxu0 %v5597
    %8765 = vmatprep.subr.bf16.mxu0 %v5594
    %8766 = vmatpush1.bf16.msra.mxu0 %v5593
    %8767 = vmatprep.subr.bf16.mxu0 %v5590
    %8768 = vmatpush1.bf16.msra.mxu0 %v5589
    %8769 = vmatprep.subr.bf16.mxu0 %v5586
    %8770 = vmatpush1.bf16.msra.mxu0 %v5585
    %8771 = vmatprep.subr.bf16.mxu0 %v5582
    %8772 = vmatpush1.bf16.msra.mxu0 %v5581
    %8773 = vmatprep.subr.bf16.mxu0 %v5642
    %8774 = vmatpush2.bf16.msra.mxu0 %v5641
    %8775 = vmatprep.subr.bf16.mxu0 %v5638
    %8776 = vmatpush2.bf16.msra.mxu0 %v5637
    %8777 = vmatprep.subr.bf16.mxu0 %v5634
    %8778 = vmatpush2.bf16.msra.mxu0 %v5633
    %8779 = vmatprep.subr.bf16.mxu0 %v5630
    %8780 = vmatpush2.bf16.msra.mxu0 %v5629
    %8781 = vmatprep.subr.bf16.mxu0 %v5626
    %8782 = vmatpush2.bf16.msra.mxu0 %v5625
    %8783 = vmatprep.subr.bf16.mxu0 %v5622
    %8784 = vmatpush2.bf16.msra.mxu0 %v5621
    %8785 = vmatprep.subr.bf16.mxu0 %v5618
    %8786 = vmatpush2.bf16.msra.mxu0 %v5617
    %8787 = vmatprep.subr.bf16.mxu0 %v5614
    %8788 = vmatpush2.bf16.msra.mxu0 %v5613
    %8789 = vmatprep.mubr.bf16.mxu0 %v155
    %8790 = vmatmul.mubr.bf16.gmra.mxu0 %v154
    %v8791 = vpop.f32.mrf.mxu0
    %v8792 = vadd.f32 %v8751, %v8791
    %v8793 = vpop.f32.mrf.mxu0
    %v8794 = vadd.f32 %v8753, %v8793
    %v8795 = vpop.f32.mrf.mxu0
    %v8796 = vpop.f32.mrf.mxu0
    %8797 = vdwg.mxu0
    %8798 = vmatprep.subr.bf16.mxu0 %v5674
    %8799 = vmatpush1.bf16.msra.mxu0 %v5673
    %8800 = vmatprep.subr.bf16.mxu0 %v5670
    %8801 = vmatpush1.bf16.msra.mxu0 %v5669
    %8802 = vmatprep.subr.bf16.mxu0 %v5666
    %8803 = vmatpush1.bf16.msra.mxu0 %v5665
    %8804 = vmatprep.subr.bf16.mxu0 %v5662
    %8805 = vmatpush1.bf16.msra.mxu0 %v5661
    %8806 = vmatprep.subr.bf16.mxu0 %v5658
    %8807 = vmatpush1.bf16.msra.mxu0 %v5657
    %8808 = vmatprep.subr.bf16.mxu0 %v5654
    %8809 = vmatpush1.bf16.msra.mxu0 %v5653
    %8810 = vmatprep.subr.bf16.mxu0 %v5650
    %8811 = vmatpush1.bf16.msra.mxu0 %v5649
    %8812 = vmatprep.subr.bf16.mxu0 %v5646
    %8813 = vmatpush1.bf16.msra.mxu0 %v5645
    %8814 = vmatprep.subr.bf16.mxu0 %v5706
    %8815 = vmatpush2.bf16.msra.mxu0 %v5705
    %8816 = vmatprep.subr.bf16.mxu0 %v5702
    %8817 = vmatpush2.bf16.msra.mxu0 %v5701
    %8818 = vmatprep.subr.bf16.mxu0 %v5698
    %8819 = vmatpush2.bf16.msra.mxu0 %v5697
    %8820 = vmatprep.subr.bf16.mxu0 %v5694
    %8821 = vmatpush2.bf16.msra.mxu0 %v5693
    %8822 = vmatprep.subr.bf16.mxu0 %v5690
    %8823 = vmatpush2.bf16.msra.mxu0 %v5689
    %8824 = vmatprep.subr.bf16.mxu0 %v5686
    %8825 = vmatpush2.bf16.msra.mxu0 %v5685
    %8826 = vmatprep.subr.bf16.mxu0 %v5682
    %8827 = vmatpush2.bf16.msra.mxu0 %v5681
    %8828 = vmatprep.subr.bf16.mxu0 %v5678
    %8829 = vmatpush2.bf16.msra.mxu0 %v5677
    %8830 = vmatprep.mubr.bf16.mxu0 %v157
    %8831 = vmatmul.mubr.bf16.gmra.mxu0 %v156
    %v8832 = vpop.f32.mrf.mxu0
    %v8833 = vadd.f32 %v8792, %v8832
    %v8834 = vpop.f32.mrf.mxu0
    %v8835 = vadd.f32 %v8794, %v8834
    %v8836 = vpop.f32.mrf.mxu0
    %v8837 = vpop.f32.mrf.mxu0
    %8838 = vdwg.mxu0
    %8839 = vmatprep.subr.bf16.mxu0 %v5738
    %8840 = vmatpush1.bf16.msra.mxu0 %v5737
    %8841 = vmatprep.subr.bf16.mxu0 %v5734
    %8842 = vmatpush1.bf16.msra.mxu0 %v5733
    %8843 = vmatprep.subr.bf16.mxu0 %v5730
    %8844 = vmatpush1.bf16.msra.mxu0 %v5729
    %8845 = vmatprep.subr.bf16.mxu0 %v5726
    %8846 = vmatpush1.bf16.msra.mxu0 %v5725
    %8847 = vmatprep.subr.bf16.mxu0 %v5722
    %8848 = vmatpush1.bf16.msra.mxu0 %v5721
    %8849 = vmatprep.subr.bf16.mxu0 %v5718
    %8850 = vmatpush1.bf16.msra.mxu0 %v5717
    %8851 = vmatprep.subr.bf16.mxu0 %v5714
    %8852 = vmatpush1.bf16.msra.mxu0 %v5713
    %8853 = vmatprep.subr.bf16.mxu0 %v5710
    %8854 = vmatpush1.bf16.msra.mxu0 %v5709
    %8855 = vmatprep.subr.bf16.mxu0 %v5770
    %8856 = vmatpush2.bf16.msra.mxu0 %v5769
    %8857 = vmatprep.subr.bf16.mxu0 %v5766
    %8858 = vmatpush2.bf16.msra.mxu0 %v5765
    %8859 = vmatprep.subr.bf16.mxu0 %v5762
    %8860 = vmatpush2.bf16.msra.mxu0 %v5761
    %8861 = vmatprep.subr.bf16.mxu0 %v5758
    %8862 = vmatpush2.bf16.msra.mxu0 %v5757
    %8863 = vmatprep.subr.bf16.mxu0 %v5754
    %8864 = vmatpush2.bf16.msra.mxu0 %v5753
    %8865 = vmatprep.subr.bf16.mxu0 %v5750
    %8866 = vmatpush2.bf16.msra.mxu0 %v5749
    %8867 = vmatprep.subr.bf16.mxu0 %v5746
    %8868 = vmatpush2.bf16.msra.mxu0 %v5745
    %8869 = vmatprep.subr.bf16.mxu0 %v5742
    %8870 = vmatpush2.bf16.msra.mxu0 %v5741
    %8871 = vmatprep.mubr.bf16.mxu0 %v159
    %8872 = vmatmul.mubr.bf16.gmra.mxu0 %v158
    %v8873 = vpop.f32.mrf.mxu0
    %v8874 = vadd.f32 %v8833, %v8873
    %v8875 = vpop.f32.mrf.mxu0
    %v8876 = vadd.f32 %v8835, %v8875
    %v8877 = vpop.f32.mrf.mxu0
    %v8878 = vpop.f32.mrf.mxu0
    %8879 = vdwg.mxu0
    %8880 = vmatprep.subr.bf16.mxu0 %v5802
    %8881 = vmatpush1.bf16.msra.mxu0 %v5801
    %8882 = vmatprep.subr.bf16.mxu0 %v5798
    %8883 = vmatpush1.bf16.msra.mxu0 %v5797
    %8884 = vmatprep.subr.bf16.mxu0 %v5794
    %8885 = vmatpush1.bf16.msra.mxu0 %v5793
    %8886 = vmatprep.subr.bf16.mxu0 %v5790
    %8887 = vmatpush1.bf16.msra.mxu0 %v5789
    %8888 = vmatprep.subr.bf16.mxu0 %v5786
    %8889 = vmatpush1.bf16.msra.mxu0 %v5785
    %8890 = vmatprep.subr.bf16.mxu0 %v5782
    %8891 = vmatpush1.bf16.msra.mxu0 %v5781
    %8892 = vmatprep.subr.bf16.mxu0 %v5778
    %8893 = vmatpush1.bf16.msra.mxu0 %v5777
    %8894 = vmatprep.subr.bf16.mxu0 %v5774
    %8895 = vmatpush1.bf16.msra.mxu0 %v5773
    %8896 = vmatprep.subr.bf16.mxu0 %v5834
    %8897 = vmatpush2.bf16.msra.mxu0 %v5833
    %8898 = vmatprep.subr.bf16.mxu0 %v5830
    %8899 = vmatpush2.bf16.msra.mxu0 %v5829
    %8900 = vmatprep.subr.bf16.mxu0 %v5826
    %8901 = vmatpush2.bf16.msra.mxu0 %v5825
    %8902 = vmatprep.subr.bf16.mxu0 %v5822
    %8903 = vmatpush2.bf16.msra.mxu0 %v5821
    %8904 = vmatprep.subr.bf16.mxu0 %v5818
    %8905 = vmatpush2.bf16.msra.mxu0 %v5817
    %8906 = vmatprep.subr.bf16.mxu0 %v5814
    %8907 = vmatpush2.bf16.msra.mxu0 %v5813
    %8908 = vmatprep.subr.bf16.mxu0 %v5810
    %8909 = vmatpush2.bf16.msra.mxu0 %v5809
    %8910 = vmatprep.subr.bf16.mxu0 %v5806
    %8911 = vmatpush2.bf16.msra.mxu0 %v5805
    %8912 = vmatprep.mubr.bf16.mxu0 %v161
    %8913 = vmatmul.mubr.bf16.gmra.mxu0 %v160
    %v8914 = vpop.f32.mrf.mxu0
    %v8915 = vadd.f32 %v8874, %v8914
    %v8916 = vpop.f32.mrf.mxu0
    %v8917 = vadd.f32 %v8876, %v8916
    %v8918 = vpop.f32.mrf.mxu0
    %v8919 = vpop.f32.mrf.mxu0
    %8920 = vdwg.mxu0
    %8921 = vmatprep.subr.bf16.mxu0 %v5866
    %8922 = vmatpush1.bf16.msra.mxu0 %v5865
    %8923 = vmatprep.subr.bf16.mxu0 %v5862
    %8924 = vmatpush1.bf16.msra.mxu0 %v5861
    %8925 = vmatprep.subr.bf16.mxu0 %v5858
    %8926 = vmatpush1.bf16.msra.mxu0 %v5857
    %8927 = vmatprep.subr.bf16.mxu0 %v5854
    %8928 = vmatpush1.bf16.msra.mxu0 %v5853
    %8929 = vmatprep.subr.bf16.mxu0 %v5850
    %8930 = vmatpush1.bf16.msra.mxu0 %v5849
    %8931 = vmatprep.subr.bf16.mxu0 %v5846
    %8932 = vmatpush1.bf16.msra.mxu0 %v5845
    %8933 = vmatprep.subr.bf16.mxu0 %v5842
    %8934 = vmatpush1.bf16.msra.mxu0 %v5841
    %8935 = vmatprep.subr.bf16.mxu0 %v5838
    %8936 = vmatpush1.bf16.msra.mxu0 %v5837
    %8937 = vmatprep.subr.bf16.mxu0 %v5898
    %8938 = vmatpush2.bf16.msra.mxu0 %v5897
    %8939 = vmatprep.subr.bf16.mxu0 %v5894
    %8940 = vmatpush2.bf16.msra.mxu0 %v5893
    %8941 = vmatprep.subr.bf16.mxu0 %v5890
    %8942 = vmatpush2.bf16.msra.mxu0 %v5889
    %8943 = vmatprep.subr.bf16.mxu0 %v5886
    %8944 = vmatpush2.bf16.msra.mxu0 %v5885
    %8945 = vmatprep.subr.bf16.mxu0 %v5882
    %8946 = vmatpush2.bf16.msra.mxu0 %v5881
    %8947 = vmatprep.subr.bf16.mxu0 %v5878
    %8948 = vmatpush2.bf16.msra.mxu0 %v5877
    %8949 = vmatprep.subr.bf16.mxu0 %v5874
    %8950 = vmatpush2.bf16.msra.mxu0 %v5873
    %8951 = vmatprep.subr.bf16.mxu0 %v5870
    %8952 = vmatpush2.bf16.msra.mxu0 %v5869
    %8953 = vmatprep.mubr.bf16.mxu0 %v163
    %8954 = vmatmul.mubr.bf16.gmra.mxu0 %v162
    %v8955 = vpop.f32.mrf.mxu0
    %v8956 = vadd.f32 %v8915, %v8955
    %v8957 = vpop.f32.mrf.mxu0
    %v8958 = vadd.f32 %v8917, %v8957
    %v8959 = vpop.f32.mrf.mxu0
    %v8960 = vpop.f32.mrf.mxu0
    %8961 = vdwg.mxu0
    %8962 = vmatprep.subr.bf16.mxu0 %v5930
    %8963 = vmatpush1.bf16.msra.mxu0 %v5929
    %8964 = vmatprep.subr.bf16.mxu0 %v5926
    %8965 = vmatpush1.bf16.msra.mxu0 %v5925
    %8966 = vmatprep.subr.bf16.mxu0 %v5922
    %8967 = vmatpush1.bf16.msra.mxu0 %v5921
    %8968 = vmatprep.subr.bf16.mxu0 %v5918
    %8969 = vmatpush1.bf16.msra.mxu0 %v5917
    %8970 = vmatprep.subr.bf16.mxu0 %v5914
    %8971 = vmatpush1.bf16.msra.mxu0 %v5913
    %8972 = vmatprep.subr.bf16.mxu0 %v5910
    %8973 = vmatpush1.bf16.msra.mxu0 %v5909
    %8974 = vmatprep.subr.bf16.mxu0 %v5906
    %8975 = vmatpush1.bf16.msra.mxu0 %v5905
    %8976 = vmatprep.subr.bf16.mxu0 %v5902
    %8977 = vmatpush1.bf16.msra.mxu0 %v5901
    %8978 = vmatprep.subr.bf16.mxu0 %v5962
    %8979 = vmatpush2.bf16.msra.mxu0 %v5961
    %8980 = vmatprep.subr.bf16.mxu0 %v5958
    %8981 = vmatpush2.bf16.msra.mxu0 %v5957
    %8982 = vmatprep.subr.bf16.mxu0 %v5954
    %8983 = vmatpush2.bf16.msra.mxu0 %v5953
    %8984 = vmatprep.subr.bf16.mxu0 %v5950
    %8985 = vmatpush2.bf16.msra.mxu0 %v5949
    %8986 = vmatprep.subr.bf16.mxu0 %v5946
    %8987 = vmatpush2.bf16.msra.mxu0 %v5945
    %8988 = vmatprep.subr.bf16.mxu0 %v5942
    %8989 = vmatpush2.bf16.msra.mxu0 %v5941
    %8990 = vmatprep.subr.bf16.mxu0 %v5938
    %8991 = vmatpush2.bf16.msra.mxu0 %v5937
    %8992 = vmatprep.subr.bf16.mxu0 %v5934
    %8993 = vmatpush2.bf16.msra.mxu0 %v5933
    %8994 = vmatprep.mubr.bf16.mxu0 %v165
    %8995 = vmatmul.mubr.bf16.gmra.mxu0 %v164
    %v8996 = vpop.f32.mrf.mxu0
    %v8997 = vadd.f32 %v8956, %v8996
    %v8998 = vpop.f32.mrf.mxu0
    %v8999 = vadd.f32 %v8958, %v8998
    %v9000 = vpop.f32.mrf.mxu0
    %v9001 = vpop.f32.mrf.mxu0
    %9002 = vdwg.mxu0
    %9003 = vmatprep.subr.bf16.mxu0 %v5994
    %9004 = vmatpush1.bf16.msra.mxu0 %v5993
    %9005 = vmatprep.subr.bf16.mxu0 %v5990
    %9006 = vmatpush1.bf16.msra.mxu0 %v5989
    %9007 = vmatprep.subr.bf16.mxu0 %v5986
    %9008 = vmatpush1.bf16.msra.mxu0 %v5985
    %9009 = vmatprep.subr.bf16.mxu0 %v5982
    %9010 = vmatpush1.bf16.msra.mxu0 %v5981
    %9011 = vmatprep.subr.bf16.mxu0 %v5978
    %9012 = vmatpush1.bf16.msra.mxu0 %v5977
    %9013 = vmatprep.subr.bf16.mxu0 %v5974
    %9014 = vmatpush1.bf16.msra.mxu0 %v5973
    %9015 = vmatprep.subr.bf16.mxu0 %v5970
    %9016 = vmatpush1.bf16.msra.mxu0 %v5969
    %9017 = vmatprep.subr.bf16.mxu0 %v5966
    %9018 = vmatpush1.bf16.msra.mxu0 %v5965
    %9019 = vmatprep.subr.bf16.mxu0 %v6026
    %9020 = vmatpush2.bf16.msra.mxu0 %v6025
    %9021 = vmatprep.subr.bf16.mxu0 %v6022
    %9022 = vmatpush2.bf16.msra.mxu0 %v6021
    %9023 = vmatprep.subr.bf16.mxu0 %v6018
    %9024 = vmatpush2.bf16.msra.mxu0 %v6017
    %9025 = vmatprep.subr.bf16.mxu0 %v6014
    %9026 = vmatpush2.bf16.msra.mxu0 %v6013
    %9027 = vmatprep.subr.bf16.mxu0 %v6010
    %9028 = vmatpush2.bf16.msra.mxu0 %v6009
    %9029 = vmatprep.subr.bf16.mxu0 %v6006
    %9030 = vmatpush2.bf16.msra.mxu0 %v6005
    %9031 = vmatprep.subr.bf16.mxu0 %v6002
    %9032 = vmatpush2.bf16.msra.mxu0 %v6001
    %9033 = vmatprep.subr.bf16.mxu0 %v5998
    %9034 = vmatpush2.bf16.msra.mxu0 %v5997
    %9035 = vmatprep.mubr.bf16.mxu0 %v167
    %9036 = vmatmul.mubr.bf16.gmra.mxu0 %v166
    %v9037 = vpop.f32.mrf.mxu0
    %v9038 = vadd.f32 %v8997, %v9037
    %v9039 = vpop.f32.mrf.mxu0
    %v9040 = vadd.f32 %v8999, %v9039
    %v9041 = vpop.f32.mrf.mxu0
    %v9042 = vpop.f32.mrf.mxu0
    %9043 = vdwg.mxu0
    %9044 = vmatprep.subr.bf16.mxu0 %v6058
    %9045 = vmatpush1.bf16.msra.mxu0 %v6057
    %9046 = vmatprep.subr.bf16.mxu0 %v6054
    %9047 = vmatpush1.bf16.msra.mxu0 %v6053
    %9048 = vmatprep.subr.bf16.mxu0 %v6050
    %9049 = vmatpush1.bf16.msra.mxu0 %v6049
    %9050 = vmatprep.subr.bf16.mxu0 %v6046
    %9051 = vmatpush1.bf16.msra.mxu0 %v6045
    %9052 = vmatprep.subr.bf16.mxu0 %v6042
    %9053 = vmatpush1.bf16.msra.mxu0 %v6041
    %9054 = vmatprep.subr.bf16.mxu0 %v6038
    %9055 = vmatpush1.bf16.msra.mxu0 %v6037
    %9056 = vmatprep.subr.bf16.mxu0 %v6034
    %9057 = vmatpush1.bf16.msra.mxu0 %v6033
    %9058 = vmatprep.subr.bf16.mxu0 %v6030
    %9059 = vmatpush1.bf16.msra.mxu0 %v6029
    %9060 = vmatprep.subr.bf16.mxu0 %v6090
    %9061 = vmatpush2.bf16.msra.mxu0 %v6089
    %9062 = vmatprep.subr.bf16.mxu0 %v6086
    %9063 = vmatpush2.bf16.msra.mxu0 %v6085
    %9064 = vmatprep.subr.bf16.mxu0 %v6082
    %9065 = vmatpush2.bf16.msra.mxu0 %v6081
    %9066 = vmatprep.subr.bf16.mxu0 %v6078
    %9067 = vmatpush2.bf16.msra.mxu0 %v6077
    %9068 = vmatprep.subr.bf16.mxu0 %v6074
    %9069 = vmatpush2.bf16.msra.mxu0 %v6073
    %9070 = vmatprep.subr.bf16.mxu0 %v6070
    %9071 = vmatpush2.bf16.msra.mxu0 %v6069
    %9072 = vmatprep.subr.bf16.mxu0 %v6066
    %9073 = vmatpush2.bf16.msra.mxu0 %v6065
    %9074 = vmatprep.subr.bf16.mxu0 %v6062
    %9075 = vmatpush2.bf16.msra.mxu0 %v6061
    %9076 = vmatprep.mubr.bf16.mxu0 %v169
    %9077 = vmatmul.mubr.bf16.gmra.mxu0 %v168
    %v9078 = vpop.f32.mrf.mxu0
    %v9079 = vadd.f32 %v9038, %v9078
    %v9080 = vpop.f32.mrf.mxu0
    %v9081 = vadd.f32 %v9040, %v9080
    %v9082 = vpop.f32.mrf.mxu0
    %v9083 = vpop.f32.mrf.mxu0
    %9084 = vdwg.mxu0
    %9085 = vmatprep.subr.bf16.mxu0 %v6122
    %9086 = vmatpush1.bf16.msra.mxu0 %v6121
    %9087 = vmatprep.subr.bf16.mxu0 %v6118
    %9088 = vmatpush1.bf16.msra.mxu0 %v6117
    %9089 = vmatprep.subr.bf16.mxu0 %v6114
    %9090 = vmatpush1.bf16.msra.mxu0 %v6113
    %9091 = vmatprep.subr.bf16.mxu0 %v6110
    %9092 = vmatpush1.bf16.msra.mxu0 %v6109
    %9093 = vmatprep.subr.bf16.mxu0 %v6106
    %9094 = vmatpush1.bf16.msra.mxu0 %v6105
    %9095 = vmatprep.subr.bf16.mxu0 %v6102
    %9096 = vmatpush1.bf16.msra.mxu0 %v6101
    %9097 = vmatprep.subr.bf16.mxu0 %v6098
    %9098 = vmatpush1.bf16.msra.mxu0 %v6097
    %9099 = vmatprep.subr.bf16.mxu0 %v6094
    %9100 = vmatpush1.bf16.msra.mxu0 %v6093
    %9101 = vmatprep.subr.bf16.mxu0 %v6154
    %9102 = vmatpush2.bf16.msra.mxu0 %v6153
    %9103 = vmatprep.subr.bf16.mxu0 %v6150
    %9104 = vmatpush2.bf16.msra.mxu0 %v6149
    %9105 = vmatprep.subr.bf16.mxu0 %v6146
    %9106 = vmatpush2.bf16.msra.mxu0 %v6145
    %9107 = vmatprep.subr.bf16.mxu0 %v6142
    %9108 = vmatpush2.bf16.msra.mxu0 %v6141
    %9109 = vmatprep.subr.bf16.mxu0 %v6138
    %9110 = vmatpush2.bf16.msra.mxu0 %v6137
    %9111 = vmatprep.subr.bf16.mxu0 %v6134
    %9112 = vmatpush2.bf16.msra.mxu0 %v6133
    %9113 = vmatprep.subr.bf16.mxu0 %v6130
    %9114 = vmatpush2.bf16.msra.mxu0 %v6129
    %9115 = vmatprep.subr.bf16.mxu0 %v6126
    %9116 = vmatpush2.bf16.msra.mxu0 %v6125
    %9117 = vmatprep.mubr.bf16.mxu0 %v171
    %9118 = vmatmul.mubr.bf16.gmra.mxu0 %v170
    %v9119 = vpop.f32.mrf.mxu0
    %v9120 = vadd.f32 %v9079, %v9119
    %v9121 = vpop.f32.mrf.mxu0
    %v9122 = vadd.f32 %v9081, %v9121
    %v9123 = vpop.f32.mrf.mxu0
    %v9124 = vpop.f32.mrf.mxu0
    %9125 = vdwg.mxu0
    %9126 = vmatprep.subr.bf16.mxu0 %v6186
    %9127 = vmatpush1.bf16.msra.mxu0 %v6185
    %9128 = vmatprep.subr.bf16.mxu0 %v6182
    %9129 = vmatpush1.bf16.msra.mxu0 %v6181
    %9130 = vmatprep.subr.bf16.mxu0 %v6178
    %9131 = vmatpush1.bf16.msra.mxu0 %v6177
    %9132 = vmatprep.subr.bf16.mxu0 %v6174
    %9133 = vmatpush1.bf16.msra.mxu0 %v6173
    %9134 = vmatprep.subr.bf16.mxu0 %v6170
    %9135 = vmatpush1.bf16.msra.mxu0 %v6169
    %9136 = vmatprep.subr.bf16.mxu0 %v6166
    %9137 = vmatpush1.bf16.msra.mxu0 %v6165
    %9138 = vmatprep.subr.bf16.mxu0 %v6162
    %9139 = vmatpush1.bf16.msra.mxu0 %v6161
    %9140 = vmatprep.subr.bf16.mxu0 %v6158
    %9141 = vmatpush1.bf16.msra.mxu0 %v6157
    %9142 = vmatprep.subr.bf16.mxu0 %v6218
    %9143 = vmatpush2.bf16.msra.mxu0 %v6217
    %9144 = vmatprep.subr.bf16.mxu0 %v6214
    %9145 = vmatpush2.bf16.msra.mxu0 %v6213
    %9146 = vmatprep.subr.bf16.mxu0 %v6210
    %9147 = vmatpush2.bf16.msra.mxu0 %v6209
    %9148 = vmatprep.subr.bf16.mxu0 %v6206
    %9149 = vmatpush2.bf16.msra.mxu0 %v6205
    %9150 = vmatprep.subr.bf16.mxu0 %v6202
    %9151 = vmatpush2.bf16.msra.mxu0 %v6201
    %9152 = vmatprep.subr.bf16.mxu0 %v6198
    %9153 = vmatpush2.bf16.msra.mxu0 %v6197
    %9154 = vmatprep.subr.bf16.mxu0 %v6194
    %9155 = vmatpush2.bf16.msra.mxu0 %v6193
    %9156 = vmatprep.subr.bf16.mxu0 %v6190
    %9157 = vmatpush2.bf16.msra.mxu0 %v6189
    %9158 = vmatprep.mubr.bf16.mxu0 %v173
    %9159 = vmatmul.mubr.bf16.gmra.mxu0 %v172
    %v9160 = vpop.f32.mrf.mxu0
    %v9161 = vadd.f32 %v9120, %v9160
    %v9162 = vpop.f32.mrf.mxu0
    %v9163 = vadd.f32 %v9122, %v9162
    %v9164 = vpop.f32.mrf.mxu0
    %v9165 = vpop.f32.mrf.mxu0
    %9166 = vdwg.mxu0
    %9167 = vmatprep.subr.bf16.mxu0 %v6250
    %9168 = vmatpush1.bf16.msra.mxu0 %v6249
    %9169 = vmatprep.subr.bf16.mxu0 %v6246
    %9170 = vmatpush1.bf16.msra.mxu0 %v6245
    %9171 = vmatprep.subr.bf16.mxu0 %v6242
    %9172 = vmatpush1.bf16.msra.mxu0 %v6241
    %9173 = vmatprep.subr.bf16.mxu0 %v6238
    %9174 = vmatpush1.bf16.msra.mxu0 %v6237
    %9175 = vmatprep.subr.bf16.mxu0 %v6234
    %9176 = vmatpush1.bf16.msra.mxu0 %v6233
    %9177 = vmatprep.subr.bf16.mxu0 %v6230
    %9178 = vmatpush1.bf16.msra.mxu0 %v6229
    %9179 = vmatprep.subr.bf16.mxu0 %v6226
    %9180 = vmatpush1.bf16.msra.mxu0 %v6225
    %9181 = vmatprep.subr.bf16.mxu0 %v6222
    %9182 = vmatpush1.bf16.msra.mxu0 %v6221
    %9183 = vmatprep.subr.bf16.mxu0 %v6282
    %9184 = vmatpush2.bf16.msra.mxu0 %v6281
    %9185 = vmatprep.subr.bf16.mxu0 %v6278
    %9186 = vmatpush2.bf16.msra.mxu0 %v6277
    %9187 = vmatprep.subr.bf16.mxu0 %v6274
    %9188 = vmatpush2.bf16.msra.mxu0 %v6273
    %9189 = vmatprep.subr.bf16.mxu0 %v6270
    %9190 = vmatpush2.bf16.msra.mxu0 %v6269
    %9191 = vmatprep.subr.bf16.mxu0 %v6266
    %9192 = vmatpush2.bf16.msra.mxu0 %v6265
    %9193 = vmatprep.subr.bf16.mxu0 %v6262
    %9194 = vmatpush2.bf16.msra.mxu0 %v6261
    %9195 = vmatprep.subr.bf16.mxu0 %v6258
    %9196 = vmatpush2.bf16.msra.mxu0 %v6257
    %9197 = vmatprep.subr.bf16.mxu0 %v6254
    %9198 = vmatpush2.bf16.msra.mxu0 %v6253
    %9199 = vmatprep.mubr.bf16.mxu0 %v175
    %9200 = vmatmul.mubr.bf16.gmra.mxu0 %v174
    %v9201 = vpop.f32.mrf.mxu0
    %v9202 = vadd.f32 %v9161, %v9201
    %v9203 = vpop.f32.mrf.mxu0
    %v9204 = vadd.f32 %v9163, %v9203
    %v9205 = vpop.f32.mrf.mxu0
    %v9206 = vpop.f32.mrf.mxu0
    %9207 = vdwg.mxu0
    %9208 = vmatprep.subr.bf16.mxu0 %v6314
    %9209 = vmatpush1.bf16.msra.mxu0 %v6313
    %9210 = vmatprep.subr.bf16.mxu0 %v6310
    %9211 = vmatpush1.bf16.msra.mxu0 %v6309
    %9212 = vmatprep.subr.bf16.mxu0 %v6306
    %9213 = vmatpush1.bf16.msra.mxu0 %v6305
    %9214 = vmatprep.subr.bf16.mxu0 %v6302
    %9215 = vmatpush1.bf16.msra.mxu0 %v6301
    %9216 = vmatprep.subr.bf16.mxu0 %v6298
    %9217 = vmatpush1.bf16.msra.mxu0 %v6297
    %9218 = vmatprep.subr.bf16.mxu0 %v6294
    %9219 = vmatpush1.bf16.msra.mxu0 %v6293
    %9220 = vmatprep.subr.bf16.mxu0 %v6290
    %9221 = vmatpush1.bf16.msra.mxu0 %v6289
    %9222 = vmatprep.subr.bf16.mxu0 %v6286
    %9223 = vmatpush1.bf16.msra.mxu0 %v6285
    %9224 = vmatprep.subr.bf16.mxu0 %v6346
    %9225 = vmatpush2.bf16.msra.mxu0 %v6345
    %9226 = vmatprep.subr.bf16.mxu0 %v6342
    %9227 = vmatpush2.bf16.msra.mxu0 %v6341
    %9228 = vmatprep.subr.bf16.mxu0 %v6338
    %9229 = vmatpush2.bf16.msra.mxu0 %v6337
    %9230 = vmatprep.subr.bf16.mxu0 %v6334
    %9231 = vmatpush2.bf16.msra.mxu0 %v6333
    %9232 = vmatprep.subr.bf16.mxu0 %v6330
    %9233 = vmatpush2.bf16.msra.mxu0 %v6329
    %9234 = vmatprep.subr.bf16.mxu0 %v6326
    %9235 = vmatpush2.bf16.msra.mxu0 %v6325
    %9236 = vmatprep.subr.bf16.mxu0 %v6322
    %9237 = vmatpush2.bf16.msra.mxu0 %v6321
    %9238 = vmatprep.subr.bf16.mxu0 %v6318
    %9239 = vmatpush2.bf16.msra.mxu0 %v6317
    %9240 = vmatprep.mubr.bf16.mxu0 %v177
    %9241 = vmatmul.mubr.bf16.gmra.mxu0 %v176
    %v9242 = vpop.f32.mrf.mxu0
    %v9243 = vadd.f32 %v9202, %v9242
    %v9244 = vpop.f32.mrf.mxu0
    %v9245 = vadd.f32 %v9204, %v9244
    %v9246 = vpop.f32.mrf.mxu0
    %v9247 = vpop.f32.mrf.mxu0
    %9248 = vdwg.mxu0
    %9249 = vmatprep.subr.bf16.mxu0 %v6378
    %9250 = vmatpush1.bf16.msra.mxu0 %v6377
    %9251 = vmatprep.subr.bf16.mxu0 %v6374
    %9252 = vmatpush1.bf16.msra.mxu0 %v6373
    %9253 = vmatprep.subr.bf16.mxu0 %v6370
    %9254 = vmatpush1.bf16.msra.mxu0 %v6369
    %9255 = vmatprep.subr.bf16.mxu0 %v6366
    %9256 = vmatpush1.bf16.msra.mxu0 %v6365
    %9257 = vmatprep.subr.bf16.mxu0 %v6362
    %9258 = vmatpush1.bf16.msra.mxu0 %v6361
    %9259 = vmatprep.subr.bf16.mxu0 %v6358
    %9260 = vmatpush1.bf16.msra.mxu0 %v6357
    %9261 = vmatprep.subr.bf16.mxu0 %v6354
    %9262 = vmatpush1.bf16.msra.mxu0 %v6353
    %9263 = vmatprep.subr.bf16.mxu0 %v6350
    %9264 = vmatpush1.bf16.msra.mxu0 %v6349
    %9265 = vmatprep.subr.bf16.mxu0 %v6410
    %9266 = vmatpush2.bf16.msra.mxu0 %v6409
    %9267 = vmatprep.subr.bf16.mxu0 %v6406
    %9268 = vmatpush2.bf16.msra.mxu0 %v6405
    %9269 = vmatprep.subr.bf16.mxu0 %v6402
    %9270 = vmatpush2.bf16.msra.mxu0 %v6401
    %9271 = vmatprep.subr.bf16.mxu0 %v6398
    %9272 = vmatpush2.bf16.msra.mxu0 %v6397
    %9273 = vmatprep.subr.bf16.mxu0 %v6394
    %9274 = vmatpush2.bf16.msra.mxu0 %v6393
    %9275 = vmatprep.subr.bf16.mxu0 %v6390
    %9276 = vmatpush2.bf16.msra.mxu0 %v6389
    %9277 = vmatprep.subr.bf16.mxu0 %v6386
    %9278 = vmatpush2.bf16.msra.mxu0 %v6385
    %9279 = vmatprep.subr.bf16.mxu0 %v6382
    %9280 = vmatpush2.bf16.msra.mxu0 %v6381
    %9281 = vmatprep.mubr.bf16.mxu0 %v179
    %9282 = vmatmul.mubr.bf16.gmra.mxu0 %v178
    %v9283 = vpop.f32.mrf.mxu0
    %v9284 = vadd.f32 %v9243, %v9283
    %v9285 = vpop.f32.mrf.mxu0
    %v9286 = vadd.f32 %v9245, %v9285
    %v9287 = vpop.f32.mrf.mxu0
    %v9288 = vpop.f32.mrf.mxu0
    %9289 = vdwg.mxu0
    %9290 = vmatprep.subr.bf16.mxu0 %v6442
    %9291 = vmatpush1.bf16.msra.mxu0 %v6441
    %9292 = vmatprep.subr.bf16.mxu0 %v6438
    %9293 = vmatpush1.bf16.msra.mxu0 %v6437
    %9294 = vmatprep.subr.bf16.mxu0 %v6434
    %9295 = vmatpush1.bf16.msra.mxu0 %v6433
    %9296 = vmatprep.subr.bf16.mxu0 %v6430
    %9297 = vmatpush1.bf16.msra.mxu0 %v6429
    %9298 = vmatprep.subr.bf16.mxu0 %v6426
    %9299 = vmatpush1.bf16.msra.mxu0 %v6425
    %9300 = vmatprep.subr.bf16.mxu0 %v6422
    %9301 = vmatpush1.bf16.msra.mxu0 %v6421
    %9302 = vmatprep.subr.bf16.mxu0 %v6418
    %9303 = vmatpush1.bf16.msra.mxu0 %v6417
    %9304 = vmatprep.subr.bf16.mxu0 %v6414
    %9305 = vmatpush1.bf16.msra.mxu0 %v6413
    %9306 = vmatprep.subr.bf16.mxu0 0
    %9307 = vmatpush2.bf16.msra.mxu0 0
    %9308 = vmatprep.subr.bf16.mxu0 0
    %9309 = vmatpush2.bf16.msra.mxu0 0
    %9310 = vmatprep.subr.bf16.mxu0 0
    %9311 = vmatpush2.bf16.msra.mxu0 0
    %9312 = vmatprep.subr.bf16.mxu0 0
    %9313 = vmatpush2.bf16.msra.mxu0 0
    %9314 = vmatprep.subr.bf16.mxu0 0
    %9315 = vmatpush2.bf16.msra.mxu0 0
    %9316 = vmatprep.subr.bf16.mxu0 0
    %9317 = vmatpush2.bf16.msra.mxu0 0
    %9318 = vmatprep.subr.bf16.mxu0 0
    %9319 = vmatpush2.bf16.msra.mxu0 0
    %9320 = vmatprep.subr.bf16.mxu0 0
    %9321 = vmatpush2.bf16.msra.mxu0 0
    %9322 = vmatprep.mubr.bf16.mxu0 0
    %9323 = vmatmul.mubr.bf16.gmra.mxu0 %v180
    %v9324 = vpop.f32.mrf.mxu0
    %v9325 = vadd.f32 %v9284, %v9324
    %v9326 = vpop.f32.mrf.mxu0
    %v9327 = vadd.f32 %v9286, %v9326
    %v9328 = vpop.f32.mrf.mxu0
    %v9329 = vpop.f32.mrf.mxu0
    %9330 = vdwg.mxu0
    %v9331 = vmax.f32 %v8505, 0.0
    %v9332 = vmax.f32 %v8507, 0.0
    %v9333 = vmax.f32 %v9325, 0.0
    %v9334 = vmax.f32 %v9327, 0.0
    %v9335 = vpack.c.bf16 %v9331, %v9331
    %v9336 = vpack.c.bf16 %v9332, %v9332
    %v9337 = vpack.c.bf16 %v9333, %v9333
    %v9338 = vpack.c.bf16 %v9334, %v9334
    %v9339 = vld [vmem:[#allocation6] sm:$0xff]
    %v9340 = vld [vmem:[#allocation6 + $0x8] sm:$0xff]
    %v9341 = vld [vmem:[#allocation6 + $0x10] sm:$0xff]
    %v9342 = vld [vmem:[#allocation6 + $0x18] sm:$0xff]
    %v9343 = vld [vmem:[#allocation6 + $0x20] sm:$0xff]
    %v9344 = vld [vmem:[#allocation6 + $0x28] sm:$0xff]
    %v9345 = vld [vmem:[#allocation6 + $0x30] sm:$0xff]
    %v9346 = vld [vmem:[#allocation6 + $0x38] sm:$0xff]
    %v9347 = vld [vmem:[#allocation6 + $0x40] sm:$0xff]
    %v9348 = vld [vmem:[#allocation6 + $0x48] sm:$0xff]
    %v9349 = vld [vmem:[#allocation6 + $0x50] sm:$0xff]
    %v9350 = vld [vmem:[#allocation6 + $0x58] sm:$0xff]
    %v9351 = vld [vmem:[#allocation6 + $0x60] sm:$0xff]
    %v9352 = vld [vmem:[#allocation6 + $0x68] sm:$0xff]
    %v9353 = vld [vmem:[#allocation6 + $0x70] sm:$0xff]
    %v9354 = vld [vmem:[#allocation6 + $0x78] sm:$0xff]
    %v9355 = vld [vmem:[#allocation6 + $0x80] sm:$0xff]
    %v9356 = vld [vmem:[#allocation6 + $0x88] sm:$0xff]
    %v9357 = vld [vmem:[#allocation6 + $0x90] sm:$0xff]
    %v9358 = vld [vmem:[#allocation6 + $0x98] sm:$0xff]
    %v9359 = vld [vmem:[#allocation6 + $0xa0] sm:$0xff]
    %v9360 = vld [vmem:[#allocation6 + $0xa8] sm:$0xff]
    %v9361 = vld [vmem:[#allocation6 + $0xb0] sm:$0xff]
    %v9362 = vld [vmem:[#allocation6 + $0xb8] sm:$0xff]
    %v9363 = vld [vmem:[#allocation6 + $0xc0] sm:$0xff]
    %v9364 = vld [vmem:[#allocation6 + $0xc8] sm:$0xff]
    %v9365 = vld [vmem:[#allocation6 + $0xd0] sm:$0xff]
    %v9366 = vld [vmem:[#allocation6 + $0xd8] sm:$0xff]
    %v9367 = vld [vmem:[#allocation6 + $0xe0] sm:$0xff]
    %v9368 = vld [vmem:[#allocation6 + $0xe8] sm:$0xff]
    %v9369 = vld [vmem:[#allocation6 + $0xf0] sm:$0xff]
    %v9370 = vld [vmem:[#allocation6 + $0xf8] sm:$0xff]
    %v9371 = vld [vmem:[#allocation6 + $0x100] sm:$0xff]
    %v9372 = vld [vmem:[#allocation6 + $0x108] sm:$0xff]
    %v9373 = vld [vmem:[#allocation6 + $0x110] sm:$0xff]
    %v9374 = vld [vmem:[#allocation6 + $0x118] sm:$0xff]
    %v9375 = vld [vmem:[#allocation6 + $0x120] sm:$0xff]
    %v9376 = vld [vmem:[#allocation6 + $0x128] sm:$0xff]
    %v9377 = vld [vmem:[#allocation6 + $0x130] sm:$0xff]
    %v9378 = vld [vmem:[#allocation6 + $0x138] sm:$0xff]
    %v9379 = vld [vmem:[#allocation6 + $0x140] sm:$0xff]
    %v9380 = vld [vmem:[#allocation6 + $0x148] sm:$0xff]
    %v9381 = vld [vmem:[#allocation6 + $0x150] sm:$0xff]
    %v9382 = vld [vmem:[#allocation6 + $0x158] sm:$0xff]
    %v9383 = vld [vmem:[#allocation6 + $0x160] sm:$0xff]
    %v9384 = vld [vmem:[#allocation6 + $0x168] sm:$0xff]
    %v9385 = vld [vmem:[#allocation6 + $0x170] sm:$0xff]
    %v9386 = vld [vmem:[#allocation6 + $0x178] sm:$0xff]
    %v9387 = vld [vmem:[#allocation6 + $0x180] sm:$0xff]
    %v9388 = vld [vmem:[#allocation6 + $0x188] sm:$0xff]
    %v9389 = vld [vmem:[#allocation6 + $0x190] sm:$0xff]
    %v9390 = vld [vmem:[#allocation6 + $0x198] sm:$0xff]
    %v9391 = vld [vmem:[#allocation6 + $0x1a0] sm:$0xff]
    %v9392 = vld [vmem:[#allocation6 + $0x1a8] sm:$0xff]
    %v9393 = vld [vmem:[#allocation6 + $0x1b0] sm:$0xff]
    %v9394 = vld [vmem:[#allocation6 + $0x1b8] sm:$0xff]
    %v9395 = vld [vmem:[#allocation6 + $0x1c0] sm:$0xff]
    %v9396 = vld [vmem:[#allocation6 + $0x1c8] sm:$0xff]
    %v9397 = vld [vmem:[#allocation6 + $0x1d0] sm:$0xff]
    %v9398 = vld [vmem:[#allocation6 + $0x1d8] sm:$0xff]
    %v9399 = vld [vmem:[#allocation6 + $0x1e0] sm:$0xff]
    %v9400 = vld [vmem:[#allocation6 + $0x1e8] sm:$0xff]
    %v9401 = vld [vmem:[#allocation6 + $0x1f0] sm:$0xff]
    %v9402 = vld [vmem:[#allocation6 + $0x1f8] sm:$0xff]
    %v9403 = vld [vmem:[#allocation7] sm:$0x3]
    %v9405 = vlaneseq
    %v9406 = vshrl.u32 %v9405, 7
    %v9407 = vsub.s32 0, %v9406
    %v9408 = vrot.slane %v9403, %v9407
    %v9409 = vlaneseq
    %v9410 = vshrl.u32 %v9409, 7
    %v9411 = vsub.s32 1, %v9410
    %v9412 = vrot.slane %v9403, %v9411
    %v9479 = vunpack.c.l.b16 %v9339
    %v9480 = vunpack.c.h.b16 %v9339
    %v9481 = vunpack.c.l.b16 %v9340
    %v9482 = vunpack.c.h.b16 %v9340
    %v9483 = vunpack.c.l.b16 %v9341
    %v9484 = vunpack.c.h.b16 %v9341
    %v9485 = vunpack.c.l.b16 %v9342
    %v9486 = vunpack.c.h.b16 %v9342
    %v9487 = vunpack.c.l.b16 %v9343
    %v9488 = vunpack.c.h.b16 %v9343
    %v9489 = vunpack.c.l.b16 %v9344
    %v9490 = vunpack.c.h.b16 %v9344
    %v9491 = vunpack.c.l.b16 %v9345
    %v9492 = vunpack.c.h.b16 %v9345
    %v9493 = vunpack.c.l.b16 %v9346
    %v9494 = vunpack.c.h.b16 %v9346
    %v9495 = vunpack.c.l.b16 %v9347
    %v9496 = vunpack.c.h.b16 %v9347
    %v9497 = vunpack.c.l.b16 %v9348
    %v9498 = vunpack.c.h.b16 %v9348
    %v9499 = vunpack.c.l.b16 %v9349
    %v9500 = vunpack.c.h.b16 %v9349
    %v9501 = vunpack.c.l.b16 %v9350
    %v9502 = vunpack.c.h.b16 %v9350
    %v9503 = vunpack.c.l.b16 %v9351
    %v9504 = vunpack.c.h.b16 %v9351
    %v9505 = vunpack.c.l.b16 %v9352
    %v9506 = vunpack.c.h.b16 %v9352
    %v9507 = vunpack.c.l.b16 %v9353
    %v9508 = vunpack.c.h.b16 %v9353
    %v9509 = vunpack.c.l.b16 %v9354
    %v9510 = vunpack.c.h.b16 %v9354
    %v9511 = vunpack.c.l.b16 %v9355
    %v9512 = vunpack.c.h.b16 %v9355
    %v9513 = vunpack.c.l.b16 %v9356
    %v9514 = vunpack.c.h.b16 %v9356
    %v9515 = vunpack.c.l.b16 %v9357
    %v9516 = vunpack.c.h.b16 %v9357
    %v9517 = vunpack.c.l.b16 %v9358
    %v9518 = vunpack.c.h.b16 %v9358
    %v9519 = vunpack.c.l.b16 %v9359
    %v9520 = vunpack.c.h.b16 %v9359
    %v9521 = vunpack.c.l.b16 %v9360
    %v9522 = vunpack.c.h.b16 %v9360
    %v9523 = vunpack.c.l.b16 %v9361
    %v9524 = vunpack.c.h.b16 %v9361
    %v9525 = vunpack.c.l.b16 %v9362
    %v9526 = vunpack.c.h.b16 %v9362
    %v9527 = vunpack.c.l.b16 %v9363
    %v9528 = vunpack.c.h.b16 %v9363
    %v9529 = vunpack.c.l.b16 %v9364
    %v9530 = vunpack.c.h.b16 %v9364
    %v9531 = vunpack.c.l.b16 %v9365
    %v9532 = vunpack.c.h.b16 %v9365
    %v9533 = vunpack.c.l.b16 %v9366
    %v9534 = vunpack.c.h.b16 %v9366
    %v9535 = vunpack.c.l.b16 %v9367
    %v9536 = vunpack.c.h.b16 %v9367
    %v9537 = vunpack.c.l.b16 %v9368
    %v9538 = vunpack.c.h.b16 %v9368
    %v9539 = vunpack.c.l.b16 %v9369
    %v9540 = vunpack.c.h.b16 %v9369
    %v9541 = vunpack.c.l.b16 %v9370
    %v9542 = vunpack.c.h.b16 %v9370
    %v9543 = vunpack.c.l.b16 %v9371
    %v9544 = vunpack.c.h.b16 %v9371
    %v9545 = vunpack.c.l.b16 %v9372
    %v9546 = vunpack.c.h.b16 %v9372
    %v9547 = vunpack.c.l.b16 %v9373
    %v9548 = vunpack.c.h.b16 %v9373
    %v9549 = vunpack.c.l.b16 %v9374
    %v9550 = vunpack.c.h.b16 %v9374
    %v9551 = vunpack.c.l.b16 %v9375
    %v9552 = vunpack.c.h.b16 %v9375
    %v9553 = vunpack.c.l.b16 %v9376
    %v9554 = vunpack.c.h.b16 %v9376
    %v9555 = vunpack.c.l.b16 %v9377
    %v9556 = vunpack.c.h.b16 %v9377
    %v9557 = vunpack.c.l.b16 %v9378
    %v9558 = vunpack.c.h.b16 %v9378
    %v9559 = vunpack.c.l.b16 %v9379
    %v9560 = vunpack.c.h.b16 %v9379
    %v9561 = vunpack.c.l.b16 %v9380
    %v9562 = vunpack.c.h.b16 %v9380
    %v9563 = vunpack.c.l.b16 %v9381
    %v9564 = vunpack.c.h.b16 %v9381
    %v9565 = vunpack.c.l.b16 %v9382
    %v9566 = vunpack.c.h.b16 %v9382
    %v9567 = vunpack.c.l.b16 %v9383
    %v9568 = vunpack.c.h.b16 %v9383
    %v9569 = vunpack.c.l.b16 %v9384
    %v9570 = vunpack.c.h.b16 %v9384
    %v9571 = vunpack.c.l.b16 %v9385
    %v9572 = vunpack.c.h.b16 %v9385
    %v9573 = vunpack.c.l.b16 %v9386
    %v9574 = vunpack.c.h.b16 %v9386
    %v9575 = vunpack.c.l.b16 %v9387
    %v9576 = vunpack.c.h.b16 %v9387
    %v9577 = vunpack.c.l.b16 %v9388
    %v9578 = vunpack.c.h.b16 %v9388
    %v9579 = vunpack.c.l.b16 %v9389
    %v9580 = vunpack.c.h.b16 %v9389
    %v9581 = vunpack.c.l.b16 %v9390
    %v9582 = vunpack.c.h.b16 %v9390
    %v9583 = vunpack.c.l.b16 %v9391
    %v9584 = vunpack.c.h.b16 %v9391
    %v9585 = vunpack.c.l.b16 %v9392
    %v9586 = vunpack.c.h.b16 %v9392
    %v9587 = vunpack.c.l.b16 %v9393
    %v9588 = vunpack.c.h.b16 %v9393
    %v9589 = vunpack.c.l.b16 %v9394
    %v9590 = vunpack.c.h.b16 %v9394
    %v9591 = vunpack.c.l.b16 %v9395
    %v9592 = vunpack.c.h.b16 %v9395
    %v9593 = vunpack.c.l.b16 %v9396
    %v9594 = vunpack.c.h.b16 %v9396
    %v9595 = vunpack.c.l.b16 %v9397
    %v9596 = vunpack.c.h.b16 %v9397
    %v9597 = vunpack.c.l.b16 %v9398
    %v9598 = vunpack.c.h.b16 %v9398
    %v9599 = vunpack.c.l.b16 %v9399
    %v9600 = vunpack.c.h.b16 %v9399
    %v9601 = vunpack.c.l.b16 %v9400
    %v9602 = vunpack.c.h.b16 %v9400
    %v9603 = vunpack.c.l.b16 %v9401
    %v9604 = vunpack.c.h.b16 %v9401
    %v9605 = vunpack.c.l.b16 %v9402
    %v9606 = vunpack.c.h.b16 %v9402
    %v9607 = vpack.c.b16 %v9481, %v9479
    %v9608 = vpack.c.b16 %v9482, %v9480
    %v9609 = vpack.c.b16 %v9485, %v9483
    %v9610 = vpack.c.b16 %v9486, %v9484
    %v9611 = vpack.c.b16 %v9489, %v9487
    %v9612 = vpack.c.b16 %v9490, %v9488
    %v9613 = vpack.c.b16 %v9493, %v9491
    %v9614 = vpack.c.b16 %v9494, %v9492
    %v9615 = vpack.c.b16 %v9497, %v9495
    %v9616 = vpack.c.b16 %v9498, %v9496
    %v9617 = vpack.c.b16 %v9501, %v9499
    %v9618 = vpack.c.b16 %v9502, %v9500
    %v9619 = vpack.c.b16 %v9505, %v9503
    %v9620 = vpack.c.b16 %v9506, %v9504
    %v9621 = vpack.c.b16 %v9509, %v9507
    %v9622 = vpack.c.b16 %v9510, %v9508
    %v9623 = vpack.c.b16 %v9513, %v9511
    %v9624 = vpack.c.b16 %v9514, %v9512
    %v9625 = vpack.c.b16 %v9517, %v9515
    %v9626 = vpack.c.b16 %v9518, %v9516
    %v9627 = vpack.c.b16 %v9521, %v9519
    %v9628 = vpack.c.b16 %v9522, %v9520
    %v9629 = vpack.c.b16 %v9525, %v9523
    %v9630 = vpack.c.b16 %v9526, %v9524
    %v9631 = vpack.c.b16 %v9529, %v9527
    %v9632 = vpack.c.b16 %v9530, %v9528
    %v9633 = vpack.c.b16 %v9533, %v9531
    %v9634 = vpack.c.b16 %v9534, %v9532
    %v9635 = vpack.c.b16 %v9537, %v9535
    %v9636 = vpack.c.b16 %v9538, %v9536
    %v9637 = vpack.c.b16 %v9541, %v9539
    %v9638 = vpack.c.b16 %v9542, %v9540
    %v9639 = vpack.c.b16 %v9545, %v9543
    %v9640 = vpack.c.b16 %v9546, %v9544
    %v9641 = vpack.c.b16 %v9549, %v9547
    %v9642 = vpack.c.b16 %v9550, %v9548
    %v9643 = vpack.c.b16 %v9553, %v9551
    %v9644 = vpack.c.b16 %v9554, %v9552
    %v9645 = vpack.c.b16 %v9557, %v9555
    %v9646 = vpack.c.b16 %v9558, %v9556
    %v9647 = vpack.c.b16 %v9561, %v9559
    %v9648 = vpack.c.b16 %v9562, %v9560
    %v9649 = vpack.c.b16 %v9565, %v9563
    %v9650 = vpack.c.b16 %v9566, %v9564
    %v9651 = vpack.c.b16 %v9569, %v9567
    %v9652 = vpack.c.b16 %v9570, %v9568
    %v9653 = vpack.c.b16 %v9573, %v9571
    %v9654 = vpack.c.b16 %v9574, %v9572
    %v9655 = vpack.c.b16 %v9577, %v9575
    %v9656 = vpack.c.b16 %v9578, %v9576
    %v9657 = vpack.c.b16 %v9581, %v9579
    %v9658 = vpack.c.b16 %v9582, %v9580
    %v9659 = vpack.c.b16 %v9585, %v9583
    %v9660 = vpack.c.b16 %v9586, %v9584
    %v9661 = vpack.c.b16 %v9589, %v9587
    %v9662 = vpack.c.b16 %v9590, %v9588
    %v9663 = vpack.c.b16 %v9593, %v9591
    %v9664 = vpack.c.b16 %v9594, %v9592
    %v9665 = vpack.c.b16 %v9597, %v9595
    %v9666 = vpack.c.b16 %v9598, %v9596
    %v9667 = vpack.c.b16 %v9601, %v9599
    %v9668 = vpack.c.b16 %v9602, %v9600
    %v9669 = vpack.c.b16 %v9605, %v9603
    %v9670 = vpack.c.b16 %v9606, %v9604
    %9735 = vmatprep.subr.bf16.mxu0 %v9622
    %9736 = vmatpush1.bf16.msra.mxu0 %v9621
    %9737 = vmatprep.subr.bf16.mxu0 %v9620
    %9738 = vmatpush1.bf16.msra.mxu0 %v9619
    %9739 = vmatprep.subr.bf16.mxu0 %v9618
    %9740 = vmatpush1.bf16.msra.mxu0 %v9617
    %9741 = vmatprep.subr.bf16.mxu0 %v9616
    %9742 = vmatpush1.bf16.msra.mxu0 %v9615
    %9743 = vmatprep.subr.bf16.mxu0 %v9614
    %9744 = vmatpush1.bf16.msra.mxu0 %v9613
    %9745 = vmatprep.subr.bf16.mxu0 %v9612
    %9746 = vmatpush1.bf16.msra.mxu0 %v9611
    %9747 = vmatprep.subr.bf16.mxu0 %v9610
    %9748 = vmatpush1.bf16.msra.mxu0 %v9609
    %9749 = vmatprep.subr.bf16.mxu0 %v9608
    %9750 = vmatpush1.bf16.msra.mxu0 %v9607
    %9751 = vmatprep.subr.bf16.mxu0 %v9638
    %9752 = vmatpush2.bf16.msra.mxu0 %v9637
    %9753 = vmatprep.subr.bf16.mxu0 %v9636
    %9754 = vmatpush2.bf16.msra.mxu0 %v9635
    %9755 = vmatprep.subr.bf16.mxu0 %v9634
    %9756 = vmatpush2.bf16.msra.mxu0 %v9633
    %9757 = vmatprep.subr.bf16.mxu0 %v9632
    %9758 = vmatpush2.bf16.msra.mxu0 %v9631
    %9759 = vmatprep.subr.bf16.mxu0 %v9630
    %9760 = vmatpush2.bf16.msra.mxu0 %v9629
    %9761 = vmatprep.subr.bf16.mxu0 %v9628
    %9762 = vmatpush2.bf16.msra.mxu0 %v9627
    %9763 = vmatprep.subr.bf16.mxu0 %v9626
    %9764 = vmatpush2.bf16.msra.mxu0 %v9625
    %9765 = vmatprep.subr.bf16.mxu0 %v9624
    %9766 = vmatpush2.bf16.msra.mxu0 %v9623
    %9767 = vmatprep.mubr.bf16.mxu0 %v9336
    %9768 = vmatmul.mubr.bf16.gmra.mxu0 %v9335
    %v9769 = vpop.f32.mrf.mxu0
    %v9770 = vadd.f32 %v9408, %v9769
    %v9771 = vpop.f32.mrf.mxu0
    %v9772 = vadd.f32 %v9412, %v9771
    %v9773 = vpop.f32.mrf.mxu0
    %v9774 = vpop.f32.mrf.mxu0
    %9775 = vdwg.mxu0
    %9776 = vmatprep.subr.bf16.mxu0 %v9654
    %9777 = vmatpush1.bf16.msra.mxu0 %v9653
    %9778 = vmatprep.subr.bf16.mxu0 %v9652
    %9779 = vmatpush1.bf16.msra.mxu0 %v9651
    %9780 = vmatprep.subr.bf16.mxu0 %v9650
    %9781 = vmatpush1.bf16.msra.mxu0 %v9649
    %9782 = vmatprep.subr.bf16.mxu0 %v9648
    %9783 = vmatpush1.bf16.msra.mxu0 %v9647
    %9784 = vmatprep.subr.bf16.mxu0 %v9646
    %9785 = vmatpush1.bf16.msra.mxu0 %v9645
    %9786 = vmatprep.subr.bf16.mxu0 %v9644
    %9787 = vmatpush1.bf16.msra.mxu0 %v9643
    %9788 = vmatprep.subr.bf16.mxu0 %v9642
    %9789 = vmatpush1.bf16.msra.mxu0 %v9641
    %9790 = vmatprep.subr.bf16.mxu0 %v9640
    %9791 = vmatpush1.bf16.msra.mxu0 %v9639
    %9792 = vmatprep.subr.bf16.mxu0 %v9670
    %9793 = vmatpush2.bf16.msra.mxu0 %v9669
    %9794 = vmatprep.subr.bf16.mxu0 %v9668
    %9795 = vmatpush2.bf16.msra.mxu0 %v9667
    %9796 = vmatprep.subr.bf16.mxu0 %v9666
    %9797 = vmatpush2.bf16.msra.mxu0 %v9665
    %9798 = vmatprep.subr.bf16.mxu0 %v9664
    %9799 = vmatpush2.bf16.msra.mxu0 %v9663
    %9800 = vmatprep.subr.bf16.mxu0 %v9662
    %9801 = vmatpush2.bf16.msra.mxu0 %v9661
    %9802 = vmatprep.subr.bf16.mxu0 %v9660
    %9803 = vmatpush2.bf16.msra.mxu0 %v9659
    %9804 = vmatprep.subr.bf16.mxu0 %v9658
    %9805 = vmatpush2.bf16.msra.mxu0 %v9657
    %9806 = vmatprep.subr.bf16.mxu0 %v9656
    %9807 = vmatpush2.bf16.msra.mxu0 %v9655
    %9808 = vmatprep.mubr.bf16.mxu0 %v9338
    %9809 = vmatmul.mubr.bf16.gmra.mxu0 %v9337
    %v9810 = vpop.f32.mrf.mxu0
    %v9811 = vadd.f32 %v9770, %v9810
    %v9812 = vpop.f32.mrf.mxu0
    %v9813 = vadd.f32 %v9772, %v9812
    %v9814 = vpop.f32.mrf.mxu0
    %v9815 = vpop.f32.mrf.mxu0
    %9816 = vdwg.mxu0
    %v9817 = vmax.f32 %v9811, 0.0
    %v9818 = vmax.f32 %v9813, 0.0
    %v9819 = vpack.c.bf16 %v9817, %v9817
    %v9820 = vpack.c.bf16 %v9818, %v9818
    %v9821 = vld [vmem:[#allocation9] sm:$0xf]
    %v9822 = vld [vmem:[#allocation9 + $0x4] sm:$0xf]
    %v9823 = vld [vmem:[#allocation9 + $0x8] sm:$0xf]
    %v9824 = vld [vmem:[#allocation9 + $0xc] sm:$0xf]
    %v9825 = vld [vmem:[#allocation9 + $0x10] sm:$0xf]
    %v9826 = vld [vmem:[#allocation9 + $0x14] sm:$0xf]
    %v9827 = vld [vmem:[#allocation9 + $0x18] sm:$0xf]
    %v9828 = vld [vmem:[#allocation9 + $0x1c] sm:$0xf]
    %v9829 = vld [vmem:[#allocation9 + $0x20] sm:$0xf]
    %v9830 = vld [vmem:[#allocation9 + $0x24] sm:$0xf]
    %v9831 = vld [vmem:[#allocation9 + $0x28] sm:$0xf]
    %v9832 = vld [vmem:[#allocation9 + $0x2c] sm:$0xf]
    %v9833 = vld [vmem:[#allocation9 + $0x30] sm:$0xf]
    %v9834 = vld [vmem:[#allocation9 + $0x34] sm:$0xf]
    %v9835 = vld [vmem:[#allocation9 + $0x38] sm:$0xf]
    %v9836 = vld [vmem:[#allocation9 + $0x3c] sm:$0xf]
    %v9837 = vld [vmem:[#allocation9 + $0x40] sm:$0xf]
    %v9838 = vld [vmem:[#allocation9 + $0x44] sm:$0xf]
    %v9839 = vld [vmem:[#allocation9 + $0x48] sm:$0xf]
    %v9840 = vld [vmem:[#allocation9 + $0x4c] sm:$0xf]
    %v9841 = vld [vmem:[#allocation9 + $0x50] sm:$0xf]
    %v9842 = vld [vmem:[#allocation9 + $0x54] sm:$0xf]
    %v9843 = vld [vmem:[#allocation9 + $0x58] sm:$0xf]
    %v9844 = vld [vmem:[#allocation9 + $0x5c] sm:$0xf]
    %v9845 = vld [vmem:[#allocation9 + $0x60] sm:$0xf]
    %v9846 = vld [vmem:[#allocation9 + $0x64] sm:$0xf]
    %v9847 = vld [vmem:[#allocation9 + $0x68] sm:$0xf]
    %v9848 = vld [vmem:[#allocation9 + $0x6c] sm:$0xf]
    %v9849 = vld [vmem:[#allocation9 + $0x70] sm:$0xf]
    %v9850 = vld [vmem:[#allocation9 + $0x74] sm:$0xf]
    %v9851 = vld [vmem:[#allocation9 + $0x78] sm:$0xf]
    %v9852 = vld [vmem:[#allocation9 + $0x7c] sm:$0xf]
    %v9853 = vld [vmem:[#allocation10] sm:$0x1]
    %v9855 = vlaneseq
    %v9856 = vshrl.u32 %v9855, 7
    %v9857 = vsub.s32 0, %v9856
    %v9858 = vrot.slane %v9853, %v9857
    %v9892 = vunpack.c.l.b16 %v9821
    %v9893 = vunpack.c.l.b16 %v9822
    %v9894 = vunpack.c.l.b16 %v9823
    %v9895 = vunpack.c.l.b16 %v9824
    %v9896 = vunpack.c.l.b16 %v9825
    %v9897 = vunpack.c.l.b16 %v9826
    %v9898 = vunpack.c.l.b16 %v9827
    %v9899 = vunpack.c.l.b16 %v9828
    %v9900 = vunpack.c.l.b16 %v9829
    %v9901 = vunpack.c.l.b16 %v9830
    %v9902 = vunpack.c.l.b16 %v9831
    %v9903 = vunpack.c.l.b16 %v9832
    %v9904 = vunpack.c.l.b16 %v9833
    %v9905 = vunpack.c.l.b16 %v9834
    %v9906 = vunpack.c.l.b16 %v9835
    %v9907 = vunpack.c.l.b16 %v9836
    %v9908 = vunpack.c.l.b16 %v9837
    %v9909 = vunpack.c.l.b16 %v9838
    %v9910 = vunpack.c.l.b16 %v9839
    %v9911 = vunpack.c.l.b16 %v9840
    %v9912 = vunpack.c.l.b16 %v9841
    %v9913 = vunpack.c.l.b16 %v9842
    %v9914 = vunpack.c.l.b16 %v9843
    %v9915 = vunpack.c.l.b16 %v9844
    %v9916 = vunpack.c.l.b16 %v9845
    %v9917 = vunpack.c.l.b16 %v9846
    %v9918 = vunpack.c.l.b16 %v9847
    %v9919 = vunpack.c.l.b16 %v9848
    %v9920 = vunpack.c.l.b16 %v9849
    %v9921 = vunpack.c.l.b16 %v9850
    %v9922 = vunpack.c.l.b16 %v9851
    %v9923 = vunpack.c.l.b16 %v9852
    %v9924 = vpack.c.b16 %v9893, %v9892
    %v9925 = vpack.c.b16 %v9895, %v9894
    %v9926 = vpack.c.b16 %v9897, %v9896
    %v9927 = vpack.c.b16 %v9899, %v9898
    %v9928 = vpack.c.b16 %v9901, %v9900
    %v9929 = vpack.c.b16 %v9903, %v9902
    %v9930 = vpack.c.b16 %v9905, %v9904
    %v9931 = vpack.c.b16 %v9907, %v9906
    %v9932 = vpack.c.b16 %v9909, %v9908
    %v9933 = vpack.c.b16 %v9911, %v9910
    %v9934 = vpack.c.b16 %v9913, %v9912
    %v9935 = vpack.c.b16 %v9915, %v9914
    %v9936 = vpack.c.b16 %v9917, %v9916
    %v9937 = vpack.c.b16 %v9919, %v9918
    %v9938 = vpack.c.b16 %v9921, %v9920
    %v9939 = vpack.c.b16 %v9923, %v9922
    %9956 = vmatprep.subr.bf16.mxu0 0
    %9957 = vmatpush1.bf16.msra.mxu0 %v9931
    %9958 = vmatprep.subr.bf16.mxu0 0
    %9959 = vmatpush1.bf16.msra.mxu0 %v9930
    %9960 = vmatprep.subr.bf16.mxu0 0
    %9961 = vmatpush1.bf16.msra.mxu0 %v9929
    %9962 = vmatprep.subr.bf16.mxu0 0
    %9963 = vmatpush1.bf16.msra.mxu0 %v9928
    %9964 = vmatprep.subr.bf16.mxu0 0
    %9965 = vmatpush1.bf16.msra.mxu0 %v9927
    %9966 = vmatprep.subr.bf16.mxu0 0
    %9967 = vmatpush1.bf16.msra.mxu0 %v9926
    %9968 = vmatprep.subr.bf16.mxu0 0
    %9969 = vmatpush1.bf16.msra.mxu0 %v9925
    %9970 = vmatprep.subr.bf16.mxu0 0
    %9971 = vmatpush1.bf16.msra.mxu0 %v9924
    %9972 = vmatprep.subr.bf16.mxu0 0
    %9973 = vmatpush2.bf16.msra.mxu0 %v9939
    %9974 = vmatprep.subr.bf16.mxu0 0
    %9975 = vmatpush2.bf16.msra.mxu0 %v9938
    %9976 = vmatprep.subr.bf16.mxu0 0
    %9977 = vmatpush2.bf16.msra.mxu0 %v9937
    %9978 = vmatprep.subr.bf16.mxu0 0
    %9979 = vmatpush2.bf16.msra.mxu0 %v9936
    %9980 = vmatprep.subr.bf16.mxu0 0
    %9981 = vmatpush2.bf16.msra.mxu0 %v9935
    %9982 = vmatprep.subr.bf16.mxu0 0
    %9983 = vmatpush2.bf16.msra.mxu0 %v9934
    %9984 = vmatprep.subr.bf16.mxu0 0
    %9985 = vmatpush2.bf16.msra.mxu0 %v9933
    %9986 = vmatprep.subr.bf16.mxu0 0
    %9987 = vmatpush2.bf16.msra.mxu0 %v9932
    %9988 = vmatprep.mubr.bf16.mxu0 %v9820
    %9989 = vmatmul.mubr.bf16.gmra.mxu0 %v9819
    %v9990 = vpop.f32.mrf.mxu0
    %v9991 = vadd.f32 %v9858, %v9990
    %v9992 = vpop.f32.mrf.mxu0
    %v9993 = vpop.f32.mrf.mxu0
    %v9994 = vpop.f32.mrf.mxu0
    %9995 = vdwg.mxu0
    %9996 = vst [vmem:[%s7] sm:$0xff] %v9991
    // Predicated region
    $region54: #{fruit_freshness_forward.1} parent=1 // pred_check
      _
    $region55: #{fruit_freshness_forward.1} parent=1 // pred_check_branch
      %9998 = sbr.rel (0) target = $region57
    $region56: #{fruit_freshness_forward.1} parent=1 // pred_region
      _
    $region57: #{fruit_freshness_forward.1} parent=1 // pred_fallthru
      _
    // Predicated region
    $region58: #{fruit_freshness_forward.1} parent=1 // pred_check
      _
    $region59: #{fruit_freshness_forward.1} parent=1 // pred_check_branch
      %10000 = sbr.rel (0) target = $region61
    $region60: #{fruit_freshness_forward.1} parent=1 // pred_region
      _
    $region61: #{fruit_freshness_forward.1} parent=1 // pred_fallthru
      _
    %10001 = vsyncpa [#allocation3], 1
    %10002 = vsyncpa [#allocation5], 1
    %10003 = vsyncpa [#allocation8], 1
    %10004 = vsyncpa [#allocation11], 1

</llo_original>
